<compile_context>
chip_gen: v5e
topology: v5e:2x2
jax: 0.10.0
libtpu: 0.0.40
codegen_flags: <defaults>
</compile_context>

<pallas_src>
import functools

import jax
import jax.numpy as jnp
from jax.experimental import pallas as pl
from jax.experimental.pallas import tpu as pltpu


def _round_up(x, m):
    return (x + m - 1) // m * m


# ---------------------------------------------------------------------------
# Pallas kernels
# ---------------------------------------------------------------------------
def _gemm_kernel(a_ref, b_ref, ss_ref, o_ref, *, act):
    """out = act((A @ B) * scale + shift); A/B bf16, accumulate f32 into o_ref."""
    k = pl.program_id(2)

    @pl.when(k == 0)
    def _():
        o_ref[...] = jnp.zeros_like(o_ref)

    o_ref[...] += jnp.dot(a_ref[...], b_ref[...], preferred_element_type=jnp.float32)

    @pl.when(k == pl.num_programs(2) - 1)
    def _():
        ss = ss_ref[...]
        y = o_ref[...] * ss[0:1, :] + ss[1:2, :]
        if act == "relu":
            y = jnp.maximum(y, 0.0)
        elif act == "lrelu":
            y = jnp.where(y >= 0.0, y, 0.01 * y)
        o_ref[...] = y


def gemm_bias_act(A, B, bias, scale, shift, act="none"):
    """out = act((A @ B + bias) * scale + shift).  bias folded into shift."""
    M, K = A.shape
    _, N = B.shape
    tm = min(512, _round_up(M, 16))   # multiple of 16 -> bf16-friendly sublanes
    Mp = _round_up(M, tm)
    tk = 256
    Kp = _round_up(K, tk)
    tn = 256
    Np = _round_up(N, tn)

    Ap = jnp.pad(A.astype(jnp.bfloat16), ((0, Mp - M), (0, Kp - K)))
    Bp = jnp.pad(B.astype(jnp.bfloat16), ((0, Kp - K), (0, Np - N)))
    eff_shift = bias * scale + shift            # (acc+bias)*scale+shift == acc*scale+eff_shift
    ss = jnp.stack(
        [jnp.pad(scale, (0, Np - N)), jnp.pad(eff_shift, (0, Np - N))], axis=0
    ).astype(jnp.float32)                        # (2, Np): row 0 scale, row 1 shift

    out = pl.pallas_call(
        functools.partial(_gemm_kernel, act=act),
        out_shape=jax.ShapeDtypeStruct((Mp, Np), jnp.float32),
        grid_spec=pltpu.PrefetchScalarGridSpec(
            num_scalar_prefetch=0,
            grid=(Mp // tm, Np // tn, Kp // tk),
            in_specs=[
                pl.BlockSpec((tm, tk), lambda i, j, k: (i, k)),
                pl.BlockSpec((tk, tn), lambda i, j, k: (k, j)),
                pl.BlockSpec((2, tn), lambda i, j, k: (0, j)),
            ],
            out_specs=pl.BlockSpec((tm, tn), lambda i, j, k: (i, j)),
        ),
        compiler_params=pltpu.CompilerParams(
            dimension_semantics=("parallel", "parallel", "arbitrary")),
    )(Ap, Bp, ss)
    return out[:M, :N]


def _gdn_kernel(x_ref, g_ref, beta_ref, o_ref, *, inverse):
    x = x_ref[...]
    norm = jnp.dot(x * x, g_ref[...], preferred_element_type=jnp.float32) + beta_ref[...]
    if inverse:
        y = x * jnp.sqrt(norm)
    else:
        y = x * jax.lax.rsqrt(norm)
    o_ref[...] = y.astype(o_ref.dtype)


def gdn_apply(x_nhwc, gamma, beta, inverse=False):
    """GDN: x / sqrt(beta + gamma @ x^2) ; IGDN uses * sqrt(...).  gamma: (C,C), beta: (C,)."""
    N, H, W, C = x_nhwc.shape
    M = N * H * W
    tm = min(512, _round_up(M, 8))
    Mp = _round_up(M, tm)
    Cp = _round_up(C, 128)

    X = jnp.pad(x_nhwc.reshape(M, C), ((0, Mp - M), (0, Cp - C)))
    G = jnp.pad(gamma.T, ((0, Cp - C), (0, Cp - C)))          # [C_in, C_out]
    Bt = jnp.pad(beta, (0, Cp - C), constant_values=1.0)[None, :]

    out = pl.pallas_call(
        functools.partial(_gdn_kernel, inverse=inverse),
        out_shape=jax.ShapeDtypeStruct((Mp, Cp), jnp.float32),
        grid_spec=pltpu.PrefetchScalarGridSpec(
            num_scalar_prefetch=0,
            grid=(Mp // tm,),
            in_specs=[
                pl.BlockSpec((tm, Cp), lambda i: (i, 0)),
                pl.BlockSpec((Cp, Cp), lambda i: (0, 0)),
                pl.BlockSpec((1, Cp), lambda i: (0, 0)),
            ],
            out_specs=pl.BlockSpec((tm, Cp), lambda i: (i, 0)),
        ),
        compiler_params=pltpu.CompilerParams(dimension_semantics=("parallel",)),
    )(X, G, Bt)
    return out[:M, :C].reshape(N, H, W, C)


# ---------------------------------------------------------------------------
# Conv helpers (im2col glue in plain JAX, GEMM in Pallas)
# ---------------------------------------------------------------------------
def _bn_fold(bn, cout):
    if bn is None:
        return jnp.ones((cout,), jnp.float32), jnp.zeros((cout,), jnp.float32)
    bn_w, bn_b, bn_mean, bn_var, eps = bn
    scale = bn_w / jnp.sqrt(bn_var + eps)
    shift = bn_b - bn_mean * scale
    return scale, shift


def conv2d(x, w, b, stride=1, pad=0, act="none", bn=None):
    """x: NHWC; w: PyTorch OIHW (Cout, Cin, kh, kw); b: (Cout,)."""
    N, H, W, Cin = x.shape
    Cout, _, kh, kw = w.shape
    xb = x.astype(jnp.bfloat16)                       # bf16 im2col: half the HBM traffic
    xp = jnp.pad(xb, ((0, 0), (pad, pad), (pad, pad), (0, 0)))
    Ho = (H + 2 * pad - kh) // stride + 1
    Wo = (W + 2 * pad - kw) // stride + 1

    cols = []
    for dy in range(kh):
        for dx in range(kw):
            cols.append(xp[:, dy:dy + stride * Ho:stride, dx:dx + stride * Wo:stride, :])
    A = jnp.concatenate(cols, axis=-1).reshape(N * Ho * Wo, kh * kw * Cin)
    Bm = jnp.transpose(w, (2, 3, 1, 0)).reshape(kh * kw * Cin, Cout)

    scale, shift = _bn_fold(bn, Cout)
    y = gemm_bias_act(A, Bm, b, scale, shift, act)
    return y.reshape(N, Ho, Wo, Cout)


def conv_transpose2d(x, w, b, stride, pad, act="none", bn=None):
    """x: NHWC; w: PyTorch (Cin, Cout, kh, kw).

    Sub-pixel decomposition for the k=4, s=2, p=1 case used by the model:
    four 2x2 sub-kernel convolutions on the (lightly padded) undilated input,
    outputs interleaved -> no structural-zero work.
    """
    N, H, W, Cin = x.shape
    _, Cout, kh, kw = w.shape
    assert stride == 2 and kh == 4 and kw == 4 and pad == 1, "only k=4,s=2,p=1 supported"

    # flipped-kernel conv weights, laid out (Cout, Cin, kh, kw)
    w_conv = jnp.transpose(w[:, :, ::-1, ::-1], (1, 0, 2, 3))
    xb = x.astype(jnp.bfloat16)
    xp = jnp.pad(xb, ((0, 0), (1, 1), (1, 1), (0, 0)))        # (N, H+2, W+2, Cin)

    scale, shift = _bn_fold(bn, Cout)

    phases = {}
    for py in range(2):
        for px in range(2):
            cols = []
            for a in range(2):
                for bb in range(2):
                    cols.append(xp[:, py + a: py + a + H, px + bb: px + bb + W, :])
            A = jnp.concatenate(cols, axis=-1).reshape(N * H * W, 4 * Cin)
            wsub = w_conv[:, :, py::2, px::2]                  # (Cout, Cin, 2, 2)
            Bm = jnp.transpose(wsub, (2, 3, 1, 0)).reshape(4 * Cin, Cout)
            yph = gemm_bias_act(A, Bm, b, scale, shift, act)
            phases[(py, px)] = yph.reshape(N, H, W, Cout)

    # interleave the four phases: y[:, 2m+py, 2k+px, :] = phases[(py,px)][:, m, k, :]
    row0 = jnp.stack([phases[(0, 0)], phases[(0, 1)]], axis=3)   # (N,H,W,2,C)
    row1 = jnp.stack([phases[(1, 0)], phases[(1, 1)]], axis=3)
    y = jnp.stack([row0, row1], axis=2)                          # (N,H,2,W,2,C)
    return y.reshape(N, 2 * H, 2 * W, Cout)


# ---------------------------------------------------------------------------
# Deterministic parameter init (synthetic; shapes follow Generator.__init__)
# ---------------------------------------------------------------------------
def init_params(key):
    keys = iter(jax.random.split(key, 64))

    def conv_p(cin, cout, k):
        fan_in = cin * k * k
        w = jax.random.normal(next(keys), (cout, cin, k, k), jnp.float32) / jnp.sqrt(fan_in)
        b = 0.01 * jax.random.normal(next(keys), (cout,), jnp.float32)
        return w, b

    def convT_p(cin, cout, k):
        fan_in = cin * k * k
        w = jax.random.normal(next(keys), (cin, cout, k, k), jnp.float32) / jnp.sqrt(fan_in)
        b = 0.01 * jax.random.normal(next(keys), (cout,), jnp.float32)
        return w, b

    def bn_p(c):
        w = 1.0 + 0.1 * jax.random.normal(next(keys), (c,), jnp.float32)
        bb = 0.01 * jax.random.normal(next(keys), (c,), jnp.float32)
        mean = 0.01 * jax.random.normal(next(keys), (c,), jnp.float32)
        var = jnp.abs(1.0 + 0.1 * jax.random.normal(next(keys), (c,), jnp.float32))
        return (w, bb, mean, var, 1e-5)

    def gdn_p(c):
        return 0.1 * jnp.eye(c, dtype=jnp.float32), jnp.ones((c,), jnp.float32)

    p = {}
    # block1: ResidualBlockWithStride(192, 256, stride=1)  (stride=1 but cin!=cout -> 1x1 skip)
    p["b1_rbs_conv1"] = conv_p(192, 256, 3)
    p["b1_rbs_conv2"] = conv_p(256, 256, 3)
    p["b1_rbs_gdn"] = gdn_p(256)
    p["b1_rbs_skip"] = conv_p(192, 256, 1)
    # block1: ResidualBlock(256, 256)
    p["b1_rb_conv1"] = conv_p(256, 256, 3)
    p["b1_rb_conv2"] = conv_p(256, 256, 3)
    # block2
    p["b2_conv"] = conv_p(256, 512, 3)
    p["b2_bn"] = bn_p(512)
    # block3
    p["b3_conv"] = conv_p(512, 1024, 3)
    p["b3_bn"] = bn_p(1024)
    # block4
    p["b4_convT"] = convT_p(1024, 512, 4)
    p["b4_bn"] = bn_p(512)
    # block5
    p["b5_convT"] = convT_p(512, 256, 4)
    p["b5_bn"] = bn_p(256)
    # block6: ResidualBlock(256, 256)
    p["b6_rb_conv1"] = conv_p(256, 256, 3)
    p["b6_rb_conv2"] = conv_p(256, 256, 3)
    # block6: ResidualBlockUpsample(256, 192, upsample=1)  (PixelShuffle(1) == identity)
    p["b6_up_subpel"] = conv_p(256, 192, 3)
    p["b6_up_conv"] = conv_p(192, 192, 3)
    p["b6_up_igdn"] = gdn_p(192)
    p["b6_up_upsample"] = conv_p(256, 192, 3)
    return p


# ---------------------------------------------------------------------------
# Forward pass (matches Generator.forward)
# ---------------------------------------------------------------------------
def generator_forward(params, x_nchw):
    x = jnp.transpose(x_nchw, (0, 2, 3, 1)).astype(jnp.float32)  # NCHW -> NHWC

    # block1a: ResidualBlockWithStride(192, 256, stride=1)
    out = conv2d(x, *params["b1_rbs_conv1"], stride=1, pad=1, act="lrelu")
    out = conv2d(out, *params["b1_rbs_conv2"], stride=1, pad=1, act="none")
    out = gdn_apply(out, *params["b1_rbs_gdn"], inverse=False)
    identity = conv2d(x, *params["b1_rbs_skip"], stride=1, pad=0, act="none")
    x = out + identity

    # block1b: ResidualBlock(256, 256)
    identity = x
    out = conv2d(x, *params["b1_rb_conv1"], stride=1, pad=1, act="lrelu")
    out = conv2d(out, *params["b1_rb_conv2"], stride=1, pad=1, act="lrelu")
    x = out + identity

    # block2: Conv(256->512, s=2) + BN + ReLU
    x = conv2d(x, *params["b2_conv"], stride=2, pad=1, act="relu", bn=params["b2_bn"])
    # block3: Conv(512->1024, s=2) + BN + ReLU
    x = conv2d(x, *params["b3_conv"], stride=2, pad=1, act="relu", bn=params["b3_bn"])
    # block4: ConvT(1024->512, k=4, s=2, p=1) + BN + ReLU
    x = conv_transpose2d(x, *params["b4_convT"], stride=2, pad=1, act="relu", bn=params["b4_bn"])
    # block5: ConvT(512->256, k=4, s=2, p=1) + BN + ReLU
    x = conv_transpose2d(x, *params["b5_convT"], stride=2, pad=1, act="relu", bn=params["b5_bn"])

    # block6a: ResidualBlock(256, 256)
    identity = x
    out = conv2d(x, *params["b6_rb_conv1"], stride=1, pad=1, act="lrelu")
    out = conv2d(out, *params["b6_rb_conv2"], stride=1, pad=1, act="lrelu")
    x = out + identity

    # block6b: ResidualBlockUpsample(256, 192, upsample=1)
    out = conv2d(x, *params["b6_up_subpel"], stride=1, pad=1, act="lrelu")
    out = conv2d(out, *params["b6_up_conv"], stride=1, pad=1, act="none")
    out = gdn_apply(out, *params["b6_up_igdn"], inverse=True)
    identity = conv2d(x, *params["b6_up_upsample"], stride=1, pad=1, act="none")
    x = out + identity

    return jnp.transpose(x, (0, 3, 1, 2))  # NHWC -> NCHW


if __name__ == "__main__":
    key = jax.random.PRNGKey(0)
    k_params, k_input = jax.random.split(key)
    params = init_params(k_params)

    # Small deterministic input: (N=1, C=192, H=8, W=8); spatial must be divisible by 4.
    x = jax.random.normal(k_input, (1, 192, 8, 8), jnp.float32)

    fwd = jax.jit(generator_forward)
    y = fwd(params, x)
    y = jax.block_until_ready(y)

    assert y.shape == (1, 192, 8, 8), y.shape
    assert jnp.all(jnp.isfinite(y)), "non-finite output"
    print("KERNEL_OK")
</pallas_src>

<mosaic_0001>
module attributes {stable_mosaic.version = 11 : i64} {
  func.func @_gemm_kernel(%arg0: i32, %arg1: i32, %arg2: i32, %arg3: memref<64x256xbf16, #tpu.memory_space<vmem>>, %arg4: memref<256x256xbf16, #tpu.memory_space<vmem>>, %arg5: memref<2x256xf32, #tpu.memory_space<vmem>>, %arg6: memref<64x256xf32, #tpu.memory_space<vmem>>) attributes {dimension_semantics = [#tpu.dimension_semantics<parallel>, #tpu.dimension_semantics<parallel>, #tpu.dimension_semantics<arbitrary>], iteration_bounds = array<i64: 1, 1, 7>, scalar_prefetch = 0 : i64, scratch_operands = 0 : i64, tpu.core_type = #tpu.core_type<tc>, window_params = [{transform_indices = @transform_0, window_bounds = array<i64: 64, 256>}, {transform_indices = @transform_1, window_bounds = array<i64: 256, 256>}, {transform_indices = @transform_2, window_bounds = array<i64: 2, 256>}, {transform_indices = @transform_3, window_bounds = array<i64: 64, 256>}]} {
    %c0_i32 = arith.constant 0 : i32
    %0 = arith.cmpi eq, %arg2, %c0_i32 : i32
    %1 = arith.extui %0 : i1 to i32
    %c0_i32_0 = arith.constant 0 : i32
    %2 = arith.cmpi ne, %1, %c0_i32_0 : i32
    scf.if %2 {
      %cst_9 = arith.constant 0.000000e+00 : f32
      %12 = vector.broadcast %cst_9 : f32 to vector<64x256xf32>
      %c0_10 = arith.constant 0 : index
      %c0_11 = arith.constant 0 : index
      %13 = vector.load %arg6[%c0_10, %c0_11] : memref<64x256xf32, #tpu.memory_space<vmem>>, vector<64x256xf32>
      tpu.vector_store %arg6[%c0_10, %c0_11], %12 {strides = array<i32>} : memref<64x256xf32, #tpu.memory_space<vmem>>, vector<64x256xf32>,
    } else {
    }
    %c0 = arith.constant 0 : index
    %c0_1 = arith.constant 0 : index
    %3 = vector.load %arg6[%c0, %c0_1] : memref<64x256xf32, #tpu.memory_space<vmem>>, vector<64x256xf32>
    %c0_2 = arith.constant 0 : index
    %c0_3 = arith.constant 0 : index
    %4 = vector.load %arg3[%c0_2, %c0_3] : memref<64x256xbf16, #tpu.memory_space<vmem>>, vector<64x256xbf16>
    %c0_4 = arith.constant 0 : index
    %c0_5 = arith.constant 0 : index
    %5 = vector.load %arg4[%c0_4, %c0_5] : memref<256x256xbf16, #tpu.memory_space<vmem>>, vector<256x256xbf16>
    %cst = arith.constant dense<0.000000e+00> : vector<64x256xf32>
    %6 = tpu.matmul %4, %5, %cst {dimension_numbers = #tpu.dot_dimension_numbers<[1], [0], [0], [1], [0, 0, 1, 1], [], []>} : vector<64x256xbf16>, vector<256x256xbf16>, vector<64x256xf32> -> vector<64x256xf32>
    %7 = arith.addf %3, %6 : vector<64x256xf32>
    %c0_6 = arith.constant 0 : index
    %c0_7 = arith.constant 0 : index
    %8 = vector.load %arg6[%c0_6, %c0_7] : memref<64x256xf32, #tpu.memory_space<vmem>>, vector<64x256xf32>
    tpu.vector_store %arg6[%c0_6, %c0_7], %7 {strides = array<i32>} : memref<64x256xf32, #tpu.memory_space<vmem>>, vector<64x256xf32>,
    %c6_i32 = arith.constant 6 : i32
    %9 = arith.cmpi eq, %arg2, %c6_i32 : i32
    %10 = arith.extui %9 : i1 to i32
    %c0_i32_8 = arith.constant 0 : i32
    %11 = arith.cmpi ne, %10, %c0_i32_8 : i32
    scf.if %11 {
      %c0_9 = arith.constant 0 : index
      %c0_10 = arith.constant 0 : index
      %12 = vector.load %arg5[%c0_9, %c0_10] : memref<2x256xf32, #tpu.memory_space<vmem>>, vector<2x256xf32>
      %c0_11 = arith.constant 0 : index
      %c0_12 = arith.constant 0 : index
      %13 = vector.load %arg6[%c0_11, %c0_12] : memref<64x256xf32, #tpu.memory_space<vmem>>, vector<64x256xf32>
      %14 = vector.extract_strided_slice %12 {offsets = [0, 0], sizes = [1, 256], strides = [1, 1]} : vector<2x256xf32> to vector<1x256xf32>
      %15 = vector.broadcast %14 : vector<1x256xf32> to vector<64x256xf32>
      %16 = arith.mulf %13, %15 : vector<64x256xf32>
      %17 = vector.extract_strided_slice %12 {offsets = [1, 0], sizes = [1, 256], strides = [1, 1]} : vector<2x256xf32> to vector<1x256xf32>
      %18 = vector.broadcast %17 : vector<1x256xf32> to vector<64x256xf32>
      %19 = arith.addf %16, %18 : vector<64x256xf32>
      %cst_13 = arith.constant 0.000000e+00 : f32
      %20 = vector.broadcast %cst_13 : f32 to vector<64x256xf32>
      %21 = arith.cmpf oge, %19, %20 : vector<64x256xf32>
      %cst_14 = arith.constant 0.00999999977 : f32
      %22 = vector.broadcast %cst_14 : f32 to vector<64x256xf32>
      %23 = arith.mulf %22, %19 : vector<64x256xf32>
      %24 = arith.select %21, %19, %23 : vector<64x256xi1>, vector<64x256xf32>
      %c0_15 = arith.constant 0 : index
      %c0_16 = arith.constant 0 : index
      %25 = vector.load %arg6[%c0_15, %c0_16] : memref<64x256xf32, #tpu.memory_space<vmem>>, vector<64x256xf32>
      tpu.vector_store %arg6[%c0_15, %c0_16], %24 {strides = array<i32>} : memref<64x256xf32, #tpu.memory_space<vmem>>, vector<64x256xf32>,
    } else {
    }
    return
  }
  func.func @transform_0(%arg0: i32, %arg1: i32, %arg2: i32) -> (i32, i32) {
    %c0_i32 = arith.constant 0 : i32
    return %arg0, %arg2 : i32, i32
  }
  func.func @transform_1(%arg0: i32, %arg1: i32, %arg2: i32) -> (i32, i32) {
    %c0_i32 = arith.constant 0 : i32
    return %arg2, %arg1 : i32, i32
  }
  func.func @transform_2(%arg0: i32, %arg1: i32, %arg2: i32) -> (i32, i32) {
    %c0_i32 = arith.constant 0 : i32
    %c0_i32_0 = arith.constant 0 : i32
    return %c0_i32, %arg1 : i32, i32
  }
  func.func @transform_3(%arg0: i32, %arg1: i32, %arg2: i32) -> (i32, i32) {
    %c0_i32 = arith.constant 0 : i32
    return %arg0, %arg1 : i32, i32
  }
}

module attributes {stable_mosaic.version = 11 : i64} {
  func.func @_gemm_kernel(%arg0: i32, %arg1: i32, %arg2: i32, %arg3: memref<64x256xbf16, #tpu.memory_space<vmem>>, %arg4: memref<256x256xbf16, #tpu.memory_space<vmem>>, %arg5: memref<2x256xf32, #tpu.memory_space<vmem>>, %arg6: memref<64x256xf32, #tpu.memory_space<vmem>>) attributes {dimension_semantics = [#tpu.dimension_semantics<parallel>, #tpu.dimension_semantics<parallel>, #tpu.dimension_semantics<arbitrary>], iteration_bounds = array<i64: 1, 1, 9>, scalar_prefetch = 0 : i64, scratch_operands = 0 : i64, tpu.core_type = #tpu.core_type<tc>, window_params = [{transform_indices = @transform_0, window_bounds = array<i64: 64, 256>}, {transform_indices = @transform_1, window_bounds = array<i64: 256, 256>}, {transform_indices = @transform_2, window_bounds = array<i64: 2, 256>}, {transform_indices = @transform_3, window_bounds = array<i64: 64, 256>}]} {
    %c0_i32 = arith.constant 0 : i32
    %0 = arith.cmpi eq, %arg2, %c0_i32 : i32
    %1 = arith.extui %0 : i1 to i32
    %c0_i32_0 = arith.constant 0 : i32
    %2 = arith.cmpi ne, %1, %c0_i32_0 : i32
    scf.if %2 {
      %cst_9 = arith.constant 0.000000e+00 : f32
      %12 = vector.broadcast %cst_9 : f32 to vector<64x256xf32>
      %c0_10 = arith.constant 0 : index
      %c0_11 = arith.constant 0 : index
      %13 = vector.load %arg6[%c0_10, %c0_11] : memref<64x256xf32, #tpu.memory_space<vmem>>, vector<64x256xf32>
      tpu.vector_store %arg6[%c0_10, %c0_11], %12 {strides = array<i32>} : memref<64x256xf32, #tpu.memory_space<vmem>>, vector<64x256xf32>,
    } else {
    }
    %c0 = arith.constant 0 : index
    %c0_1 = arith.constant 0 : index
    %3 = vector.load %arg6[%c0, %c0_1] : memref<64x256xf32, #tpu.memory_space<vmem>>, vector<64x256xf32>
    %c0_2 = arith.constant 0 : index
    %c0_3 = arith.constant 0 : index
    %4 = vector.load %arg3[%c0_2, %c0_3] : memref<64x256xbf16, #tpu.memory_space<vmem>>, vector<64x256xbf16>
    %c0_4 = arith.constant 0 : index
    %c0_5 = arith.constant 0 : index
    %5 = vector.load %arg4[%c0_4, %c0_5] : memref<256x256xbf16, #tpu.memory_space<vmem>>, vector<256x256xbf16>
    %cst = arith.constant dense<0.000000e+00> : vector<64x256xf32>
    %6 = tpu.matmul %4, %5, %cst {dimension_numbers = #tpu.dot_dimension_numbers<[1], [0], [0], [1], [0, 0, 1, 1], [], []>} : vector<64x256xbf16>, vector<256x256xbf16>, vector<64x256xf32> -> vector<64x256xf32>
    %7 = arith.addf %3, %6 : vector<64x256xf32>
    %c0_6 = arith.constant 0 : index
    %c0_7 = arith.constant 0 : index
    %8 = vector.load %arg6[%c0_6, %c0_7] : memref<64x256xf32, #tpu.memory_space<vmem>>, vector<64x256xf32>
    tpu.vector_store %arg6[%c0_6, %c0_7], %7 {strides = array<i32>} : memref<64x256xf32, #tpu.memory_space<vmem>>, vector<64x256xf32>,
    %c8_i32 = arith.constant 8 : i32
    %9 = arith.cmpi eq, %arg2, %c8_i32 : i32
    %10 = arith.extui %9 : i1 to i32
    %c0_i32_8 = arith.constant 0 : i32
    %11 = arith.cmpi ne, %10, %c0_i32_8 : i32
    scf.if %11 {
      %c0_9 = arith.constant 0 : index
      %c0_10 = arith.constant 0 : index
      %12 = vector.load %arg5[%c0_9, %c0_10] : memref<2x256xf32, #tpu.memory_space<vmem>>, vector<2x256xf32>
      %c0_11 = arith.constant 0 : index
      %c0_12 = arith.constant 0 : index
      %13 = vector.load %arg6[%c0_11, %c0_12] : memref<64x256xf32, #tpu.memory_space<vmem>>, vector<64x256xf32>
      %14 = vector.extract_strided_slice %12 {offsets = [0, 0], sizes = [1, 256], strides = [1, 1]} : vector<2x256xf32> to vector<1x256xf32>
      %15 = vector.broadcast %14 : vector<1x256xf32> to vector<64x256xf32>
      %16 = arith.mulf %13, %15 : vector<64x256xf32>
      %17 = vector.extract_strided_slice %12 {offsets = [1, 0], sizes = [1, 256], strides = [1, 1]} : vector<2x256xf32> to vector<1x256xf32>
      %18 = vector.broadcast %17 : vector<1x256xf32> to vector<64x256xf32>
      %19 = arith.addf %16, %18 : vector<64x256xf32>
      %c0_13 = arith.constant 0 : index
      %c0_14 = arith.constant 0 : index
      %20 = vector.load %arg6[%c0_13, %c0_14] : memref<64x256xf32, #tpu.memory_space<vmem>>, vector<64x256xf32>
      tpu.vector_store %arg6[%c0_13, %c0_14], %19 {strides = array<i32>} : memref<64x256xf32, #tpu.memory_space<vmem>>, vector<64x256xf32>,
    } else {
    }
    return
  }
  func.func @transform_0(%arg0: i32, %arg1: i32, %arg2: i32) -> (i32, i32) {
    %c0_i32 = arith.constant 0 : i32
    return %arg0, %arg2 : i32, i32
  }
  func.func @transform_1(%arg0: i32, %arg1: i32, %arg2: i32) -> (i32, i32) {
    %c0_i32 = arith.constant 0 : i32
    return %arg2, %arg1 : i32, i32
  }
  func.func @transform_2(%arg0: i32, %arg1: i32, %arg2: i32) -> (i32, i32) {
    %c0_i32 = arith.constant 0 : i32
    %c0_i32_0 = arith.constant 0 : i32
    return %c0_i32, %arg1 : i32, i32
  }
  func.func @transform_3(%arg0: i32, %arg1: i32, %arg2: i32) -> (i32, i32) {
    %c0_i32 = arith.constant 0 : i32
    return %arg0, %arg1 : i32, i32
  }
}

module attributes {stable_mosaic.version = 11 : i64} {
  func.func @_gdn_kernel(%arg0: i32, %arg1: memref<64x256xf32, #tpu.memory_space<vmem>>, %arg2: memref<256x256xf32, #tpu.memory_space<vmem>>, %arg3: memref<1x256xf32, #tpu.memory_space<vmem>>, %arg4: memref<64x256xf32, #tpu.memory_space<vmem>>) attributes {dimension_semantics = [#tpu.dimension_semantics<parallel>], iteration_bounds = array<i64: 1>, scalar_prefetch = 0 : i64, scratch_operands = 0 : i64, tpu.core_type = #tpu.core_type<tc>, window_params = [{transform_indices = @transform_0, window_bounds = array<i64: 64, 256>}, {pipeline_mode = #tpu.pipeline_mode<synchronous>, transform_indices = @transform_1, window_bounds = array<i64: 256, 256>}, {pipeline_mode = #tpu.pipeline_mode<synchronous>, transform_indices = @transform_2, window_bounds = array<i64: 1, 256>}, {transform_indices = @transform_3, window_bounds = array<i64: 64, 256>}]} {
    %c0 = arith.constant 0 : index
    %c0_0 = arith.constant 0 : index
    %0 = vector.load %arg1[%c0, %c0_0] : memref<64x256xf32, #tpu.memory_space<vmem>>, vector<64x256xf32>
    %1 = arith.mulf %0, %0 : vector<64x256xf32>
    %c0_1 = arith.constant 0 : index
    %c0_2 = arith.constant 0 : index
    %2 = vector.load %arg2[%c0_1, %c0_2] : memref<256x256xf32, #tpu.memory_space<vmem>>, vector<256x256xf32>
    %cst = arith.constant dense<0.000000e+00> : vector<64x256xf32>
    %3 = tpu.matmul %1, %2, %cst {dimension_numbers = #tpu.dot_dimension_numbers<[1], [0], [0], [1], [0, 0, 1, 1], [], []>} : vector<64x256xf32>, vector<256x256xf32>, vector<64x256xf32> -> vector<64x256xf32>
    %c0_3 = arith.constant 0 : index
    %c0_4 = arith.constant 0 : index
    %4 = vector.load %arg3[%c0_3, %c0_4] : memref<1x256xf32, #tpu.memory_space<vmem>>, vector<1x256xf32>
    %5 = vector.broadcast %4 : vector<1x256xf32> to vector<64x256xf32>
    %6 = arith.addf %3, %5 : vector<64x256xf32>
    %7 = math.rsqrt %6 : vector<64x256xf32>
    %8 = arith.mulf %0, %7 : vector<64x256xf32>
    %c0_5 = arith.constant 0 : index
    %c0_6 = arith.constant 0 : index
    %9 = vector.load %arg4[%c0_5, %c0_6] : memref<64x256xf32, #tpu.memory_space<vmem>>, vector<64x256xf32>
    tpu.vector_store %arg4[%c0_5, %c0_6], %8 {strides = array<i32>} : memref<64x256xf32, #tpu.memory_space<vmem>>, vector<64x256xf32>,
    return
  }
  func.func @transform_0(%arg0: i32) -> (i32, i32) {
    %c0_i32 = arith.constant 0 : i32
    %c0_i32_0 = arith.constant 0 : i32
    return %arg0, %c0_i32 : i32, i32
  }
  func.func @transform_1(%arg0: i32) -> (i32, i32) {
    %c0_i32 = arith.constant 0 : i32
    %c0_i32_0 = arith.constant 0 : i32
    %c0_i32_1 = arith.constant 0 : i32
    return %c0_i32, %c0_i32_0 : i32, i32
  }
  func.func @transform_2(%arg0: i32) -> (i32, i32) {
    %c0_i32 = arith.constant 0 : i32
    %c0_i32_0 = arith.constant 0 : i32
    %c0_i32_1 = arith.constant 0 : i32
    return %c0_i32, %c0_i32_0 : i32, i32
  }
  func.func @transform_3(%arg0: i32) -> (i32, i32) {
    %c0_i32 = arith.constant 0 : i32
    %c0_i32_0 = arith.constant 0 : i32
    return %arg0, %c0_i32 : i32, i32
  }
}

module attributes {stable_mosaic.version = 11 : i64} {
  func.func @_gemm_kernel(%arg0: i32, %arg1: i32, %arg2: i32, %arg3: memref<64x256xbf16, #tpu.memory_space<vmem>>, %arg4: memref<256x256xbf16, #tpu.memory_space<vmem>>, %arg5: memref<2x256xf32, #tpu.memory_space<vmem>>, %arg6: memref<64x256xf32, #tpu.memory_space<vmem>>) attributes {dimension_semantics = [#tpu.dimension_semantics<parallel>, #tpu.dimension_semantics<parallel>, #tpu.dimension_semantics<arbitrary>], iteration_bounds = array<i64: 1, 1, 1>, scalar_prefetch = 0 : i64, scratch_operands = 0 : i64, tpu.core_type = #tpu.core_type<tc>, window_params = [{transform_indices = @transform_0, window_bounds = array<i64: 64, 256>}, {transform_indices = @transform_1, window_bounds = array<i64: 256, 256>}, {transform_indices = @transform_2, window_bounds = array<i64: 2, 256>}, {transform_indices = @transform_3, window_bounds = array<i64: 64, 256>}]} {
    %c0_i32 = arith.constant 0 : i32
    %0 = arith.cmpi eq, %arg2, %c0_i32 : i32
    %1 = arith.extui %0 : i1 to i32
    %c0_i32_0 = arith.constant 0 : i32
    %2 = arith.cmpi ne, %1, %c0_i32_0 : i32
    scf.if %2 {
      %cst_10 = arith.constant 0.000000e+00 : f32
      %12 = vector.broadcast %cst_10 : f32 to vector<64x256xf32>
      %c0_11 = arith.constant 0 : index
      %c0_12 = arith.constant 0 : index
      %13 = vector.load %arg6[%c0_11, %c0_12] : memref<64x256xf32, #tpu.memory_space<vmem>>, vector<64x256xf32>
      tpu.vector_store %arg6[%c0_11, %c0_12], %12 {strides = array<i32>} : memref<64x256xf32, #tpu.memory_space<vmem>>, vector<64x256xf32>,
    } else {
    }
    %c0 = arith.constant 0 : index
    %c0_1 = arith.constant 0 : index
    %3 = vector.load %arg6[%c0, %c0_1] : memref<64x256xf32, #tpu.memory_space<vmem>>, vector<64x256xf32>
    %c0_2 = arith.constant 0 : index
    %c0_3 = arith.constant 0 : index
    %4 = vector.load %arg3[%c0_2, %c0_3] : memref<64x256xbf16, #tpu.memory_space<vmem>>, vector<64x256xbf16>
    %c0_4 = arith.constant 0 : index
    %c0_5 = arith.constant 0 : index
    %5 = vector.load %arg4[%c0_4, %c0_5] : memref<256x256xbf16, #tpu.memory_space<vmem>>, vector<256x256xbf16>
    %cst = arith.constant dense<0.000000e+00> : vector<64x256xf32>
    %6 = tpu.matmul %4, %5, %cst {dimension_numbers = #tpu.dot_dimension_numbers<[1], [0], [0], [1], [0, 0, 1, 1], [], []>} : vector<64x256xbf16>, vector<256x256xbf16>, vector<64x256xf32> -> vector<64x256xf32>
    %7 = arith.addf %3, %6 : vector<64x256xf32>
    %c0_6 = arith.constant 0 : index
    %c0_7 = arith.constant 0 : index
    %8 = vector.load %arg6[%c0_6, %c0_7] : memref<64x256xf32, #tpu.memory_space<vmem>>, vector<64x256xf32>
    tpu.vector_store %arg6[%c0_6, %c0_7], %7 {strides = array<i32>} : memref<64x256xf32, #tpu.memory_space<vmem>>, vector<64x256xf32>,
    %c0_i32_8 = arith.constant 0 : i32
    %9 = arith.cmpi eq, %arg2, %c0_i32_8 : i32
    %10 = arith.extui %9 : i1 to i32
    %c0_i32_9 = arith.constant 0 : i32
    %11 = arith.cmpi ne, %10, %c0_i32_9 : i32
    scf.if %11 {
      %c0_10 = arith.constant 0 : index
      %c0_11 = arith.constant 0 : index
      %12 = vector.load %arg5[%c0_10, %c0_11] : memref<2x256xf32, #tpu.memory_space<vmem>>, vector<2x256xf32>
      %c0_12 = arith.constant 0 : index
      %c0_13 = arith.constant 0 : index
      %13 = vector.load %arg6[%c0_12, %c0_13] : memref<64x256xf32, #tpu.memory_space<vmem>>, vector<64x256xf32>
      %14 = vector.extract_strided_slice %12 {offsets = [0, 0], sizes = [1, 256], strides = [1, 1]} : vector<2x256xf32> to vector<1x256xf32>
      %15 = vector.broadcast %14 : vector<1x256xf32> to vector<64x256xf32>
      %16 = arith.mulf %13, %15 : vector<64x256xf32>
      %17 = vector.extract_strided_slice %12 {offsets = [1, 0], sizes = [1, 256], strides = [1, 1]} : vector<2x256xf32> to vector<1x256xf32>
      %18 = vector.broadcast %17 : vector<1x256xf32> to vector<64x256xf32>
      %19 = arith.addf %16, %18 : vector<64x256xf32>
      %c0_14 = arith.constant 0 : index
      %c0_15 = arith.constant 0 : index
      %20 = vector.load %arg6[%c0_14, %c0_15] : memref<64x256xf32, #tpu.memory_space<vmem>>, vector<64x256xf32>
      tpu.vector_store %arg6[%c0_14, %c0_15], %19 {strides = array<i32>} : memref<64x256xf32, #tpu.memory_space<vmem>>, vector<64x256xf32>,
    } else {
    }
    return
  }
  func.func @transform_0(%arg0: i32, %arg1: i32, %arg2: i32) -> (i32, i32) {
    %c0_i32 = arith.constant 0 : i32
    return %arg0, %arg2 : i32, i32
  }
  func.func @transform_1(%arg0: i32, %arg1: i32, %arg2: i32) -> (i32, i32) {
    %c0_i32 = arith.constant 0 : i32
    return %arg2, %arg1 : i32, i32
  }
  func.func @transform_2(%arg0: i32, %arg1: i32, %arg2: i32) -> (i32, i32) {
    %c0_i32 = arith.constant 0 : i32
    %c0_i32_0 = arith.constant 0 : i32
    return %c0_i32, %arg1 : i32, i32
  }
  func.func @transform_3(%arg0: i32, %arg1: i32, %arg2: i32) -> (i32, i32) {
    %c0_i32 = arith.constant 0 : i32
    return %arg0, %arg1 : i32, i32
  }
}

module attributes {stable_mosaic.version = 11 : i64} {
  func.func @_gemm_kernel(%arg0: i32, %arg1: i32, %arg2: i32, %arg3: memref<64x256xbf16, #tpu.memory_space<vmem>>, %arg4: memref<256x256xbf16, #tpu.memory_space<vmem>>, %arg5: memref<2x256xf32, #tpu.memory_space<vmem>>, %arg6: memref<64x256xf32, #tpu.memory_space<vmem>>) attributes {dimension_semantics = [#tpu.dimension_semantics<parallel>, #tpu.dimension_semantics<parallel>, #tpu.dimension_semantics<arbitrary>], iteration_bounds = array<i64: 1, 1, 9>, scalar_prefetch = 0 : i64, scratch_operands = 0 : i64, tpu.core_type = #tpu.core_type<tc>, window_params = [{transform_indices = @transform_0, window_bounds = array<i64: 64, 256>}, {transform_indices = @transform_1, window_bounds = array<i64: 256, 256>}, {transform_indices = @transform_2, window_bounds = array<i64: 2, 256>}, {transform_indices = @transform_3, window_bounds = array<i64: 64, 256>}]} {
    %c0_i32 = arith.constant 0 : i32
    %0 = arith.cmpi eq, %arg2, %c0_i32 : i32
    %1 = arith.extui %0 : i1 to i32
    %c0_i32_0 = arith.constant 0 : i32
    %2 = arith.cmpi ne, %1, %c0_i32_0 : i32
    scf.if %2 {
      %cst_9 = arith.constant 0.000000e+00 : f32
      %12 = vector.broadcast %cst_9 : f32 to vector<64x256xf32>
      %c0_10 = arith.constant 0 : index
      %c0_11 = arith.constant 0 : index
      %13 = vector.load %arg6[%c0_10, %c0_11] : memref<64x256xf32, #tpu.memory_space<vmem>>, vector<64x256xf32>
      tpu.vector_store %arg6[%c0_10, %c0_11], %12 {strides = array<i32>} : memref<64x256xf32, #tpu.memory_space<vmem>>, vector<64x256xf32>,
    } else {
    }
    %c0 = arith.constant 0 : index
    %c0_1 = arith.constant 0 : index
    %3 = vector.load %arg6[%c0, %c0_1] : memref<64x256xf32, #tpu.memory_space<vmem>>, vector<64x256xf32>
    %c0_2 = arith.constant 0 : index
    %c0_3 = arith.constant 0 : index
    %4 = vector.load %arg3[%c0_2, %c0_3] : memref<64x256xbf16, #tpu.memory_space<vmem>>, vector<64x256xbf16>
    %c0_4 = arith.constant 0 : index
    %c0_5 = arith.constant 0 : index
    %5 = vector.load %arg4[%c0_4, %c0_5] : memref<256x256xbf16, #tpu.memory_space<vmem>>, vector<256x256xbf16>
    %cst = arith.constant dense<0.000000e+00> : vector<64x256xf32>
    %6 = tpu.matmul %4, %5, %cst {dimension_numbers = #tpu.dot_dimension_numbers<[1], [0], [0], [1], [0, 0, 1, 1], [], []>} : vector<64x256xbf16>, vector<256x256xbf16>, vector<64x256xf32> -> vector<64x256xf32>
    %7 = arith.addf %3, %6 : vector<64x256xf32>
    %c0_6 = arith.constant 0 : index
    %c0_7 = arith.constant 0 : index
    %8 = vector.load %arg6[%c0_6, %c0_7] : memref<64x256xf32, #tpu.memory_space<vmem>>, vector<64x256xf32>
    tpu.vector_store %arg6[%c0_6, %c0_7], %7 {strides = array<i32>} : memref<64x256xf32, #tpu.memory_space<vmem>>, vector<64x256xf32>,
    %c8_i32 = arith.constant 8 : i32
    %9 = arith.cmpi eq, %arg2, %c8_i32 : i32
    %10 = arith.extui %9 : i1 to i32
    %c0_i32_8 = arith.constant 0 : i32
    %11 = arith.cmpi ne, %10, %c0_i32_8 : i32
    scf.if %11 {
      %c0_9 = arith.constant 0 : index
      %c0_10 = arith.constant 0 : index
      %12 = vector.load %arg5[%c0_9, %c0_10] : memref<2x256xf32, #tpu.memory_space<vmem>>, vector<2x256xf32>
      %c0_11 = arith.constant 0 : index
      %c0_12 = arith.constant 0 : index
      %13 = vector.load %arg6[%c0_11, %c0_12] : memref<64x256xf32, #tpu.memory_space<vmem>>, vector<64x256xf32>
      %14 = vector.extract_strided_slice %12 {offsets = [0, 0], sizes = [1, 256], strides = [1, 1]} : vector<2x256xf32> to vector<1x256xf32>
      %15 = vector.broadcast %14 : vector<1x256xf32> to vector<64x256xf32>
      %16 = arith.mulf %13, %15 : vector<64x256xf32>
      %17 = vector.extract_strided_slice %12 {offsets = [1, 0], sizes = [1, 256], strides = [1, 1]} : vector<2x256xf32> to vector<1x256xf32>
      %18 = vector.broadcast %17 : vector<1x256xf32> to vector<64x256xf32>
      %19 = arith.addf %16, %18 : vector<64x256xf32>
      %cst_13 = arith.constant 0.000000e+00 : f32
      %20 = vector.broadcast %cst_13 : f32 to vector<64x256xf32>
      %21 = arith.cmpf oge, %19, %20 : vector<64x256xf32>
      %cst_14 = arith.constant 0.00999999977 : f32
      %22 = vector.broadcast %cst_14 : f32 to vector<64x256xf32>
      %23 = arith.mulf %22, %19 : vector<64x256xf32>
      %24 = arith.select %21, %19, %23 : vector<64x256xi1>, vector<64x256xf32>
      %c0_15 = arith.constant 0 : index
      %c0_16 = arith.constant 0 : index
      %25 = vector.load %arg6[%c0_15, %c0_16] : memref<64x256xf32, #tpu.memory_space<vmem>>, vector<64x256xf32>
      tpu.vector_store %arg6[%c0_15, %c0_16], %24 {strides = array<i32>} : memref<64x256xf32, #tpu.memory_space<vmem>>, vector<64x256xf32>,
    } else {
    }
    return
  }
  func.func @transform_0(%arg0: i32, %arg1: i32, %arg2: i32) -> (i32, i32) {
    %c0_i32 = arith.constant 0 : i32
    return %arg0, %arg2 : i32, i32
  }
  func.func @transform_1(%arg0: i32, %arg1: i32, %arg2: i32) -> (i32, i32) {
    %c0_i32 = arith.constant 0 : i32
    return %arg2, %arg1 : i32, i32
  }
  func.func @transform_2(%arg0: i32, %arg1: i32, %arg2: i32) -> (i32, i32) {
    %c0_i32 = arith.constant 0 : i32
    %c0_i32_0 = arith.constant 0 : i32
    return %c0_i32, %arg1 : i32, i32
  }
  func.func @transform_3(%arg0: i32, %arg1: i32, %arg2: i32) -> (i32, i32) {
    %c0_i32 = arith.constant 0 : i32
    return %arg0, %arg1 : i32, i32
  }
}

module attributes {stable_mosaic.version = 11 : i64} {
  func.func @_gemm_kernel(%arg0: i32, %arg1: i32, %arg2: i32, %arg3: memref<16x256xbf16, #tpu.memory_space<vmem>>, %arg4: memref<256x256xbf16, #tpu.memory_space<vmem>>, %arg5: memref<2x256xf32, #tpu.memory_space<vmem>>, %arg6: memref<16x256xf32, #tpu.memory_space<vmem>>) attributes {dimension_semantics = [#tpu.dimension_semantics<parallel>, #tpu.dimension_semantics<parallel>, #tpu.dimension_semantics<arbitrary>], iteration_bounds = array<i64: 1, 2, 9>, scalar_prefetch = 0 : i64, scratch_operands = 0 : i64, tpu.core_type = #tpu.core_type<tc>, window_params = [{transform_indices = @transform_0, window_bounds = array<i64: 16, 256>}, {transform_indices = @transform_1, window_bounds = array<i64: 256, 256>}, {transform_indices = @transform_2, window_bounds = array<i64: 2, 256>}, {transform_indices = @transform_3, window_bounds = array<i64: 16, 256>}]} {
    %c0_i32 = arith.constant 0 : i32
    %0 = arith.cmpi eq, %arg2, %c0_i32 : i32
    %1 = arith.extui %0 : i1 to i32
    %c0_i32_0 = arith.constant 0 : i32
    %2 = arith.cmpi ne, %1, %c0_i32_0 : i32
    scf.if %2 {
      %cst_9 = arith.constant 0.000000e+00 : f32
      %12 = vector.broadcast %cst_9 : f32 to vector<16x256xf32>
      %c0_10 = arith.constant 0 : index
      %c0_11 = arith.constant 0 : index
      %13 = vector.load %arg6[%c0_10, %c0_11] : memref<16x256xf32, #tpu.memory_space<vmem>>, vector<16x256xf32>
      tpu.vector_store %arg6[%c0_10, %c0_11], %12 {strides = array<i32>} : memref<16x256xf32, #tpu.memory_space<vmem>>, vector<16x256xf32>,
    } else {
    }
    %c0 = arith.constant 0 : index
    %c0_1 = arith.constant 0 : index
    %3 = vector.load %arg6[%c0, %c0_1] : memref<16x256xf32, #tpu.memory_space<vmem>>, vector<16x256xf32>
    %c0_2 = arith.constant 0 : index
    %c0_3 = arith.constant 0 : index
    %4 = vector.load %arg3[%c0_2, %c0_3] : memref<16x256xbf16, #tpu.memory_space<vmem>>, vector<16x256xbf16>
    %c0_4 = arith.constant 0 : index
    %c0_5 = arith.constant 0 : index
    %5 = vector.load %arg4[%c0_4, %c0_5] : memref<256x256xbf16, #tpu.memory_space<vmem>>, vector<256x256xbf16>
    %cst = arith.constant dense<0.000000e+00> : vector<16x256xf32>
    %6 = tpu.matmul %4, %5, %cst {dimension_numbers = #tpu.dot_dimension_numbers<[1], [0], [0], [1], [0, 0, 1, 1], [], []>} : vector<16x256xbf16>, vector<256x256xbf16>, vector<16x256xf32> -> vector<16x256xf32>
    %7 = arith.addf %3, %6 : vector<16x256xf32>
    %c0_6 = arith.constant 0 : index
    %c0_7 = arith.constant 0 : index
    %8 = vector.load %arg6[%c0_6, %c0_7] : memref<16x256xf32, #tpu.memory_space<vmem>>, vector<16x256xf32>
    tpu.vector_store %arg6[%c0_6, %c0_7], %7 {strides = array<i32>} : memref<16x256xf32, #tpu.memory_space<vmem>>, vector<16x256xf32>,
    %c8_i32 = arith.constant 8 : i32
    %9 = arith.cmpi eq, %arg2, %c8_i32 : i32
    %10 = arith.extui %9 : i1 to i32
    %c0_i32_8 = arith.constant 0 : i32
    %11 = arith.cmpi ne, %10, %c0_i32_8 : i32
    scf.if %11 {
      %c0_9 = arith.constant 0 : index
      %c0_10 = arith.constant 0 : index
      %12 = vector.load %arg5[%c0_9, %c0_10] : memref<2x256xf32, #tpu.memory_space<vmem>>, vector<2x256xf32>
      %c0_11 = arith.constant 0 : index
      %c0_12 = arith.constant 0 : index
      %13 = vector.load %arg6[%c0_11, %c0_12] : memref<16x256xf32, #tpu.memory_space<vmem>>, vector<16x256xf32>
      %14 = vector.extract_strided_slice %12 {offsets = [0, 0], sizes = [1, 256], strides = [1, 1]} : vector<2x256xf32> to vector<1x256xf32>
      %15 = vector.broadcast %14 : vector<1x256xf32> to vector<16x256xf32>
      %16 = arith.mulf %13, %15 : vector<16x256xf32>
      %17 = vector.extract_strided_slice %12 {offsets = [1, 0], sizes = [1, 256], strides = [1, 1]} : vector<2x256xf32> to vector<1x256xf32>
      %18 = vector.broadcast %17 : vector<1x256xf32> to vector<16x256xf32>
      %19 = arith.addf %16, %18 : vector<16x256xf32>
      %cst_13 = arith.constant 0.000000e+00 : f32
      %20 = vector.broadcast %cst_13 : f32 to vector<16x256xf32>
      %21 = arith.maximumf %19, %20 : vector<16x256xf32>
      %c0_14 = arith.constant 0 : index
      %c0_15 = arith.constant 0 : index
      %22 = vector.load %arg6[%c0_14, %c0_15] : memref<16x256xf32, #tpu.memory_space<vmem>>, vector<16x256xf32>
      tpu.vector_store %arg6[%c0_14, %c0_15], %21 {strides = array<i32>} : memref<16x256xf32, #tpu.memory_space<vmem>>, vector<16x256xf32>,
    } else {
    }
    return
  }
  func.func @transform_0(%arg0: i32, %arg1: i32, %arg2: i32) -> (i32, i32) {
    %c0_i32 = arith.constant 0 : i32
    return %arg0, %arg2 : i32, i32
  }
  func.func @transform_1(%arg0: i32, %arg1: i32, %arg2: i32) -> (i32, i32) {
    %c0_i32 = arith.constant 0 : i32
    return %arg2, %arg1 : i32, i32
  }
  func.func @transform_2(%arg0: i32, %arg1: i32, %arg2: i32) -> (i32, i32) {
    %c0_i32 = arith.constant 0 : i32
    %c0_i32_0 = arith.constant 0 : i32
    return %c0_i32, %arg1 : i32, i32
  }
  func.func @transform_3(%arg0: i32, %arg1: i32, %arg2: i32) -> (i32, i32) {
    %c0_i32 = arith.constant 0 : i32
    return %arg0, %arg1 : i32, i32
  }
}

module attributes {stable_mosaic.version = 11 : i64} {
  func.func @_gemm_kernel(%arg0: i32, %arg1: i32, %arg2: i32, %arg3: memref<16x256xbf16, #tpu.memory_space<vmem>>, %arg4: memref<256x256xbf16, #tpu.memory_space<vmem>>, %arg5: memref<2x256xf32, #tpu.memory_space<vmem>>, %arg6: memref<16x256xf32, #tpu.memory_space<vmem>>) attributes {dimension_semantics = [#tpu.dimension_semantics<parallel>, #tpu.dimension_semantics<parallel>, #tpu.dimension_semantics<arbitrary>], iteration_bounds = array<i64: 1, 4, 18>, scalar_prefetch = 0 : i64, scratch_operands = 0 : i64, tpu.core_type = #tpu.core_type<tc>, window_params = [{transform_indices = @transform_0, window_bounds = array<i64: 16, 256>}, {transform_indices = @transform_1, window_bounds = array<i64: 256, 256>}, {transform_indices = @transform_2, window_bounds = array<i64: 2, 256>}, {transform_indices = @transform_3, window_bounds = array<i64: 16, 256>}]} {
    %c0_i32 = arith.constant 0 : i32
    %0 = arith.cmpi eq, %arg2, %c0_i32 : i32
    %1 = arith.extui %0 : i1 to i32
    %c0_i32_0 = arith.constant 0 : i32
    %2 = arith.cmpi ne, %1, %c0_i32_0 : i32
    scf.if %2 {
      %cst_9 = arith.constant 0.000000e+00 : f32
      %12 = vector.broadcast %cst_9 : f32 to vector<16x256xf32>
      %c0_10 = arith.constant 0 : index
      %c0_11 = arith.constant 0 : index
      %13 = vector.load %arg6[%c0_10, %c0_11] : memref<16x256xf32, #tpu.memory_space<vmem>>, vector<16x256xf32>
      tpu.vector_store %arg6[%c0_10, %c0_11], %12 {strides = array<i32>} : memref<16x256xf32, #tpu.memory_space<vmem>>, vector<16x256xf32>,
    } else {
    }
    %c0 = arith.constant 0 : index
    %c0_1 = arith.constant 0 : index
    %3 = vector.load %arg6[%c0, %c0_1] : memref<16x256xf32, #tpu.memory_space<vmem>>, vector<16x256xf32>
    %c0_2 = arith.constant 0 : index
    %c0_3 = arith.constant 0 : index
    %4 = vector.load %arg3[%c0_2, %c0_3] : memref<16x256xbf16, #tpu.memory_space<vmem>>, vector<16x256xbf16>
    %c0_4 = arith.constant 0 : index
    %c0_5 = arith.constant 0 : index
    %5 = vector.load %arg4[%c0_4, %c0_5] : memref<256x256xbf16, #tpu.memory_space<vmem>>, vector<256x256xbf16>
    %cst = arith.constant dense<0.000000e+00> : vector<16x256xf32>
    %6 = tpu.matmul %4, %5, %cst {dimension_numbers = #tpu.dot_dimension_numbers<[1], [0], [0], [1], [0, 0, 1, 1], [], []>} : vector<16x256xbf16>, vector<256x256xbf16>, vector<16x256xf32> -> vector<16x256xf32>
    %7 = arith.addf %3, %6 : vector<16x256xf32>
    %c0_6 = arith.constant 0 : index
    %c0_7 = arith.constant 0 : index
    %8 = vector.load %arg6[%c0_6, %c0_7] : memref<16x256xf32, #tpu.memory_space<vmem>>, vector<16x256xf32>
    tpu.vector_store %arg6[%c0_6, %c0_7], %7 {strides = array<i32>} : memref<16x256xf32, #tpu.memory_space<vmem>>, vector<16x256xf32>,
    %c17_i32 = arith.constant 17 : i32
    %9 = arith.cmpi eq, %arg2, %c17_i32 : i32
    %10 = arith.extui %9 : i1 to i32
    %c0_i32_8 = arith.constant 0 : i32
    %11 = arith.cmpi ne, %10, %c0_i32_8 : i32
    scf.if %11 {
      %c0_9 = arith.constant 0 : index
      %c0_10 = arith.constant 0 : index
      %12 = vector.load %arg5[%c0_9, %c0_10] : memref<2x256xf32, #tpu.memory_space<vmem>>, vector<2x256xf32>
      %c0_11 = arith.constant 0 : index
      %c0_12 = arith.constant 0 : index
      %13 = vector.load %arg6[%c0_11, %c0_12] : memref<16x256xf32, #tpu.memory_space<vmem>>, vector<16x256xf32>
      %14 = vector.extract_strided_slice %12 {offsets = [0, 0], sizes = [1, 256], strides = [1, 1]} : vector<2x256xf32> to vector<1x256xf32>
      %15 = vector.broadcast %14 : vector<1x256xf32> to vector<16x256xf32>
      %16 = arith.mulf %13, %15 : vector<16x256xf32>
      %17 = vector.extract_strided_slice %12 {offsets = [1, 0], sizes = [1, 256], strides = [1, 1]} : vector<2x256xf32> to vector<1x256xf32>
      %18 = vector.broadcast %17 : vector<1x256xf32> to vector<16x256xf32>
      %19 = arith.addf %16, %18 : vector<16x256xf32>
      %cst_13 = arith.constant 0.000000e+00 : f32
      %20 = vector.broadcast %cst_13 : f32 to vector<16x256xf32>
      %21 = arith.maximumf %19, %20 : vector<16x256xf32>
      %c0_14 = arith.constant 0 : index
      %c0_15 = arith.constant 0 : index
      %22 = vector.load %arg6[%c0_14, %c0_15] : memref<16x256xf32, #tpu.memory_space<vmem>>, vector<16x256xf32>
      tpu.vector_store %arg6[%c0_14, %c0_15], %21 {strides = array<i32>} : memref<16x256xf32, #tpu.memory_space<vmem>>, vector<16x256xf32>,
    } else {
    }
    return
  }
  func.func @transform_0(%arg0: i32, %arg1: i32, %arg2: i32) -> (i32, i32) {
    %c0_i32 = arith.constant 0 : i32
    return %arg0, %arg2 : i32, i32
  }
  func.func @transform_1(%arg0: i32, %arg1: i32, %arg2: i32) -> (i32, i32) {
    %c0_i32 = arith.constant 0 : i32
    return %arg2, %arg1 : i32, i32
  }
  func.func @transform_2(%arg0: i32, %arg1: i32, %arg2: i32) -> (i32, i32) {
    %c0_i32 = arith.constant 0 : i32
    %c0_i32_0 = arith.constant 0 : i32
    return %c0_i32, %arg1 : i32, i32
  }
  func.func @transform_3(%arg0: i32, %arg1: i32, %arg2: i32) -> (i32, i32) {
    %c0_i32 = arith.constant 0 : i32
    return %arg0, %arg1 : i32, i32
  }
}

module attributes {stable_mosaic.version = 11 : i64} {
  func.func @_gemm_kernel(%arg0: i32, %arg1: i32, %arg2: i32, %arg3: memref<16x256xbf16, #tpu.memory_space<vmem>>, %arg4: memref<256x256xbf16, #tpu.memory_space<vmem>>, %arg5: memref<2x256xf32, #tpu.memory_space<vmem>>, %arg6: memref<16x256xf32, #tpu.memory_space<vmem>>) attributes {dimension_semantics = [#tpu.dimension_semantics<parallel>, #tpu.dimension_semantics<parallel>, #tpu.dimension_semantics<arbitrary>], iteration_bounds = array<i64: 1, 2, 16>, scalar_prefetch = 0 : i64, scratch_operands = 0 : i64, tpu.core_type = #tpu.core_type<tc>, window_params = [{transform_indices = @transform_0, window_bounds = array<i64: 16, 256>}, {transform_indices = @transform_1, window_bounds = array<i64: 256, 256>}, {transform_indices = @transform_2, window_bounds = array<i64: 2, 256>}, {transform_indices = @transform_3, window_bounds = array<i64: 16, 256>}]} {
    %c0_i32 = arith.constant 0 : i32
    %0 = arith.cmpi eq, %arg2, %c0_i32 : i32
    %1 = arith.extui %0 : i1 to i32
    %c0_i32_0 = arith.constant 0 : i32
    %2 = arith.cmpi ne, %1, %c0_i32_0 : i32
    scf.if %2 {
      %cst_9 = arith.constant 0.000000e+00 : f32
      %12 = vector.broadcast %cst_9 : f32 to vector<16x256xf32>
      %c0_10 = arith.constant 0 : index
      %c0_11 = arith.constant 0 : index
      %13 = vector.load %arg6[%c0_10, %c0_11] : memref<16x256xf32, #tpu.memory_space<vmem>>, vector<16x256xf32>
      tpu.vector_store %arg6[%c0_10, %c0_11], %12 {strides = array<i32>} : memref<16x256xf32, #tpu.memory_space<vmem>>, vector<16x256xf32>,
    } else {
    }
    %c0 = arith.constant 0 : index
    %c0_1 = arith.constant 0 : index
    %3 = vector.load %arg6[%c0, %c0_1] : memref<16x256xf32, #tpu.memory_space<vmem>>, vector<16x256xf32>
    %c0_2 = arith.constant 0 : index
    %c0_3 = arith.constant 0 : index
    %4 = vector.load %arg3[%c0_2, %c0_3] : memref<16x256xbf16, #tpu.memory_space<vmem>>, vector<16x256xbf16>
    %c0_4 = arith.constant 0 : index
    %c0_5 = arith.constant 0 : index
    %5 = vector.load %arg4[%c0_4, %c0_5] : memref<256x256xbf16, #tpu.memory_space<vmem>>, vector<256x256xbf16>
    %cst = arith.constant dense<0.000000e+00> : vector<16x256xf32>
    %6 = tpu.matmul %4, %5, %cst {dimension_numbers = #tpu.dot_dimension_numbers<[1], [0], [0], [1], [0, 0, 1, 1], [], []>} : vector<16x256xbf16>, vector<256x256xbf16>, vector<16x256xf32> -> vector<16x256xf32>
    %7 = arith.addf %3, %6 : vector<16x256xf32>
    %c0_6 = arith.constant 0 : index
    %c0_7 = arith.constant 0 : index
    %8 = vector.load %arg6[%c0_6, %c0_7] : memref<16x256xf32, #tpu.memory_space<vmem>>, vector<16x256xf32>
    tpu.vector_store %arg6[%c0_6, %c0_7], %7 {strides = array<i32>} : memref<16x256xf32, #tpu.memory_space<vmem>>, vector<16x256xf32>,
    %c15_i32 = arith.constant 15 : i32
    %9 = arith.cmpi eq, %arg2, %c15_i32 : i32
    %10 = arith.extui %9 : i1 to i32
    %c0_i32_8 = arith.constant 0 : i32
    %11 = arith.cmpi ne, %10, %c0_i32_8 : i32
    scf.if %11 {
      %c0_9 = arith.constant 0 : index
      %c0_10 = arith.constant 0 : index
      %12 = vector.load %arg5[%c0_9, %c0_10] : memref<2x256xf32, #tpu.memory_space<vmem>>, vector<2x256xf32>
      %c0_11 = arith.constant 0 : index
      %c0_12 = arith.constant 0 : index
      %13 = vector.load %arg6[%c0_11, %c0_12] : memref<16x256xf32, #tpu.memory_space<vmem>>, vector<16x256xf32>
      %14 = vector.extract_strided_slice %12 {offsets = [0, 0], sizes = [1, 256], strides = [1, 1]} : vector<2x256xf32> to vector<1x256xf32>
      %15 = vector.broadcast %14 : vector<1x256xf32> to vector<16x256xf32>
      %16 = arith.mulf %13, %15 : vector<16x256xf32>
      %17 = vector.extract_strided_slice %12 {offsets = [1, 0], sizes = [1, 256], strides = [1, 1]} : vector<2x256xf32> to vector<1x256xf32>
      %18 = vector.broadcast %17 : vector<1x256xf32> to vector<16x256xf32>
      %19 = arith.addf %16, %18 : vector<16x256xf32>
      %cst_13 = arith.constant 0.000000e+00 : f32
      %20 = vector.broadcast %cst_13 : f32 to vector<16x256xf32>
      %21 = arith.maximumf %19, %20 : vector<16x256xf32>
      %c0_14 = arith.constant 0 : index
      %c0_15 = arith.constant 0 : index
      %22 = vector.load %arg6[%c0_14, %c0_15] : memref<16x256xf32, #tpu.memory_space<vmem>>, vector<16x256xf32>
      tpu.vector_store %arg6[%c0_14, %c0_15], %21 {strides = array<i32>} : memref<16x256xf32, #tpu.memory_space<vmem>>, vector<16x256xf32>,
    } else {
    }
    return
  }
  func.func @transform_0(%arg0: i32, %arg1: i32, %arg2: i32) -> (i32, i32) {
    %c0_i32 = arith.constant 0 : i32
    return %arg0, %arg2 : i32, i32
  }
  func.func @transform_1(%arg0: i32, %arg1: i32, %arg2: i32) -> (i32, i32) {
    %c0_i32 = arith.constant 0 : i32
    return %arg2, %arg1 : i32, i32
  }
  func.func @transform_2(%arg0: i32, %arg1: i32, %arg2: i32) -> (i32, i32) {
    %c0_i32 = arith.constant 0 : i32
    %c0_i32_0 = arith.constant 0 : i32
    return %c0_i32, %arg1 : i32, i32
  }
  func.func @transform_3(%arg0: i32, %arg1: i32, %arg2: i32) -> (i32, i32) {
    %c0_i32 = arith.constant 0 : i32
    return %arg0, %arg1 : i32, i32
  }
}

module attributes {stable_mosaic.version = 11 : i64} {
  func.func @_gemm_kernel(%arg0: i32, %arg1: i32, %arg2: i32, %arg3: memref<16x256xbf16, #tpu.memory_space<vmem>>, %arg4: memref<256x256xbf16, #tpu.memory_space<vmem>>, %arg5: memref<2x256xf32, #tpu.memory_space<vmem>>, %arg6: memref<16x256xf32, #tpu.memory_space<vmem>>) attributes {dimension_semantics = [#tpu.dimension_semantics<parallel>, #tpu.dimension_semantics<parallel>, #tpu.dimension_semantics<arbitrary>], iteration_bounds = array<i64: 1, 1, 8>, scalar_prefetch = 0 : i64, scratch_operands = 0 : i64, tpu.core_type = #tpu.core_type<tc>, window_params = [{transform_indices = @transform_0, window_bounds = array<i64: 16, 256>}, {transform_indices = @transform_1, window_bounds = array<i64: 256, 256>}, {transform_indices = @transform_2, window_bounds = array<i64: 2, 256>}, {transform_indices = @transform_3, window_bounds = array<i64: 16, 256>}]} {
    %c0_i32 = arith.constant 0 : i32
    %0 = arith.cmpi eq, %arg2, %c0_i32 : i32
    %1 = arith.extui %0 : i1 to i32
    %c0_i32_0 = arith.constant 0 : i32
    %2 = arith.cmpi ne, %1, %c0_i32_0 : i32
    scf.if %2 {
      %cst_9 = arith.constant 0.000000e+00 : f32
      %12 = vector.broadcast %cst_9 : f32 to vector<16x256xf32>
      %c0_10 = arith.constant 0 : index
      %c0_11 = arith.constant 0 : index
      %13 = vector.load %arg6[%c0_10, %c0_11] : memref<16x256xf32, #tpu.memory_space<vmem>>, vector<16x256xf32>
      tpu.vector_store %arg6[%c0_10, %c0_11], %12 {strides = array<i32>} : memref<16x256xf32, #tpu.memory_space<vmem>>, vector<16x256xf32>,
    } else {
    }
    %c0 = arith.constant 0 : index
    %c0_1 = arith.constant 0 : index
    %3 = vector.load %arg6[%c0, %c0_1] : memref<16x256xf32, #tpu.memory_space<vmem>>, vector<16x256xf32>
    %c0_2 = arith.constant 0 : index
    %c0_3 = arith.constant 0 : index
    %4 = vector.load %arg3[%c0_2, %c0_3] : memref<16x256xbf16, #tpu.memory_space<vmem>>, vector<16x256xbf16>
    %c0_4 = arith.constant 0 : index
    %c0_5 = arith.constant 0 : index
    %5 = vector.load %arg4[%c0_4, %c0_5] : memref<256x256xbf16, #tpu.memory_space<vmem>>, vector<256x256xbf16>
    %cst = arith.constant dense<0.000000e+00> : vector<16x256xf32>
    %6 = tpu.matmul %4, %5, %cst {dimension_numbers = #tpu.dot_dimension_numbers<[1], [0], [0], [1], [0, 0, 1, 1], [], []>} : vector<16x256xbf16>, vector<256x256xbf16>, vector<16x256xf32> -> vector<16x256xf32>
    %7 = arith.addf %3, %6 : vector<16x256xf32>
    %c0_6 = arith.constant 0 : index
    %c0_7 = arith.constant 0 : index
    %8 = vector.load %arg6[%c0_6, %c0_7] : memref<16x256xf32, #tpu.memory_space<vmem>>, vector<16x256xf32>
    tpu.vector_store %arg6[%c0_6, %c0_7], %7 {strides = array<i32>} : memref<16x256xf32, #tpu.memory_space<vmem>>, vector<16x256xf32>,
    %c7_i32 = arith.constant 7 : i32
    %9 = arith.cmpi eq, %arg2, %c7_i32 : i32
    %10 = arith.extui %9 : i1 to i32
    %c0_i32_8 = arith.constant 0 : i32
    %11 = arith.cmpi ne, %10, %c0_i32_8 : i32
    scf.if %11 {
      %c0_9 = arith.constant 0 : index
      %c0_10 = arith.constant 0 : index
      %12 = vector.load %arg5[%c0_9, %c0_10] : memref<2x256xf32, #tpu.memory_space<vmem>>, vector<2x256xf32>
      %c0_11 = arith.constant 0 : index
      %c0_12 = arith.constant 0 : index
      %13 = vector.load %arg6[%c0_11, %c0_12] : memref<16x256xf32, #tpu.memory_space<vmem>>, vector<16x256xf32>
      %14 = vector.extract_strided_slice %12 {offsets = [0, 0], sizes = [1, 256], strides = [1, 1]} : vector<2x256xf32> to vector<1x256xf32>
      %15 = vector.broadcast %14 : vector<1x256xf32> to vector<16x256xf32>
      %16 = arith.mulf %13, %15 : vector<16x256xf32>
      %17 = vector.extract_strided_slice %12 {offsets = [1, 0], sizes = [1, 256], strides = [1, 1]} : vector<2x256xf32> to vector<1x256xf32>
      %18 = vector.broadcast %17 : vector<1x256xf32> to vector<16x256xf32>
      %19 = arith.addf %16, %18 : vector<16x256xf32>
      %cst_13 = arith.constant 0.000000e+00 : f32
      %20 = vector.broadcast %cst_13 : f32 to vector<16x256xf32>
      %21 = arith.maximumf %19, %20 : vector<16x256xf32>
      %c0_14 = arith.constant 0 : index
      %c0_15 = arith.constant 0 : index
      %22 = vector.load %arg6[%c0_14, %c0_15] : memref<16x256xf32, #tpu.memory_space<vmem>>, vector<16x256xf32>
      tpu.vector_store %arg6[%c0_14, %c0_15], %21 {strides = array<i32>} : memref<16x256xf32, #tpu.memory_space<vmem>>, vector<16x256xf32>,
    } else {
    }
    return
  }
  func.func @transform_0(%arg0: i32, %arg1: i32, %arg2: i32) -> (i32, i32) {
    %c0_i32 = arith.constant 0 : i32
    return %arg0, %arg2 : i32, i32
  }
  func.func @transform_1(%arg0: i32, %arg1: i32, %arg2: i32) -> (i32, i32) {
    %c0_i32 = arith.constant 0 : i32
    return %arg2, %arg1 : i32, i32
  }
  func.func @transform_2(%arg0: i32, %arg1: i32, %arg2: i32) -> (i32, i32) {
    %c0_i32 = arith.constant 0 : i32
    %c0_i32_0 = arith.constant 0 : i32
    return %c0_i32, %arg1 : i32, i32
  }
  func.func @transform_3(%arg0: i32, %arg1: i32, %arg2: i32) -> (i32, i32) {
    %c0_i32 = arith.constant 0 : i32
    return %arg0, %arg1 : i32, i32
  }
}

module attributes {stable_mosaic.version = 11 : i64} {
  func.func @_gemm_kernel(%arg0: i32, %arg1: i32, %arg2: i32, %arg3: memref<64x256xbf16, #tpu.memory_space<vmem>>, %arg4: memref<256x256xbf16, #tpu.memory_space<vmem>>, %arg5: memref<2x256xf32, #tpu.memory_space<vmem>>, %arg6: memref<64x256xf32, #tpu.memory_space<vmem>>) attributes {dimension_semantics = [#tpu.dimension_semantics<parallel>, #tpu.dimension_semantics<parallel>, #tpu.dimension_semantics<arbitrary>], iteration_bounds = array<i64: 1, 1, 7>, scalar_prefetch = 0 : i64, scratch_operands = 0 : i64, tpu.core_type = #tpu.core_type<tc>, window_params = [{transform_indices = @transform_0, window_bounds = array<i64: 64, 256>}, {transform_indices = @transform_1, window_bounds = array<i64: 256, 256>}, {transform_indices = @transform_2, window_bounds = array<i64: 2, 256>}, {transform_indices = @transform_3, window_bounds = array<i64: 64, 256>}]} {
    %c0_i32 = arith.constant 0 : i32
    %0 = arith.cmpi eq, %arg2, %c0_i32 : i32
    %1 = arith.extui %0 : i1 to i32
    %c0_i32_0 = arith.constant 0 : i32
    %2 = arith.cmpi ne, %1, %c0_i32_0 : i32
    scf.if %2 {
      %cst_9 = arith.constant 0.000000e+00 : f32
      %12 = vector.broadcast %cst_9 : f32 to vector<64x256xf32>
      %c0_10 = arith.constant 0 : index
      %c0_11 = arith.constant 0 : index
      %13 = vector.load %arg6[%c0_10, %c0_11] : memref<64x256xf32, #tpu.memory_space<vmem>>, vector<64x256xf32>
      tpu.vector_store %arg6[%c0_10, %c0_11], %12 {strides = array<i32>} : memref<64x256xf32, #tpu.memory_space<vmem>>, vector<64x256xf32>,
    } else {
    }
    %c0 = arith.constant 0 : index
    %c0_1 = arith.constant 0 : index
    %3 = vector.load %arg6[%c0, %c0_1] : memref<64x256xf32, #tpu.memory_space<vmem>>, vector<64x256xf32>
    %c0_2 = arith.constant 0 : index
    %c0_3 = arith.constant 0 : index
    %4 = vector.load %arg3[%c0_2, %c0_3] : memref<64x256xbf16, #tpu.memory_space<vmem>>, vector<64x256xbf16>
    %c0_4 = arith.constant 0 : index
    %c0_5 = arith.constant 0 : index
    %5 = vector.load %arg4[%c0_4, %c0_5] : memref<256x256xbf16, #tpu.memory_space<vmem>>, vector<256x256xbf16>
    %cst = arith.constant dense<0.000000e+00> : vector<64x256xf32>
    %6 = tpu.matmul %4, %5, %cst {dimension_numbers = #tpu.dot_dimension_numbers<[1], [0], [0], [1], [0, 0, 1, 1], [], []>} : vector<64x256xbf16>, vector<256x256xbf16>, vector<64x256xf32> -> vector<64x256xf32>
    %7 = arith.addf %3, %6 : vector<64x256xf32>
    %c0_6 = arith.constant 0 : index
    %c0_7 = arith.constant 0 : index
    %8 = vector.load %arg6[%c0_6, %c0_7] : memref<64x256xf32, #tpu.memory_space<vmem>>, vector<64x256xf32>
    tpu.vector_store %arg6[%c0_6, %c0_7], %7 {strides = array<i32>} : memref<64x256xf32, #tpu.memory_space<vmem>>, vector<64x256xf32>,
    %c6_i32 = arith.constant 6 : i32
    %9 = arith.cmpi eq, %arg2, %c6_i32 : i32
    %10 = arith.extui %9 : i1 to i32
    %c0_i32_8 = arith.constant 0 : i32
    %11 = arith.cmpi ne, %10, %c0_i32_8 : i32
    scf.if %11 {
      %c0_9 = arith.constant 0 : index
      %c0_10 = arith.constant 0 : index
      %12 = vector.load %arg5[%c0_9, %c0_10] : memref<2x256xf32, #tpu.memory_space<vmem>>, vector<2x256xf32>
      %c0_11 = arith.constant 0 : index
      %c0_12 = arith.constant 0 : index
      %13 = vector.load %arg6[%c0_11, %c0_12] : memref<64x256xf32, #tpu.memory_space<vmem>>, vector<64x256xf32>
      %14 = vector.extract_strided_slice %12 {offsets = [0, 0], sizes = [1, 256], strides = [1, 1]} : vector<2x256xf32> to vector<1x256xf32>
      %15 = vector.broadcast %14 : vector<1x256xf32> to vector<64x256xf32>
      %16 = arith.mulf %13, %15 : vector<64x256xf32>
      %17 = vector.extract_strided_slice %12 {offsets = [1, 0], sizes = [1, 256], strides = [1, 1]} : vector<2x256xf32> to vector<1x256xf32>
      %18 = vector.broadcast %17 : vector<1x256xf32> to vector<64x256xf32>
      %19 = arith.addf %16, %18 : vector<64x256xf32>
      %c0_13 = arith.constant 0 : index
      %c0_14 = arith.constant 0 : index
      %20 = vector.load %arg6[%c0_13, %c0_14] : memref<64x256xf32, #tpu.memory_space<vmem>>, vector<64x256xf32>
      tpu.vector_store %arg6[%c0_13, %c0_14], %19 {strides = array<i32>} : memref<64x256xf32, #tpu.memory_space<vmem>>, vector<64x256xf32>,
    } else {
    }
    return
  }
  func.func @transform_0(%arg0: i32, %arg1: i32, %arg2: i32) -> (i32, i32) {
    %c0_i32 = arith.constant 0 : i32
    return %arg0, %arg2 : i32, i32
  }
  func.func @transform_1(%arg0: i32, %arg1: i32, %arg2: i32) -> (i32, i32) {
    %c0_i32 = arith.constant 0 : i32
    return %arg2, %arg1 : i32, i32
  }
  func.func @transform_2(%arg0: i32, %arg1: i32, %arg2: i32) -> (i32, i32) {
    %c0_i32 = arith.constant 0 : i32
    %c0_i32_0 = arith.constant 0 : i32
    return %c0_i32, %arg1 : i32, i32
  }
  func.func @transform_3(%arg0: i32, %arg1: i32, %arg2: i32) -> (i32, i32) {
    %c0_i32 = arith.constant 0 : i32
    return %arg0, %arg1 : i32, i32
  }
}

module attributes {stable_mosaic.version = 11 : i64} {
  func.func @_gdn_kernel(%arg0: i32, %arg1: memref<64x256xf32, #tpu.memory_space<vmem>>, %arg2: memref<256x256xf32, #tpu.memory_space<vmem>>, %arg3: memref<1x256xf32, #tpu.memory_space<vmem>>, %arg4: memref<64x256xf32, #tpu.memory_space<vmem>>) attributes {dimension_semantics = [#tpu.dimension_semantics<parallel>], iteration_bounds = array<i64: 1>, scalar_prefetch = 0 : i64, scratch_operands = 0 : i64, tpu.core_type = #tpu.core_type<tc>, window_params = [{transform_indices = @transform_0, window_bounds = array<i64: 64, 256>}, {pipeline_mode = #tpu.pipeline_mode<synchronous>, transform_indices = @transform_1, window_bounds = array<i64: 256, 256>}, {pipeline_mode = #tpu.pipeline_mode<synchronous>, transform_indices = @transform_2, window_bounds = array<i64: 1, 256>}, {transform_indices = @transform_3, window_bounds = array<i64: 64, 256>}]} {
    %c0 = arith.constant 0 : index
    %c0_0 = arith.constant 0 : index
    %0 = vector.load %arg1[%c0, %c0_0] : memref<64x256xf32, #tpu.memory_space<vmem>>, vector<64x256xf32>
    %1 = arith.mulf %0, %0 : vector<64x256xf32>
    %c0_1 = arith.constant 0 : index
    %c0_2 = arith.constant 0 : index
    %2 = vector.load %arg2[%c0_1, %c0_2] : memref<256x256xf32, #tpu.memory_space<vmem>>, vector<256x256xf32>
    %cst = arith.constant dense<0.000000e+00> : vector<64x256xf32>
    %3 = tpu.matmul %1, %2, %cst {dimension_numbers = #tpu.dot_dimension_numbers<[1], [0], [0], [1], [0, 0, 1, 1], [], []>} : vector<64x256xf32>, vector<256x256xf32>, vector<64x256xf32> -> vector<64x256xf32>
    %c0_3 = arith.constant 0 : index
    %c0_4 = arith.constant 0 : index
    %4 = vector.load %arg3[%c0_3, %c0_4] : memref<1x256xf32, #tpu.memory_space<vmem>>, vector<1x256xf32>
    %5 = vector.broadcast %4 : vector<1x256xf32> to vector<64x256xf32>
    %6 = arith.addf %3, %5 : vector<64x256xf32>
    %7 = math.sqrt %6 : vector<64x256xf32>
    %8 = arith.mulf %0, %7 : vector<64x256xf32>
    %c0_5 = arith.constant 0 : index
    %c0_6 = arith.constant 0 : index
    %9 = vector.load %arg4[%c0_5, %c0_6] : memref<64x256xf32, #tpu.memory_space<vmem>>, vector<64x256xf32>
    tpu.vector_store %arg4[%c0_5, %c0_6], %8 {strides = array<i32>} : memref<64x256xf32, #tpu.memory_space<vmem>>, vector<64x256xf32>,
    return
  }
  func.func @transform_0(%arg0: i32) -> (i32, i32) {
    %c0_i32 = arith.constant 0 : i32
    %c0_i32_0 = arith.constant 0 : i32
    return %arg0, %c0_i32 : i32, i32
  }
  func.func @transform_1(%arg0: i32) -> (i32, i32) {
    %c0_i32 = arith.constant 0 : i32
    %c0_i32_0 = arith.constant 0 : i32
    %c0_i32_1 = arith.constant 0 : i32
    return %c0_i32, %c0_i32_0 : i32, i32
  }
  func.func @transform_2(%arg0: i32) -> (i32, i32) {
    %c0_i32 = arith.constant 0 : i32
    %c0_i32_0 = arith.constant 0 : i32
    %c0_i32_1 = arith.constant 0 : i32
    return %c0_i32, %c0_i32_0 : i32, i32
  }
  func.func @transform_3(%arg0: i32) -> (i32, i32) {
    %c0_i32 = arith.constant 0 : i32
    %c0_i32_0 = arith.constant 0 : i32
    return %arg0, %c0_i32 : i32, i32
  }
}

</mosaic_0001>

<llo_original>
// kernel: generator_forward.22
$region0: #{generator_forward.22}
  #allocation0 [shape = 'u32[]', space=smem, size = 0x4, offset = 0x4, fixed_abs, tag = 'smem constant byte address 0x4 - core index']
  #allocation1 [shape = 'u32[72,128]{1,0:T(1,128)}', space=vmem, size = 0x9000, scoped, tag = 'internal scratch']
  %s0 = inlined_call_operand.vmem [shape: bf16[64,1792], index: 0, kind: input, shape index: {}]
  %s1 = inlined_call_operand.vmem [shape: bf16[1792,256], index: 1, kind: input, shape index: {}]
  %s2 = inlined_call_operand.vmem [shape: f32[2,256], index: 2, kind: input, shape index: {}]
  %s3 = inlined_call_operand.vmem [shape: f32[64,256], index: 3, kind: output, shape index: {}]
  %s4 = sld [smem:[#allocation0]]
  $region91: #{generator_forward.22} parent=0
    _
  %s6 = ssub.s32 1, %s4
  %s7 = scalar_select 0, %s6, %s4
  $region1: #{generator_forward.22} parent=0
    #allocation2 [shape = 'u8[65536]{0}', space=vmem, size = 0x10000, scoped, tag = 'input window, operand 0']
    loop: start=0, step=1, limit=9
    $region2: #{generator_forward.22} parent=1 // loop_pre_header
      _
    $region3: #{generator_forward.22} parent=1 // loop_header
      %s9 = sphi 0, %s13
      %p10 = scmp.ge.s32.totalorder %s9, 9
      %s16 = sphi 0, %s35
      %s17 = sphi 0, %s31
      %s18 = sphi 0, %s27
      %s19 = sphi 0, %s16
      %s20 = sphi 0, %s17
      %s21 = sphi 0, %s18
      %s22 = sphi 0, %s19
      %s23 = sphi 0, %s20
      %s24 = sphi 0, %s21
      %s40 = sphi 0, %s42
      %s43 = sphi 0, %s40
      %s44 = sphi 0, %s43
      %s60 = sphi 0, %s44
      %s68 = sphi 0, %s70
      %s71 = sphi 0, %s68
      %s72 = sphi 0, %s71
      %s88 = sphi 0, %s72
      %s94 = sphi 0, %s96
      %s97 = sphi 0, %s94
      %s98 = sphi 0, %s97
      %s114 = sphi 0, %s98
      %s122 = sphi 0, %s124
      %s125 = sphi 0, %s122
      %s126 = sphi 0, %s125
      %s142 = sphi 0, %s126
    $region4: #{generator_forward.22} parent=1 // loop_header_branch
      %12 = sbr.rel (%p10) target = $region8
    $region5: #{generator_forward.22} parent=1 // loop_body
      %s14 = ssub.s32 %s9, 1
      %s15 = ssub.s32 %s9, 2
      %s25 = sadd.s32 1, %s18
      %p26 = scmp.ge.s32.totalorder %s25, 7
      %s27 = scalar_select %p26, 0, %s25
      %s28 = sadd.s32 1, %s17
      %s29 = scalar_select %p26, %s28, %s17
      %p30 = scmp.ge.s32.totalorder %s29, 1
      %s31 = scalar_select %p30, 0, %s29
      %s32 = sadd.s32 1, %s16
      %s33 = scalar_select %p30, %s32, %s16
      %p34 = scmp.ge.s32.totalorder %s33, 1
      %s35 = scalar_select %p34, 0, %s33
      %s36 = ssub.s32 %s16, %s35
      %s37 = ssub.s32 %s18, %s27
      %s38 = sor.u32 %s36, %s37
      %p39 = scmp.eq.s32.totalorder %s38, 0
      %s41 = sadd.s32 %s40, 1
      %s42 = scalar_select %p39, %s40, %s41
      %p45 = pneg %p39
      %p46 = scmp.eq.s32.totalorder %s9, 6
      %p47 = por %p45, %p46
      %p48 = scmp.ne.s32.totalorder %s40, %s43
      %p49 = scmp.eq.s32.totalorder %s9, 0
      %p50 = por %p48, %p49
      %p51 = scmp.ne.s32.totalorder %s40, %s43
      %p52 = scmp.eq.s32.totalorder %s14, 6
      %p53 = por %p51, %p52
      %p54 = scmp.ne.s32.totalorder %s43, %s44
      %p55 = scmp.eq.s32.totalorder %s14, 0
      %p56 = por %p54, %p55
      %p57 = scmp.ne.s32.totalorder %s43, %s44
      %p58 = scmp.eq.s32.totalorder %s15, 6
      %p59 = por %p57, %p58
      %p61 = scmp.ne.s32.totalorder %s44, %s60
      %p62 = scmp.eq.s32.totalorder %s15, 0
      %p63 = por %p61, %p62
      %s64 = ssub.s32 %s18, %s27
      %s65 = ssub.s32 %s17, %s31
      %s66 = sor.u32 %s64, %s65
      %p67 = scmp.eq.s32.totalorder %s66, 0
      %s69 = sadd.s32 %s68, 1
      %s70 = scalar_select %p67, %s68, %s69
      %p73 = pneg %p67
      %p74 = scmp.eq.s32.totalorder %s9, 6
      %p75 = por %p73, %p74
      %p76 = scmp.ne.s32.totalorder %s68, %s71
      %p77 = scmp.eq.s32.totalorder %s9, 0
      %p78 = por %p76, %p77
      %p79 = scmp.ne.s32.totalorder %s68, %s71
      %p80 = scmp.eq.s32.totalorder %s14, 6
      %p81 = por %p79, %p80
      %p82 = scmp.ne.s32.totalorder %s71, %s72
      %p83 = scmp.eq.s32.totalorder %s14, 0
      %p84 = por %p82, %p83
      %p85 = scmp.ne.s32.totalorder %s71, %s72
      %p86 = scmp.eq.s32.totalorder %s15, 6
      %p87 = por %p85, %p86
      %p89 = scmp.ne.s32.totalorder %s72, %s88
      %p90 = scmp.eq.s32.totalorder %s15, 0
      %p91 = por %p89, %p90
      %s92 = ssub.s32 %s17, %s31
      %p93 = scmp.eq.s32.totalorder %s92, 0
      %s95 = sadd.s32 %s94, 1
      %s96 = scalar_select %p93, %s94, %s95
      %p99 = pneg %p93
      %p100 = scmp.eq.s32.totalorder %s9, 6
      %p101 = por %p99, %p100
      %p102 = scmp.ne.s32.totalorder %s94, %s97
      %p103 = scmp.eq.s32.totalorder %s9, 0
      %p104 = por %p102, %p103
      %p105 = scmp.ne.s32.totalorder %s94, %s97
      %p106 = scmp.eq.s32.totalorder %s14, 6
      %p107 = por %p105, %p106
      %p108 = scmp.ne.s32.totalorder %s97, %s98
      %p109 = scmp.eq.s32.totalorder %s14, 0
      %p110 = por %p108, %p109
      %p111 = scmp.ne.s32.totalorder %s97, %s98
      %p112 = scmp.eq.s32.totalorder %s15, 6
      %p113 = por %p111, %p112
      %p115 = scmp.ne.s32.totalorder %s98, %s114
      %p116 = scmp.eq.s32.totalorder %s15, 0
      %p117 = por %p115, %p116
      %s118 = ssub.s32 %s16, %s35
      %s119 = ssub.s32 %s17, %s31
      %s120 = sor.u32 %s118, %s119
      %p121 = scmp.eq.s32.totalorder %s120, 0
      %s123 = sadd.s32 %s122, 1
      %s124 = scalar_select %p121, %s122, %s123
      %p127 = pneg %p121
      %p128 = scmp.eq.s32.totalorder %s9, 6
      %p129 = por %p127, %p128
      %p130 = scmp.ne.s32.totalorder %s122, %s125
      %p131 = scmp.eq.s32.totalorder %s9, 0
      %p132 = por %p130, %p131
      %p133 = scmp.ne.s32.totalorder %s122, %s125
      %p134 = scmp.eq.s32.totalorder %s14, 6
      %p135 = por %p133, %p134
      %p136 = scmp.ne.s32.totalorder %s125, %s126
      %p137 = scmp.eq.s32.totalorder %s14, 0
      %p138 = por %p136, %p137
      %p139 = scmp.ne.s32.totalorder %s125, %s126
      %p140 = scmp.eq.s32.totalorder %s15, 6
      %p141 = por %p139, %p140
      %p143 = scmp.ne.s32.totalorder %s126, %s142
      %p144 = scmp.eq.s32.totalorder %s15, 0
      %p145 = por %p143, %p144
      %p146 = scmp.le.s32.totalorder 1, %s9
      %p147 = scmp.lt.s32.totalorder %s9, 8
      %p148 = pnand %p146, %p147
      %p149 = pneg %p148
      // Predicated region
      $region9: #{generator_forward.22} parent=5 // pred_check
        _
      $region10: #{generator_forward.22} parent=5 // pred_check_branch
        %151 = sbr.rel (%p148) target = $region12
      $region11: #{generator_forward.22} parent=5 // pred_region
        %s152 = ssub.s32 %s9, 1
        // Predicated region
        $region13: #{generator_forward.22} parent=11 // pred_check
          %p153 = pneg %p110
        $region14: #{generator_forward.22} parent=11 // pred_check_branch
          %155 = sbr.rel (%p153) target = $region16
        $region15: #{generator_forward.22} parent=11 // pred_region
          %s156 = smul.u32 2, %s20
          %p157 = scmp.lt.s32.totalorder %s156, 1
          %s158 = scalar_select %p157, %s156, 1
          %s159 = smul.addr %s158, 2
          %s160 = scalar_lea.vmem %s2, %s159
          %s161 = smul.u32 2, %s20
        $region16: #{generator_forward.22} parent=11 // pred_fallthru
          _
      $region12: #{generator_forward.22} parent=5 // pred_fallthru
        _
      %p162 = scmp.lt.s32.totalorder %s9, 7
      // Predicated region
      $region17: #{generator_forward.22} parent=5 // pred_check
        %p163 = pneg %p162
      $region18: #{generator_forward.22} parent=5 // pred_check_branch
        %165 = sbr.rel (%p163) target = $region20
      $region19: #{generator_forward.22} parent=5 // pred_region
        // Predicated region
        $region21: #{generator_forward.22} parent=19 // pred_check
          %p166 = pneg %p50
        $region22: #{generator_forward.22} parent=19 // pred_check_branch
          %168 = sbr.rel (%p166) target = $region24
        $region23: #{generator_forward.22} parent=19 // pred_region
          %s169 = sand.u32 %s40, 1
          %s170 = sand.u32 %s40, 1
          %s171 = smul.addr %s170, 64
          %s172 = scalar_lea.vmem [#allocation2], %s171
          %s173 = smul.u32 8, %s16
          %s174 = smul.u32 2, %s18
          %s175 = smul.addr %s173, 14
          %s176 = sadd.s32 %s174, %s175
          %s177 = smul.addr %s176, 4
          %s178 = scalar_lea.vmem %s0, %s177
          // Predicated region
          $region25: #{generator_forward.22} parent=23 // pred_check
            _
          $region26: #{generator_forward.22} parent=23 // pred_check_branch
            %180 = sbr.rel (0) target = $region28
          $region27: #{generator_forward.22} parent=23 // pred_region
            // Predicated region
            $region29: #{generator_forward.22} parent=27 // pred_check
              _
            $region30: #{generator_forward.22} parent=27 // pred_check_branch
              %182 = sbr.rel (0) target = $region32
            $region31: #{generator_forward.22} parent=27 // pred_region
              // Predicated region
              $region44: #{generator_forward.22} parent=31 // pred_check
                _
              $region45: #{generator_forward.22} parent=31 // pred_check_branch
                %212 = sbr.rel (0) target = $region47
              $region46: #{generator_forward.22} parent=31 // pred_region
                loop: start=0, step=1, limit=1
                $region48: #{generator_forward.22} parent=46 // loop_pre_header
                  _
                $region49: #{generator_forward.22} parent=46 // loop_header
                  %s214 = sphi 0, %s218
                  %p215 = scmp.ge.s32.totalorder %s214, 1
                  %s219 = sphi %s178, %s178
                  %s220 = sphi %s172, %s172
                $region50: #{generator_forward.22} parent=46 // loop_header_branch
                  %217 = sbr.rel (%p215) target = $region54
                $region51: #{generator_forward.22} parent=46 // loop_body
                  %v221 = vld [vmem:[%s219] sm:$0xff]
                  %222 = vst [vmem:[%s220] sm:$0xff] %v221
                  %v223 = vld [vmem:[%s219 + $0x38] sm:$0xff]
                  %224 = vst [vmem:[%s220 + $0x8] sm:$0xff] %v223
                  %v225 = vld [vmem:[%s219 + $0x70] sm:$0xff]
                  %226 = vst [vmem:[%s220 + $0x10] sm:$0xff] %v225
                  %v227 = vld [vmem:[%s219 + $0xa8] sm:$0xff]
                  %228 = vst [vmem:[%s220 + $0x18] sm:$0xff] %v227
                  %v229 = vld [vmem:[%s219 + $0xe0] sm:$0xff]
                  %230 = vst [vmem:[%s220 + $0x20] sm:$0xff] %v229
                  %v231 = vld [vmem:[%s219 + $0x118] sm:$0xff]
                  %232 = vst [vmem:[%s220 + $0x28] sm:$0xff] %v231
                  %v233 = vld [vmem:[%s219 + $0x150] sm:$0xff]
                  %234 = vst [vmem:[%s220 + $0x30] sm:$0xff] %v233
                  %v235 = vld [vmem:[%s219 + $0x188] sm:$0xff]
                  %236 = vst [vmem:[%s220 + $0x38] sm:$0xff] %v235
                $region52: #{generator_forward.22} parent=46 // loop_footer
                  %s218 = sadd.s32 1, %s214
                $region53: #{generator_forward.22} parent=46 // loop_footer_branch
                  %213 = sbr.rel target = $region49
                $region54: #{generator_forward.22} parent=46 // loop_exit
                  _
              $region47: #{generator_forward.22} parent=31 // pred_fallthru
                _
              // Predicated region
              $region55: #{generator_forward.22} parent=31 // pred_check
                _
              $region56: #{generator_forward.22} parent=31 // pred_check_branch
                %238 = sbr.rel target = $region58
              $region57: #{generator_forward.22} parent=31 // pred_region
                _
              $region58: #{generator_forward.22} parent=31 // pred_fallthru
                _
            $region32: #{generator_forward.22} parent=27 // pred_fallthru
              _
            // Predicated region
            $region33: #{generator_forward.22} parent=27 // pred_check
              _
            $region34: #{generator_forward.22} parent=27 // pred_check_branch
              %184 = sbr.rel target = $region36
            $region35: #{generator_forward.22} parent=27 // pred_region
              %s186 = ssub.s32 256, 1
              loop: start=0, step=1, limit=1
              $region37: #{generator_forward.22} parent=35 // loop_pre_header
                _
              $region38: #{generator_forward.22} parent=35 // loop_header
                %s188 = sphi 0, %s192
                %p189 = scmp.ge.s32.totalorder %s188, 1
                %s193 = sphi %s178, %s178
                %s194 = sphi %s172, %s172
              $region39: #{generator_forward.22} parent=35 // loop_header_branch
                %191 = sbr.rel (%p189) target = $region43
              $region40: #{generator_forward.22} parent=35 // loop_body
                %v195 = vld [vmem:[%s193] sm:%s186]
                %196 = vst [vmem:[%s194] sm:%s186] %v195
                %v197 = vld [vmem:[%s193 + $0x38] sm:%s186]
                %198 = vst [vmem:[%s194 + $0x8] sm:%s186] %v197
                %v199 = vld [vmem:[%s193 + $0x70] sm:%s186]
                %200 = vst [vmem:[%s194 + $0x10] sm:%s186] %v199
                %v201 = vld [vmem:[%s193 + $0xa8] sm:%s186]
                %202 = vst [vmem:[%s194 + $0x18] sm:%s186] %v201
                %v203 = vld [vmem:[%s193 + $0xe0] sm:%s186]
                %204 = vst [vmem:[%s194 + $0x20] sm:%s186] %v203
                %v205 = vld [vmem:[%s193 + $0x118] sm:%s186]
                %206 = vst [vmem:[%s194 + $0x28] sm:%s186] %v205
                %v207 = vld [vmem:[%s193 + $0x150] sm:%s186]
                %208 = vst [vmem:[%s194 + $0x30] sm:%s186] %v207
                %v209 = vld [vmem:[%s193 + $0x188] sm:%s186]
                %210 = vst [vmem:[%s194 + $0x38] sm:%s186] %v209
              $region41: #{generator_forward.22} parent=35 // loop_footer
                %s192 = sadd.s32 1, %s188
              $region42: #{generator_forward.22} parent=35 // loop_footer_branch
                %187 = sbr.rel target = $region38
              $region43: #{generator_forward.22} parent=35 // loop_exit
                _
            $region36: #{generator_forward.22} parent=27 // pred_fallthru
              _
          $region28: #{generator_forward.22} parent=23 // pred_fallthru
            _
          %239 = vnop
        $region24: #{generator_forward.22} parent=19 // pred_fallthru
          _
        // Predicated region
        $region59: #{generator_forward.22} parent=19 // pred_check
          %p240 = pneg %p78
        $region60: #{generator_forward.22} parent=19 // pred_check_branch
          %242 = sbr.rel (%p240) target = $region62
        $region61: #{generator_forward.22} parent=19 // pred_region
          %s243 = smul.u32 32, %s18
          %s244 = smul.u32 2, %s17
          %p245 = scmp.lt.s32.totalorder %s243, 223
          %s246 = scalar_select %p245, %s243, 223
          %p247 = scmp.lt.s32.totalorder %s244, 1
          %s248 = scalar_select %p247, %s244, 1
          %s249 = smul.addr %s246, 2
          %s250 = sadd.s32 %s248, %s249
          %s251 = smul.addr %s250, 4
          %s252 = scalar_lea.vmem %s1, %s251
          %s253 = smul.u32 32, %s18
          %s254 = smul.u32 2, %s17
        $region62: #{generator_forward.22} parent=19 // pred_fallthru
          _
      $region20: #{generator_forward.22} parent=5 // pred_fallthru
        _
      %p255 = scmp.le.s32.totalorder 1, %s9
      %p256 = scmp.lt.s32.totalorder %s9, 8
      %p257 = pnand %p255, %p256
      %p258 = pneg %p257
      // Predicated region
      $region63: #{generator_forward.22} parent=5 // pred_check
        _
      $region64: #{generator_forward.22} parent=5 // pred_check_branch
        %260 = sbr.rel (%p257) target = $region66
      $region65: #{generator_forward.22} parent=5 // pred_region
        %s261 = ssub.s32 %s9, 1
        %s262 = sand.u32 %s43, 1
        %s263 = sand.u32 %s43, 1
        %s264 = smul.addr %s263, 64
        %s265 = scalar_lea.vmem [#allocation2], %s264
        // Predicated region
        $region67: #{generator_forward.22} parent=65 // pred_check
          %p266 = pneg %p56
        $region68: #{generator_forward.22} parent=65 // pred_check_branch
          %268 = sbr.rel (%p266) target = $region70
        $region69: #{generator_forward.22} parent=65 // pred_region
          _
        $region70: #{generator_forward.22} parent=65 // pred_fallthru
          _
        %s269 = sand.u32 %s43, 1
        %s270 = sand.u32 %s43, 1
        %s271 = smul.addr %s270, 64
        %s272 = scalar_lea.vmem [#allocation2], %s271
        %p273 = pneg %p56
        %p274 = pneg %p53
        %s275 = smul.u32 32, %s21
        %s276 = smul.u32 2, %s20
        %p277 = scmp.lt.s32.totalorder %s275, 223
        %s278 = scalar_select %p277, %s275, 223
        %p279 = scmp.lt.s32.totalorder %s276, 1
        %s280 = scalar_select %p279, %s276, 1
        %s281 = smul.addr %s278, 2
        %s282 = sadd.s32 %s280, %s281
        %s283 = smul.addr %s282, 4
        %s284 = scalar_lea.vmem %s1, %s283
        %p285 = pneg %p84
        %p286 = pneg %p81
        %s287 = smul.u32 2, %s20
        %p288 = scmp.lt.s32.totalorder %s287, 1
        %s289 = scalar_select %p288, %s287, 1
        %s290 = smul.addr %s289, 2
        %s291 = scalar_lea.vmem %s2, %s290
        %p292 = pneg %p110
        %p293 = pneg %p107
        %p294 = pneg %p138
        %p295 = pneg %p135
        %s296 = smul.u32 8, %s19
        %s297 = smul.u32 2, %s20
        %p298 = scmp.lt.s32.totalorder %s296, 7
        %s299 = scalar_select %p298, %s296, 7
        %p300 = scmp.lt.s32.totalorder %s297, 1
        %s301 = scalar_select %p300, %s297, 1
        %s302 = smul.addr %s299, 2
        %s303 = sadd.s32 %s301, %s302
        %s304 = smul.addr %s303, 8
        %s305 = scalar_lea.vmem %s3, %s304
        %s306 = smul.u32 8, %s19
        %s307 = smul.u32 2, %s21
        %s308 = smul.u32 32, %s21
        %s309 = smul.u32 2, %s20
        %p310 = scmp.lt.s32.totalorder %s308, 223
        %s311 = scalar_select %p310, %s308, 223
        %p312 = scmp.lt.s32.totalorder %s309, 1
        %s313 = scalar_select %p312, %s309, 1
        %s314 = smul.addr %s311, 2
        %s315 = sadd.s32 %s313, %s314
        %s316 = smul.addr %s315, 4
        %s317 = scalar_lea.vmem %s1, %s316
        %s318 = smul.u32 32, %s21
        %s319 = smul.u32 2, %s20
        %s320 = smul.u32 2, %s20
        %p321 = scmp.lt.s32.totalorder %s320, 1
        %s322 = scalar_select %p321, %s320, 1
        %s323 = smul.addr %s322, 2
        %s324 = scalar_lea.vmem %s2, %s323
        %s325 = smul.u32 2, %s20
        %s326 = smul.u32 8, %s19
        %s327 = smul.u32 2, %s20
        %p328 = scmp.lt.s32.totalorder %s326, 7
        %s329 = scalar_select %p328, %s326, 7
        %p330 = scmp.lt.s32.totalorder %s327, 1
        %s331 = scalar_select %p330, %s327, 1
        %s332 = smul.addr %s329, 2
        %s333 = sadd.s32 %s331, %s332
        %s334 = smul.addr %s333, 8
        %s335 = scalar_lea.vmem %s3, %s334
        %s336 = smul.u32 8, %s19
        %s337 = smul.u32 2, %s20
        %p338 = scmp.eq.s32.totalorder %s21, 0
        // Predicated region
        $region71: #{generator_forward.22} parent=65 // pred_check
          %p339 = pneg %p338
        $region72: #{generator_forward.22} parent=65 // pred_check_branch
          %341 = sbr.rel (%p339) target = $region74
        $region73: #{generator_forward.22} parent=65 // pred_region
          %342 = vst [vmem:[%s335] sm:$0xff] 0.0
          %343 = vst [vmem:[%s335 + $0x8] sm:$0xff] 0.0
          %344 = vst [vmem:[%s335 + $0x10] sm:$0xff] 0.0
          %345 = vst [vmem:[%s335 + $0x18] sm:$0xff] 0.0
          %346 = vst [vmem:[%s335 + $0x20] sm:$0xff] 0.0
          %347 = vst [vmem:[%s335 + $0x28] sm:$0xff] 0.0
          %348 = vst [vmem:[%s335 + $0x30] sm:$0xff] 0.0
          %349 = vst [vmem:[%s335 + $0x38] sm:$0xff] 0.0
          %350 = vst [vmem:[%s335 + $0x40] sm:$0xff] 0.0
          %351 = vst [vmem:[%s335 + $0x48] sm:$0xff] 0.0
          %352 = vst [vmem:[%s335 + $0x50] sm:$0xff] 0.0
          %353 = vst [vmem:[%s335 + $0x58] sm:$0xff] 0.0
          %354 = vst [vmem:[%s335 + $0x60] sm:$0xff] 0.0
          %355 = vst [vmem:[%s335 + $0x68] sm:$0xff] 0.0
          %356 = vst [vmem:[%s335 + $0x70] sm:$0xff] 0.0
          %357 = vst [vmem:[%s335 + $0x78] sm:$0xff] 0.0
        $region74: #{generator_forward.22} parent=65 // pred_fallthru
          _
        %v358 = vld [vmem:[%s335] sm:$0xff]
        %v359 = vld [vmem:[%s335 + $0x8] sm:$0xff]
        %v360 = vld [vmem:[%s335 + $0x10] sm:$0xff]
        %v361 = vld [vmem:[%s335 + $0x18] sm:$0xff]
        %v362 = vld [vmem:[%s335 + $0x20] sm:$0xff]
        %v363 = vld [vmem:[%s335 + $0x28] sm:$0xff]
        %v364 = vld [vmem:[%s335 + $0x30] sm:$0xff]
        %v365 = vld [vmem:[%s335 + $0x38] sm:$0xff]
        %v366 = vld [vmem:[%s335 + $0x40] sm:$0xff]
        %v367 = vld [vmem:[%s335 + $0x48] sm:$0xff]
        %v368 = vld [vmem:[%s335 + $0x50] sm:$0xff]
        %v369 = vld [vmem:[%s335 + $0x58] sm:$0xff]
        %v370 = vld [vmem:[%s335 + $0x60] sm:$0xff]
        %v371 = vld [vmem:[%s335 + $0x68] sm:$0xff]
        %v372 = vld [vmem:[%s335 + $0x70] sm:$0xff]
        %v373 = vld [vmem:[%s335 + $0x78] sm:$0xff]
        %v374 = vld [vmem:[%s265] sm:$0xff]
        %v375 = vld [vmem:[%s265 + $0x8] sm:$0xff]
        %v376 = vld [vmem:[%s265 + $0x10] sm:$0xff]
        %v377 = vld [vmem:[%s265 + $0x18] sm:$0xff]
        %v378 = vld [vmem:[%s265 + $0x20] sm:$0xff]
        %v379 = vld [vmem:[%s265 + $0x28] sm:$0xff]
        %v380 = vld [vmem:[%s265 + $0x30] sm:$0xff]
        %v381 = vld [vmem:[%s265 + $0x38] sm:$0xff]
        %v382 = vld [vmem:[%s317] sm:$0xff]
        %v383 = vld [vmem:[%s317 + $0x8] sm:$0xff]
        %v384 = vld [vmem:[%s317 + $0x10] sm:$0xff]
        %v385 = vld [vmem:[%s317 + $0x18] sm:$0xff]
        %v386 = vld [vmem:[%s317 + $0x20] sm:$0xff]
        %v387 = vld [vmem:[%s317 + $0x28] sm:$0xff]
        %v388 = vld [vmem:[%s317 + $0x30] sm:$0xff]
        %v389 = vld [vmem:[%s317 + $0x38] sm:$0xff]
        %v390 = vld [vmem:[%s317 + $0x40] sm:$0xff]
        %v391 = vld [vmem:[%s317 + $0x48] sm:$0xff]
        %v392 = vld [vmem:[%s317 + $0x50] sm:$0xff]
        %v393 = vld [vmem:[%s317 + $0x58] sm:$0xff]
        %v394 = vld [vmem:[%s317 + $0x60] sm:$0xff]
        %v395 = vld [vmem:[%s317 + $0x68] sm:$0xff]
        %v396 = vld [vmem:[%s317 + $0x70] sm:$0xff]
        %v397 = vld [vmem:[%s317 + $0x78] sm:$0xff]
        %v398 = vld [vmem:[%s317 + $0x80] sm:$0xff]
        %v399 = vld [vmem:[%s317 + $0x88] sm:$0xff]
        %v400 = vld [vmem:[%s317 + $0x90] sm:$0xff]
        %v401 = vld [vmem:[%s317 + $0x98] sm:$0xff]
        %v402 = vld [vmem:[%s317 + $0xa0] sm:$0xff]
        %v403 = vld [vmem:[%s317 + $0xa8] sm:$0xff]
        %v404 = vld [vmem:[%s317 + $0xb0] sm:$0xff]
        %v405 = vld [vmem:[%s317 + $0xb8] sm:$0xff]
        %v406 = vld [vmem:[%s317 + $0xc0] sm:$0xff]
        %v407 = vld [vmem:[%s317 + $0xc8] sm:$0xff]
        %v408 = vld [vmem:[%s317 + $0xd0] sm:$0xff]
        %v409 = vld [vmem:[%s317 + $0xd8] sm:$0xff]
        %v410 = vld [vmem:[%s317 + $0xe0] sm:$0xff]
        %v411 = vld [vmem:[%s317 + $0xe8] sm:$0xff]
        %v412 = vld [vmem:[%s317 + $0xf0] sm:$0xff]
        %v413 = vld [vmem:[%s317 + $0xf8] sm:$0xff]
        %v422 = vunpack.c.l.b16 %v374
        %v423 = vunpack.c.h.b16 %v374
        %v424 = vunpack.c.l.b16 %v375
        %v425 = vunpack.c.h.b16 %v375
        %v426 = vunpack.c.l.b16 %v376
        %v427 = vunpack.c.h.b16 %v376
        %v428 = vunpack.c.l.b16 %v377
        %v429 = vunpack.c.h.b16 %v377
        %v430 = vunpack.c.l.b16 %v378
        %v431 = vunpack.c.h.b16 %v378
        %v432 = vunpack.c.l.b16 %v379
        %v433 = vunpack.c.h.b16 %v379
        %v434 = vunpack.c.l.b16 %v380
        %v435 = vunpack.c.h.b16 %v380
        %v436 = vunpack.c.l.b16 %v381
        %v437 = vunpack.c.h.b16 %v381
        %v438 = vpack.c.b16 %v424, %v422
        %v439 = vpack.c.b16 %v425, %v423
        %v440 = vpack.c.b16 %v428, %v426
        %v441 = vpack.c.b16 %v429, %v427
        %v442 = vpack.c.b16 %v432, %v430
        %v443 = vpack.c.b16 %v433, %v431
        %v444 = vpack.c.b16 %v436, %v434
        %v445 = vpack.c.b16 %v437, %v435
        %v486 = vunpack.c.l.b16 %v382
        %v487 = vunpack.c.h.b16 %v382
        %v488 = vunpack.c.l.b16 %v383
        %v489 = vunpack.c.h.b16 %v383
        %v490 = vunpack.c.l.b16 %v384
        %v491 = vunpack.c.h.b16 %v384
        %v492 = vunpack.c.l.b16 %v385
        %v493 = vunpack.c.h.b16 %v385
        %v494 = vunpack.c.l.b16 %v386
        %v495 = vunpack.c.h.b16 %v386
        %v496 = vunpack.c.l.b16 %v387
        %v497 = vunpack.c.h.b16 %v387
        %v498 = vunpack.c.l.b16 %v388
        %v499 = vunpack.c.h.b16 %v388
        %v500 = vunpack.c.l.b16 %v389
        %v501 = vunpack.c.h.b16 %v389
        %v502 = vunpack.c.l.b16 %v390
        %v503 = vunpack.c.h.b16 %v390
        %v504 = vunpack.c.l.b16 %v391
        %v505 = vunpack.c.h.b16 %v391
        %v506 = vunpack.c.l.b16 %v392
        %v507 = vunpack.c.h.b16 %v392
        %v508 = vunpack.c.l.b16 %v393
        %v509 = vunpack.c.h.b16 %v393
        %v510 = vunpack.c.l.b16 %v394
        %v511 = vunpack.c.h.b16 %v394
        %v512 = vunpack.c.l.b16 %v395
        %v513 = vunpack.c.h.b16 %v395
        %v514 = vunpack.c.l.b16 %v396
        %v515 = vunpack.c.h.b16 %v396
        %v516 = vunpack.c.l.b16 %v397
        %v517 = vunpack.c.h.b16 %v397
        %v518 = vunpack.c.l.b16 %v398
        %v519 = vunpack.c.h.b16 %v398
        %v520 = vunpack.c.l.b16 %v399
        %v521 = vunpack.c.h.b16 %v399
        %v522 = vunpack.c.l.b16 %v400
        %v523 = vunpack.c.h.b16 %v400
        %v524 = vunpack.c.l.b16 %v401
        %v525 = vunpack.c.h.b16 %v401
        %v526 = vunpack.c.l.b16 %v402
        %v527 = vunpack.c.h.b16 %v402
        %v528 = vunpack.c.l.b16 %v403
        %v529 = vunpack.c.h.b16 %v403
        %v530 = vunpack.c.l.b16 %v404
        %v531 = vunpack.c.h.b16 %v404
        %v532 = vunpack.c.l.b16 %v405
        %v533 = vunpack.c.h.b16 %v405
        %v534 = vunpack.c.l.b16 %v406
        %v535 = vunpack.c.h.b16 %v406
        %v536 = vunpack.c.l.b16 %v407
        %v537 = vunpack.c.h.b16 %v407
        %v538 = vunpack.c.l.b16 %v408
        %v539 = vunpack.c.h.b16 %v408
        %v540 = vunpack.c.l.b16 %v409
        %v541 = vunpack.c.h.b16 %v409
        %v542 = vunpack.c.l.b16 %v410
        %v543 = vunpack.c.h.b16 %v410
        %v544 = vunpack.c.l.b16 %v411
        %v545 = vunpack.c.h.b16 %v411
        %v546 = vunpack.c.l.b16 %v412
        %v547 = vunpack.c.h.b16 %v412
        %v548 = vunpack.c.l.b16 %v413
        %v549 = vunpack.c.h.b16 %v413
        %v550 = vpack.c.b16 %v488, %v486
        %v551 = vpack.c.b16 %v489, %v487
        %v552 = vpack.c.b16 %v492, %v490
        %v553 = vpack.c.b16 %v493, %v491
        %v554 = vpack.c.b16 %v496, %v494
        %v555 = vpack.c.b16 %v497, %v495
        %v556 = vpack.c.b16 %v500, %v498
        %v557 = vpack.c.b16 %v501, %v499
        %v558 = vpack.c.b16 %v504, %v502
        %v559 = vpack.c.b16 %v505, %v503
        %v560 = vpack.c.b16 %v508, %v506
        %v561 = vpack.c.b16 %v509, %v507
        %v562 = vpack.c.b16 %v512, %v510
        %v563 = vpack.c.b16 %v513, %v511
        %v564 = vpack.c.b16 %v516, %v514
        %v565 = vpack.c.b16 %v517, %v515
        %v566 = vpack.c.b16 %v520, %v518
        %v567 = vpack.c.b16 %v521, %v519
        %v568 = vpack.c.b16 %v524, %v522
        %v569 = vpack.c.b16 %v525, %v523
        %v570 = vpack.c.b16 %v528, %v526
        %v571 = vpack.c.b16 %v529, %v527
        %v572 = vpack.c.b16 %v532, %v530
        %v573 = vpack.c.b16 %v533, %v531
        %v574 = vpack.c.b16 %v536, %v534
        %v575 = vpack.c.b16 %v537, %v535
        %v576 = vpack.c.b16 %v540, %v538
        %v577 = vpack.c.b16 %v541, %v539
        %v578 = vpack.c.b16 %v544, %v542
        %v579 = vpack.c.b16 %v545, %v543
        %v580 = vpack.c.b16 %v548, %v546
        %v581 = vpack.c.b16 %v549, %v547
        %614 = vmatpush.bf16.msra.mxu0 %v564
        %615 = vmatpush.bf16.msra.mxu0 %v562
        %616 = vmatpush.bf16.msra.mxu0 %v560
        %617 = vmatpush.bf16.msra.mxu0 %v558
        %618 = vmatpush.bf16.msra.mxu0 %v556
        %619 = vmatpush.bf16.msra.mxu0 %v554
        %620 = vmatpush.bf16.msra.mxu0 %v552
        %621 = vmatpush.bf16.msra.mxu0 %v550
        %622 = vmatmul.bf16.gmra.mxu0 %v438
        %v623 = vpop.f32.mrf.mxu0
        %v624 = vadd.f32 0.0, %v623
        %v625 = vpop.f32.mrf.mxu0
        %v626 = vadd.f32 0.0, %v625
        %627 = vmatmul.bf16.gmra.mxu0 %v440
        %v628 = vpop.f32.mrf.mxu0
        %v629 = vadd.f32 0.0, %v628
        %v630 = vpop.f32.mrf.mxu0
        %v631 = vadd.f32 0.0, %v630
        %632 = vmatmul.bf16.gmra.mxu0 %v442
        %v633 = vpop.f32.mrf.mxu0
        %v634 = vadd.f32 0.0, %v633
        %v635 = vpop.f32.mrf.mxu0
        %v636 = vadd.f32 0.0, %v635
        %637 = vmatmul.bf16.gmra.mxu0 %v444
        %v638 = vpop.f32.mrf.mxu0
        %v639 = vadd.f32 0.0, %v638
        %v640 = vpop.f32.mrf.mxu0
        %v641 = vadd.f32 0.0, %v640
        %642 = vdwg.mxu0
        %643 = vmatpush.bf16.msra.mxu0 %v580
        %644 = vmatpush.bf16.msra.mxu0 %v578
        %645 = vmatpush.bf16.msra.mxu0 %v576
        %646 = vmatpush.bf16.msra.mxu0 %v574
        %647 = vmatpush.bf16.msra.mxu0 %v572
        %648 = vmatpush.bf16.msra.mxu0 %v570
        %649 = vmatpush.bf16.msra.mxu0 %v568
        %650 = vmatpush.bf16.msra.mxu0 %v566
        %651 = vmatmul.bf16.gmra.mxu0 %v439
        %v652 = vpop.f32.mrf.mxu0
        %v653 = vadd.f32 %v624, %v652
        %v654 = vpop.f32.mrf.mxu0
        %v655 = vadd.f32 %v626, %v654
        %656 = vmatmul.bf16.gmra.mxu0 %v441
        %v657 = vpop.f32.mrf.mxu0
        %v658 = vadd.f32 %v629, %v657
        %v659 = vpop.f32.mrf.mxu0
        %v660 = vadd.f32 %v631, %v659
        %661 = vmatmul.bf16.gmra.mxu0 %v443
        %v662 = vpop.f32.mrf.mxu0
        %v663 = vadd.f32 %v634, %v662
        %v664 = vpop.f32.mrf.mxu0
        %v665 = vadd.f32 %v636, %v664
        %666 = vmatmul.bf16.gmra.mxu0 %v445
        %v667 = vpop.f32.mrf.mxu0
        %v668 = vadd.f32 %v639, %v667
        %v669 = vpop.f32.mrf.mxu0
        %v670 = vadd.f32 %v641, %v669
        %671 = vdwg.mxu0
        %672 = vmatpush.bf16.msra.mxu0 %v565
        %673 = vmatpush.bf16.msra.mxu0 %v563
        %674 = vmatpush.bf16.msra.mxu0 %v561
        %675 = vmatpush.bf16.msra.mxu0 %v559
        %676 = vmatpush.bf16.msra.mxu0 %v557
        %677 = vmatpush.bf16.msra.mxu0 %v555
        %678 = vmatpush.bf16.msra.mxu0 %v553
        %679 = vmatpush.bf16.msra.mxu0 %v551
        %680 = vmatmul.bf16.gmra.mxu0 %v438
        %v681 = vpop.f32.mrf.mxu0
        %v682 = vadd.f32 0.0, %v681
        %v683 = vpop.f32.mrf.mxu0
        %v684 = vadd.f32 0.0, %v683
        %685 = vmatmul.bf16.gmra.mxu0 %v440
        %v686 = vpop.f32.mrf.mxu0
        %v687 = vadd.f32 0.0, %v686
        %v688 = vpop.f32.mrf.mxu0
        %v689 = vadd.f32 0.0, %v688
        %690 = vmatmul.bf16.gmra.mxu0 %v442
        %v691 = vpop.f32.mrf.mxu0
        %v692 = vadd.f32 0.0, %v691
        %v693 = vpop.f32.mrf.mxu0
        %v694 = vadd.f32 0.0, %v693
        %695 = vmatmul.bf16.gmra.mxu0 %v444
        %v696 = vpop.f32.mrf.mxu0
        %v697 = vadd.f32 0.0, %v696
        %v698 = vpop.f32.mrf.mxu0
        %v699 = vadd.f32 0.0, %v698
        %700 = vdwg.mxu0
        %701 = vmatpush.bf16.msra.mxu0 %v581
        %702 = vmatpush.bf16.msra.mxu0 %v579
        %703 = vmatpush.bf16.msra.mxu0 %v577
        %704 = vmatpush.bf16.msra.mxu0 %v575
        %705 = vmatpush.bf16.msra.mxu0 %v573
        %706 = vmatpush.bf16.msra.mxu0 %v571
        %707 = vmatpush.bf16.msra.mxu0 %v569
        %708 = vmatpush.bf16.msra.mxu0 %v567
        %709 = vmatmul.bf16.gmra.mxu0 %v439
        %v710 = vpop.f32.mrf.mxu0
        %v711 = vadd.f32 %v682, %v710
        %v712 = vpop.f32.mrf.mxu0
        %v713 = vadd.f32 %v684, %v712
        %714 = vmatmul.bf16.gmra.mxu0 %v441
        %v715 = vpop.f32.mrf.mxu0
        %v716 = vadd.f32 %v687, %v715
        %v717 = vpop.f32.mrf.mxu0
        %v718 = vadd.f32 %v689, %v717
        %719 = vmatmul.bf16.gmra.mxu0 %v443
        %v720 = vpop.f32.mrf.mxu0
        %v721 = vadd.f32 %v692, %v720
        %v722 = vpop.f32.mrf.mxu0
        %v723 = vadd.f32 %v694, %v722
        %724 = vmatmul.bf16.gmra.mxu0 %v445
        %v725 = vpop.f32.mrf.mxu0
        %v726 = vadd.f32 %v697, %v725
        %v727 = vpop.f32.mrf.mxu0
        %v728 = vadd.f32 %v699, %v727
        %729 = vdwg.mxu0
        %v730 = vadd.f32 %v358, %v653
        %v731 = vadd.f32 %v359, %v711
        %v732 = vadd.f32 %v360, %v655
        %v733 = vadd.f32 %v361, %v713
        %v734 = vadd.f32 %v362, %v658
        %v735 = vadd.f32 %v363, %v716
        %v736 = vadd.f32 %v364, %v660
        %v737 = vadd.f32 %v365, %v718
        %v738 = vadd.f32 %v366, %v663
        %v739 = vadd.f32 %v367, %v721
        %v740 = vadd.f32 %v368, %v665
        %v741 = vadd.f32 %v369, %v723
        %v742 = vadd.f32 %v370, %v668
        %v743 = vadd.f32 %v371, %v726
        %v744 = vadd.f32 %v372, %v670
        %v745 = vadd.f32 %v373, %v728
        %746 = vst [vmem:[%s335] sm:$0xff] %v730
        %747 = vst [vmem:[%s335 + $0x8] sm:$0xff] %v731
        %748 = vst [vmem:[%s335 + $0x10] sm:$0xff] %v732
        %749 = vst [vmem:[%s335 + $0x18] sm:$0xff] %v733
        %750 = vst [vmem:[%s335 + $0x20] sm:$0xff] %v734
        %751 = vst [vmem:[%s335 + $0x28] sm:$0xff] %v735
        %752 = vst [vmem:[%s335 + $0x30] sm:$0xff] %v736
        %753 = vst [vmem:[%s335 + $0x38] sm:$0xff] %v737
        %754 = vst [vmem:[%s335 + $0x40] sm:$0xff] %v738
        %755 = vst [vmem:[%s335 + $0x48] sm:$0xff] %v739
        %756 = vst [vmem:[%s335 + $0x50] sm:$0xff] %v740
        %757 = vst [vmem:[%s335 + $0x58] sm:$0xff] %v741
        %758 = vst [vmem:[%s335 + $0x60] sm:$0xff] %v742
        %759 = vst [vmem:[%s335 + $0x68] sm:$0xff] %v743
        %760 = vst [vmem:[%s335 + $0x70] sm:$0xff] %v744
        %761 = vst [vmem:[%s335 + $0x78] sm:$0xff] %v745
        %p762 = scmp.eq.s32.totalorder %s21, 6
        // Predicated region
        $region75: #{generator_forward.22} parent=65 // pred_check
          %p763 = pneg %p762
        $region76: #{generator_forward.22} parent=65 // pred_check_branch
          %765 = sbr.rel (%p763) target = $region78
        $region77: #{generator_forward.22} parent=65 // pred_region
          %v766 = vld [vmem:[%s324] sm:$0xf]
          %v767 = vld [vmem:[%s335] sm:$0xff]
          %v768 = vld [vmem:[%s335 + $0x8] sm:$0xff]
          %v769 = vld [vmem:[%s335 + $0x10] sm:$0xff]
          %v770 = vld [vmem:[%s335 + $0x18] sm:$0xff]
          %v771 = vld [vmem:[%s335 + $0x20] sm:$0xff]
          %v772 = vld [vmem:[%s335 + $0x28] sm:$0xff]
          %v773 = vld [vmem:[%s335 + $0x30] sm:$0xff]
          %v774 = vld [vmem:[%s335 + $0x38] sm:$0xff]
          %v775 = vld [vmem:[%s335 + $0x40] sm:$0xff]
          %v776 = vld [vmem:[%s335 + $0x48] sm:$0xff]
          %v777 = vld [vmem:[%s335 + $0x50] sm:$0xff]
          %v778 = vld [vmem:[%s335 + $0x58] sm:$0xff]
          %v779 = vld [vmem:[%s335 + $0x60] sm:$0xff]
          %v780 = vld [vmem:[%s335 + $0x68] sm:$0xff]
          %v781 = vld [vmem:[%s335 + $0x70] sm:$0xff]
          %v782 = vld [vmem:[%s335 + $0x78] sm:$0xff]
          %v784 = vperm.slane %v766, 0
          %v785 = vperm.slane %v766, 2
          %v788 = vperm.slane %v784, 0
          %v789 = vperm.slane %v785, 0
          %v790 = vmul.f32 %v767, %v788
          %v791 = vmul.f32 %v768, %v789
          %v792 = vmul.f32 %v769, %v788
          %v793 = vmul.f32 %v770, %v789
          %v794 = vmul.f32 %v771, %v788
          %v795 = vmul.f32 %v772, %v789
          %v796 = vmul.f32 %v773, %v788
          %v797 = vmul.f32 %v774, %v789
          %v798 = vmul.f32 %v775, %v788
          %v799 = vmul.f32 %v776, %v789
          %v800 = vmul.f32 %v777, %v788
          %v801 = vmul.f32 %v778, %v789
          %v802 = vmul.f32 %v779, %v788
          %v803 = vmul.f32 %v780, %v789
          %v804 = vmul.f32 %v781, %v788
          %v805 = vmul.f32 %v782, %v789
          %v806 = vperm.slane %v766, 1
          %v807 = vperm.slane %v766, 3
          %v810 = vperm.slane %v806, 1
          %v811 = vperm.slane %v807, 1
          %v812 = vadd.f32 %v790, %v810
          %v813 = vadd.f32 %v791, %v811
          %v814 = vadd.f32 %v792, %v810
          %v815 = vadd.f32 %v793, %v811
          %v816 = vadd.f32 %v794, %v810
          %v817 = vadd.f32 %v795, %v811
          %v818 = vadd.f32 %v796, %v810
          %v819 = vadd.f32 %v797, %v811
          %v820 = vadd.f32 %v798, %v810
          %v821 = vadd.f32 %v799, %v811
          %v822 = vadd.f32 %v800, %v810
          %v823 = vadd.f32 %v801, %v811
          %v824 = vadd.f32 %v802, %v810
          %v825 = vadd.f32 %v803, %v811
          %v826 = vadd.f32 %v804, %v810
          %v827 = vadd.f32 %v805, %v811
          %vm828 = vcmp.ge.f32.partialorder %v812, 0.0
          %vm829 = vcmp.ge.f32.partialorder %v813, 0.0
          %vm830 = vcmp.ge.f32.partialorder %v814, 0.0
          %vm831 = vcmp.ge.f32.partialorder %v815, 0.0
          %vm832 = vcmp.ge.f32.partialorder %v816, 0.0
          %vm833 = vcmp.ge.f32.partialorder %v817, 0.0
          %vm834 = vcmp.ge.f32.partialorder %v818, 0.0
          %vm835 = vcmp.ge.f32.partialorder %v819, 0.0
          %vm836 = vcmp.ge.f32.partialorder %v820, 0.0
          %vm837 = vcmp.ge.f32.partialorder %v821, 0.0
          %vm838 = vcmp.ge.f32.partialorder %v822, 0.0
          %vm839 = vcmp.ge.f32.partialorder %v823, 0.0
          %vm840 = vcmp.ge.f32.partialorder %v824, 0.0
          %vm841 = vcmp.ge.f32.partialorder %v825, 0.0
          %vm842 = vcmp.ge.f32.partialorder %v826, 0.0
          %vm843 = vcmp.ge.f32.partialorder %v827, 0.0
          %v844 = vmul.f32 %v812, 0.01
          %v845 = vmul.f32 %v813, 0.01
          %v846 = vmul.f32 %v814, 0.01
          %v847 = vmul.f32 %v815, 0.01
          %v848 = vmul.f32 %v816, 0.01
          %v849 = vmul.f32 %v817, 0.01
          %v850 = vmul.f32 %v818, 0.01
          %v851 = vmul.f32 %v819, 0.01
          %v852 = vmul.f32 %v820, 0.01
          %v853 = vmul.f32 %v821, 0.01
          %v854 = vmul.f32 %v822, 0.01
          %v855 = vmul.f32 %v823, 0.01
          %v856 = vmul.f32 %v824, 0.01
          %v857 = vmul.f32 %v825, 0.01
          %v858 = vmul.f32 %v826, 0.01
          %v859 = vmul.f32 %v827, 0.01
          %v860 = vsel %vm828, %v812, %v844
          %v861 = vsel %vm829, %v813, %v845
          %v862 = vsel %vm830, %v814, %v846
          %v863 = vsel %vm831, %v815, %v847
          %v864 = vsel %vm832, %v816, %v848
          %v865 = vsel %vm833, %v817, %v849
          %v866 = vsel %vm834, %v818, %v850
          %v867 = vsel %vm835, %v819, %v851
          %v868 = vsel %vm836, %v820, %v852
          %v869 = vsel %vm837, %v821, %v853
          %v870 = vsel %vm838, %v822, %v854
          %v871 = vsel %vm839, %v823, %v855
          %v872 = vsel %vm840, %v824, %v856
          %v873 = vsel %vm841, %v825, %v857
          %v874 = vsel %vm842, %v826, %v858
          %v875 = vsel %vm843, %v827, %v859
          %876 = vst [vmem:[%s335] sm:$0xff] %v860
          %877 = vst [vmem:[%s335 + $0x8] sm:$0xff] %v861
          %878 = vst [vmem:[%s335 + $0x10] sm:$0xff] %v862
          %879 = vst [vmem:[%s335 + $0x18] sm:$0xff] %v863
          %880 = vst [vmem:[%s335 + $0x20] sm:$0xff] %v864
          %881 = vst [vmem:[%s335 + $0x28] sm:$0xff] %v865
          %882 = vst [vmem:[%s335 + $0x30] sm:$0xff] %v866
          %883 = vst [vmem:[%s335 + $0x38] sm:$0xff] %v867
          %884 = vst [vmem:[%s335 + $0x40] sm:$0xff] %v868
          %885 = vst [vmem:[%s335 + $0x48] sm:$0xff] %v869
          %886 = vst [vmem:[%s335 + $0x50] sm:$0xff] %v870
          %887 = vst [vmem:[%s335 + $0x58] sm:$0xff] %v871
          %888 = vst [vmem:[%s335 + $0x60] sm:$0xff] %v872
          %889 = vst [vmem:[%s335 + $0x68] sm:$0xff] %v873
          %890 = vst [vmem:[%s335 + $0x70] sm:$0xff] %v874
          %891 = vst [vmem:[%s335 + $0x78] sm:$0xff] %v875
        $region78: #{generator_forward.22} parent=65 // pred_fallthru
          _
        %s892 = smul.u32 8, %s19
        %s893 = smul.u32 2, %s20
        %p894 = scmp.lt.s32.totalorder %s892, 7
        %s895 = scalar_select %p894, %s892, 7
        %p896 = scmp.lt.s32.totalorder %s893, 1
        %s897 = scalar_select %p896, %s893, 1
        %s898 = smul.addr %s895, 2
        %s899 = sadd.s32 %s897, %s898
        %s900 = smul.addr %s899, 8
        %s901 = scalar_lea.vmem %s3, %s900
        // Predicated region
        $region79: #{generator_forward.22} parent=65 // pred_check
          %p902 = pneg %p135
        $region80: #{generator_forward.22} parent=65 // pred_check_branch
          %904 = sbr.rel (%p902) target = $region82
        $region81: #{generator_forward.22} parent=65 // pred_region
          %s905 = smul.u32 8, %s19
          %s906 = smul.u32 2, %s20
        $region82: #{generator_forward.22} parent=65 // pred_fallthru
          _
        // Predicated region
        $region83: #{generator_forward.22} parent=65 // pred_check
          %p907 = pneg %p135
        $region84: #{generator_forward.22} parent=65 // pred_check_branch
          %909 = sbr.rel (%p907) target = $region86
        $region85: #{generator_forward.22} parent=65 // pred_region
          %s910 = smul.u32 8, %s19
          %s911 = smul.u32 2, %s20
          %p912 = scmp.lt.s32.totalorder %s910, 7
          %s913 = scalar_select %p912, %s910, 7
          %p914 = scmp.lt.s32.totalorder %s911, 1
          %s915 = scalar_select %p914, %s911, 1
          %s916 = smul.addr %s913, 2
          %s917 = sadd.s32 %s915, %s916
          %s918 = smul.addr %s917, 8
          %s919 = scalar_lea.vmem %s3, %s918
        $region86: #{generator_forward.22} parent=65 // pred_fallthru
          _
      $region66: #{generator_forward.22} parent=5 // pred_fallthru
        _
      %p920 = scmp.le.s32.totalorder 2, %s9
      // Predicated region
      $region87: #{generator_forward.22} parent=5 // pred_check
        %p921 = pneg %p920
      $region88: #{generator_forward.22} parent=5 // pred_check_branch
        %923 = sbr.rel (%p921) target = $region90
      $region89: #{generator_forward.22} parent=5 // pred_region
        %s924 = ssub.s32 %s9, 2
      $region90: #{generator_forward.22} parent=5 // pred_fallthru
        _
    $region6: #{generator_forward.22} parent=1 // loop_footer
      %s13 = sadd.s32 1, %s9
    $region7: #{generator_forward.22} parent=1 // loop_footer_branch
      %8 = sbr.rel target = $region3
    $region8: #{generator_forward.22} parent=1 // loop_exit
      _

// kernel: generator_forward.24
$region0: #{generator_forward.24}
  #allocation0 [shape = 'u32[]', space=smem, size = 0x4, offset = 0x4, fixed_abs, tag = 'smem constant byte address 0x4 - core index']
  #allocation1 [shape = 'u32[72,128]{1,0:T(1,128)}', space=vmem, size = 0x9000, scoped, tag = 'internal scratch']
  %s0 = inlined_call_operand.vmem [shape: f32[64,256], index: 0, kind: input, shape index: {}]
  %s1 = inlined_call_operand.vmem [shape: f32[256,256], index: 1, kind: input, shape index: {}]
  %s2 = inlined_call_operand.vmem [shape: f32[1,256], index: 2, kind: input, shape index: {}]
  %s3 = inlined_call_operand.vmem [shape: f32[64,256], index: 3, kind: output, shape index: {}]
  %s4 = sld [smem:[#allocation0]]
  $region22: #{generator_forward.24} parent=0
    _
  %s6 = ssub.s32 1, %s4
  %s7 = scalar_select 0, %s6, %s4
  // Predicated region
  $region2: #{generator_forward.24} parent=0 // pred_check
    _
  $region3: #{generator_forward.24} parent=0 // pred_check_branch
    %9 = sbr.rel (0) target = $region5
  $region4: #{generator_forward.24} parent=0 // pred_region
    _
  $region5: #{generator_forward.24} parent=0 // pred_fallthru
    _
  // Predicated region
  $region6: #{generator_forward.24} parent=0 // pred_check
    _
  $region7: #{generator_forward.24} parent=0 // pred_check_branch
    %11 = sbr.rel (0) target = $region9
  $region8: #{generator_forward.24} parent=0 // pred_region
    _
  $region9: #{generator_forward.24} parent=0 // pred_fallthru
    _
  // Predicated region
  $region10: #{generator_forward.24} parent=0 // pred_check
    _
  $region11: #{generator_forward.24} parent=0 // pred_check_branch
    %13 = sbr.rel (0) target = $region13
  $region12: #{generator_forward.24} parent=0 // pred_region
    _
  $region13: #{generator_forward.24} parent=0 // pred_fallthru
    _
  %v14 = vld [vmem:[%s0] sm:$0xff]
  %v15 = vld [vmem:[%s0 + $0x8] sm:$0xff]
  %v16 = vld [vmem:[%s0 + $0x10] sm:$0xff]
  %v17 = vld [vmem:[%s0 + $0x18] sm:$0xff]
  %v18 = vld [vmem:[%s0 + $0x20] sm:$0xff]
  %v19 = vld [vmem:[%s0 + $0x28] sm:$0xff]
  %v20 = vld [vmem:[%s0 + $0x30] sm:$0xff]
  %v21 = vld [vmem:[%s0 + $0x38] sm:$0xff]
  %v22 = vld [vmem:[%s0 + $0x40] sm:$0xff]
  %v23 = vld [vmem:[%s0 + $0x48] sm:$0xff]
  %v24 = vld [vmem:[%s0 + $0x50] sm:$0xff]
  %v25 = vld [vmem:[%s0 + $0x58] sm:$0xff]
  %v26 = vld [vmem:[%s0 + $0x60] sm:$0xff]
  %v27 = vld [vmem:[%s0 + $0x68] sm:$0xff]
  %v28 = vld [vmem:[%s0 + $0x70] sm:$0xff]
  %v29 = vld [vmem:[%s0 + $0x78] sm:$0xff]
  %v30 = vmul.f32 %v14, %v14
  %v31 = vmul.f32 %v15, %v15
  %v32 = vmul.f32 %v16, %v16
  %v33 = vmul.f32 %v17, %v17
  %v34 = vmul.f32 %v18, %v18
  %v35 = vmul.f32 %v19, %v19
  %v36 = vmul.f32 %v20, %v20
  %v37 = vmul.f32 %v21, %v21
  %v38 = vmul.f32 %v22, %v22
  %v39 = vmul.f32 %v23, %v23
  %v40 = vmul.f32 %v24, %v24
  %v41 = vmul.f32 %v25, %v25
  %v42 = vmul.f32 %v26, %v26
  %v43 = vmul.f32 %v27, %v27
  %v44 = vmul.f32 %v28, %v28
  %v45 = vmul.f32 %v29, %v29
  %v46 = vld [vmem:[%s1] sm:$0xff]
  %v47 = vld [vmem:[%s1 + $0x8] sm:$0xff]
  %v48 = vld [vmem:[%s1 + $0x10] sm:$0xff]
  %v49 = vld [vmem:[%s1 + $0x18] sm:$0xff]
  %v50 = vld [vmem:[%s1 + $0x20] sm:$0xff]
  %v51 = vld [vmem:[%s1 + $0x28] sm:$0xff]
  %v52 = vld [vmem:[%s1 + $0x30] sm:$0xff]
  %v53 = vld [vmem:[%s1 + $0x38] sm:$0xff]
  %v54 = vld [vmem:[%s1 + $0x40] sm:$0xff]
  %v55 = vld [vmem:[%s1 + $0x48] sm:$0xff]
  %v56 = vld [vmem:[%s1 + $0x50] sm:$0xff]
  %v57 = vld [vmem:[%s1 + $0x58] sm:$0xff]
  %v58 = vld [vmem:[%s1 + $0x60] sm:$0xff]
  %v59 = vld [vmem:[%s1 + $0x68] sm:$0xff]
  %v60 = vld [vmem:[%s1 + $0x70] sm:$0xff]
  %v61 = vld [vmem:[%s1 + $0x78] sm:$0xff]
  %v62 = vld [vmem:[%s1 + $0x80] sm:$0xff]
  %v63 = vld [vmem:[%s1 + $0x88] sm:$0xff]
  %v64 = vld [vmem:[%s1 + $0x90] sm:$0xff]
  %v65 = vld [vmem:[%s1 + $0x98] sm:$0xff]
  %v66 = vld [vmem:[%s1 + $0xa0] sm:$0xff]
  %v67 = vld [vmem:[%s1 + $0xa8] sm:$0xff]
  %v68 = vld [vmem:[%s1 + $0xb0] sm:$0xff]
  %v69 = vld [vmem:[%s1 + $0xb8] sm:$0xff]
  %v70 = vld [vmem:[%s1 + $0xc0] sm:$0xff]
  %v71 = vld [vmem:[%s1 + $0xc8] sm:$0xff]
  %v72 = vld [vmem:[%s1 + $0xd0] sm:$0xff]
  %v73 = vld [vmem:[%s1 + $0xd8] sm:$0xff]
  %v74 = vld [vmem:[%s1 + $0xe0] sm:$0xff]
  %v75 = vld [vmem:[%s1 + $0xe8] sm:$0xff]
  %v76 = vld [vmem:[%s1 + $0xf0] sm:$0xff]
  %v77 = vld [vmem:[%s1 + $0xf8] sm:$0xff]
  %v78 = vld [vmem:[%s1 + $0x100] sm:$0xff]
  %v79 = vld [vmem:[%s1 + $0x108] sm:$0xff]
  %v80 = vld [vmem:[%s1 + $0x110] sm:$0xff]
  %v81 = vld [vmem:[%s1 + $0x118] sm:$0xff]
  %v82 = vld [vmem:[%s1 + $0x120] sm:$0xff]
  %v83 = vld [vmem:[%s1 + $0x128] sm:$0xff]
  %v84 = vld [vmem:[%s1 + $0x130] sm:$0xff]
  %v85 = vld [vmem:[%s1 + $0x138] sm:$0xff]
  %v86 = vld [vmem:[%s1 + $0x140] sm:$0xff]
  %v87 = vld [vmem:[%s1 + $0x148] sm:$0xff]
  %v88 = vld [vmem:[%s1 + $0x150] sm:$0xff]
  %v89 = vld [vmem:[%s1 + $0x158] sm:$0xff]
  %v90 = vld [vmem:[%s1 + $0x160] sm:$0xff]
  %v91 = vld [vmem:[%s1 + $0x168] sm:$0xff]
  %v92 = vld [vmem:[%s1 + $0x170] sm:$0xff]
  %v93 = vld [vmem:[%s1 + $0x178] sm:$0xff]
  %v94 = vld [vmem:[%s1 + $0x180] sm:$0xff]
  %v95 = vld [vmem:[%s1 + $0x188] sm:$0xff]
  %v96 = vld [vmem:[%s1 + $0x190] sm:$0xff]
  %v97 = vld [vmem:[%s1 + $0x198] sm:$0xff]
  %v98 = vld [vmem:[%s1 + $0x1a0] sm:$0xff]
  %v99 = vld [vmem:[%s1 + $0x1a8] sm:$0xff]
  %v100 = vld [vmem:[%s1 + $0x1b0] sm:$0xff]
  %v101 = vld [vmem:[%s1 + $0x1b8] sm:$0xff]
  %v102 = vld [vmem:[%s1 + $0x1c0] sm:$0xff]
  %v103 = vld [vmem:[%s1 + $0x1c8] sm:$0xff]
  %v104 = vld [vmem:[%s1 + $0x1d0] sm:$0xff]
  %v105 = vld [vmem:[%s1 + $0x1d8] sm:$0xff]
  %v106 = vld [vmem:[%s1 + $0x1e0] sm:$0xff]
  %v107 = vld [vmem:[%s1 + $0x1e8] sm:$0xff]
  %v108 = vld [vmem:[%s1 + $0x1f0] sm:$0xff]
  %v109 = vld [vmem:[%s1 + $0x1f8] sm:$0xff]
  %v110 = vld [vmem:[%s2] sm:$0x3]
  %v112 = vperm.slane %v110, 0
  %v113 = vperm.slane %v110, 1
  %116 = vmatpush.msra.mxu0 %v76
  %117 = vmatpush.msra.mxu0 %v74
  %118 = vmatpush.msra.mxu0 %v72
  %119 = vmatpush.msra.mxu0 %v70
  %120 = vmatpush.msra.mxu0 %v68
  %121 = vmatpush.msra.mxu0 %v66
  %122 = vmatpush.msra.mxu0 %v64
  %123 = vmatpush.msra.mxu0 %v62
  %124 = vmatpush.msra.mxu0 %v60
  %125 = vmatpush.msra.mxu0 %v58
  %126 = vmatpush.msra.mxu0 %v56
  %127 = vmatpush.msra.mxu0 %v54
  %128 = vmatpush.msra.mxu0 %v52
  %129 = vmatpush.msra.mxu0 %v50
  %130 = vmatpush.msra.mxu0 %v48
  %131 = vmatpush.msra.mxu0 %v46
  %132 = vmatmul.f32.gmra.mxu0 %v30
  %v133 = vpop.f32.mrf.mxu0
  %v134 = vadd.f32 %v112, %v133
  %135 = vmatmul.f32.gmra.mxu0 %v32
  %v136 = vpop.f32.mrf.mxu0
  %v137 = vadd.f32 %v112, %v136
  %138 = vmatmul.f32.gmra.mxu0 %v34
  %v139 = vpop.f32.mrf.mxu0
  %v140 = vadd.f32 %v112, %v139
  %141 = vmatmul.f32.gmra.mxu0 %v36
  %v142 = vpop.f32.mrf.mxu0
  %v143 = vadd.f32 %v112, %v142
  %144 = vmatmul.f32.gmra.mxu0 %v38
  %v145 = vpop.f32.mrf.mxu0
  %v146 = vadd.f32 %v112, %v145
  %147 = vmatmul.f32.gmra.mxu0 %v40
  %v148 = vpop.f32.mrf.mxu0
  %v149 = vadd.f32 %v112, %v148
  %150 = vmatmul.f32.gmra.mxu0 %v42
  %v151 = vpop.f32.mrf.mxu0
  %v152 = vadd.f32 %v112, %v151
  %153 = vmatmul.f32.gmra.mxu0 %v44
  %v154 = vpop.f32.mrf.mxu0
  %v155 = vadd.f32 %v112, %v154
  %156 = vdwg.mxu0
  %157 = vmatpush.msra.mxu0 %v108
  %158 = vmatpush.msra.mxu0 %v106
  %159 = vmatpush.msra.mxu0 %v104
  %160 = vmatpush.msra.mxu0 %v102
  %161 = vmatpush.msra.mxu0 %v100
  %162 = vmatpush.msra.mxu0 %v98
  %163 = vmatpush.msra.mxu0 %v96
  %164 = vmatpush.msra.mxu0 %v94
  %165 = vmatpush.msra.mxu0 %v92
  %166 = vmatpush.msra.mxu0 %v90
  %167 = vmatpush.msra.mxu0 %v88
  %168 = vmatpush.msra.mxu0 %v86
  %169 = vmatpush.msra.mxu0 %v84
  %170 = vmatpush.msra.mxu0 %v82
  %171 = vmatpush.msra.mxu0 %v80
  %172 = vmatpush.msra.mxu0 %v78
  %173 = vmatmul.f32.gmra.mxu0 %v31
  %v174 = vpop.f32.mrf.mxu0
  %v175 = vadd.f32 %v134, %v174
  %176 = vmatmul.f32.gmra.mxu0 %v33
  %v177 = vpop.f32.mrf.mxu0
  %v178 = vadd.f32 %v137, %v177
  %179 = vmatmul.f32.gmra.mxu0 %v35
  %v180 = vpop.f32.mrf.mxu0
  %v181 = vadd.f32 %v140, %v180
  %182 = vmatmul.f32.gmra.mxu0 %v37
  %v183 = vpop.f32.mrf.mxu0
  %v184 = vadd.f32 %v143, %v183
  %185 = vmatmul.f32.gmra.mxu0 %v39
  %v186 = vpop.f32.mrf.mxu0
  %v187 = vadd.f32 %v146, %v186
  %188 = vmatmul.f32.gmra.mxu0 %v41
  %v189 = vpop.f32.mrf.mxu0
  %v190 = vadd.f32 %v149, %v189
  %191 = vmatmul.f32.gmra.mxu0 %v43
  %v192 = vpop.f32.mrf.mxu0
  %v193 = vadd.f32 %v152, %v192
  %194 = vmatmul.f32.gmra.mxu0 %v45
  %v195 = vpop.f32.mrf.mxu0
  %v196 = vadd.f32 %v155, %v195
  %197 = vdwg.mxu0
  %198 = vmatpush.msra.mxu0 %v77
  %199 = vmatpush.msra.mxu0 %v75
  %200 = vmatpush.msra.mxu0 %v73
  %201 = vmatpush.msra.mxu0 %v71
  %202 = vmatpush.msra.mxu0 %v69
  %203 = vmatpush.msra.mxu0 %v67
  %204 = vmatpush.msra.mxu0 %v65
  %205 = vmatpush.msra.mxu0 %v63
  %206 = vmatpush.msra.mxu0 %v61
  %207 = vmatpush.msra.mxu0 %v59
  %208 = vmatpush.msra.mxu0 %v57
  %209 = vmatpush.msra.mxu0 %v55
  %210 = vmatpush.msra.mxu0 %v53
  %211 = vmatpush.msra.mxu0 %v51
  %212 = vmatpush.msra.mxu0 %v49
  %213 = vmatpush.msra.mxu0 %v47
  %214 = vmatmul.f32.gmra.mxu0 %v30
  %v215 = vpop.f32.mrf.mxu0
  %v216 = vadd.f32 %v113, %v215
  %217 = vmatmul.f32.gmra.mxu0 %v32
  %v218 = vpop.f32.mrf.mxu0
  %v219 = vadd.f32 %v113, %v218
  %220 = vmatmul.f32.gmra.mxu0 %v34
  %v221 = vpop.f32.mrf.mxu0
  %v222 = vadd.f32 %v113, %v221
  %223 = vmatmul.f32.gmra.mxu0 %v36
  %v224 = vpop.f32.mrf.mxu0
  %v225 = vadd.f32 %v113, %v224
  %226 = vmatmul.f32.gmra.mxu0 %v38
  %v227 = vpop.f32.mrf.mxu0
  %v228 = vadd.f32 %v113, %v227
  %229 = vmatmul.f32.gmra.mxu0 %v40
  %v230 = vpop.f32.mrf.mxu0
  %v231 = vadd.f32 %v113, %v230
  %232 = vmatmul.f32.gmra.mxu0 %v42
  %v233 = vpop.f32.mrf.mxu0
  %v234 = vadd.f32 %v113, %v233
  %235 = vmatmul.f32.gmra.mxu0 %v44
  %v236 = vpop.f32.mrf.mxu0
  %v237 = vadd.f32 %v113, %v236
  %238 = vdwg.mxu0
  %239 = vmatpush.msra.mxu0 %v109
  %240 = vmatpush.msra.mxu0 %v107
  %241 = vmatpush.msra.mxu0 %v105
  %242 = vmatpush.msra.mxu0 %v103
  %243 = vmatpush.msra.mxu0 %v101
  %244 = vmatpush.msra.mxu0 %v99
  %245 = vmatpush.msra.mxu0 %v97
  %246 = vmatpush.msra.mxu0 %v95
  %247 = vmatpush.msra.mxu0 %v93
  %248 = vmatpush.msra.mxu0 %v91
  %249 = vmatpush.msra.mxu0 %v89
  %250 = vmatpush.msra.mxu0 %v87
  %251 = vmatpush.msra.mxu0 %v85
  %252 = vmatpush.msra.mxu0 %v83
  %253 = vmatpush.msra.mxu0 %v81
  %254 = vmatpush.msra.mxu0 %v79
  %255 = vmatmul.f32.gmra.mxu0 %v31
  %v256 = vpop.f32.mrf.mxu0
  %v257 = vadd.f32 %v216, %v256
  %258 = vmatmul.f32.gmra.mxu0 %v33
  %v259 = vpop.f32.mrf.mxu0
  %v260 = vadd.f32 %v219, %v259
  %261 = vmatmul.f32.gmra.mxu0 %v35
  %v262 = vpop.f32.mrf.mxu0
  %v263 = vadd.f32 %v222, %v262
  %264 = vmatmul.f32.gmra.mxu0 %v37
  %v265 = vpop.f32.mrf.mxu0
  %v266 = vadd.f32 %v225, %v265
  %267 = vmatmul.f32.gmra.mxu0 %v39
  %v268 = vpop.f32.mrf.mxu0
  %v269 = vadd.f32 %v228, %v268
  %270 = vmatmul.f32.gmra.mxu0 %v41
  %v271 = vpop.f32.mrf.mxu0
  %v272 = vadd.f32 %v231, %v271
  %273 = vmatmul.f32.gmra.mxu0 %v43
  %v274 = vpop.f32.mrf.mxu0
  %v275 = vadd.f32 %v234, %v274
  %276 = vmatmul.f32.gmra.mxu0 %v45
  %v277 = vpop.f32.mrf.mxu0
  %v278 = vadd.f32 %v237, %v277
  %279 = vdwg.mxu0
  %v280 = vrsqrt.pop %v175
  %v281 = vmul.f32 %v280, %v175
  %v282 = vmul.f32 %v281, %v280
  %v283 = vmul.f32 0.5, %v282
  %v284 = vsub.f32 1.5, %v283
  %v285 = vmul.f32 %v280, %v284
  %vm286 = vweird.f32 %v175
  %vm287 = vweird.f32 %v280
  %vm288 = vmor %vm286, %vm287
  %v289 = vsel %vm288, %v280, %v285
  %v290 = vrsqrt.pop %v257
  %v291 = vmul.f32 %v290, %v257
  %v292 = vmul.f32 %v291, %v290
  %v293 = vmul.f32 0.5, %v292
  %v294 = vsub.f32 1.5, %v293
  %v295 = vmul.f32 %v290, %v294
  %vm296 = vweird.f32 %v257
  %vm297 = vweird.f32 %v290
  %vm298 = vmor %vm296, %vm297
  %v299 = vsel %vm298, %v290, %v295
  %v300 = vrsqrt.pop %v178
  %v301 = vmul.f32 %v300, %v178
  %v302 = vmul.f32 %v301, %v300
  %v303 = vmul.f32 0.5, %v302
  %v304 = vsub.f32 1.5, %v303
  %v305 = vmul.f32 %v300, %v304
  %vm306 = vweird.f32 %v178
  %vm307 = vweird.f32 %v300
  %vm308 = vmor %vm306, %vm307
  %v309 = vsel %vm308, %v300, %v305
  %v310 = vrsqrt.pop %v260
  %v311 = vmul.f32 %v310, %v260
  %v312 = vmul.f32 %v311, %v310
  %v313 = vmul.f32 0.5, %v312
  %v314 = vsub.f32 1.5, %v313
  %v315 = vmul.f32 %v310, %v314
  %vm316 = vweird.f32 %v260
  %vm317 = vweird.f32 %v310
  %vm318 = vmor %vm316, %vm317
  %v319 = vsel %vm318, %v310, %v315
  %v320 = vrsqrt.pop %v181
  %v321 = vmul.f32 %v320, %v181
  %v322 = vmul.f32 %v321, %v320
  %v323 = vmul.f32 0.5, %v322
  %v324 = vsub.f32 1.5, %v323
  %v325 = vmul.f32 %v320, %v324
  %vm326 = vweird.f32 %v181
  %vm327 = vweird.f32 %v320
  %vm328 = vmor %vm326, %vm327
  %v329 = vsel %vm328, %v320, %v325
  %v330 = vrsqrt.pop %v263
  %v331 = vmul.f32 %v330, %v263
  %v332 = vmul.f32 %v331, %v330
  %v333 = vmul.f32 0.5, %v332
  %v334 = vsub.f32 1.5, %v333
  %v335 = vmul.f32 %v330, %v334
  %vm336 = vweird.f32 %v263
  %vm337 = vweird.f32 %v330
  %vm338 = vmor %vm336, %vm337
  %v339 = vsel %vm338, %v330, %v335
  %v340 = vrsqrt.pop %v184
  %v341 = vmul.f32 %v340, %v184
  %v342 = vmul.f32 %v341, %v340
  %v343 = vmul.f32 0.5, %v342
  %v344 = vsub.f32 1.5, %v343
  %v345 = vmul.f32 %v340, %v344
  %vm346 = vweird.f32 %v184
  %vm347 = vweird.f32 %v340
  %vm348 = vmor %vm346, %vm347
  %v349 = vsel %vm348, %v340, %v345
  %v350 = vrsqrt.pop %v266
  %v351 = vmul.f32 %v350, %v266
  %v352 = vmul.f32 %v351, %v350
  %v353 = vmul.f32 0.5, %v352
  %v354 = vsub.f32 1.5, %v353
  %v355 = vmul.f32 %v350, %v354
  %vm356 = vweird.f32 %v266
  %vm357 = vweird.f32 %v350
  %vm358 = vmor %vm356, %vm357
  %v359 = vsel %vm358, %v350, %v355
  %v360 = vrsqrt.pop %v187
  %v361 = vmul.f32 %v360, %v187
  %v362 = vmul.f32 %v361, %v360
  %v363 = vmul.f32 0.5, %v362
  %v364 = vsub.f32 1.5, %v363
  %v365 = vmul.f32 %v360, %v364
  %vm366 = vweird.f32 %v187
  %vm367 = vweird.f32 %v360
  %vm368 = vmor %vm366, %vm367
  %v369 = vsel %vm368, %v360, %v365
  %v370 = vrsqrt.pop %v269
  %v371 = vmul.f32 %v370, %v269
  %v372 = vmul.f32 %v371, %v370
  %v373 = vmul.f32 0.5, %v372
  %v374 = vsub.f32 1.5, %v373
  %v375 = vmul.f32 %v370, %v374
  %vm376 = vweird.f32 %v269
  %vm377 = vweird.f32 %v370
  %vm378 = vmor %vm376, %vm377
  %v379 = vsel %vm378, %v370, %v375
  %v380 = vrsqrt.pop %v190
  %v381 = vmul.f32 %v380, %v190
  %v382 = vmul.f32 %v381, %v380
  %v383 = vmul.f32 0.5, %v382
  %v384 = vsub.f32 1.5, %v383
  %v385 = vmul.f32 %v380, %v384
  %vm386 = vweird.f32 %v190
  %vm387 = vweird.f32 %v380
  %vm388 = vmor %vm386, %vm387
  %v389 = vsel %vm388, %v380, %v385
  %v390 = vrsqrt.pop %v272
  %v391 = vmul.f32 %v390, %v272
  %v392 = vmul.f32 %v391, %v390
  %v393 = vmul.f32 0.5, %v392
  %v394 = vsub.f32 1.5, %v393
  %v395 = vmul.f32 %v390, %v394
  %vm396 = vweird.f32 %v272
  %vm397 = vweird.f32 %v390
  %vm398 = vmor %vm396, %vm397
  %v399 = vsel %vm398, %v390, %v395
  %v400 = vrsqrt.pop %v193
  %v401 = vmul.f32 %v400, %v193
  %v402 = vmul.f32 %v401, %v400
  %v403 = vmul.f32 0.5, %v402
  %v404 = vsub.f32 1.5, %v403
  %v405 = vmul.f32 %v400, %v404
  %vm406 = vweird.f32 %v193
  %vm407 = vweird.f32 %v400
  %vm408 = vmor %vm406, %vm407
  %v409 = vsel %vm408, %v400, %v405
  %v410 = vrsqrt.pop %v275
  %v411 = vmul.f32 %v410, %v275
  %v412 = vmul.f32 %v411, %v410
  %v413 = vmul.f32 0.5, %v412
  %v414 = vsub.f32 1.5, %v413
  %v415 = vmul.f32 %v410, %v414
  %vm416 = vweird.f32 %v275
  %vm417 = vweird.f32 %v410
  %vm418 = vmor %vm416, %vm417
  %v419 = vsel %vm418, %v410, %v415
  %v420 = vrsqrt.pop %v196
  %v421 = vmul.f32 %v420, %v196
  %v422 = vmul.f32 %v421, %v420
  %v423 = vmul.f32 0.5, %v422
  %v424 = vsub.f32 1.5, %v423
  %v425 = vmul.f32 %v420, %v424
  %vm426 = vweird.f32 %v196
  %vm427 = vweird.f32 %v420
  %vm428 = vmor %vm426, %vm427
  %v429 = vsel %vm428, %v420, %v425
  %v430 = vrsqrt.pop %v278
  %v431 = vmul.f32 %v430, %v278
  %v432 = vmul.f32 %v431, %v430
  %v433 = vmul.f32 0.5, %v432
  %v434 = vsub.f32 1.5, %v433
  %v435 = vmul.f32 %v430, %v434
  %vm436 = vweird.f32 %v278
  %vm437 = vweird.f32 %v430
  %vm438 = vmor %vm436, %vm437
  %v439 = vsel %vm438, %v430, %v435
  %v440 = vmul.f32 %v14, %v289
  %v441 = vmul.f32 %v15, %v299
  %v442 = vmul.f32 %v16, %v309
  %v443 = vmul.f32 %v17, %v319
  %v444 = vmul.f32 %v18, %v329
  %v445 = vmul.f32 %v19, %v339
  %v446 = vmul.f32 %v20, %v349
  %v447 = vmul.f32 %v21, %v359
  %v448 = vmul.f32 %v22, %v369
  %v449 = vmul.f32 %v23, %v379
  %v450 = vmul.f32 %v24, %v389
  %v451 = vmul.f32 %v25, %v399
  %v452 = vmul.f32 %v26, %v409
  %v453 = vmul.f32 %v27, %v419
  %v454 = vmul.f32 %v28, %v429
  %v455 = vmul.f32 %v29, %v439
  %456 = vst [vmem:[%s3] sm:$0xff] %v440
  %457 = vst [vmem:[%s3 + $0x8] sm:$0xff] %v441
  %458 = vst [vmem:[%s3 + $0x10] sm:$0xff] %v442
  %459 = vst [vmem:[%s3 + $0x18] sm:$0xff] %v443
  %460 = vst [vmem:[%s3 + $0x20] sm:$0xff] %v444
  %461 = vst [vmem:[%s3 + $0x28] sm:$0xff] %v445
  %462 = vst [vmem:[%s3 + $0x30] sm:$0xff] %v446
  %463 = vst [vmem:[%s3 + $0x38] sm:$0xff] %v447
  %464 = vst [vmem:[%s3 + $0x40] sm:$0xff] %v448
  %465 = vst [vmem:[%s3 + $0x48] sm:$0xff] %v449
  %466 = vst [vmem:[%s3 + $0x50] sm:$0xff] %v450
  %467 = vst [vmem:[%s3 + $0x58] sm:$0xff] %v451
  %468 = vst [vmem:[%s3 + $0x60] sm:$0xff] %v452
  %469 = vst [vmem:[%s3 + $0x68] sm:$0xff] %v453
  %470 = vst [vmem:[%s3 + $0x70] sm:$0xff] %v454
  %471 = vst [vmem:[%s3 + $0x78] sm:$0xff] %v455
  // Predicated region
  $region14: #{generator_forward.24} parent=0 // pred_check
    _
  $region15: #{generator_forward.24} parent=0 // pred_check_branch
    %473 = sbr.rel (0) target = $region17
  $region16: #{generator_forward.24} parent=0 // pred_region
    _
  $region17: #{generator_forward.24} parent=0 // pred_fallthru
    _
  // Predicated region
  $region18: #{generator_forward.24} parent=0 // pred_check
    _
  $region19: #{generator_forward.24} parent=0 // pred_check_branch
    %475 = sbr.rel (0) target = $region21
  $region20: #{generator_forward.24} parent=0 // pred_region
    _
  $region21: #{generator_forward.24} parent=0 // pred_fallthru
    _

// kernel: generator_forward.23
$region0: #{generator_forward.23}
  #allocation0 [shape = 'u32[]', space=smem, size = 0x4, offset = 0x4, fixed_abs, tag = 'smem constant byte address 0x4 - core index']
  #allocation1 [shape = 'u32[72,128]{1,0:T(1,128)}', space=vmem, size = 0x9000, scoped, tag = 'internal scratch']
  %s0 = inlined_call_operand.vmem [shape: bf16[64,2304], index: 0, kind: input, shape index: {}]
  %s1 = inlined_call_operand.vmem [shape: bf16[2304,256], index: 1, kind: input, shape index: {}]
  %s2 = inlined_call_operand.vmem [shape: f32[2,256], index: 2, kind: input, shape index: {}]
  %s3 = inlined_call_operand.vmem [shape: f32[64,256], index: 3, kind: output, shape index: {}]
  %s4 = sld [smem:[#allocation0]]
  $region91: #{generator_forward.23} parent=0
    _
  %s6 = ssub.s32 1, %s4
  %s7 = scalar_select 0, %s6, %s4
  $region1: #{generator_forward.23} parent=0
    #allocation2 [shape = 'u8[65536]{0}', space=vmem, size = 0x10000, scoped, tag = 'input window, operand 0']
    loop: start=0, step=1, limit=11
    $region2: #{generator_forward.23} parent=1 // loop_pre_header
      _
    $region3: #{generator_forward.23} parent=1 // loop_header
      %s9 = sphi 0, %s13
      %p10 = scmp.ge.s32.totalorder %s9, 11
      %s16 = sphi 0, %s35
      %s17 = sphi 0, %s31
      %s18 = sphi 0, %s27
      %s19 = sphi 0, %s16
      %s20 = sphi 0, %s17
      %s21 = sphi 0, %s18
      %s22 = sphi 0, %s19
      %s23 = sphi 0, %s20
      %s24 = sphi 0, %s21
      %s40 = sphi 0, %s42
      %s43 = sphi 0, %s40
      %s44 = sphi 0, %s43
      %s60 = sphi 0, %s44
      %s68 = sphi 0, %s70
      %s71 = sphi 0, %s68
      %s72 = sphi 0, %s71
      %s88 = sphi 0, %s72
      %s94 = sphi 0, %s96
      %s97 = sphi 0, %s94
      %s98 = sphi 0, %s97
      %s114 = sphi 0, %s98
      %s122 = sphi 0, %s124
      %s125 = sphi 0, %s122
      %s126 = sphi 0, %s125
      %s142 = sphi 0, %s126
    $region4: #{generator_forward.23} parent=1 // loop_header_branch
      %12 = sbr.rel (%p10) target = $region8
    $region5: #{generator_forward.23} parent=1 // loop_body
      %s14 = ssub.s32 %s9, 1
      %s15 = ssub.s32 %s9, 2
      %s25 = sadd.s32 1, %s18
      %p26 = scmp.ge.s32.totalorder %s25, 9
      %s27 = scalar_select %p26, 0, %s25
      %s28 = sadd.s32 1, %s17
      %s29 = scalar_select %p26, %s28, %s17
      %p30 = scmp.ge.s32.totalorder %s29, 1
      %s31 = scalar_select %p30, 0, %s29
      %s32 = sadd.s32 1, %s16
      %s33 = scalar_select %p30, %s32, %s16
      %p34 = scmp.ge.s32.totalorder %s33, 1
      %s35 = scalar_select %p34, 0, %s33
      %s36 = ssub.s32 %s16, %s35
      %s37 = ssub.s32 %s18, %s27
      %s38 = sor.u32 %s36, %s37
      %p39 = scmp.eq.s32.totalorder %s38, 0
      %s41 = sadd.s32 %s40, 1
      %s42 = scalar_select %p39, %s40, %s41
      %p45 = pneg %p39
      %p46 = scmp.eq.s32.totalorder %s9, 8
      %p47 = por %p45, %p46
      %p48 = scmp.ne.s32.totalorder %s40, %s43
      %p49 = scmp.eq.s32.totalorder %s9, 0
      %p50 = por %p48, %p49
      %p51 = scmp.ne.s32.totalorder %s40, %s43
      %p52 = scmp.eq.s32.totalorder %s14, 8
      %p53 = por %p51, %p52
      %p54 = scmp.ne.s32.totalorder %s43, %s44
      %p55 = scmp.eq.s32.totalorder %s14, 0
      %p56 = por %p54, %p55
      %p57 = scmp.ne.s32.totalorder %s43, %s44
      %p58 = scmp.eq.s32.totalorder %s15, 8
      %p59 = por %p57, %p58
      %p61 = scmp.ne.s32.totalorder %s44, %s60
      %p62 = scmp.eq.s32.totalorder %s15, 0
      %p63 = por %p61, %p62
      %s64 = ssub.s32 %s18, %s27
      %s65 = ssub.s32 %s17, %s31
      %s66 = sor.u32 %s64, %s65
      %p67 = scmp.eq.s32.totalorder %s66, 0
      %s69 = sadd.s32 %s68, 1
      %s70 = scalar_select %p67, %s68, %s69
      %p73 = pneg %p67
      %p74 = scmp.eq.s32.totalorder %s9, 8
      %p75 = por %p73, %p74
      %p76 = scmp.ne.s32.totalorder %s68, %s71
      %p77 = scmp.eq.s32.totalorder %s9, 0
      %p78 = por %p76, %p77
      %p79 = scmp.ne.s32.totalorder %s68, %s71
      %p80 = scmp.eq.s32.totalorder %s14, 8
      %p81 = por %p79, %p80
      %p82 = scmp.ne.s32.totalorder %s71, %s72
      %p83 = scmp.eq.s32.totalorder %s14, 0
      %p84 = por %p82, %p83
      %p85 = scmp.ne.s32.totalorder %s71, %s72
      %p86 = scmp.eq.s32.totalorder %s15, 8
      %p87 = por %p85, %p86
      %p89 = scmp.ne.s32.totalorder %s72, %s88
      %p90 = scmp.eq.s32.totalorder %s15, 0
      %p91 = por %p89, %p90
      %s92 = ssub.s32 %s17, %s31
      %p93 = scmp.eq.s32.totalorder %s92, 0
      %s95 = sadd.s32 %s94, 1
      %s96 = scalar_select %p93, %s94, %s95
      %p99 = pneg %p93
      %p100 = scmp.eq.s32.totalorder %s9, 8
      %p101 = por %p99, %p100
      %p102 = scmp.ne.s32.totalorder %s94, %s97
      %p103 = scmp.eq.s32.totalorder %s9, 0
      %p104 = por %p102, %p103
      %p105 = scmp.ne.s32.totalorder %s94, %s97
      %p106 = scmp.eq.s32.totalorder %s14, 8
      %p107 = por %p105, %p106
      %p108 = scmp.ne.s32.totalorder %s97, %s98
      %p109 = scmp.eq.s32.totalorder %s14, 0
      %p110 = por %p108, %p109
      %p111 = scmp.ne.s32.totalorder %s97, %s98
      %p112 = scmp.eq.s32.totalorder %s15, 8
      %p113 = por %p111, %p112
      %p115 = scmp.ne.s32.totalorder %s98, %s114
      %p116 = scmp.eq.s32.totalorder %s15, 0
      %p117 = por %p115, %p116
      %s118 = ssub.s32 %s16, %s35
      %s119 = ssub.s32 %s17, %s31
      %s120 = sor.u32 %s118, %s119
      %p121 = scmp.eq.s32.totalorder %s120, 0
      %s123 = sadd.s32 %s122, 1
      %s124 = scalar_select %p121, %s122, %s123
      %p127 = pneg %p121
      %p128 = scmp.eq.s32.totalorder %s9, 8
      %p129 = por %p127, %p128
      %p130 = scmp.ne.s32.totalorder %s122, %s125
      %p131 = scmp.eq.s32.totalorder %s9, 0
      %p132 = por %p130, %p131
      %p133 = scmp.ne.s32.totalorder %s122, %s125
      %p134 = scmp.eq.s32.totalorder %s14, 8
      %p135 = por %p133, %p134
      %p136 = scmp.ne.s32.totalorder %s125, %s126
      %p137 = scmp.eq.s32.totalorder %s14, 0
      %p138 = por %p136, %p137
      %p139 = scmp.ne.s32.totalorder %s125, %s126
      %p140 = scmp.eq.s32.totalorder %s15, 8
      %p141 = por %p139, %p140
      %p143 = scmp.ne.s32.totalorder %s126, %s142
      %p144 = scmp.eq.s32.totalorder %s15, 0
      %p145 = por %p143, %p144
      %p146 = scmp.le.s32.totalorder 1, %s9
      %p147 = scmp.lt.s32.totalorder %s9, 10
      %p148 = pnand %p146, %p147
      %p149 = pneg %p148
      // Predicated region
      $region9: #{generator_forward.23} parent=5 // pred_check
        _
      $region10: #{generator_forward.23} parent=5 // pred_check_branch
        %151 = sbr.rel (%p148) target = $region12
      $region11: #{generator_forward.23} parent=5 // pred_region
        %s152 = ssub.s32 %s9, 1
        // Predicated region
        $region13: #{generator_forward.23} parent=11 // pred_check
          %p153 = pneg %p110
        $region14: #{generator_forward.23} parent=11 // pred_check_branch
          %155 = sbr.rel (%p153) target = $region16
        $region15: #{generator_forward.23} parent=11 // pred_region
          %s156 = smul.u32 2, %s20
          %p157 = scmp.lt.s32.totalorder %s156, 1
          %s158 = scalar_select %p157, %s156, 1
          %s159 = smul.addr %s158, 2
          %s160 = scalar_lea.vmem %s2, %s159
          %s161 = smul.u32 2, %s20
        $region16: #{generator_forward.23} parent=11 // pred_fallthru
          _
      $region12: #{generator_forward.23} parent=5 // pred_fallthru
        _
      %p162 = scmp.lt.s32.totalorder %s9, 9
      // Predicated region
      $region17: #{generator_forward.23} parent=5 // pred_check
        %p163 = pneg %p162
      $region18: #{generator_forward.23} parent=5 // pred_check_branch
        %165 = sbr.rel (%p163) target = $region20
      $region19: #{generator_forward.23} parent=5 // pred_region
        // Predicated region
        $region21: #{generator_forward.23} parent=19 // pred_check
          %p166 = pneg %p50
        $region22: #{generator_forward.23} parent=19 // pred_check_branch
          %168 = sbr.rel (%p166) target = $region24
        $region23: #{generator_forward.23} parent=19 // pred_region
          %s169 = sand.u32 %s40, 1
          %s170 = sand.u32 %s40, 1
          %s171 = smul.addr %s170, 64
          %s172 = scalar_lea.vmem [#allocation2], %s171
          %s173 = smul.u32 8, %s16
          %s174 = smul.u32 2, %s18
          %s175 = smul.addr %s173, 18
          %s176 = sadd.s32 %s174, %s175
          %s177 = smul.addr %s176, 4
          %s178 = scalar_lea.vmem %s0, %s177
          // Predicated region
          $region25: #{generator_forward.23} parent=23 // pred_check
            _
          $region26: #{generator_forward.23} parent=23 // pred_check_branch
            %180 = sbr.rel (0) target = $region28
          $region27: #{generator_forward.23} parent=23 // pred_region
            // Predicated region
            $region29: #{generator_forward.23} parent=27 // pred_check
              _
            $region30: #{generator_forward.23} parent=27 // pred_check_branch
              %182 = sbr.rel (0) target = $region32
            $region31: #{generator_forward.23} parent=27 // pred_region
              // Predicated region
              $region44: #{generator_forward.23} parent=31 // pred_check
                _
              $region45: #{generator_forward.23} parent=31 // pred_check_branch
                %212 = sbr.rel (0) target = $region47
              $region46: #{generator_forward.23} parent=31 // pred_region
                loop: start=0, step=1, limit=1
                $region48: #{generator_forward.23} parent=46 // loop_pre_header
                  _
                $region49: #{generator_forward.23} parent=46 // loop_header
                  %s214 = sphi 0, %s218
                  %p215 = scmp.ge.s32.totalorder %s214, 1
                  %s219 = sphi %s178, %s178
                  %s220 = sphi %s172, %s172
                $region50: #{generator_forward.23} parent=46 // loop_header_branch
                  %217 = sbr.rel (%p215) target = $region54
                $region51: #{generator_forward.23} parent=46 // loop_body
                  %v221 = vld [vmem:[%s219] sm:$0xff]
                  %222 = vst [vmem:[%s220] sm:$0xff] %v221
                  %v223 = vld [vmem:[%s219 + $0x48] sm:$0xff]
                  %224 = vst [vmem:[%s220 + $0x8] sm:$0xff] %v223
                  %v225 = vld [vmem:[%s219 + $0x90] sm:$0xff]
                  %226 = vst [vmem:[%s220 + $0x10] sm:$0xff] %v225
                  %v227 = vld [vmem:[%s219 + $0xd8] sm:$0xff]
                  %228 = vst [vmem:[%s220 + $0x18] sm:$0xff] %v227
                  %v229 = vld [vmem:[%s219 + $0x120] sm:$0xff]
                  %230 = vst [vmem:[%s220 + $0x20] sm:$0xff] %v229
                  %v231 = vld [vmem:[%s219 + $0x168] sm:$0xff]
                  %232 = vst [vmem:[%s220 + $0x28] sm:$0xff] %v231
                  %v233 = vld [vmem:[%s219 + $0x1b0] sm:$0xff]
                  %234 = vst [vmem:[%s220 + $0x30] sm:$0xff] %v233
                  %v235 = vld [vmem:[%s219 + $0x1f8] sm:$0xff]
                  %236 = vst [vmem:[%s220 + $0x38] sm:$0xff] %v235
                $region52: #{generator_forward.23} parent=46 // loop_footer
                  %s218 = sadd.s32 1, %s214
                $region53: #{generator_forward.23} parent=46 // loop_footer_branch
                  %213 = sbr.rel target = $region49
                $region54: #{generator_forward.23} parent=46 // loop_exit
                  _
              $region47: #{generator_forward.23} parent=31 // pred_fallthru
                _
              // Predicated region
              $region55: #{generator_forward.23} parent=31 // pred_check
                _
              $region56: #{generator_forward.23} parent=31 // pred_check_branch
                %238 = sbr.rel target = $region58
              $region57: #{generator_forward.23} parent=31 // pred_region
                _
              $region58: #{generator_forward.23} parent=31 // pred_fallthru
                _
            $region32: #{generator_forward.23} parent=27 // pred_fallthru
              _
            // Predicated region
            $region33: #{generator_forward.23} parent=27 // pred_check
              _
            $region34: #{generator_forward.23} parent=27 // pred_check_branch
              %184 = sbr.rel target = $region36
            $region35: #{generator_forward.23} parent=27 // pred_region
              %s186 = ssub.s32 256, 1
              loop: start=0, step=1, limit=1
              $region37: #{generator_forward.23} parent=35 // loop_pre_header
                _
              $region38: #{generator_forward.23} parent=35 // loop_header
                %s188 = sphi 0, %s192
                %p189 = scmp.ge.s32.totalorder %s188, 1
                %s193 = sphi %s178, %s178
                %s194 = sphi %s172, %s172
              $region39: #{generator_forward.23} parent=35 // loop_header_branch
                %191 = sbr.rel (%p189) target = $region43
              $region40: #{generator_forward.23} parent=35 // loop_body
                %v195 = vld [vmem:[%s193] sm:%s186]
                %196 = vst [vmem:[%s194] sm:%s186] %v195
                %v197 = vld [vmem:[%s193 + $0x48] sm:%s186]
                %198 = vst [vmem:[%s194 + $0x8] sm:%s186] %v197
                %v199 = vld [vmem:[%s193 + $0x90] sm:%s186]
                %200 = vst [vmem:[%s194 + $0x10] sm:%s186] %v199
                %v201 = vld [vmem:[%s193 + $0xd8] sm:%s186]
                %202 = vst [vmem:[%s194 + $0x18] sm:%s186] %v201
                %v203 = vld [vmem:[%s193 + $0x120] sm:%s186]
                %204 = vst [vmem:[%s194 + $0x20] sm:%s186] %v203
                %v205 = vld [vmem:[%s193 + $0x168] sm:%s186]
                %206 = vst [vmem:[%s194 + $0x28] sm:%s186] %v205
                %v207 = vld [vmem:[%s193 + $0x1b0] sm:%s186]
                %208 = vst [vmem:[%s194 + $0x30] sm:%s186] %v207
                %v209 = vld [vmem:[%s193 + $0x1f8] sm:%s186]
                %210 = vst [vmem:[%s194 + $0x38] sm:%s186] %v209
              $region41: #{generator_forward.23} parent=35 // loop_footer
                %s192 = sadd.s32 1, %s188
              $region42: #{generator_forward.23} parent=35 // loop_footer_branch
                %187 = sbr.rel target = $region38
              $region43: #{generator_forward.23} parent=35 // loop_exit
                _
            $region36: #{generator_forward.23} parent=27 // pred_fallthru
              _
          $region28: #{generator_forward.23} parent=23 // pred_fallthru
            _
          %239 = vnop
        $region24: #{generator_forward.23} parent=19 // pred_fallthru
          _
        // Predicated region
        $region59: #{generator_forward.23} parent=19 // pred_check
          %p240 = pneg %p78
        $region60: #{generator_forward.23} parent=19 // pred_check_branch
          %242 = sbr.rel (%p240) target = $region62
        $region61: #{generator_forward.23} parent=19 // pred_region
          %s243 = smul.u32 32, %s18
          %s244 = smul.u32 2, %s17
          %p245 = scmp.lt.s32.totalorder %s243, 287
          %s246 = scalar_select %p245, %s243, 287
          %p247 = scmp.lt.s32.totalorder %s244, 1
          %s248 = scalar_select %p247, %s244, 1
          %s249 = smul.addr %s246, 2
          %s250 = sadd.s32 %s248, %s249
          %s251 = smul.addr %s250, 4
          %s252 = scalar_lea.vmem %s1, %s251
          %s253 = smul.u32 32, %s18
          %s254 = smul.u32 2, %s17
        $region62: #{generator_forward.23} parent=19 // pred_fallthru
          _
      $region20: #{generator_forward.23} parent=5 // pred_fallthru
        _
      %p255 = scmp.le.s32.totalorder 1, %s9
      %p256 = scmp.lt.s32.totalorder %s9, 10
      %p257 = pnand %p255, %p256
      %p258 = pneg %p257
      // Predicated region
      $region63: #{generator_forward.23} parent=5 // pred_check
        _
      $region64: #{generator_forward.23} parent=5 // pred_check_branch
        %260 = sbr.rel (%p257) target = $region66
      $region65: #{generator_forward.23} parent=5 // pred_region
        %s261 = ssub.s32 %s9, 1
        %s262 = sand.u32 %s43, 1
        %s263 = sand.u32 %s43, 1
        %s264 = smul.addr %s263, 64
        %s265 = scalar_lea.vmem [#allocation2], %s264
        // Predicated region
        $region67: #{generator_forward.23} parent=65 // pred_check
          %p266 = pneg %p56
        $region68: #{generator_forward.23} parent=65 // pred_check_branch
          %268 = sbr.rel (%p266) target = $region70
        $region69: #{generator_forward.23} parent=65 // pred_region
          _
        $region70: #{generator_forward.23} parent=65 // pred_fallthru
          _
        %s269 = sand.u32 %s43, 1
        %s270 = sand.u32 %s43, 1
        %s271 = smul.addr %s270, 64
        %s272 = scalar_lea.vmem [#allocation2], %s271
        %p273 = pneg %p56
        %p274 = pneg %p53
        %s275 = smul.u32 32, %s21
        %s276 = smul.u32 2, %s20
        %p277 = scmp.lt.s32.totalorder %s275, 287
        %s278 = scalar_select %p277, %s275, 287
        %p279 = scmp.lt.s32.totalorder %s276, 1
        %s280 = scalar_select %p279, %s276, 1
        %s281 = smul.addr %s278, 2
        %s282 = sadd.s32 %s280, %s281
        %s283 = smul.addr %s282, 4
        %s284 = scalar_lea.vmem %s1, %s283
        %p285 = pneg %p84
        %p286 = pneg %p81
        %s287 = smul.u32 2, %s20
        %p288 = scmp.lt.s32.totalorder %s287, 1
        %s289 = scalar_select %p288, %s287, 1
        %s290 = smul.addr %s289, 2
        %s291 = scalar_lea.vmem %s2, %s290
        %p292 = pneg %p110
        %p293 = pneg %p107
        %p294 = pneg %p138
        %p295 = pneg %p135
        %s296 = smul.u32 8, %s19
        %s297 = smul.u32 2, %s20
        %p298 = scmp.lt.s32.totalorder %s296, 7
        %s299 = scalar_select %p298, %s296, 7
        %p300 = scmp.lt.s32.totalorder %s297, 1
        %s301 = scalar_select %p300, %s297, 1
        %s302 = smul.addr %s299, 2
        %s303 = sadd.s32 %s301, %s302
        %s304 = smul.addr %s303, 8
        %s305 = scalar_lea.vmem %s3, %s304
        %s306 = smul.u32 8, %s19
        %s307 = smul.u32 2, %s21
        %s308 = smul.u32 32, %s21
        %s309 = smul.u32 2, %s20
        %p310 = scmp.lt.s32.totalorder %s308, 287
        %s311 = scalar_select %p310, %s308, 287
        %p312 = scmp.lt.s32.totalorder %s309, 1
        %s313 = scalar_select %p312, %s309, 1
        %s314 = smul.addr %s311, 2
        %s315 = sadd.s32 %s313, %s314
        %s316 = smul.addr %s315, 4
        %s317 = scalar_lea.vmem %s1, %s316
        %s318 = smul.u32 32, %s21
        %s319 = smul.u32 2, %s20
        %s320 = smul.u32 2, %s20
        %p321 = scmp.lt.s32.totalorder %s320, 1
        %s322 = scalar_select %p321, %s320, 1
        %s323 = smul.addr %s322, 2
        %s324 = scalar_lea.vmem %s2, %s323
        %s325 = smul.u32 2, %s20
        %s326 = smul.u32 8, %s19
        %s327 = smul.u32 2, %s20
        %p328 = scmp.lt.s32.totalorder %s326, 7
        %s329 = scalar_select %p328, %s326, 7
        %p330 = scmp.lt.s32.totalorder %s327, 1
        %s331 = scalar_select %p330, %s327, 1
        %s332 = smul.addr %s329, 2
        %s333 = sadd.s32 %s331, %s332
        %s334 = smul.addr %s333, 8
        %s335 = scalar_lea.vmem %s3, %s334
        %s336 = smul.u32 8, %s19
        %s337 = smul.u32 2, %s20
        %p338 = scmp.eq.s32.totalorder %s21, 0
        // Predicated region
        $region71: #{generator_forward.23} parent=65 // pred_check
          %p339 = pneg %p338
        $region72: #{generator_forward.23} parent=65 // pred_check_branch
          %341 = sbr.rel (%p339) target = $region74
        $region73: #{generator_forward.23} parent=65 // pred_region
          %342 = vst [vmem:[%s335] sm:$0xff] 0.0
          %343 = vst [vmem:[%s335 + $0x8] sm:$0xff] 0.0
          %344 = vst [vmem:[%s335 + $0x10] sm:$0xff] 0.0
          %345 = vst [vmem:[%s335 + $0x18] sm:$0xff] 0.0
          %346 = vst [vmem:[%s335 + $0x20] sm:$0xff] 0.0
          %347 = vst [vmem:[%s335 + $0x28] sm:$0xff] 0.0
          %348 = vst [vmem:[%s335 + $0x30] sm:$0xff] 0.0
          %349 = vst [vmem:[%s335 + $0x38] sm:$0xff] 0.0
          %350 = vst [vmem:[%s335 + $0x40] sm:$0xff] 0.0
          %351 = vst [vmem:[%s335 + $0x48] sm:$0xff] 0.0
          %352 = vst [vmem:[%s335 + $0x50] sm:$0xff] 0.0
          %353 = vst [vmem:[%s335 + $0x58] sm:$0xff] 0.0
          %354 = vst [vmem:[%s335 + $0x60] sm:$0xff] 0.0
          %355 = vst [vmem:[%s335 + $0x68] sm:$0xff] 0.0
          %356 = vst [vmem:[%s335 + $0x70] sm:$0xff] 0.0
          %357 = vst [vmem:[%s335 + $0x78] sm:$0xff] 0.0
        $region74: #{generator_forward.23} parent=65 // pred_fallthru
          _
        %v358 = vld [vmem:[%s335] sm:$0xff]
        %v359 = vld [vmem:[%s335 + $0x8] sm:$0xff]
        %v360 = vld [vmem:[%s335 + $0x10] sm:$0xff]
        %v361 = vld [vmem:[%s335 + $0x18] sm:$0xff]
        %v362 = vld [vmem:[%s335 + $0x20] sm:$0xff]
        %v363 = vld [vmem:[%s335 + $0x28] sm:$0xff]
        %v364 = vld [vmem:[%s335 + $0x30] sm:$0xff]
        %v365 = vld [vmem:[%s335 + $0x38] sm:$0xff]
        %v366 = vld [vmem:[%s335 + $0x40] sm:$0xff]
        %v367 = vld [vmem:[%s335 + $0x48] sm:$0xff]
        %v368 = vld [vmem:[%s335 + $0x50] sm:$0xff]
        %v369 = vld [vmem:[%s335 + $0x58] sm:$0xff]
        %v370 = vld [vmem:[%s335 + $0x60] sm:$0xff]
        %v371 = vld [vmem:[%s335 + $0x68] sm:$0xff]
        %v372 = vld [vmem:[%s335 + $0x70] sm:$0xff]
        %v373 = vld [vmem:[%s335 + $0x78] sm:$0xff]
        %v374 = vld [vmem:[%s265] sm:$0xff]
        %v375 = vld [vmem:[%s265 + $0x8] sm:$0xff]
        %v376 = vld [vmem:[%s265 + $0x10] sm:$0xff]
        %v377 = vld [vmem:[%s265 + $0x18] sm:$0xff]
        %v378 = vld [vmem:[%s265 + $0x20] sm:$0xff]
        %v379 = vld [vmem:[%s265 + $0x28] sm:$0xff]
        %v380 = vld [vmem:[%s265 + $0x30] sm:$0xff]
        %v381 = vld [vmem:[%s265 + $0x38] sm:$0xff]
        %v382 = vld [vmem:[%s317] sm:$0xff]
        %v383 = vld [vmem:[%s317 + $0x8] sm:$0xff]
        %v384 = vld [vmem:[%s317 + $0x10] sm:$0xff]
        %v385 = vld [vmem:[%s317 + $0x18] sm:$0xff]
        %v386 = vld [vmem:[%s317 + $0x20] sm:$0xff]
        %v387 = vld [vmem:[%s317 + $0x28] sm:$0xff]
        %v388 = vld [vmem:[%s317 + $0x30] sm:$0xff]
        %v389 = vld [vmem:[%s317 + $0x38] sm:$0xff]
        %v390 = vld [vmem:[%s317 + $0x40] sm:$0xff]
        %v391 = vld [vmem:[%s317 + $0x48] sm:$0xff]
        %v392 = vld [vmem:[%s317 + $0x50] sm:$0xff]
        %v393 = vld [vmem:[%s317 + $0x58] sm:$0xff]
        %v394 = vld [vmem:[%s317 + $0x60] sm:$0xff]
        %v395 = vld [vmem:[%s317 + $0x68] sm:$0xff]
        %v396 = vld [vmem:[%s317 + $0x70] sm:$0xff]
        %v397 = vld [vmem:[%s317 + $0x78] sm:$0xff]
        %v398 = vld [vmem:[%s317 + $0x80] sm:$0xff]
        %v399 = vld [vmem:[%s317 + $0x88] sm:$0xff]
        %v400 = vld [vmem:[%s317 + $0x90] sm:$0xff]
        %v401 = vld [vmem:[%s317 + $0x98] sm:$0xff]
        %v402 = vld [vmem:[%s317 + $0xa0] sm:$0xff]
        %v403 = vld [vmem:[%s317 + $0xa8] sm:$0xff]
        %v404 = vld [vmem:[%s317 + $0xb0] sm:$0xff]
        %v405 = vld [vmem:[%s317 + $0xb8] sm:$0xff]
        %v406 = vld [vmem:[%s317 + $0xc0] sm:$0xff]
        %v407 = vld [vmem:[%s317 + $0xc8] sm:$0xff]
        %v408 = vld [vmem:[%s317 + $0xd0] sm:$0xff]
        %v409 = vld [vmem:[%s317 + $0xd8] sm:$0xff]
        %v410 = vld [vmem:[%s317 + $0xe0] sm:$0xff]
        %v411 = vld [vmem:[%s317 + $0xe8] sm:$0xff]
        %v412 = vld [vmem:[%s317 + $0xf0] sm:$0xff]
        %v413 = vld [vmem:[%s317 + $0xf8] sm:$0xff]
        %v422 = vunpack.c.l.b16 %v374
        %v423 = vunpack.c.h.b16 %v374
        %v424 = vunpack.c.l.b16 %v375
        %v425 = vunpack.c.h.b16 %v375
        %v426 = vunpack.c.l.b16 %v376
        %v427 = vunpack.c.h.b16 %v376
        %v428 = vunpack.c.l.b16 %v377
        %v429 = vunpack.c.h.b16 %v377
        %v430 = vunpack.c.l.b16 %v378
        %v431 = vunpack.c.h.b16 %v378
        %v432 = vunpack.c.l.b16 %v379
        %v433 = vunpack.c.h.b16 %v379
        %v434 = vunpack.c.l.b16 %v380
        %v435 = vunpack.c.h.b16 %v380
        %v436 = vunpack.c.l.b16 %v381
        %v437 = vunpack.c.h.b16 %v381
        %v438 = vpack.c.b16 %v424, %v422
        %v439 = vpack.c.b16 %v425, %v423
        %v440 = vpack.c.b16 %v428, %v426
        %v441 = vpack.c.b16 %v429, %v427
        %v442 = vpack.c.b16 %v432, %v430
        %v443 = vpack.c.b16 %v433, %v431
        %v444 = vpack.c.b16 %v436, %v434
        %v445 = vpack.c.b16 %v437, %v435
        %v486 = vunpack.c.l.b16 %v382
        %v487 = vunpack.c.h.b16 %v382
        %v488 = vunpack.c.l.b16 %v383
        %v489 = vunpack.c.h.b16 %v383
        %v490 = vunpack.c.l.b16 %v384
        %v491 = vunpack.c.h.b16 %v384
        %v492 = vunpack.c.l.b16 %v385
        %v493 = vunpack.c.h.b16 %v385
        %v494 = vunpack.c.l.b16 %v386
        %v495 = vunpack.c.h.b16 %v386
        %v496 = vunpack.c.l.b16 %v387
        %v497 = vunpack.c.h.b16 %v387
        %v498 = vunpack.c.l.b16 %v388
        %v499 = vunpack.c.h.b16 %v388
        %v500 = vunpack.c.l.b16 %v389
        %v501 = vunpack.c.h.b16 %v389
        %v502 = vunpack.c.l.b16 %v390
        %v503 = vunpack.c.h.b16 %v390
        %v504 = vunpack.c.l.b16 %v391
        %v505 = vunpack.c.h.b16 %v391
        %v506 = vunpack.c.l.b16 %v392
        %v507 = vunpack.c.h.b16 %v392
        %v508 = vunpack.c.l.b16 %v393
        %v509 = vunpack.c.h.b16 %v393
        %v510 = vunpack.c.l.b16 %v394
        %v511 = vunpack.c.h.b16 %v394
        %v512 = vunpack.c.l.b16 %v395
        %v513 = vunpack.c.h.b16 %v395
        %v514 = vunpack.c.l.b16 %v396
        %v515 = vunpack.c.h.b16 %v396
        %v516 = vunpack.c.l.b16 %v397
        %v517 = vunpack.c.h.b16 %v397
        %v518 = vunpack.c.l.b16 %v398
        %v519 = vunpack.c.h.b16 %v398
        %v520 = vunpack.c.l.b16 %v399
        %v521 = vunpack.c.h.b16 %v399
        %v522 = vunpack.c.l.b16 %v400
        %v523 = vunpack.c.h.b16 %v400
        %v524 = vunpack.c.l.b16 %v401
        %v525 = vunpack.c.h.b16 %v401
        %v526 = vunpack.c.l.b16 %v402
        %v527 = vunpack.c.h.b16 %v402
        %v528 = vunpack.c.l.b16 %v403
        %v529 = vunpack.c.h.b16 %v403
        %v530 = vunpack.c.l.b16 %v404
        %v531 = vunpack.c.h.b16 %v404
        %v532 = vunpack.c.l.b16 %v405
        %v533 = vunpack.c.h.b16 %v405
        %v534 = vunpack.c.l.b16 %v406
        %v535 = vunpack.c.h.b16 %v406
        %v536 = vunpack.c.l.b16 %v407
        %v537 = vunpack.c.h.b16 %v407
        %v538 = vunpack.c.l.b16 %v408
        %v539 = vunpack.c.h.b16 %v408
        %v540 = vunpack.c.l.b16 %v409
        %v541 = vunpack.c.h.b16 %v409
        %v542 = vunpack.c.l.b16 %v410
        %v543 = vunpack.c.h.b16 %v410
        %v544 = vunpack.c.l.b16 %v411
        %v545 = vunpack.c.h.b16 %v411
        %v546 = vunpack.c.l.b16 %v412
        %v547 = vunpack.c.h.b16 %v412
        %v548 = vunpack.c.l.b16 %v413
        %v549 = vunpack.c.h.b16 %v413
        %v550 = vpack.c.b16 %v488, %v486
        %v551 = vpack.c.b16 %v489, %v487
        %v552 = vpack.c.b16 %v492, %v490
        %v553 = vpack.c.b16 %v493, %v491
        %v554 = vpack.c.b16 %v496, %v494
        %v555 = vpack.c.b16 %v497, %v495
        %v556 = vpack.c.b16 %v500, %v498
        %v557 = vpack.c.b16 %v501, %v499
        %v558 = vpack.c.b16 %v504, %v502
        %v559 = vpack.c.b16 %v505, %v503
        %v560 = vpack.c.b16 %v508, %v506
        %v561 = vpack.c.b16 %v509, %v507
        %v562 = vpack.c.b16 %v512, %v510
        %v563 = vpack.c.b16 %v513, %v511
        %v564 = vpack.c.b16 %v516, %v514
        %v565 = vpack.c.b16 %v517, %v515
        %v566 = vpack.c.b16 %v520, %v518
        %v567 = vpack.c.b16 %v521, %v519
        %v568 = vpack.c.b16 %v524, %v522
        %v569 = vpack.c.b16 %v525, %v523
        %v570 = vpack.c.b16 %v528, %v526
        %v571 = vpack.c.b16 %v529, %v527
        %v572 = vpack.c.b16 %v532, %v530
        %v573 = vpack.c.b16 %v533, %v531
        %v574 = vpack.c.b16 %v536, %v534
        %v575 = vpack.c.b16 %v537, %v535
        %v576 = vpack.c.b16 %v540, %v538
        %v577 = vpack.c.b16 %v541, %v539
        %v578 = vpack.c.b16 %v544, %v542
        %v579 = vpack.c.b16 %v545, %v543
        %v580 = vpack.c.b16 %v548, %v546
        %v581 = vpack.c.b16 %v549, %v547
        %614 = vmatpush.bf16.msra.mxu0 %v564
        %615 = vmatpush.bf16.msra.mxu0 %v562
        %616 = vmatpush.bf16.msra.mxu0 %v560
        %617 = vmatpush.bf16.msra.mxu0 %v558
        %618 = vmatpush.bf16.msra.mxu0 %v556
        %619 = vmatpush.bf16.msra.mxu0 %v554
        %620 = vmatpush.bf16.msra.mxu0 %v552
        %621 = vmatpush.bf16.msra.mxu0 %v550
        %622 = vmatmul.bf16.gmra.mxu0 %v438
        %v623 = vpop.f32.mrf.mxu0
        %v624 = vadd.f32 0.0, %v623
        %v625 = vpop.f32.mrf.mxu0
        %v626 = vadd.f32 0.0, %v625
        %627 = vmatmul.bf16.gmra.mxu0 %v440
        %v628 = vpop.f32.mrf.mxu0
        %v629 = vadd.f32 0.0, %v628
        %v630 = vpop.f32.mrf.mxu0
        %v631 = vadd.f32 0.0, %v630
        %632 = vmatmul.bf16.gmra.mxu0 %v442
        %v633 = vpop.f32.mrf.mxu0
        %v634 = vadd.f32 0.0, %v633
        %v635 = vpop.f32.mrf.mxu0
        %v636 = vadd.f32 0.0, %v635
        %637 = vmatmul.bf16.gmra.mxu0 %v444
        %v638 = vpop.f32.mrf.mxu0
        %v639 = vadd.f32 0.0, %v638
        %v640 = vpop.f32.mrf.mxu0
        %v641 = vadd.f32 0.0, %v640
        %642 = vdwg.mxu0
        %643 = vmatpush.bf16.msra.mxu0 %v580
        %644 = vmatpush.bf16.msra.mxu0 %v578
        %645 = vmatpush.bf16.msra.mxu0 %v576
        %646 = vmatpush.bf16.msra.mxu0 %v574
        %647 = vmatpush.bf16.msra.mxu0 %v572
        %648 = vmatpush.bf16.msra.mxu0 %v570
        %649 = vmatpush.bf16.msra.mxu0 %v568
        %650 = vmatpush.bf16.msra.mxu0 %v566
        %651 = vmatmul.bf16.gmra.mxu0 %v439
        %v652 = vpop.f32.mrf.mxu0
        %v653 = vadd.f32 %v624, %v652
        %v654 = vpop.f32.mrf.mxu0
        %v655 = vadd.f32 %v626, %v654
        %656 = vmatmul.bf16.gmra.mxu0 %v441
        %v657 = vpop.f32.mrf.mxu0
        %v658 = vadd.f32 %v629, %v657
        %v659 = vpop.f32.mrf.mxu0
        %v660 = vadd.f32 %v631, %v659
        %661 = vmatmul.bf16.gmra.mxu0 %v443
        %v662 = vpop.f32.mrf.mxu0
        %v663 = vadd.f32 %v634, %v662
        %v664 = vpop.f32.mrf.mxu0
        %v665 = vadd.f32 %v636, %v664
        %666 = vmatmul.bf16.gmra.mxu0 %v445
        %v667 = vpop.f32.mrf.mxu0
        %v668 = vadd.f32 %v639, %v667
        %v669 = vpop.f32.mrf.mxu0
        %v670 = vadd.f32 %v641, %v669
        %671 = vdwg.mxu0
        %672 = vmatpush.bf16.msra.mxu0 %v565
        %673 = vmatpush.bf16.msra.mxu0 %v563
        %674 = vmatpush.bf16.msra.mxu0 %v561
        %675 = vmatpush.bf16.msra.mxu0 %v559
        %676 = vmatpush.bf16.msra.mxu0 %v557
        %677 = vmatpush.bf16.msra.mxu0 %v555
        %678 = vmatpush.bf16.msra.mxu0 %v553
        %679 = vmatpush.bf16.msra.mxu0 %v551
        %680 = vmatmul.bf16.gmra.mxu0 %v438
        %v681 = vpop.f32.mrf.mxu0
        %v682 = vadd.f32 0.0, %v681
        %v683 = vpop.f32.mrf.mxu0
        %v684 = vadd.f32 0.0, %v683
        %685 = vmatmul.bf16.gmra.mxu0 %v440
        %v686 = vpop.f32.mrf.mxu0
        %v687 = vadd.f32 0.0, %v686
        %v688 = vpop.f32.mrf.mxu0
        %v689 = vadd.f32 0.0, %v688
        %690 = vmatmul.bf16.gmra.mxu0 %v442
        %v691 = vpop.f32.mrf.mxu0
        %v692 = vadd.f32 0.0, %v691
        %v693 = vpop.f32.mrf.mxu0
        %v694 = vadd.f32 0.0, %v693
        %695 = vmatmul.bf16.gmra.mxu0 %v444
        %v696 = vpop.f32.mrf.mxu0
        %v697 = vadd.f32 0.0, %v696
        %v698 = vpop.f32.mrf.mxu0
        %v699 = vadd.f32 0.0, %v698
        %700 = vdwg.mxu0
        %701 = vmatpush.bf16.msra.mxu0 %v581
        %702 = vmatpush.bf16.msra.mxu0 %v579
        %703 = vmatpush.bf16.msra.mxu0 %v577
        %704 = vmatpush.bf16.msra.mxu0 %v575
        %705 = vmatpush.bf16.msra.mxu0 %v573
        %706 = vmatpush.bf16.msra.mxu0 %v571
        %707 = vmatpush.bf16.msra.mxu0 %v569
        %708 = vmatpush.bf16.msra.mxu0 %v567
        %709 = vmatmul.bf16.gmra.mxu0 %v439
        %v710 = vpop.f32.mrf.mxu0
        %v711 = vadd.f32 %v682, %v710
        %v712 = vpop.f32.mrf.mxu0
        %v713 = vadd.f32 %v684, %v712
        %714 = vmatmul.bf16.gmra.mxu0 %v441
        %v715 = vpop.f32.mrf.mxu0
        %v716 = vadd.f32 %v687, %v715
        %v717 = vpop.f32.mrf.mxu0
        %v718 = vadd.f32 %v689, %v717
        %719 = vmatmul.bf16.gmra.mxu0 %v443
        %v720 = vpop.f32.mrf.mxu0
        %v721 = vadd.f32 %v692, %v720
        %v722 = vpop.f32.mrf.mxu0
        %v723 = vadd.f32 %v694, %v722
        %724 = vmatmul.bf16.gmra.mxu0 %v445
        %v725 = vpop.f32.mrf.mxu0
        %v726 = vadd.f32 %v697, %v725
        %v727 = vpop.f32.mrf.mxu0
        %v728 = vadd.f32 %v699, %v727
        %729 = vdwg.mxu0
        %v730 = vadd.f32 %v358, %v653
        %v731 = vadd.f32 %v359, %v711
        %v732 = vadd.f32 %v360, %v655
        %v733 = vadd.f32 %v361, %v713
        %v734 = vadd.f32 %v362, %v658
        %v735 = vadd.f32 %v363, %v716
        %v736 = vadd.f32 %v364, %v660
        %v737 = vadd.f32 %v365, %v718
        %v738 = vadd.f32 %v366, %v663
        %v739 = vadd.f32 %v367, %v721
        %v740 = vadd.f32 %v368, %v665
        %v741 = vadd.f32 %v369, %v723
        %v742 = vadd.f32 %v370, %v668
        %v743 = vadd.f32 %v371, %v726
        %v744 = vadd.f32 %v372, %v670
        %v745 = vadd.f32 %v373, %v728
        %746 = vst [vmem:[%s335] sm:$0xff] %v730
        %747 = vst [vmem:[%s335 + $0x8] sm:$0xff] %v731
        %748 = vst [vmem:[%s335 + $0x10] sm:$0xff] %v732
        %749 = vst [vmem:[%s335 + $0x18] sm:$0xff] %v733
        %750 = vst [vmem:[%s335 + $0x20] sm:$0xff] %v734
        %751 = vst [vmem:[%s335 + $0x28] sm:$0xff] %v735
        %752 = vst [vmem:[%s335 + $0x30] sm:$0xff] %v736
        %753 = vst [vmem:[%s335 + $0x38] sm:$0xff] %v737
        %754 = vst [vmem:[%s335 + $0x40] sm:$0xff] %v738
        %755 = vst [vmem:[%s335 + $0x48] sm:$0xff] %v739
        %756 = vst [vmem:[%s335 + $0x50] sm:$0xff] %v740
        %757 = vst [vmem:[%s335 + $0x58] sm:$0xff] %v741
        %758 = vst [vmem:[%s335 + $0x60] sm:$0xff] %v742
        %759 = vst [vmem:[%s335 + $0x68] sm:$0xff] %v743
        %760 = vst [vmem:[%s335 + $0x70] sm:$0xff] %v744
        %761 = vst [vmem:[%s335 + $0x78] sm:$0xff] %v745
        %p762 = scmp.eq.s32.totalorder %s21, 8
        // Predicated region
        $region75: #{generator_forward.23} parent=65 // pred_check
          %p763 = pneg %p762
        $region76: #{generator_forward.23} parent=65 // pred_check_branch
          %765 = sbr.rel (%p763) target = $region78
        $region77: #{generator_forward.23} parent=65 // pred_region
          %v766 = vld [vmem:[%s324] sm:$0xf]
          %v767 = vld [vmem:[%s335] sm:$0xff]
          %v768 = vld [vmem:[%s335 + $0x8] sm:$0xff]
          %v769 = vld [vmem:[%s335 + $0x10] sm:$0xff]
          %v770 = vld [vmem:[%s335 + $0x18] sm:$0xff]
          %v771 = vld [vmem:[%s335 + $0x20] sm:$0xff]
          %v772 = vld [vmem:[%s335 + $0x28] sm:$0xff]
          %v773 = vld [vmem:[%s335 + $0x30] sm:$0xff]
          %v774 = vld [vmem:[%s335 + $0x38] sm:$0xff]
          %v775 = vld [vmem:[%s335 + $0x40] sm:$0xff]
          %v776 = vld [vmem:[%s335 + $0x48] sm:$0xff]
          %v777 = vld [vmem:[%s335 + $0x50] sm:$0xff]
          %v778 = vld [vmem:[%s335 + $0x58] sm:$0xff]
          %v779 = vld [vmem:[%s335 + $0x60] sm:$0xff]
          %v780 = vld [vmem:[%s335 + $0x68] sm:$0xff]
          %v781 = vld [vmem:[%s335 + $0x70] sm:$0xff]
          %v782 = vld [vmem:[%s335 + $0x78] sm:$0xff]
          %v784 = vperm.slane %v766, 0
          %v785 = vperm.slane %v766, 2
          %v788 = vperm.slane %v784, 0
          %v789 = vperm.slane %v785, 0
          %v790 = vmul.f32 %v767, %v788
          %v791 = vmul.f32 %v768, %v789
          %v792 = vmul.f32 %v769, %v788
          %v793 = vmul.f32 %v770, %v789
          %v794 = vmul.f32 %v771, %v788
          %v795 = vmul.f32 %v772, %v789
          %v796 = vmul.f32 %v773, %v788
          %v797 = vmul.f32 %v774, %v789
          %v798 = vmul.f32 %v775, %v788
          %v799 = vmul.f32 %v776, %v789
          %v800 = vmul.f32 %v777, %v788
          %v801 = vmul.f32 %v778, %v789
          %v802 = vmul.f32 %v779, %v788
          %v803 = vmul.f32 %v780, %v789
          %v804 = vmul.f32 %v781, %v788
          %v805 = vmul.f32 %v782, %v789
          %v806 = vperm.slane %v766, 1
          %v807 = vperm.slane %v766, 3
          %v810 = vperm.slane %v806, 1
          %v811 = vperm.slane %v807, 1
          %v812 = vadd.f32 %v790, %v810
          %v813 = vadd.f32 %v791, %v811
          %v814 = vadd.f32 %v792, %v810
          %v815 = vadd.f32 %v793, %v811
          %v816 = vadd.f32 %v794, %v810
          %v817 = vadd.f32 %v795, %v811
          %v818 = vadd.f32 %v796, %v810
          %v819 = vadd.f32 %v797, %v811
          %v820 = vadd.f32 %v798, %v810
          %v821 = vadd.f32 %v799, %v811
          %v822 = vadd.f32 %v800, %v810
          %v823 = vadd.f32 %v801, %v811
          %v824 = vadd.f32 %v802, %v810
          %v825 = vadd.f32 %v803, %v811
          %v826 = vadd.f32 %v804, %v810
          %v827 = vadd.f32 %v805, %v811
          %828 = vst [vmem:[%s335] sm:$0xff] %v812
          %829 = vst [vmem:[%s335 + $0x8] sm:$0xff] %v813
          %830 = vst [vmem:[%s335 + $0x10] sm:$0xff] %v814
          %831 = vst [vmem:[%s335 + $0x18] sm:$0xff] %v815
          %832 = vst [vmem:[%s335 + $0x20] sm:$0xff] %v816
          %833 = vst [vmem:[%s335 + $0x28] sm:$0xff] %v817
          %834 = vst [vmem:[%s335 + $0x30] sm:$0xff] %v818
          %835 = vst [vmem:[%s335 + $0x38] sm:$0xff] %v819
          %836 = vst [vmem:[%s335 + $0x40] sm:$0xff] %v820
          %837 = vst [vmem:[%s335 + $0x48] sm:$0xff] %v821
          %838 = vst [vmem:[%s335 + $0x50] sm:$0xff] %v822
          %839 = vst [vmem:[%s335 + $0x58] sm:$0xff] %v823
          %840 = vst [vmem:[%s335 + $0x60] sm:$0xff] %v824
          %841 = vst [vmem:[%s335 + $0x68] sm:$0xff] %v825
          %842 = vst [vmem:[%s335 + $0x70] sm:$0xff] %v826
          %843 = vst [vmem:[%s335 + $0x78] sm:$0xff] %v827
        $region78: #{generator_forward.23} parent=65 // pred_fallthru
          _
        %s844 = smul.u32 8, %s19
        %s845 = smul.u32 2, %s20
        %p846 = scmp.lt.s32.totalorder %s844, 7
        %s847 = scalar_select %p846, %s844, 7
        %p848 = scmp.lt.s32.totalorder %s845, 1
        %s849 = scalar_select %p848, %s845, 1
        %s850 = smul.addr %s847, 2
        %s851 = sadd.s32 %s849, %s850
        %s852 = smul.addr %s851, 8
        %s853 = scalar_lea.vmem %s3, %s852
        // Predicated region
        $region79: #{generator_forward.23} parent=65 // pred_check
          %p854 = pneg %p135
        $region80: #{generator_forward.23} parent=65 // pred_check_branch
          %856 = sbr.rel (%p854) target = $region82
        $region81: #{generator_forward.23} parent=65 // pred_region
          %s857 = smul.u32 8, %s19
          %s858 = smul.u32 2, %s20
        $region82: #{generator_forward.23} parent=65 // pred_fallthru
          _
        // Predicated region
        $region83: #{generator_forward.23} parent=65 // pred_check
          %p859 = pneg %p135
        $region84: #{generator_forward.23} parent=65 // pred_check_branch
          %861 = sbr.rel (%p859) target = $region86
        $region85: #{generator_forward.23} parent=65 // pred_region
          %s862 = smul.u32 8, %s19
          %s863 = smul.u32 2, %s20
          %p864 = scmp.lt.s32.totalorder %s862, 7
          %s865 = scalar_select %p864, %s862, 7
          %p866 = scmp.lt.s32.totalorder %s863, 1
          %s867 = scalar_select %p866, %s863, 1
          %s868 = smul.addr %s865, 2
          %s869 = sadd.s32 %s867, %s868
          %s870 = smul.addr %s869, 8
          %s871 = scalar_lea.vmem %s3, %s870
        $region86: #{generator_forward.23} parent=65 // pred_fallthru
          _
      $region66: #{generator_forward.23} parent=5 // pred_fallthru
        _
      %p872 = scmp.le.s32.totalorder 2, %s9
      // Predicated region
      $region87: #{generator_forward.23} parent=5 // pred_check
        %p873 = pneg %p872
      $region88: #{generator_forward.23} parent=5 // pred_check_branch
        %875 = sbr.rel (%p873) target = $region90
      $region89: #{generator_forward.23} parent=5 // pred_region
        %s876 = ssub.s32 %s9, 2
      $region90: #{generator_forward.23} parent=5 // pred_fallthru
        _
    $region6: #{generator_forward.23} parent=1 // loop_footer
      %s13 = sadd.s32 1, %s9
    $region7: #{generator_forward.23} parent=1 // loop_footer_branch
      %8 = sbr.rel target = $region3
    $region8: #{generator_forward.23} parent=1 // loop_exit
      _

// kernel: generator_forward.25
$region0: #{generator_forward.25}
  #allocation0 [shape = 'u32[]', space=smem, size = 0x4, offset = 0x4, fixed_abs, tag = 'smem constant byte address 0x4 - core index']
  #allocation1 [shape = 'u32[72,128]{1,0:T(1,128)}', space=vmem, size = 0x9000, scoped, tag = 'internal scratch']
  %s0 = inlined_call_operand.vmem [shape: bf16[64,256], index: 0, kind: input, shape index: {}]
  %s1 = inlined_call_operand.vmem [shape: bf16[256,256], index: 1, kind: input, shape index: {}]
  %s2 = inlined_call_operand.vmem [shape: f32[2,256], index: 2, kind: input, shape index: {}]
  %s3 = inlined_call_operand.vmem [shape: f32[64,256], index: 3, kind: output, shape index: {}]
  %s4 = sld [smem:[#allocation0]]
  $region30: #{generator_forward.25} parent=0
    _
  %s6 = ssub.s32 1, %s4
  %s7 = scalar_select 0, %s6, %s4
  // Predicated region
  $region2: #{generator_forward.25} parent=0 // pred_check
    _
  $region3: #{generator_forward.25} parent=0 // pred_check_branch
    %9 = sbr.rel (0) target = $region5
  $region4: #{generator_forward.25} parent=0 // pred_region
    _
  $region5: #{generator_forward.25} parent=0 // pred_fallthru
    _
  // Predicated region
  $region6: #{generator_forward.25} parent=0 // pred_check
    _
  $region7: #{generator_forward.25} parent=0 // pred_check_branch
    %11 = sbr.rel (0) target = $region9
  $region8: #{generator_forward.25} parent=0 // pred_region
    _
  $region9: #{generator_forward.25} parent=0 // pred_fallthru
    _
  // Predicated region
  $region10: #{generator_forward.25} parent=0 // pred_check
    _
  $region11: #{generator_forward.25} parent=0 // pred_check_branch
    %13 = sbr.rel (0) target = $region13
  $region12: #{generator_forward.25} parent=0 // pred_region
    _
  $region13: #{generator_forward.25} parent=0 // pred_fallthru
    _
  %p14 = scmp.eq.s32.totalorder 0, 0
  // Predicated region
  $region14: #{generator_forward.25} parent=0 // pred_check
    %p15 = pneg %p14
  $region15: #{generator_forward.25} parent=0 // pred_check_branch
    %17 = sbr.rel (%p15) target = $region17
  $region16: #{generator_forward.25} parent=0 // pred_region
    %18 = vst [vmem:[%s3] sm:$0xff] 0.0
    %19 = vst [vmem:[%s3 + $0x8] sm:$0xff] 0.0
    %20 = vst [vmem:[%s3 + $0x10] sm:$0xff] 0.0
    %21 = vst [vmem:[%s3 + $0x18] sm:$0xff] 0.0
    %22 = vst [vmem:[%s3 + $0x20] sm:$0xff] 0.0
    %23 = vst [vmem:[%s3 + $0x28] sm:$0xff] 0.0
    %24 = vst [vmem:[%s3 + $0x30] sm:$0xff] 0.0
    %25 = vst [vmem:[%s3 + $0x38] sm:$0xff] 0.0
    %26 = vst [vmem:[%s3 + $0x40] sm:$0xff] 0.0
    %27 = vst [vmem:[%s3 + $0x48] sm:$0xff] 0.0
    %28 = vst [vmem:[%s3 + $0x50] sm:$0xff] 0.0
    %29 = vst [vmem:[%s3 + $0x58] sm:$0xff] 0.0
    %30 = vst [vmem:[%s3 + $0x60] sm:$0xff] 0.0
    %31 = vst [vmem:[%s3 + $0x68] sm:$0xff] 0.0
    %32 = vst [vmem:[%s3 + $0x70] sm:$0xff] 0.0
    %33 = vst [vmem:[%s3 + $0x78] sm:$0xff] 0.0
  $region17: #{generator_forward.25} parent=0 // pred_fallthru
    _
  %v34 = vld [vmem:[%s3] sm:$0xff]
  %v35 = vld [vmem:[%s3 + $0x8] sm:$0xff]
  %v36 = vld [vmem:[%s3 + $0x10] sm:$0xff]
  %v37 = vld [vmem:[%s3 + $0x18] sm:$0xff]
  %v38 = vld [vmem:[%s3 + $0x20] sm:$0xff]
  %v39 = vld [vmem:[%s3 + $0x28] sm:$0xff]
  %v40 = vld [vmem:[%s3 + $0x30] sm:$0xff]
  %v41 = vld [vmem:[%s3 + $0x38] sm:$0xff]
  %v42 = vld [vmem:[%s3 + $0x40] sm:$0xff]
  %v43 = vld [vmem:[%s3 + $0x48] sm:$0xff]
  %v44 = vld [vmem:[%s3 + $0x50] sm:$0xff]
  %v45 = vld [vmem:[%s3 + $0x58] sm:$0xff]
  %v46 = vld [vmem:[%s3 + $0x60] sm:$0xff]
  %v47 = vld [vmem:[%s3 + $0x68] sm:$0xff]
  %v48 = vld [vmem:[%s3 + $0x70] sm:$0xff]
  %v49 = vld [vmem:[%s3 + $0x78] sm:$0xff]
  %v50 = vld [vmem:[%s0] sm:$0xff]
  %v51 = vld [vmem:[%s0 + $0x8] sm:$0xff]
  %v52 = vld [vmem:[%s0 + $0x10] sm:$0xff]
  %v53 = vld [vmem:[%s0 + $0x18] sm:$0xff]
  %v54 = vld [vmem:[%s0 + $0x20] sm:$0xff]
  %v55 = vld [vmem:[%s0 + $0x28] sm:$0xff]
  %v56 = vld [vmem:[%s0 + $0x30] sm:$0xff]
  %v57 = vld [vmem:[%s0 + $0x38] sm:$0xff]
  %v58 = vld [vmem:[%s1] sm:$0xff]
  %v59 = vld [vmem:[%s1 + $0x8] sm:$0xff]
  %v60 = vld [vmem:[%s1 + $0x10] sm:$0xff]
  %v61 = vld [vmem:[%s1 + $0x18] sm:$0xff]
  %v62 = vld [vmem:[%s1 + $0x20] sm:$0xff]
  %v63 = vld [vmem:[%s1 + $0x28] sm:$0xff]
  %v64 = vld [vmem:[%s1 + $0x30] sm:$0xff]
  %v65 = vld [vmem:[%s1 + $0x38] sm:$0xff]
  %v66 = vld [vmem:[%s1 + $0x40] sm:$0xff]
  %v67 = vld [vmem:[%s1 + $0x48] sm:$0xff]
  %v68 = vld [vmem:[%s1 + $0x50] sm:$0xff]
  %v69 = vld [vmem:[%s1 + $0x58] sm:$0xff]
  %v70 = vld [vmem:[%s1 + $0x60] sm:$0xff]
  %v71 = vld [vmem:[%s1 + $0x68] sm:$0xff]
  %v72 = vld [vmem:[%s1 + $0x70] sm:$0xff]
  %v73 = vld [vmem:[%s1 + $0x78] sm:$0xff]
  %v74 = vld [vmem:[%s1 + $0x80] sm:$0xff]
  %v75 = vld [vmem:[%s1 + $0x88] sm:$0xff]
  %v76 = vld [vmem:[%s1 + $0x90] sm:$0xff]
  %v77 = vld [vmem:[%s1 + $0x98] sm:$0xff]
  %v78 = vld [vmem:[%s1 + $0xa0] sm:$0xff]
  %v79 = vld [vmem:[%s1 + $0xa8] sm:$0xff]
  %v80 = vld [vmem:[%s1 + $0xb0] sm:$0xff]
  %v81 = vld [vmem:[%s1 + $0xb8] sm:$0xff]
  %v82 = vld [vmem:[%s1 + $0xc0] sm:$0xff]
  %v83 = vld [vmem:[%s1 + $0xc8] sm:$0xff]
  %v84 = vld [vmem:[%s1 + $0xd0] sm:$0xff]
  %v85 = vld [vmem:[%s1 + $0xd8] sm:$0xff]
  %v86 = vld [vmem:[%s1 + $0xe0] sm:$0xff]
  %v87 = vld [vmem:[%s1 + $0xe8] sm:$0xff]
  %v88 = vld [vmem:[%s1 + $0xf0] sm:$0xff]
  %v89 = vld [vmem:[%s1 + $0xf8] sm:$0xff]
  %v98 = vunpack.c.l.b16 %v50
  %v99 = vunpack.c.h.b16 %v50
  %v100 = vunpack.c.l.b16 %v51
  %v101 = vunpack.c.h.b16 %v51
  %v102 = vunpack.c.l.b16 %v52
  %v103 = vunpack.c.h.b16 %v52
  %v104 = vunpack.c.l.b16 %v53
  %v105 = vunpack.c.h.b16 %v53
  %v106 = vunpack.c.l.b16 %v54
  %v107 = vunpack.c.h.b16 %v54
  %v108 = vunpack.c.l.b16 %v55
  %v109 = vunpack.c.h.b16 %v55
  %v110 = vunpack.c.l.b16 %v56
  %v111 = vunpack.c.h.b16 %v56
  %v112 = vunpack.c.l.b16 %v57
  %v113 = vunpack.c.h.b16 %v57
  %v114 = vpack.c.b16 %v100, %v98
  %v115 = vpack.c.b16 %v101, %v99
  %v116 = vpack.c.b16 %v104, %v102
  %v117 = vpack.c.b16 %v105, %v103
  %v118 = vpack.c.b16 %v108, %v106
  %v119 = vpack.c.b16 %v109, %v107
  %v120 = vpack.c.b16 %v112, %v110
  %v121 = vpack.c.b16 %v113, %v111
  %v162 = vunpack.c.l.b16 %v58
  %v163 = vunpack.c.h.b16 %v58
  %v164 = vunpack.c.l.b16 %v59
  %v165 = vunpack.c.h.b16 %v59
  %v166 = vunpack.c.l.b16 %v60
  %v167 = vunpack.c.h.b16 %v60
  %v168 = vunpack.c.l.b16 %v61
  %v169 = vunpack.c.h.b16 %v61
  %v170 = vunpack.c.l.b16 %v62
  %v171 = vunpack.c.h.b16 %v62
  %v172 = vunpack.c.l.b16 %v63
  %v173 = vunpack.c.h.b16 %v63
  %v174 = vunpack.c.l.b16 %v64
  %v175 = vunpack.c.h.b16 %v64
  %v176 = vunpack.c.l.b16 %v65
  %v177 = vunpack.c.h.b16 %v65
  %v178 = vunpack.c.l.b16 %v66
  %v179 = vunpack.c.h.b16 %v66
  %v180 = vunpack.c.l.b16 %v67
  %v181 = vunpack.c.h.b16 %v67
  %v182 = vunpack.c.l.b16 %v68
  %v183 = vunpack.c.h.b16 %v68
  %v184 = vunpack.c.l.b16 %v69
  %v185 = vunpack.c.h.b16 %v69
  %v186 = vunpack.c.l.b16 %v70
  %v187 = vunpack.c.h.b16 %v70
  %v188 = vunpack.c.l.b16 %v71
  %v189 = vunpack.c.h.b16 %v71
  %v190 = vunpack.c.l.b16 %v72
  %v191 = vunpack.c.h.b16 %v72
  %v192 = vunpack.c.l.b16 %v73
  %v193 = vunpack.c.h.b16 %v73
  %v194 = vunpack.c.l.b16 %v74
  %v195 = vunpack.c.h.b16 %v74
  %v196 = vunpack.c.l.b16 %v75
  %v197 = vunpack.c.h.b16 %v75
  %v198 = vunpack.c.l.b16 %v76
  %v199 = vunpack.c.h.b16 %v76
  %v200 = vunpack.c.l.b16 %v77
  %v201 = vunpack.c.h.b16 %v77
  %v202 = vunpack.c.l.b16 %v78
  %v203 = vunpack.c.h.b16 %v78
  %v204 = vunpack.c.l.b16 %v79
  %v205 = vunpack.c.h.b16 %v79
  %v206 = vunpack.c.l.b16 %v80
  %v207 = vunpack.c.h.b16 %v80
  %v208 = vunpack.c.l.b16 %v81
  %v209 = vunpack.c.h.b16 %v81
  %v210 = vunpack.c.l.b16 %v82
  %v211 = vunpack.c.h.b16 %v82
  %v212 = vunpack.c.l.b16 %v83
  %v213 = vunpack.c.h.b16 %v83
  %v214 = vunpack.c.l.b16 %v84
  %v215 = vunpack.c.h.b16 %v84
  %v216 = vunpack.c.l.b16 %v85
  %v217 = vunpack.c.h.b16 %v85
  %v218 = vunpack.c.l.b16 %v86
  %v219 = vunpack.c.h.b16 %v86
  %v220 = vunpack.c.l.b16 %v87
  %v221 = vunpack.c.h.b16 %v87
  %v222 = vunpack.c.l.b16 %v88
  %v223 = vunpack.c.h.b16 %v88
  %v224 = vunpack.c.l.b16 %v89
  %v225 = vunpack.c.h.b16 %v89
  %v226 = vpack.c.b16 %v164, %v162
  %v227 = vpack.c.b16 %v165, %v163
  %v228 = vpack.c.b16 %v168, %v166
  %v229 = vpack.c.b16 %v169, %v167
  %v230 = vpack.c.b16 %v172, %v170
  %v231 = vpack.c.b16 %v173, %v171
  %v232 = vpack.c.b16 %v176, %v174
  %v233 = vpack.c.b16 %v177, %v175
  %v234 = vpack.c.b16 %v180, %v178
  %v235 = vpack.c.b16 %v181, %v179
  %v236 = vpack.c.b16 %v184, %v182
  %v237 = vpack.c.b16 %v185, %v183
  %v238 = vpack.c.b16 %v188, %v186
  %v239 = vpack.c.b16 %v189, %v187
  %v240 = vpack.c.b16 %v192, %v190
  %v241 = vpack.c.b16 %v193, %v191
  %v242 = vpack.c.b16 %v196, %v194
  %v243 = vpack.c.b16 %v197, %v195
  %v244 = vpack.c.b16 %v200, %v198
  %v245 = vpack.c.b16 %v201, %v199
  %v246 = vpack.c.b16 %v204, %v202
  %v247 = vpack.c.b16 %v205, %v203
  %v248 = vpack.c.b16 %v208, %v206
  %v249 = vpack.c.b16 %v209, %v207
  %v250 = vpack.c.b16 %v212, %v210
  %v251 = vpack.c.b16 %v213, %v211
  %v252 = vpack.c.b16 %v216, %v214
  %v253 = vpack.c.b16 %v217, %v215
  %v254 = vpack.c.b16 %v220, %v218
  %v255 = vpack.c.b16 %v221, %v219
  %v256 = vpack.c.b16 %v224, %v222
  %v257 = vpack.c.b16 %v225, %v223
  %290 = vmatpush.bf16.msra.mxu0 %v240
  %291 = vmatpush.bf16.msra.mxu0 %v238
  %292 = vmatpush.bf16.msra.mxu0 %v236
  %293 = vmatpush.bf16.msra.mxu0 %v234
  %294 = vmatpush.bf16.msra.mxu0 %v232
  %295 = vmatpush.bf16.msra.mxu0 %v230
  %296 = vmatpush.bf16.msra.mxu0 %v228
  %297 = vmatpush.bf16.msra.mxu0 %v226
  %298 = vmatmul.bf16.gmra.mxu0 %v114
  %v299 = vpop.f32.mrf.mxu0
  %v300 = vadd.f32 0.0, %v299
  %v301 = vpop.f32.mrf.mxu0
  %v302 = vadd.f32 0.0, %v301
  %303 = vmatmul.bf16.gmra.mxu0 %v116
  %v304 = vpop.f32.mrf.mxu0
  %v305 = vadd.f32 0.0, %v304
  %v306 = vpop.f32.mrf.mxu0
  %v307 = vadd.f32 0.0, %v306
  %308 = vmatmul.bf16.gmra.mxu0 %v118
  %v309 = vpop.f32.mrf.mxu0
  %v310 = vadd.f32 0.0, %v309
  %v311 = vpop.f32.mrf.mxu0
  %v312 = vadd.f32 0.0, %v311
  %313 = vmatmul.bf16.gmra.mxu0 %v120
  %v314 = vpop.f32.mrf.mxu0
  %v315 = vadd.f32 0.0, %v314
  %v316 = vpop.f32.mrf.mxu0
  %v317 = vadd.f32 0.0, %v316
  %318 = vdwg.mxu0
  %319 = vmatpush.bf16.msra.mxu0 %v256
  %320 = vmatpush.bf16.msra.mxu0 %v254
  %321 = vmatpush.bf16.msra.mxu0 %v252
  %322 = vmatpush.bf16.msra.mxu0 %v250
  %323 = vmatpush.bf16.msra.mxu0 %v248
  %324 = vmatpush.bf16.msra.mxu0 %v246
  %325 = vmatpush.bf16.msra.mxu0 %v244
  %326 = vmatpush.bf16.msra.mxu0 %v242
  %327 = vmatmul.bf16.gmra.mxu0 %v115
  %v328 = vpop.f32.mrf.mxu0
  %v329 = vadd.f32 %v300, %v328
  %v330 = vpop.f32.mrf.mxu0
  %v331 = vadd.f32 %v302, %v330
  %332 = vmatmul.bf16.gmra.mxu0 %v117
  %v333 = vpop.f32.mrf.mxu0
  %v334 = vadd.f32 %v305, %v333
  %v335 = vpop.f32.mrf.mxu0
  %v336 = vadd.f32 %v307, %v335
  %337 = vmatmul.bf16.gmra.mxu0 %v119
  %v338 = vpop.f32.mrf.mxu0
  %v339 = vadd.f32 %v310, %v338
  %v340 = vpop.f32.mrf.mxu0
  %v341 = vadd.f32 %v312, %v340
  %342 = vmatmul.bf16.gmra.mxu0 %v121
  %v343 = vpop.f32.mrf.mxu0
  %v344 = vadd.f32 %v315, %v343
  %v345 = vpop.f32.mrf.mxu0
  %v346 = vadd.f32 %v317, %v345
  %347 = vdwg.mxu0
  %348 = vmatpush.bf16.msra.mxu0 %v241
  %349 = vmatpush.bf16.msra.mxu0 %v239
  %350 = vmatpush.bf16.msra.mxu0 %v237
  %351 = vmatpush.bf16.msra.mxu0 %v235
  %352 = vmatpush.bf16.msra.mxu0 %v233
  %353 = vmatpush.bf16.msra.mxu0 %v231
  %354 = vmatpush.bf16.msra.mxu0 %v229
  %355 = vmatpush.bf16.msra.mxu0 %v227
  %356 = vmatmul.bf16.gmra.mxu0 %v114
  %v357 = vpop.f32.mrf.mxu0
  %v358 = vadd.f32 0.0, %v357
  %v359 = vpop.f32.mrf.mxu0
  %v360 = vadd.f32 0.0, %v359
  %361 = vmatmul.bf16.gmra.mxu0 %v116
  %v362 = vpop.f32.mrf.mxu0
  %v363 = vadd.f32 0.0, %v362
  %v364 = vpop.f32.mrf.mxu0
  %v365 = vadd.f32 0.0, %v364
  %366 = vmatmul.bf16.gmra.mxu0 %v118
  %v367 = vpop.f32.mrf.mxu0
  %v368 = vadd.f32 0.0, %v367
  %v369 = vpop.f32.mrf.mxu0
  %v370 = vadd.f32 0.0, %v369
  %371 = vmatmul.bf16.gmra.mxu0 %v120
  %v372 = vpop.f32.mrf.mxu0
  %v373 = vadd.f32 0.0, %v372
  %v374 = vpop.f32.mrf.mxu0
  %v375 = vadd.f32 0.0, %v374
  %376 = vdwg.mxu0
  %377 = vmatpush.bf16.msra.mxu0 %v257
  %378 = vmatpush.bf16.msra.mxu0 %v255
  %379 = vmatpush.bf16.msra.mxu0 %v253
  %380 = vmatpush.bf16.msra.mxu0 %v251
  %381 = vmatpush.bf16.msra.mxu0 %v249
  %382 = vmatpush.bf16.msra.mxu0 %v247
  %383 = vmatpush.bf16.msra.mxu0 %v245
  %384 = vmatpush.bf16.msra.mxu0 %v243
  %385 = vmatmul.bf16.gmra.mxu0 %v115
  %v386 = vpop.f32.mrf.mxu0
  %v387 = vadd.f32 %v358, %v386
  %v388 = vpop.f32.mrf.mxu0
  %v389 = vadd.f32 %v360, %v388
  %390 = vmatmul.bf16.gmra.mxu0 %v117
  %v391 = vpop.f32.mrf.mxu0
  %v392 = vadd.f32 %v363, %v391
  %v393 = vpop.f32.mrf.mxu0
  %v394 = vadd.f32 %v365, %v393
  %395 = vmatmul.bf16.gmra.mxu0 %v119
  %v396 = vpop.f32.mrf.mxu0
  %v397 = vadd.f32 %v368, %v396
  %v398 = vpop.f32.mrf.mxu0
  %v399 = vadd.f32 %v370, %v398
  %400 = vmatmul.bf16.gmra.mxu0 %v121
  %v401 = vpop.f32.mrf.mxu0
  %v402 = vadd.f32 %v373, %v401
  %v403 = vpop.f32.mrf.mxu0
  %v404 = vadd.f32 %v375, %v403
  %405 = vdwg.mxu0
  %v406 = vadd.f32 %v34, %v329
  %v407 = vadd.f32 %v35, %v387
  %v408 = vadd.f32 %v36, %v331
  %v409 = vadd.f32 %v37, %v389
  %v410 = vadd.f32 %v38, %v334
  %v411 = vadd.f32 %v39, %v392
  %v412 = vadd.f32 %v40, %v336
  %v413 = vadd.f32 %v41, %v394
  %v414 = vadd.f32 %v42, %v339
  %v415 = vadd.f32 %v43, %v397
  %v416 = vadd.f32 %v44, %v341
  %v417 = vadd.f32 %v45, %v399
  %v418 = vadd.f32 %v46, %v344
  %v419 = vadd.f32 %v47, %v402
  %v420 = vadd.f32 %v48, %v346
  %v421 = vadd.f32 %v49, %v404
  %422 = vst [vmem:[%s3] sm:$0xff] %v406
  %423 = vst [vmem:[%s3 + $0x8] sm:$0xff] %v407
  %424 = vst [vmem:[%s3 + $0x10] sm:$0xff] %v408
  %425 = vst [vmem:[%s3 + $0x18] sm:$0xff] %v409
  %426 = vst [vmem:[%s3 + $0x20] sm:$0xff] %v410
  %427 = vst [vmem:[%s3 + $0x28] sm:$0xff] %v411
  %428 = vst [vmem:[%s3 + $0x30] sm:$0xff] %v412
  %429 = vst [vmem:[%s3 + $0x38] sm:$0xff] %v413
  %430 = vst [vmem:[%s3 + $0x40] sm:$0xff] %v414
  %431 = vst [vmem:[%s3 + $0x48] sm:$0xff] %v415
  %432 = vst [vmem:[%s3 + $0x50] sm:$0xff] %v416
  %433 = vst [vmem:[%s3 + $0x58] sm:$0xff] %v417
  %434 = vst [vmem:[%s3 + $0x60] sm:$0xff] %v418
  %435 = vst [vmem:[%s3 + $0x68] sm:$0xff] %v419
  %436 = vst [vmem:[%s3 + $0x70] sm:$0xff] %v420
  %437 = vst [vmem:[%s3 + $0x78] sm:$0xff] %v421
  // Predicated region
  $region18: #{generator_forward.25} parent=0 // pred_check
    %p438 = pneg %p14
  $region19: #{generator_forward.25} parent=0 // pred_check_branch
    %440 = sbr.rel (%p438) target = $region21
  $region20: #{generator_forward.25} parent=0 // pred_region
    %v441 = vld [vmem:[%s2] sm:$0xf]
    %v442 = vld [vmem:[%s3] sm:$0xff]
    %v443 = vld [vmem:[%s3 + $0x8] sm:$0xff]
    %v444 = vld [vmem:[%s3 + $0x10] sm:$0xff]
    %v445 = vld [vmem:[%s3 + $0x18] sm:$0xff]
    %v446 = vld [vmem:[%s3 + $0x20] sm:$0xff]
    %v447 = vld [vmem:[%s3 + $0x28] sm:$0xff]
    %v448 = vld [vmem:[%s3 + $0x30] sm:$0xff]
    %v449 = vld [vmem:[%s3 + $0x38] sm:$0xff]
    %v450 = vld [vmem:[%s3 + $0x40] sm:$0xff]
    %v451 = vld [vmem:[%s3 + $0x48] sm:$0xff]
    %v452 = vld [vmem:[%s3 + $0x50] sm:$0xff]
    %v453 = vld [vmem:[%s3 + $0x58] sm:$0xff]
    %v454 = vld [vmem:[%s3 + $0x60] sm:$0xff]
    %v455 = vld [vmem:[%s3 + $0x68] sm:$0xff]
    %v456 = vld [vmem:[%s3 + $0x70] sm:$0xff]
    %v457 = vld [vmem:[%s3 + $0x78] sm:$0xff]
    %v459 = vperm.slane %v441, 0
    %v460 = vperm.slane %v441, 2
    %v463 = vperm.slane %v459, 0
    %v464 = vperm.slane %v460, 0
    %v465 = vmul.f32 %v442, %v463
    %v466 = vmul.f32 %v443, %v464
    %v467 = vmul.f32 %v444, %v463
    %v468 = vmul.f32 %v445, %v464
    %v469 = vmul.f32 %v446, %v463
    %v470 = vmul.f32 %v447, %v464
    %v471 = vmul.f32 %v448, %v463
    %v472 = vmul.f32 %v449, %v464
    %v473 = vmul.f32 %v450, %v463
    %v474 = vmul.f32 %v451, %v464
    %v475 = vmul.f32 %v452, %v463
    %v476 = vmul.f32 %v453, %v464
    %v477 = vmul.f32 %v454, %v463
    %v478 = vmul.f32 %v455, %v464
    %v479 = vmul.f32 %v456, %v463
    %v480 = vmul.f32 %v457, %v464
    %v481 = vperm.slane %v441, 1
    %v482 = vperm.slane %v441, 3
    %v485 = vperm.slane %v481, 1
    %v486 = vperm.slane %v482, 1
    %v487 = vadd.f32 %v465, %v485
    %v488 = vadd.f32 %v466, %v486
    %v489 = vadd.f32 %v467, %v485
    %v490 = vadd.f32 %v468, %v486
    %v491 = vadd.f32 %v469, %v485
    %v492 = vadd.f32 %v470, %v486
    %v493 = vadd.f32 %v471, %v485
    %v494 = vadd.f32 %v472, %v486
    %v495 = vadd.f32 %v473, %v485
    %v496 = vadd.f32 %v474, %v486
    %v497 = vadd.f32 %v475, %v485
    %v498 = vadd.f32 %v476, %v486
    %v499 = vadd.f32 %v477, %v485
    %v500 = vadd.f32 %v478, %v486
    %v501 = vadd.f32 %v479, %v485
    %v502 = vadd.f32 %v480, %v486
    %503 = vst [vmem:[%s3] sm:$0xff] %v487
    %504 = vst [vmem:[%s3 + $0x8] sm:$0xff] %v488
    %505 = vst [vmem:[%s3 + $0x10] sm:$0xff] %v489
    %506 = vst [vmem:[%s3 + $0x18] sm:$0xff] %v490
    %507 = vst [vmem:[%s3 + $0x20] sm:$0xff] %v491
    %508 = vst [vmem:[%s3 + $0x28] sm:$0xff] %v492
    %509 = vst [vmem:[%s3 + $0x30] sm:$0xff] %v493
    %510 = vst [vmem:[%s3 + $0x38] sm:$0xff] %v494
    %511 = vst [vmem:[%s3 + $0x40] sm:$0xff] %v495
    %512 = vst [vmem:[%s3 + $0x48] sm:$0xff] %v496
    %513 = vst [vmem:[%s3 + $0x50] sm:$0xff] %v497
    %514 = vst [vmem:[%s3 + $0x58] sm:$0xff] %v498
    %515 = vst [vmem:[%s3 + $0x60] sm:$0xff] %v499
    %516 = vst [vmem:[%s3 + $0x68] sm:$0xff] %v500
    %517 = vst [vmem:[%s3 + $0x70] sm:$0xff] %v501
    %518 = vst [vmem:[%s3 + $0x78] sm:$0xff] %v502
  $region21: #{generator_forward.25} parent=0 // pred_fallthru
    _
  // Predicated region
  $region22: #{generator_forward.25} parent=0 // pred_check
    _
  $region23: #{generator_forward.25} parent=0 // pred_check_branch
    %520 = sbr.rel (0) target = $region25
  $region24: #{generator_forward.25} parent=0 // pred_region
    _
  $region25: #{generator_forward.25} parent=0 // pred_fallthru
    _
  // Predicated region
  $region26: #{generator_forward.25} parent=0 // pred_check
    _
  $region27: #{generator_forward.25} parent=0 // pred_check_branch
    %522 = sbr.rel (0) target = $region29
  $region28: #{generator_forward.25} parent=0 // pred_region
    _
  $region29: #{generator_forward.25} parent=0 // pred_fallthru
    _

// kernel: generator_forward.26
$region0: #{generator_forward.26}
  #allocation0 [shape = 'u32[]', space=smem, size = 0x4, offset = 0x4, fixed_abs, tag = 'smem constant byte address 0x4 - core index']
  #allocation1 [shape = 'u32[72,128]{1,0:T(1,128)}', space=vmem, size = 0x9000, scoped, tag = 'internal scratch']
  %s0 = inlined_call_operand.vmem [shape: bf16[64,2304], index: 0, kind: input, shape index: {}]
  %s1 = inlined_call_operand.vmem [shape: bf16[2304,256], index: 1, kind: input, shape index: {}]
  %s2 = inlined_call_operand.vmem [shape: f32[2,256], index: 2, kind: input, shape index: {}]
  %s3 = inlined_call_operand.vmem [shape: f32[64,256], index: 3, kind: output, shape index: {}]
  %s4 = sld [smem:[#allocation0]]
  $region91: #{generator_forward.26} parent=0
    _
  %s6 = ssub.s32 1, %s4
  %s7 = scalar_select 0, %s6, %s4
  $region1: #{generator_forward.26} parent=0
    #allocation2 [shape = 'u8[65536]{0}', space=vmem, size = 0x10000, scoped, tag = 'input window, operand 0']
    loop: start=0, step=1, limit=11
    $region2: #{generator_forward.26} parent=1 // loop_pre_header
      _
    $region3: #{generator_forward.26} parent=1 // loop_header
      %s9 = sphi 0, %s13
      %p10 = scmp.ge.s32.totalorder %s9, 11
      %s16 = sphi 0, %s35
      %s17 = sphi 0, %s31
      %s18 = sphi 0, %s27
      %s19 = sphi 0, %s16
      %s20 = sphi 0, %s17
      %s21 = sphi 0, %s18
      %s22 = sphi 0, %s19
      %s23 = sphi 0, %s20
      %s24 = sphi 0, %s21
      %s40 = sphi 0, %s42
      %s43 = sphi 0, %s40
      %s44 = sphi 0, %s43
      %s60 = sphi 0, %s44
      %s68 = sphi 0, %s70
      %s71 = sphi 0, %s68
      %s72 = sphi 0, %s71
      %s88 = sphi 0, %s72
      %s94 = sphi 0, %s96
      %s97 = sphi 0, %s94
      %s98 = sphi 0, %s97
      %s114 = sphi 0, %s98
      %s122 = sphi 0, %s124
      %s125 = sphi 0, %s122
      %s126 = sphi 0, %s125
      %s142 = sphi 0, %s126
    $region4: #{generator_forward.26} parent=1 // loop_header_branch
      %12 = sbr.rel (%p10) target = $region8
    $region5: #{generator_forward.26} parent=1 // loop_body
      %s14 = ssub.s32 %s9, 1
      %s15 = ssub.s32 %s9, 2
      %s25 = sadd.s32 1, %s18
      %p26 = scmp.ge.s32.totalorder %s25, 9
      %s27 = scalar_select %p26, 0, %s25
      %s28 = sadd.s32 1, %s17
      %s29 = scalar_select %p26, %s28, %s17
      %p30 = scmp.ge.s32.totalorder %s29, 1
      %s31 = scalar_select %p30, 0, %s29
      %s32 = sadd.s32 1, %s16
      %s33 = scalar_select %p30, %s32, %s16
      %p34 = scmp.ge.s32.totalorder %s33, 1
      %s35 = scalar_select %p34, 0, %s33
      %s36 = ssub.s32 %s16, %s35
      %s37 = ssub.s32 %s18, %s27
      %s38 = sor.u32 %s36, %s37
      %p39 = scmp.eq.s32.totalorder %s38, 0
      %s41 = sadd.s32 %s40, 1
      %s42 = scalar_select %p39, %s40, %s41
      %p45 = pneg %p39
      %p46 = scmp.eq.s32.totalorder %s9, 8
      %p47 = por %p45, %p46
      %p48 = scmp.ne.s32.totalorder %s40, %s43
      %p49 = scmp.eq.s32.totalorder %s9, 0
      %p50 = por %p48, %p49
      %p51 = scmp.ne.s32.totalorder %s40, %s43
      %p52 = scmp.eq.s32.totalorder %s14, 8
      %p53 = por %p51, %p52
      %p54 = scmp.ne.s32.totalorder %s43, %s44
      %p55 = scmp.eq.s32.totalorder %s14, 0
      %p56 = por %p54, %p55
      %p57 = scmp.ne.s32.totalorder %s43, %s44
      %p58 = scmp.eq.s32.totalorder %s15, 8
      %p59 = por %p57, %p58
      %p61 = scmp.ne.s32.totalorder %s44, %s60
      %p62 = scmp.eq.s32.totalorder %s15, 0
      %p63 = por %p61, %p62
      %s64 = ssub.s32 %s18, %s27
      %s65 = ssub.s32 %s17, %s31
      %s66 = sor.u32 %s64, %s65
      %p67 = scmp.eq.s32.totalorder %s66, 0
      %s69 = sadd.s32 %s68, 1
      %s70 = scalar_select %p67, %s68, %s69
      %p73 = pneg %p67
      %p74 = scmp.eq.s32.totalorder %s9, 8
      %p75 = por %p73, %p74
      %p76 = scmp.ne.s32.totalorder %s68, %s71
      %p77 = scmp.eq.s32.totalorder %s9, 0
      %p78 = por %p76, %p77
      %p79 = scmp.ne.s32.totalorder %s68, %s71
      %p80 = scmp.eq.s32.totalorder %s14, 8
      %p81 = por %p79, %p80
      %p82 = scmp.ne.s32.totalorder %s71, %s72
      %p83 = scmp.eq.s32.totalorder %s14, 0
      %p84 = por %p82, %p83
      %p85 = scmp.ne.s32.totalorder %s71, %s72
      %p86 = scmp.eq.s32.totalorder %s15, 8
      %p87 = por %p85, %p86
      %p89 = scmp.ne.s32.totalorder %s72, %s88
      %p90 = scmp.eq.s32.totalorder %s15, 0
      %p91 = por %p89, %p90
      %s92 = ssub.s32 %s17, %s31
      %p93 = scmp.eq.s32.totalorder %s92, 0
      %s95 = sadd.s32 %s94, 1
      %s96 = scalar_select %p93, %s94, %s95
      %p99 = pneg %p93
      %p100 = scmp.eq.s32.totalorder %s9, 8
      %p101 = por %p99, %p100
      %p102 = scmp.ne.s32.totalorder %s94, %s97
      %p103 = scmp.eq.s32.totalorder %s9, 0
      %p104 = por %p102, %p103
      %p105 = scmp.ne.s32.totalorder %s94, %s97
      %p106 = scmp.eq.s32.totalorder %s14, 8
      %p107 = por %p105, %p106
      %p108 = scmp.ne.s32.totalorder %s97, %s98
      %p109 = scmp.eq.s32.totalorder %s14, 0
      %p110 = por %p108, %p109
      %p111 = scmp.ne.s32.totalorder %s97, %s98
      %p112 = scmp.eq.s32.totalorder %s15, 8
      %p113 = por %p111, %p112
      %p115 = scmp.ne.s32.totalorder %s98, %s114
      %p116 = scmp.eq.s32.totalorder %s15, 0
      %p117 = por %p115, %p116
      %s118 = ssub.s32 %s16, %s35
      %s119 = ssub.s32 %s17, %s31
      %s120 = sor.u32 %s118, %s119
      %p121 = scmp.eq.s32.totalorder %s120, 0
      %s123 = sadd.s32 %s122, 1
      %s124 = scalar_select %p121, %s122, %s123
      %p127 = pneg %p121
      %p128 = scmp.eq.s32.totalorder %s9, 8
      %p129 = por %p127, %p128
      %p130 = scmp.ne.s32.totalorder %s122, %s125
      %p131 = scmp.eq.s32.totalorder %s9, 0
      %p132 = por %p130, %p131
      %p133 = scmp.ne.s32.totalorder %s122, %s125
      %p134 = scmp.eq.s32.totalorder %s14, 8
      %p135 = por %p133, %p134
      %p136 = scmp.ne.s32.totalorder %s125, %s126
      %p137 = scmp.eq.s32.totalorder %s14, 0
      %p138 = por %p136, %p137
      %p139 = scmp.ne.s32.totalorder %s125, %s126
      %p140 = scmp.eq.s32.totalorder %s15, 8
      %p141 = por %p139, %p140
      %p143 = scmp.ne.s32.totalorder %s126, %s142
      %p144 = scmp.eq.s32.totalorder %s15, 0
      %p145 = por %p143, %p144
      %p146 = scmp.le.s32.totalorder 1, %s9
      %p147 = scmp.lt.s32.totalorder %s9, 10
      %p148 = pnand %p146, %p147
      %p149 = pneg %p148
      // Predicated region
      $region9: #{generator_forward.26} parent=5 // pred_check
        _
      $region10: #{generator_forward.26} parent=5 // pred_check_branch
        %151 = sbr.rel (%p148) target = $region12
      $region11: #{generator_forward.26} parent=5 // pred_region
        %s152 = ssub.s32 %s9, 1
        // Predicated region
        $region13: #{generator_forward.26} parent=11 // pred_check
          %p153 = pneg %p110
        $region14: #{generator_forward.26} parent=11 // pred_check_branch
          %155 = sbr.rel (%p153) target = $region16
        $region15: #{generator_forward.26} parent=11 // pred_region
          %s156 = smul.u32 2, %s20
          %p157 = scmp.lt.s32.totalorder %s156, 1
          %s158 = scalar_select %p157, %s156, 1
          %s159 = smul.addr %s158, 2
          %s160 = scalar_lea.vmem %s2, %s159
          %s161 = smul.u32 2, %s20
        $region16: #{generator_forward.26} parent=11 // pred_fallthru
          _
      $region12: #{generator_forward.26} parent=5 // pred_fallthru
        _
      %p162 = scmp.lt.s32.totalorder %s9, 9
      // Predicated region
      $region17: #{generator_forward.26} parent=5 // pred_check
        %p163 = pneg %p162
      $region18: #{generator_forward.26} parent=5 // pred_check_branch
        %165 = sbr.rel (%p163) target = $region20
      $region19: #{generator_forward.26} parent=5 // pred_region
        // Predicated region
        $region21: #{generator_forward.26} parent=19 // pred_check
          %p166 = pneg %p50
        $region22: #{generator_forward.26} parent=19 // pred_check_branch
          %168 = sbr.rel (%p166) target = $region24
        $region23: #{generator_forward.26} parent=19 // pred_region
          %s169 = sand.u32 %s40, 1
          %s170 = sand.u32 %s40, 1
          %s171 = smul.addr %s170, 64
          %s172 = scalar_lea.vmem [#allocation2], %s171
          %s173 = smul.u32 8, %s16
          %s174 = smul.u32 2, %s18
          %s175 = smul.addr %s173, 18
          %s176 = sadd.s32 %s174, %s175
          %s177 = smul.addr %s176, 4
          %s178 = scalar_lea.vmem %s0, %s177
          // Predicated region
          $region25: #{generator_forward.26} parent=23 // pred_check
            _
          $region26: #{generator_forward.26} parent=23 // pred_check_branch
            %180 = sbr.rel (0) target = $region28
          $region27: #{generator_forward.26} parent=23 // pred_region
            // Predicated region
            $region29: #{generator_forward.26} parent=27 // pred_check
              _
            $region30: #{generator_forward.26} parent=27 // pred_check_branch
              %182 = sbr.rel (0) target = $region32
            $region31: #{generator_forward.26} parent=27 // pred_region
              // Predicated region
              $region44: #{generator_forward.26} parent=31 // pred_check
                _
              $region45: #{generator_forward.26} parent=31 // pred_check_branch
                %212 = sbr.rel (0) target = $region47
              $region46: #{generator_forward.26} parent=31 // pred_region
                loop: start=0, step=1, limit=1
                $region48: #{generator_forward.26} parent=46 // loop_pre_header
                  _
                $region49: #{generator_forward.26} parent=46 // loop_header
                  %s214 = sphi 0, %s218
                  %p215 = scmp.ge.s32.totalorder %s214, 1
                  %s219 = sphi %s178, %s178
                  %s220 = sphi %s172, %s172
                $region50: #{generator_forward.26} parent=46 // loop_header_branch
                  %217 = sbr.rel (%p215) target = $region54
                $region51: #{generator_forward.26} parent=46 // loop_body
                  %v221 = vld [vmem:[%s219] sm:$0xff]
                  %222 = vst [vmem:[%s220] sm:$0xff] %v221
                  %v223 = vld [vmem:[%s219 + $0x48] sm:$0xff]
                  %224 = vst [vmem:[%s220 + $0x8] sm:$0xff] %v223
                  %v225 = vld [vmem:[%s219 + $0x90] sm:$0xff]
                  %226 = vst [vmem:[%s220 + $0x10] sm:$0xff] %v225
                  %v227 = vld [vmem:[%s219 + $0xd8] sm:$0xff]
                  %228 = vst [vmem:[%s220 + $0x18] sm:$0xff] %v227
                  %v229 = vld [vmem:[%s219 + $0x120] sm:$0xff]
                  %230 = vst [vmem:[%s220 + $0x20] sm:$0xff] %v229
                  %v231 = vld [vmem:[%s219 + $0x168] sm:$0xff]
                  %232 = vst [vmem:[%s220 + $0x28] sm:$0xff] %v231
                  %v233 = vld [vmem:[%s219 + $0x1b0] sm:$0xff]
                  %234 = vst [vmem:[%s220 + $0x30] sm:$0xff] %v233
                  %v235 = vld [vmem:[%s219 + $0x1f8] sm:$0xff]
                  %236 = vst [vmem:[%s220 + $0x38] sm:$0xff] %v235
                $region52: #{generator_forward.26} parent=46 // loop_footer
                  %s218 = sadd.s32 1, %s214
                $region53: #{generator_forward.26} parent=46 // loop_footer_branch
                  %213 = sbr.rel target = $region49
                $region54: #{generator_forward.26} parent=46 // loop_exit
                  _
              $region47: #{generator_forward.26} parent=31 // pred_fallthru
                _
              // Predicated region
              $region55: #{generator_forward.26} parent=31 // pred_check
                _
              $region56: #{generator_forward.26} parent=31 // pred_check_branch
                %238 = sbr.rel target = $region58
              $region57: #{generator_forward.26} parent=31 // pred_region
                _
              $region58: #{generator_forward.26} parent=31 // pred_fallthru
                _
            $region32: #{generator_forward.26} parent=27 // pred_fallthru
              _
            // Predicated region
            $region33: #{generator_forward.26} parent=27 // pred_check
              _
            $region34: #{generator_forward.26} parent=27 // pred_check_branch
              %184 = sbr.rel target = $region36
            $region35: #{generator_forward.26} parent=27 // pred_region
              %s186 = ssub.s32 256, 1
              loop: start=0, step=1, limit=1
              $region37: #{generator_forward.26} parent=35 // loop_pre_header
                _
              $region38: #{generator_forward.26} parent=35 // loop_header
                %s188 = sphi 0, %s192
                %p189 = scmp.ge.s32.totalorder %s188, 1
                %s193 = sphi %s178, %s178
                %s194 = sphi %s172, %s172
              $region39: #{generator_forward.26} parent=35 // loop_header_branch
                %191 = sbr.rel (%p189) target = $region43
              $region40: #{generator_forward.26} parent=35 // loop_body
                %v195 = vld [vmem:[%s193] sm:%s186]
                %196 = vst [vmem:[%s194] sm:%s186] %v195
                %v197 = vld [vmem:[%s193 + $0x48] sm:%s186]
                %198 = vst [vmem:[%s194 + $0x8] sm:%s186] %v197
                %v199 = vld [vmem:[%s193 + $0x90] sm:%s186]
                %200 = vst [vmem:[%s194 + $0x10] sm:%s186] %v199
                %v201 = vld [vmem:[%s193 + $0xd8] sm:%s186]
                %202 = vst [vmem:[%s194 + $0x18] sm:%s186] %v201
                %v203 = vld [vmem:[%s193 + $0x120] sm:%s186]
                %204 = vst [vmem:[%s194 + $0x20] sm:%s186] %v203
                %v205 = vld [vmem:[%s193 + $0x168] sm:%s186]
                %206 = vst [vmem:[%s194 + $0x28] sm:%s186] %v205
                %v207 = vld [vmem:[%s193 + $0x1b0] sm:%s186]
                %208 = vst [vmem:[%s194 + $0x30] sm:%s186] %v207
                %v209 = vld [vmem:[%s193 + $0x1f8] sm:%s186]
                %210 = vst [vmem:[%s194 + $0x38] sm:%s186] %v209
              $region41: #{generator_forward.26} parent=35 // loop_footer
                %s192 = sadd.s32 1, %s188
              $region42: #{generator_forward.26} parent=35 // loop_footer_branch
                %187 = sbr.rel target = $region38
              $region43: #{generator_forward.26} parent=35 // loop_exit
                _
            $region36: #{generator_forward.26} parent=27 // pred_fallthru
              _
          $region28: #{generator_forward.26} parent=23 // pred_fallthru
            _
          %239 = vnop
        $region24: #{generator_forward.26} parent=19 // pred_fallthru
          _
        // Predicated region
        $region59: #{generator_forward.26} parent=19 // pred_check
          %p240 = pneg %p78
        $region60: #{generator_forward.26} parent=19 // pred_check_branch
          %242 = sbr.rel (%p240) target = $region62
        $region61: #{generator_forward.26} parent=19 // pred_region
          %s243 = smul.u32 32, %s18
          %s244 = smul.u32 2, %s17
          %p245 = scmp.lt.s32.totalorder %s243, 287
          %s246 = scalar_select %p245, %s243, 287
          %p247 = scmp.lt.s32.totalorder %s244, 1
          %s248 = scalar_select %p247, %s244, 1
          %s249 = smul.addr %s246, 2
          %s250 = sadd.s32 %s248, %s249
          %s251 = smul.addr %s250, 4
          %s252 = scalar_lea.vmem %s1, %s251
          %s253 = smul.u32 32, %s18
          %s254 = smul.u32 2, %s17
        $region62: #{generator_forward.26} parent=19 // pred_fallthru
          _
      $region20: #{generator_forward.26} parent=5 // pred_fallthru
        _
      %p255 = scmp.le.s32.totalorder 1, %s9
      %p256 = scmp.lt.s32.totalorder %s9, 10
      %p257 = pnand %p255, %p256
      %p258 = pneg %p257
      // Predicated region
      $region63: #{generator_forward.26} parent=5 // pred_check
        _
      $region64: #{generator_forward.26} parent=5 // pred_check_branch
        %260 = sbr.rel (%p257) target = $region66
      $region65: #{generator_forward.26} parent=5 // pred_region
        %s261 = ssub.s32 %s9, 1
        %s262 = sand.u32 %s43, 1
        %s263 = sand.u32 %s43, 1
        %s264 = smul.addr %s263, 64
        %s265 = scalar_lea.vmem [#allocation2], %s264
        // Predicated region
        $region67: #{generator_forward.26} parent=65 // pred_check
          %p266 = pneg %p56
        $region68: #{generator_forward.26} parent=65 // pred_check_branch
          %268 = sbr.rel (%p266) target = $region70
        $region69: #{generator_forward.26} parent=65 // pred_region
          _
        $region70: #{generator_forward.26} parent=65 // pred_fallthru
          _
        %s269 = sand.u32 %s43, 1
        %s270 = sand.u32 %s43, 1
        %s271 = smul.addr %s270, 64
        %s272 = scalar_lea.vmem [#allocation2], %s271
        %p273 = pneg %p56
        %p274 = pneg %p53
        %s275 = smul.u32 32, %s21
        %s276 = smul.u32 2, %s20
        %p277 = scmp.lt.s32.totalorder %s275, 287
        %s278 = scalar_select %p277, %s275, 287
        %p279 = scmp.lt.s32.totalorder %s276, 1
        %s280 = scalar_select %p279, %s276, 1
        %s281 = smul.addr %s278, 2
        %s282 = sadd.s32 %s280, %s281
        %s283 = smul.addr %s282, 4
        %s284 = scalar_lea.vmem %s1, %s283
        %p285 = pneg %p84
        %p286 = pneg %p81
        %s287 = smul.u32 2, %s20
        %p288 = scmp.lt.s32.totalorder %s287, 1
        %s289 = scalar_select %p288, %s287, 1
        %s290 = smul.addr %s289, 2
        %s291 = scalar_lea.vmem %s2, %s290
        %p292 = pneg %p110
        %p293 = pneg %p107
        %p294 = pneg %p138
        %p295 = pneg %p135
        %s296 = smul.u32 8, %s19
        %s297 = smul.u32 2, %s20
        %p298 = scmp.lt.s32.totalorder %s296, 7
        %s299 = scalar_select %p298, %s296, 7
        %p300 = scmp.lt.s32.totalorder %s297, 1
        %s301 = scalar_select %p300, %s297, 1
        %s302 = smul.addr %s299, 2
        %s303 = sadd.s32 %s301, %s302
        %s304 = smul.addr %s303, 8
        %s305 = scalar_lea.vmem %s3, %s304
        %s306 = smul.u32 8, %s19
        %s307 = smul.u32 2, %s21
        %s308 = smul.u32 32, %s21
        %s309 = smul.u32 2, %s20
        %p310 = scmp.lt.s32.totalorder %s308, 287
        %s311 = scalar_select %p310, %s308, 287
        %p312 = scmp.lt.s32.totalorder %s309, 1
        %s313 = scalar_select %p312, %s309, 1
        %s314 = smul.addr %s311, 2
        %s315 = sadd.s32 %s313, %s314
        %s316 = smul.addr %s315, 4
        %s317 = scalar_lea.vmem %s1, %s316
        %s318 = smul.u32 32, %s21
        %s319 = smul.u32 2, %s20
        %s320 = smul.u32 2, %s20
        %p321 = scmp.lt.s32.totalorder %s320, 1
        %s322 = scalar_select %p321, %s320, 1
        %s323 = smul.addr %s322, 2
        %s324 = scalar_lea.vmem %s2, %s323
        %s325 = smul.u32 2, %s20
        %s326 = smul.u32 8, %s19
        %s327 = smul.u32 2, %s20
        %p328 = scmp.lt.s32.totalorder %s326, 7
        %s329 = scalar_select %p328, %s326, 7
        %p330 = scmp.lt.s32.totalorder %s327, 1
        %s331 = scalar_select %p330, %s327, 1
        %s332 = smul.addr %s329, 2
        %s333 = sadd.s32 %s331, %s332
        %s334 = smul.addr %s333, 8
        %s335 = scalar_lea.vmem %s3, %s334
        %s336 = smul.u32 8, %s19
        %s337 = smul.u32 2, %s20
        %p338 = scmp.eq.s32.totalorder %s21, 0
        // Predicated region
        $region71: #{generator_forward.26} parent=65 // pred_check
          %p339 = pneg %p338
        $region72: #{generator_forward.26} parent=65 // pred_check_branch
          %341 = sbr.rel (%p339) target = $region74
        $region73: #{generator_forward.26} parent=65 // pred_region
          %342 = vst [vmem:[%s335] sm:$0xff] 0.0
          %343 = vst [vmem:[%s335 + $0x8] sm:$0xff] 0.0
          %344 = vst [vmem:[%s335 + $0x10] sm:$0xff] 0.0
          %345 = vst [vmem:[%s335 + $0x18] sm:$0xff] 0.0
          %346 = vst [vmem:[%s335 + $0x20] sm:$0xff] 0.0
          %347 = vst [vmem:[%s335 + $0x28] sm:$0xff] 0.0
          %348 = vst [vmem:[%s335 + $0x30] sm:$0xff] 0.0
          %349 = vst [vmem:[%s335 + $0x38] sm:$0xff] 0.0
          %350 = vst [vmem:[%s335 + $0x40] sm:$0xff] 0.0
          %351 = vst [vmem:[%s335 + $0x48] sm:$0xff] 0.0
          %352 = vst [vmem:[%s335 + $0x50] sm:$0xff] 0.0
          %353 = vst [vmem:[%s335 + $0x58] sm:$0xff] 0.0
          %354 = vst [vmem:[%s335 + $0x60] sm:$0xff] 0.0
          %355 = vst [vmem:[%s335 + $0x68] sm:$0xff] 0.0
          %356 = vst [vmem:[%s335 + $0x70] sm:$0xff] 0.0
          %357 = vst [vmem:[%s335 + $0x78] sm:$0xff] 0.0
        $region74: #{generator_forward.26} parent=65 // pred_fallthru
          _
        %v358 = vld [vmem:[%s335] sm:$0xff]
        %v359 = vld [vmem:[%s335 + $0x8] sm:$0xff]
        %v360 = vld [vmem:[%s335 + $0x10] sm:$0xff]
        %v361 = vld [vmem:[%s335 + $0x18] sm:$0xff]
        %v362 = vld [vmem:[%s335 + $0x20] sm:$0xff]
        %v363 = vld [vmem:[%s335 + $0x28] sm:$0xff]
        %v364 = vld [vmem:[%s335 + $0x30] sm:$0xff]
        %v365 = vld [vmem:[%s335 + $0x38] sm:$0xff]
        %v366 = vld [vmem:[%s335 + $0x40] sm:$0xff]
        %v367 = vld [vmem:[%s335 + $0x48] sm:$0xff]
        %v368 = vld [vmem:[%s335 + $0x50] sm:$0xff]
        %v369 = vld [vmem:[%s335 + $0x58] sm:$0xff]
        %v370 = vld [vmem:[%s335 + $0x60] sm:$0xff]
        %v371 = vld [vmem:[%s335 + $0x68] sm:$0xff]
        %v372 = vld [vmem:[%s335 + $0x70] sm:$0xff]
        %v373 = vld [vmem:[%s335 + $0x78] sm:$0xff]
        %v374 = vld [vmem:[%s265] sm:$0xff]
        %v375 = vld [vmem:[%s265 + $0x8] sm:$0xff]
        %v376 = vld [vmem:[%s265 + $0x10] sm:$0xff]
        %v377 = vld [vmem:[%s265 + $0x18] sm:$0xff]
        %v378 = vld [vmem:[%s265 + $0x20] sm:$0xff]
        %v379 = vld [vmem:[%s265 + $0x28] sm:$0xff]
        %v380 = vld [vmem:[%s265 + $0x30] sm:$0xff]
        %v381 = vld [vmem:[%s265 + $0x38] sm:$0xff]
        %v382 = vld [vmem:[%s317] sm:$0xff]
        %v383 = vld [vmem:[%s317 + $0x8] sm:$0xff]
        %v384 = vld [vmem:[%s317 + $0x10] sm:$0xff]
        %v385 = vld [vmem:[%s317 + $0x18] sm:$0xff]
        %v386 = vld [vmem:[%s317 + $0x20] sm:$0xff]
        %v387 = vld [vmem:[%s317 + $0x28] sm:$0xff]
        %v388 = vld [vmem:[%s317 + $0x30] sm:$0xff]
        %v389 = vld [vmem:[%s317 + $0x38] sm:$0xff]
        %v390 = vld [vmem:[%s317 + $0x40] sm:$0xff]
        %v391 = vld [vmem:[%s317 + $0x48] sm:$0xff]
        %v392 = vld [vmem:[%s317 + $0x50] sm:$0xff]
        %v393 = vld [vmem:[%s317 + $0x58] sm:$0xff]
        %v394 = vld [vmem:[%s317 + $0x60] sm:$0xff]
        %v395 = vld [vmem:[%s317 + $0x68] sm:$0xff]
        %v396 = vld [vmem:[%s317 + $0x70] sm:$0xff]
        %v397 = vld [vmem:[%s317 + $0x78] sm:$0xff]
        %v398 = vld [vmem:[%s317 + $0x80] sm:$0xff]
        %v399 = vld [vmem:[%s317 + $0x88] sm:$0xff]
        %v400 = vld [vmem:[%s317 + $0x90] sm:$0xff]
        %v401 = vld [vmem:[%s317 + $0x98] sm:$0xff]
        %v402 = vld [vmem:[%s317 + $0xa0] sm:$0xff]
        %v403 = vld [vmem:[%s317 + $0xa8] sm:$0xff]
        %v404 = vld [vmem:[%s317 + $0xb0] sm:$0xff]
        %v405 = vld [vmem:[%s317 + $0xb8] sm:$0xff]
        %v406 = vld [vmem:[%s317 + $0xc0] sm:$0xff]
        %v407 = vld [vmem:[%s317 + $0xc8] sm:$0xff]
        %v408 = vld [vmem:[%s317 + $0xd0] sm:$0xff]
        %v409 = vld [vmem:[%s317 + $0xd8] sm:$0xff]
        %v410 = vld [vmem:[%s317 + $0xe0] sm:$0xff]
        %v411 = vld [vmem:[%s317 + $0xe8] sm:$0xff]
        %v412 = vld [vmem:[%s317 + $0xf0] sm:$0xff]
        %v413 = vld [vmem:[%s317 + $0xf8] sm:$0xff]
        %v422 = vunpack.c.l.b16 %v374
        %v423 = vunpack.c.h.b16 %v374
        %v424 = vunpack.c.l.b16 %v375
        %v425 = vunpack.c.h.b16 %v375
        %v426 = vunpack.c.l.b16 %v376
        %v427 = vunpack.c.h.b16 %v376
        %v428 = vunpack.c.l.b16 %v377
        %v429 = vunpack.c.h.b16 %v377
        %v430 = vunpack.c.l.b16 %v378
        %v431 = vunpack.c.h.b16 %v378
        %v432 = vunpack.c.l.b16 %v379
        %v433 = vunpack.c.h.b16 %v379
        %v434 = vunpack.c.l.b16 %v380
        %v435 = vunpack.c.h.b16 %v380
        %v436 = vunpack.c.l.b16 %v381
        %v437 = vunpack.c.h.b16 %v381
        %v438 = vpack.c.b16 %v424, %v422
        %v439 = vpack.c.b16 %v425, %v423
        %v440 = vpack.c.b16 %v428, %v426
        %v441 = vpack.c.b16 %v429, %v427
        %v442 = vpack.c.b16 %v432, %v430
        %v443 = vpack.c.b16 %v433, %v431
        %v444 = vpack.c.b16 %v436, %v434
        %v445 = vpack.c.b16 %v437, %v435
        %v486 = vunpack.c.l.b16 %v382
        %v487 = vunpack.c.h.b16 %v382
        %v488 = vunpack.c.l.b16 %v383
        %v489 = vunpack.c.h.b16 %v383
        %v490 = vunpack.c.l.b16 %v384
        %v491 = vunpack.c.h.b16 %v384
        %v492 = vunpack.c.l.b16 %v385
        %v493 = vunpack.c.h.b16 %v385
        %v494 = vunpack.c.l.b16 %v386
        %v495 = vunpack.c.h.b16 %v386
        %v496 = vunpack.c.l.b16 %v387
        %v497 = vunpack.c.h.b16 %v387
        %v498 = vunpack.c.l.b16 %v388
        %v499 = vunpack.c.h.b16 %v388
        %v500 = vunpack.c.l.b16 %v389
        %v501 = vunpack.c.h.b16 %v389
        %v502 = vunpack.c.l.b16 %v390
        %v503 = vunpack.c.h.b16 %v390
        %v504 = vunpack.c.l.b16 %v391
        %v505 = vunpack.c.h.b16 %v391
        %v506 = vunpack.c.l.b16 %v392
        %v507 = vunpack.c.h.b16 %v392
        %v508 = vunpack.c.l.b16 %v393
        %v509 = vunpack.c.h.b16 %v393
        %v510 = vunpack.c.l.b16 %v394
        %v511 = vunpack.c.h.b16 %v394
        %v512 = vunpack.c.l.b16 %v395
        %v513 = vunpack.c.h.b16 %v395
        %v514 = vunpack.c.l.b16 %v396
        %v515 = vunpack.c.h.b16 %v396
        %v516 = vunpack.c.l.b16 %v397
        %v517 = vunpack.c.h.b16 %v397
        %v518 = vunpack.c.l.b16 %v398
        %v519 = vunpack.c.h.b16 %v398
        %v520 = vunpack.c.l.b16 %v399
        %v521 = vunpack.c.h.b16 %v399
        %v522 = vunpack.c.l.b16 %v400
        %v523 = vunpack.c.h.b16 %v400
        %v524 = vunpack.c.l.b16 %v401
        %v525 = vunpack.c.h.b16 %v401
        %v526 = vunpack.c.l.b16 %v402
        %v527 = vunpack.c.h.b16 %v402
        %v528 = vunpack.c.l.b16 %v403
        %v529 = vunpack.c.h.b16 %v403
        %v530 = vunpack.c.l.b16 %v404
        %v531 = vunpack.c.h.b16 %v404
        %v532 = vunpack.c.l.b16 %v405
        %v533 = vunpack.c.h.b16 %v405
        %v534 = vunpack.c.l.b16 %v406
        %v535 = vunpack.c.h.b16 %v406
        %v536 = vunpack.c.l.b16 %v407
        %v537 = vunpack.c.h.b16 %v407
        %v538 = vunpack.c.l.b16 %v408
        %v539 = vunpack.c.h.b16 %v408
        %v540 = vunpack.c.l.b16 %v409
        %v541 = vunpack.c.h.b16 %v409
        %v542 = vunpack.c.l.b16 %v410
        %v543 = vunpack.c.h.b16 %v410
        %v544 = vunpack.c.l.b16 %v411
        %v545 = vunpack.c.h.b16 %v411
        %v546 = vunpack.c.l.b16 %v412
        %v547 = vunpack.c.h.b16 %v412
        %v548 = vunpack.c.l.b16 %v413
        %v549 = vunpack.c.h.b16 %v413
        %v550 = vpack.c.b16 %v488, %v486
        %v551 = vpack.c.b16 %v489, %v487
        %v552 = vpack.c.b16 %v492, %v490
        %v553 = vpack.c.b16 %v493, %v491
        %v554 = vpack.c.b16 %v496, %v494
        %v555 = vpack.c.b16 %v497, %v495
        %v556 = vpack.c.b16 %v500, %v498
        %v557 = vpack.c.b16 %v501, %v499
        %v558 = vpack.c.b16 %v504, %v502
        %v559 = vpack.c.b16 %v505, %v503
        %v560 = vpack.c.b16 %v508, %v506
        %v561 = vpack.c.b16 %v509, %v507
        %v562 = vpack.c.b16 %v512, %v510
        %v563 = vpack.c.b16 %v513, %v511
        %v564 = vpack.c.b16 %v516, %v514
        %v565 = vpack.c.b16 %v517, %v515
        %v566 = vpack.c.b16 %v520, %v518
        %v567 = vpack.c.b16 %v521, %v519
        %v568 = vpack.c.b16 %v524, %v522
        %v569 = vpack.c.b16 %v525, %v523
        %v570 = vpack.c.b16 %v528, %v526
        %v571 = vpack.c.b16 %v529, %v527
        %v572 = vpack.c.b16 %v532, %v530
        %v573 = vpack.c.b16 %v533, %v531
        %v574 = vpack.c.b16 %v536, %v534
        %v575 = vpack.c.b16 %v537, %v535
        %v576 = vpack.c.b16 %v540, %v538
        %v577 = vpack.c.b16 %v541, %v539
        %v578 = vpack.c.b16 %v544, %v542
        %v579 = vpack.c.b16 %v545, %v543
        %v580 = vpack.c.b16 %v548, %v546
        %v581 = vpack.c.b16 %v549, %v547
        %614 = vmatpush.bf16.msra.mxu0 %v564
        %615 = vmatpush.bf16.msra.mxu0 %v562
        %616 = vmatpush.bf16.msra.mxu0 %v560
        %617 = vmatpush.bf16.msra.mxu0 %v558
        %618 = vmatpush.bf16.msra.mxu0 %v556
        %619 = vmatpush.bf16.msra.mxu0 %v554
        %620 = vmatpush.bf16.msra.mxu0 %v552
        %621 = vmatpush.bf16.msra.mxu0 %v550
        %622 = vmatmul.bf16.gmra.mxu0 %v438
        %v623 = vpop.f32.mrf.mxu0
        %v624 = vadd.f32 0.0, %v623
        %v625 = vpop.f32.mrf.mxu0
        %v626 = vadd.f32 0.0, %v625
        %627 = vmatmul.bf16.gmra.mxu0 %v440
        %v628 = vpop.f32.mrf.mxu0
        %v629 = vadd.f32 0.0, %v628
        %v630 = vpop.f32.mrf.mxu0
        %v631 = vadd.f32 0.0, %v630
        %632 = vmatmul.bf16.gmra.mxu0 %v442
        %v633 = vpop.f32.mrf.mxu0
        %v634 = vadd.f32 0.0, %v633
        %v635 = vpop.f32.mrf.mxu0
        %v636 = vadd.f32 0.0, %v635
        %637 = vmatmul.bf16.gmra.mxu0 %v444
        %v638 = vpop.f32.mrf.mxu0
        %v639 = vadd.f32 0.0, %v638
        %v640 = vpop.f32.mrf.mxu0
        %v641 = vadd.f32 0.0, %v640
        %642 = vdwg.mxu0
        %643 = vmatpush.bf16.msra.mxu0 %v580
        %644 = vmatpush.bf16.msra.mxu0 %v578
        %645 = vmatpush.bf16.msra.mxu0 %v576
        %646 = vmatpush.bf16.msra.mxu0 %v574
        %647 = vmatpush.bf16.msra.mxu0 %v572
        %648 = vmatpush.bf16.msra.mxu0 %v570
        %649 = vmatpush.bf16.msra.mxu0 %v568
        %650 = vmatpush.bf16.msra.mxu0 %v566
        %651 = vmatmul.bf16.gmra.mxu0 %v439
        %v652 = vpop.f32.mrf.mxu0
        %v653 = vadd.f32 %v624, %v652
        %v654 = vpop.f32.mrf.mxu0
        %v655 = vadd.f32 %v626, %v654
        %656 = vmatmul.bf16.gmra.mxu0 %v441
        %v657 = vpop.f32.mrf.mxu0
        %v658 = vadd.f32 %v629, %v657
        %v659 = vpop.f32.mrf.mxu0
        %v660 = vadd.f32 %v631, %v659
        %661 = vmatmul.bf16.gmra.mxu0 %v443
        %v662 = vpop.f32.mrf.mxu0
        %v663 = vadd.f32 %v634, %v662
        %v664 = vpop.f32.mrf.mxu0
        %v665 = vadd.f32 %v636, %v664
        %666 = vmatmul.bf16.gmra.mxu0 %v445
        %v667 = vpop.f32.mrf.mxu0
        %v668 = vadd.f32 %v639, %v667
        %v669 = vpop.f32.mrf.mxu0
        %v670 = vadd.f32 %v641, %v669
        %671 = vdwg.mxu0
        %672 = vmatpush.bf16.msra.mxu0 %v565
        %673 = vmatpush.bf16.msra.mxu0 %v563
        %674 = vmatpush.bf16.msra.mxu0 %v561
        %675 = vmatpush.bf16.msra.mxu0 %v559
        %676 = vmatpush.bf16.msra.mxu0 %v557
        %677 = vmatpush.bf16.msra.mxu0 %v555
        %678 = vmatpush.bf16.msra.mxu0 %v553
        %679 = vmatpush.bf16.msra.mxu0 %v551
        %680 = vmatmul.bf16.gmra.mxu0 %v438
        %v681 = vpop.f32.mrf.mxu0
        %v682 = vadd.f32 0.0, %v681
        %v683 = vpop.f32.mrf.mxu0
        %v684 = vadd.f32 0.0, %v683
        %685 = vmatmul.bf16.gmra.mxu0 %v440
        %v686 = vpop.f32.mrf.mxu0
        %v687 = vadd.f32 0.0, %v686
        %v688 = vpop.f32.mrf.mxu0
        %v689 = vadd.f32 0.0, %v688
        %690 = vmatmul.bf16.gmra.mxu0 %v442
        %v691 = vpop.f32.mrf.mxu0
        %v692 = vadd.f32 0.0, %v691
        %v693 = vpop.f32.mrf.mxu0
        %v694 = vadd.f32 0.0, %v693
        %695 = vmatmul.bf16.gmra.mxu0 %v444
        %v696 = vpop.f32.mrf.mxu0
        %v697 = vadd.f32 0.0, %v696
        %v698 = vpop.f32.mrf.mxu0
        %v699 = vadd.f32 0.0, %v698
        %700 = vdwg.mxu0
        %701 = vmatpush.bf16.msra.mxu0 %v581
        %702 = vmatpush.bf16.msra.mxu0 %v579
        %703 = vmatpush.bf16.msra.mxu0 %v577
        %704 = vmatpush.bf16.msra.mxu0 %v575
        %705 = vmatpush.bf16.msra.mxu0 %v573
        %706 = vmatpush.bf16.msra.mxu0 %v571
        %707 = vmatpush.bf16.msra.mxu0 %v569
        %708 = vmatpush.bf16.msra.mxu0 %v567
        %709 = vmatmul.bf16.gmra.mxu0 %v439
        %v710 = vpop.f32.mrf.mxu0
        %v711 = vadd.f32 %v682, %v710
        %v712 = vpop.f32.mrf.mxu0
        %v713 = vadd.f32 %v684, %v712
        %714 = vmatmul.bf16.gmra.mxu0 %v441
        %v715 = vpop.f32.mrf.mxu0
        %v716 = vadd.f32 %v687, %v715
        %v717 = vpop.f32.mrf.mxu0
        %v718 = vadd.f32 %v689, %v717
        %719 = vmatmul.bf16.gmra.mxu0 %v443
        %v720 = vpop.f32.mrf.mxu0
        %v721 = vadd.f32 %v692, %v720
        %v722 = vpop.f32.mrf.mxu0
        %v723 = vadd.f32 %v694, %v722
        %724 = vmatmul.bf16.gmra.mxu0 %v445
        %v725 = vpop.f32.mrf.mxu0
        %v726 = vadd.f32 %v697, %v725
        %v727 = vpop.f32.mrf.mxu0
        %v728 = vadd.f32 %v699, %v727
        %729 = vdwg.mxu0
        %v730 = vadd.f32 %v358, %v653
        %v731 = vadd.f32 %v359, %v711
        %v732 = vadd.f32 %v360, %v655
        %v733 = vadd.f32 %v361, %v713
        %v734 = vadd.f32 %v362, %v658
        %v735 = vadd.f32 %v363, %v716
        %v736 = vadd.f32 %v364, %v660
        %v737 = vadd.f32 %v365, %v718
        %v738 = vadd.f32 %v366, %v663
        %v739 = vadd.f32 %v367, %v721
        %v740 = vadd.f32 %v368, %v665
        %v741 = vadd.f32 %v369, %v723
        %v742 = vadd.f32 %v370, %v668
        %v743 = vadd.f32 %v371, %v726
        %v744 = vadd.f32 %v372, %v670
        %v745 = vadd.f32 %v373, %v728
        %746 = vst [vmem:[%s335] sm:$0xff] %v730
        %747 = vst [vmem:[%s335 + $0x8] sm:$0xff] %v731
        %748 = vst [vmem:[%s335 + $0x10] sm:$0xff] %v732
        %749 = vst [vmem:[%s335 + $0x18] sm:$0xff] %v733
        %750 = vst [vmem:[%s335 + $0x20] sm:$0xff] %v734
        %751 = vst [vmem:[%s335 + $0x28] sm:$0xff] %v735
        %752 = vst [vmem:[%s335 + $0x30] sm:$0xff] %v736
        %753 = vst [vmem:[%s335 + $0x38] sm:$0xff] %v737
        %754 = vst [vmem:[%s335 + $0x40] sm:$0xff] %v738
        %755 = vst [vmem:[%s335 + $0x48] sm:$0xff] %v739
        %756 = vst [vmem:[%s335 + $0x50] sm:$0xff] %v740
        %757 = vst [vmem:[%s335 + $0x58] sm:$0xff] %v741
        %758 = vst [vmem:[%s335 + $0x60] sm:$0xff] %v742
        %759 = vst [vmem:[%s335 + $0x68] sm:$0xff] %v743
        %760 = vst [vmem:[%s335 + $0x70] sm:$0xff] %v744
        %761 = vst [vmem:[%s335 + $0x78] sm:$0xff] %v745
        %p762 = scmp.eq.s32.totalorder %s21, 8
        // Predicated region
        $region75: #{generator_forward.26} parent=65 // pred_check
          %p763 = pneg %p762
        $region76: #{generator_forward.26} parent=65 // pred_check_branch
          %765 = sbr.rel (%p763) target = $region78
        $region77: #{generator_forward.26} parent=65 // pred_region
          %v766 = vld [vmem:[%s324] sm:$0xf]
          %v767 = vld [vmem:[%s335] sm:$0xff]
          %v768 = vld [vmem:[%s335 + $0x8] sm:$0xff]
          %v769 = vld [vmem:[%s335 + $0x10] sm:$0xff]
          %v770 = vld [vmem:[%s335 + $0x18] sm:$0xff]
          %v771 = vld [vmem:[%s335 + $0x20] sm:$0xff]
          %v772 = vld [vmem:[%s335 + $0x28] sm:$0xff]
          %v773 = vld [vmem:[%s335 + $0x30] sm:$0xff]
          %v774 = vld [vmem:[%s335 + $0x38] sm:$0xff]
          %v775 = vld [vmem:[%s335 + $0x40] sm:$0xff]
          %v776 = vld [vmem:[%s335 + $0x48] sm:$0xff]
          %v777 = vld [vmem:[%s335 + $0x50] sm:$0xff]
          %v778 = vld [vmem:[%s335 + $0x58] sm:$0xff]
          %v779 = vld [vmem:[%s335 + $0x60] sm:$0xff]
          %v780 = vld [vmem:[%s335 + $0x68] sm:$0xff]
          %v781 = vld [vmem:[%s335 + $0x70] sm:$0xff]
          %v782 = vld [vmem:[%s335 + $0x78] sm:$0xff]
          %v784 = vperm.slane %v766, 0
          %v785 = vperm.slane %v766, 2
          %v788 = vperm.slane %v784, 0
          %v789 = vperm.slane %v785, 0
          %v790 = vmul.f32 %v767, %v788
          %v791 = vmul.f32 %v768, %v789
          %v792 = vmul.f32 %v769, %v788
          %v793 = vmul.f32 %v770, %v789
          %v794 = vmul.f32 %v771, %v788
          %v795 = vmul.f32 %v772, %v789
          %v796 = vmul.f32 %v773, %v788
          %v797 = vmul.f32 %v774, %v789
          %v798 = vmul.f32 %v775, %v788
          %v799 = vmul.f32 %v776, %v789
          %v800 = vmul.f32 %v777, %v788
          %v801 = vmul.f32 %v778, %v789
          %v802 = vmul.f32 %v779, %v788
          %v803 = vmul.f32 %v780, %v789
          %v804 = vmul.f32 %v781, %v788
          %v805 = vmul.f32 %v782, %v789
          %v806 = vperm.slane %v766, 1
          %v807 = vperm.slane %v766, 3
          %v810 = vperm.slane %v806, 1
          %v811 = vperm.slane %v807, 1
          %v812 = vadd.f32 %v790, %v810
          %v813 = vadd.f32 %v791, %v811
          %v814 = vadd.f32 %v792, %v810
          %v815 = vadd.f32 %v793, %v811
          %v816 = vadd.f32 %v794, %v810
          %v817 = vadd.f32 %v795, %v811
          %v818 = vadd.f32 %v796, %v810
          %v819 = vadd.f32 %v797, %v811
          %v820 = vadd.f32 %v798, %v810
          %v821 = vadd.f32 %v799, %v811
          %v822 = vadd.f32 %v800, %v810
          %v823 = vadd.f32 %v801, %v811
          %v824 = vadd.f32 %v802, %v810
          %v825 = vadd.f32 %v803, %v811
          %v826 = vadd.f32 %v804, %v810
          %v827 = vadd.f32 %v805, %v811
          %vm828 = vcmp.ge.f32.partialorder %v812, 0.0
          %vm829 = vcmp.ge.f32.partialorder %v813, 0.0
          %vm830 = vcmp.ge.f32.partialorder %v814, 0.0
          %vm831 = vcmp.ge.f32.partialorder %v815, 0.0
          %vm832 = vcmp.ge.f32.partialorder %v816, 0.0
          %vm833 = vcmp.ge.f32.partialorder %v817, 0.0
          %vm834 = vcmp.ge.f32.partialorder %v818, 0.0
          %vm835 = vcmp.ge.f32.partialorder %v819, 0.0
          %vm836 = vcmp.ge.f32.partialorder %v820, 0.0
          %vm837 = vcmp.ge.f32.partialorder %v821, 0.0
          %vm838 = vcmp.ge.f32.partialorder %v822, 0.0
          %vm839 = vcmp.ge.f32.partialorder %v823, 0.0
          %vm840 = vcmp.ge.f32.partialorder %v824, 0.0
          %vm841 = vcmp.ge.f32.partialorder %v825, 0.0
          %vm842 = vcmp.ge.f32.partialorder %v826, 0.0
          %vm843 = vcmp.ge.f32.partialorder %v827, 0.0
          %v844 = vmul.f32 %v812, 0.01
          %v845 = vmul.f32 %v813, 0.01
          %v846 = vmul.f32 %v814, 0.01
          %v847 = vmul.f32 %v815, 0.01
          %v848 = vmul.f32 %v816, 0.01
          %v849 = vmul.f32 %v817, 0.01
          %v850 = vmul.f32 %v818, 0.01
          %v851 = vmul.f32 %v819, 0.01
          %v852 = vmul.f32 %v820, 0.01
          %v853 = vmul.f32 %v821, 0.01
          %v854 = vmul.f32 %v822, 0.01
          %v855 = vmul.f32 %v823, 0.01
          %v856 = vmul.f32 %v824, 0.01
          %v857 = vmul.f32 %v825, 0.01
          %v858 = vmul.f32 %v826, 0.01
          %v859 = vmul.f32 %v827, 0.01
          %v860 = vsel %vm828, %v812, %v844
          %v861 = vsel %vm829, %v813, %v845
          %v862 = vsel %vm830, %v814, %v846
          %v863 = vsel %vm831, %v815, %v847
          %v864 = vsel %vm832, %v816, %v848
          %v865 = vsel %vm833, %v817, %v849
          %v866 = vsel %vm834, %v818, %v850
          %v867 = vsel %vm835, %v819, %v851
          %v868 = vsel %vm836, %v820, %v852
          %v869 = vsel %vm837, %v821, %v853
          %v870 = vsel %vm838, %v822, %v854
          %v871 = vsel %vm839, %v823, %v855
          %v872 = vsel %vm840, %v824, %v856
          %v873 = vsel %vm841, %v825, %v857
          %v874 = vsel %vm842, %v826, %v858
          %v875 = vsel %vm843, %v827, %v859
          %876 = vst [vmem:[%s335] sm:$0xff] %v860
          %877 = vst [vmem:[%s335 + $0x8] sm:$0xff] %v861
          %878 = vst [vmem:[%s335 + $0x10] sm:$0xff] %v862
          %879 = vst [vmem:[%s335 + $0x18] sm:$0xff] %v863
          %880 = vst [vmem:[%s335 + $0x20] sm:$0xff] %v864
          %881 = vst [vmem:[%s335 + $0x28] sm:$0xff] %v865
          %882 = vst [vmem:[%s335 + $0x30] sm:$0xff] %v866
          %883 = vst [vmem:[%s335 + $0x38] sm:$0xff] %v867
          %884 = vst [vmem:[%s335 + $0x40] sm:$0xff] %v868
          %885 = vst [vmem:[%s335 + $0x48] sm:$0xff] %v869
          %886 = vst [vmem:[%s335 + $0x50] sm:$0xff] %v870
          %887 = vst [vmem:[%s335 + $0x58] sm:$0xff] %v871
          %888 = vst [vmem:[%s335 + $0x60] sm:$0xff] %v872
          %889 = vst [vmem:[%s335 + $0x68] sm:$0xff] %v873
          %890 = vst [vmem:[%s335 + $0x70] sm:$0xff] %v874
          %891 = vst [vmem:[%s335 + $0x78] sm:$0xff] %v875
        $region78: #{generator_forward.26} parent=65 // pred_fallthru
          _
        %s892 = smul.u32 8, %s19
        %s893 = smul.u32 2, %s20
        %p894 = scmp.lt.s32.totalorder %s892, 7
        %s895 = scalar_select %p894, %s892, 7
        %p896 = scmp.lt.s32.totalorder %s893, 1
        %s897 = scalar_select %p896, %s893, 1
        %s898 = smul.addr %s895, 2
        %s899 = sadd.s32 %s897, %s898
        %s900 = smul.addr %s899, 8
        %s901 = scalar_lea.vmem %s3, %s900
        // Predicated region
        $region79: #{generator_forward.26} parent=65 // pred_check
          %p902 = pneg %p135
        $region80: #{generator_forward.26} parent=65 // pred_check_branch
          %904 = sbr.rel (%p902) target = $region82
        $region81: #{generator_forward.26} parent=65 // pred_region
          %s905 = smul.u32 8, %s19
          %s906 = smul.u32 2, %s20
        $region82: #{generator_forward.26} parent=65 // pred_fallthru
          _
        // Predicated region
        $region83: #{generator_forward.26} parent=65 // pred_check
          %p907 = pneg %p135
        $region84: #{generator_forward.26} parent=65 // pred_check_branch
          %909 = sbr.rel (%p907) target = $region86
        $region85: #{generator_forward.26} parent=65 // pred_region
          %s910 = smul.u32 8, %s19
          %s911 = smul.u32 2, %s20
          %p912 = scmp.lt.s32.totalorder %s910, 7
          %s913 = scalar_select %p912, %s910, 7
          %p914 = scmp.lt.s32.totalorder %s911, 1
          %s915 = scalar_select %p914, %s911, 1
          %s916 = smul.addr %s913, 2
          %s917 = sadd.s32 %s915, %s916
          %s918 = smul.addr %s917, 8
          %s919 = scalar_lea.vmem %s3, %s918
        $region86: #{generator_forward.26} parent=65 // pred_fallthru
          _
      $region66: #{generator_forward.26} parent=5 // pred_fallthru
        _
      %p920 = scmp.le.s32.totalorder 2, %s9
      // Predicated region
      $region87: #{generator_forward.26} parent=5 // pred_check
        %p921 = pneg %p920
      $region88: #{generator_forward.26} parent=5 // pred_check_branch
        %923 = sbr.rel (%p921) target = $region90
      $region89: #{generator_forward.26} parent=5 // pred_region
        %s924 = ssub.s32 %s9, 2
      $region90: #{generator_forward.26} parent=5 // pred_fallthru
        _
    $region6: #{generator_forward.26} parent=1 // loop_footer
      %s13 = sadd.s32 1, %s9
    $region7: #{generator_forward.26} parent=1 // loop_footer_branch
      %8 = sbr.rel target = $region3
    $region8: #{generator_forward.26} parent=1 // loop_exit
      _

// kernel: generator_forward.28
$region0: #{generator_forward.28}
  #allocation0 [shape = 'u32[]', space=smem, size = 0x4, offset = 0x4, fixed_abs, tag = 'smem constant byte address 0x4 - core index']
  #allocation1 [shape = 'u32[72,128]{1,0:T(1,128)}', space=vmem, size = 0x9000, scoped, tag = 'internal scratch']
  %s0 = inlined_call_operand.vmem [shape: bf16[16,2304], index: 0, kind: input, shape index: {}]
  %s1 = inlined_call_operand.vmem [shape: bf16[2304,512], index: 1, kind: input, shape index: {}]
  %s2 = inlined_call_operand.vmem [shape: f32[2,512], index: 2, kind: input, shape index: {}]
  %s3 = inlined_call_operand.vmem [shape: f32[16,512], index: 3, kind: output, shape index: {}]
  %s4 = sld [smem:[#allocation0]]
  $region148: #{generator_forward.28} parent=0
    _
  %s6 = ssub.s32 1, %s4
  %s7 = scalar_select 0, %s6, %s4
  $region1: #{generator_forward.28} parent=0
    #allocation2 [shape = 'u8[16384]{0}', space=vmem, size = 0x4000, scoped, tag = 'input window, operand 0']
    #allocation3 [shape = 'u8[262144]{0}', space=vmem, size = 0x40000, scoped, tag = 'input window, operand 1']
    #allocation4 [shape = 'u8[32768]{0}', space=vmem, size = 0x8000, scoped, tag = 'output window, operand 0']
    loop: start=0, step=1, limit=20
    $region2: #{generator_forward.28} parent=1 // loop_pre_header
      _
    $region3: #{generator_forward.28} parent=1 // loop_header
      %s9 = sphi 0, %s13
      %p10 = scmp.ge.s32.totalorder %s9, 20
      %s16 = sphi 0, %s35
      %s17 = sphi 0, %s31
      %s18 = sphi 0, %s27
      %s19 = sphi 0, %s16
      %s20 = sphi 0, %s17
      %s21 = sphi 0, %s18
      %s22 = sphi 0, %s19
      %s23 = sphi 0, %s20
      %s24 = sphi 0, %s21
      %s40 = sphi 0, %s42
      %s43 = sphi 0, %s40
      %s44 = sphi 0, %s43
      %s60 = sphi 0, %s44
      %s68 = sphi 0, %s70
      %s71 = sphi 0, %s68
      %s72 = sphi 0, %s71
      %s88 = sphi 0, %s72
      %s94 = sphi 0, %s96
      %s97 = sphi 0, %s94
      %s98 = sphi 0, %s97
      %s114 = sphi 0, %s98
      %s122 = sphi 0, %s124
      %s125 = sphi 0, %s122
      %s126 = sphi 0, %s125
      %s142 = sphi 0, %s126
    $region4: #{generator_forward.28} parent=1 // loop_header_branch
      %12 = sbr.rel (%p10) target = $region8
    $region5: #{generator_forward.28} parent=1 // loop_body
      %s14 = ssub.s32 %s9, 1
      %s15 = ssub.s32 %s9, 2
      %s25 = sadd.s32 1, %s18
      %p26 = scmp.ge.s32.totalorder %s25, 9
      %s27 = scalar_select %p26, 0, %s25
      %s28 = sadd.s32 1, %s17
      %s29 = scalar_select %p26, %s28, %s17
      %p30 = scmp.ge.s32.totalorder %s29, 2
      %s31 = scalar_select %p30, 0, %s29
      %s32 = sadd.s32 1, %s16
      %s33 = scalar_select %p30, %s32, %s16
      %p34 = scmp.ge.s32.totalorder %s33, 1
      %s35 = scalar_select %p34, 0, %s33
      %s36 = ssub.s32 %s16, %s35
      %s37 = ssub.s32 %s18, %s27
      %s38 = sor.u32 %s36, %s37
      %p39 = scmp.eq.s32.totalorder %s38, 0
      %s41 = sadd.s32 %s40, 1
      %s42 = scalar_select %p39, %s40, %s41
      %p45 = pneg %p39
      %p46 = scmp.eq.s32.totalorder %s9, 17
      %p47 = por %p45, %p46
      %p48 = scmp.ne.s32.totalorder %s40, %s43
      %p49 = scmp.eq.s32.totalorder %s9, 0
      %p50 = por %p48, %p49
      %p51 = scmp.ne.s32.totalorder %s40, %s43
      %p52 = scmp.eq.s32.totalorder %s14, 17
      %p53 = por %p51, %p52
      %p54 = scmp.ne.s32.totalorder %s43, %s44
      %p55 = scmp.eq.s32.totalorder %s14, 0
      %p56 = por %p54, %p55
      %p57 = scmp.ne.s32.totalorder %s43, %s44
      %p58 = scmp.eq.s32.totalorder %s15, 17
      %p59 = por %p57, %p58
      %p61 = scmp.ne.s32.totalorder %s44, %s60
      %p62 = scmp.eq.s32.totalorder %s15, 0
      %p63 = por %p61, %p62
      %s64 = ssub.s32 %s18, %s27
      %s65 = ssub.s32 %s17, %s31
      %s66 = sor.u32 %s64, %s65
      %p67 = scmp.eq.s32.totalorder %s66, 0
      %s69 = sadd.s32 %s68, 1
      %s70 = scalar_select %p67, %s68, %s69
      %p73 = pneg %p67
      %p74 = scmp.eq.s32.totalorder %s9, 17
      %p75 = por %p73, %p74
      %p76 = scmp.ne.s32.totalorder %s68, %s71
      %p77 = scmp.eq.s32.totalorder %s9, 0
      %p78 = por %p76, %p77
      %p79 = scmp.ne.s32.totalorder %s68, %s71
      %p80 = scmp.eq.s32.totalorder %s14, 17
      %p81 = por %p79, %p80
      %p82 = scmp.ne.s32.totalorder %s71, %s72
      %p83 = scmp.eq.s32.totalorder %s14, 0
      %p84 = por %p82, %p83
      %p85 = scmp.ne.s32.totalorder %s71, %s72
      %p86 = scmp.eq.s32.totalorder %s15, 17
      %p87 = por %p85, %p86
      %p89 = scmp.ne.s32.totalorder %s72, %s88
      %p90 = scmp.eq.s32.totalorder %s15, 0
      %p91 = por %p89, %p90
      %s92 = ssub.s32 %s17, %s31
      %p93 = scmp.eq.s32.totalorder %s92, 0
      %s95 = sadd.s32 %s94, 1
      %s96 = scalar_select %p93, %s94, %s95
      %p99 = pneg %p93
      %p100 = scmp.eq.s32.totalorder %s9, 17
      %p101 = por %p99, %p100
      %p102 = scmp.ne.s32.totalorder %s94, %s97
      %p103 = scmp.eq.s32.totalorder %s9, 0
      %p104 = por %p102, %p103
      %p105 = scmp.ne.s32.totalorder %s94, %s97
      %p106 = scmp.eq.s32.totalorder %s14, 17
      %p107 = por %p105, %p106
      %p108 = scmp.ne.s32.totalorder %s97, %s98
      %p109 = scmp.eq.s32.totalorder %s14, 0
      %p110 = por %p108, %p109
      %p111 = scmp.ne.s32.totalorder %s97, %s98
      %p112 = scmp.eq.s32.totalorder %s15, 17
      %p113 = por %p111, %p112
      %p115 = scmp.ne.s32.totalorder %s98, %s114
      %p116 = scmp.eq.s32.totalorder %s15, 0
      %p117 = por %p115, %p116
      %s118 = ssub.s32 %s16, %s35
      %s119 = ssub.s32 %s17, %s31
      %s120 = sor.u32 %s118, %s119
      %p121 = scmp.eq.s32.totalorder %s120, 0
      %s123 = sadd.s32 %s122, 1
      %s124 = scalar_select %p121, %s122, %s123
      %p127 = pneg %p121
      %p128 = scmp.eq.s32.totalorder %s9, 17
      %p129 = por %p127, %p128
      %p130 = scmp.ne.s32.totalorder %s122, %s125
      %p131 = scmp.eq.s32.totalorder %s9, 0
      %p132 = por %p130, %p131
      %p133 = scmp.ne.s32.totalorder %s122, %s125
      %p134 = scmp.eq.s32.totalorder %s14, 17
      %p135 = por %p133, %p134
      %p136 = scmp.ne.s32.totalorder %s125, %s126
      %p137 = scmp.eq.s32.totalorder %s14, 0
      %p138 = por %p136, %p137
      %p139 = scmp.ne.s32.totalorder %s125, %s126
      %p140 = scmp.eq.s32.totalorder %s15, 17
      %p141 = por %p139, %p140
      %p143 = scmp.ne.s32.totalorder %s126, %s142
      %p144 = scmp.eq.s32.totalorder %s15, 0
      %p145 = por %p143, %p144
      %p146 = scmp.le.s32.totalorder 1, %s9
      %p147 = scmp.lt.s32.totalorder %s9, 19
      %p148 = pnand %p146, %p147
      %p149 = pneg %p148
      // Predicated region
      $region9: #{generator_forward.28} parent=5 // pred_check
        _
      $region10: #{generator_forward.28} parent=5 // pred_check_branch
        %151 = sbr.rel (%p148) target = $region12
      $region11: #{generator_forward.28} parent=5 // pred_region
        %s152 = ssub.s32 %s9, 1
      $region12: #{generator_forward.28} parent=5 // pred_fallthru
        _
      %p153 = scmp.lt.s32.totalorder %s9, 18
      // Predicated region
      $region13: #{generator_forward.28} parent=5 // pred_check
        %p154 = pneg %p153
      $region14: #{generator_forward.28} parent=5 // pred_check_branch
        %156 = sbr.rel (%p154) target = $region16
      $region15: #{generator_forward.28} parent=5 // pred_region
        // Predicated region
        $region17: #{generator_forward.28} parent=15 // pred_check
          %p157 = pneg %p50
        $region18: #{generator_forward.28} parent=15 // pred_check_branch
          %159 = sbr.rel (%p157) target = $region20
        $region19: #{generator_forward.28} parent=15 // pred_region
          %s160 = sand.u32 %s40, 1
          %s161 = sand.u32 %s40, 1
          %s162 = smul.addr %s161, 16
          %s163 = scalar_lea.vmem [#allocation2], %s162
          %s164 = smul.u32 2, %s16
          %s165 = smul.u32 2, %s18
          %s166 = smul.addr %s164, 18
          %s167 = sadd.s32 %s165, %s166
          %s168 = smul.addr %s167, 4
          %s169 = scalar_lea.vmem %s0, %s168
          // Predicated region
          $region21: #{generator_forward.28} parent=19 // pred_check
            _
          $region22: #{generator_forward.28} parent=19 // pred_check_branch
            %171 = sbr.rel (0) target = $region24
          $region23: #{generator_forward.28} parent=19 // pred_region
            // Predicated region
            $region25: #{generator_forward.28} parent=23 // pred_check
              _
            $region26: #{generator_forward.28} parent=23 // pred_check_branch
              %173 = sbr.rel (0) target = $region28
            $region27: #{generator_forward.28} parent=23 // pred_region
              // Predicated region
              $region40: #{generator_forward.28} parent=27 // pred_check
                _
              $region41: #{generator_forward.28} parent=27 // pred_check_branch
                %191 = sbr.rel (0) target = $region43
              $region42: #{generator_forward.28} parent=27 // pred_region
                loop: start=0, step=1, limit=1
                $region44: #{generator_forward.28} parent=42 // loop_pre_header
                  _
                $region45: #{generator_forward.28} parent=42 // loop_header
                  %s193 = sphi 0, %s197
                  %p194 = scmp.ge.s32.totalorder %s193, 1
                  %s198 = sphi %s169, %s169
                  %s199 = sphi %s163, %s163
                $region46: #{generator_forward.28} parent=42 // loop_header_branch
                  %196 = sbr.rel (%p194) target = $region50
                $region47: #{generator_forward.28} parent=42 // loop_body
                  %v200 = vld [vmem:[%s198] sm:$0xff]
                  %201 = vst [vmem:[%s199] sm:$0xff] %v200
                  %v202 = vld [vmem:[%s198 + $0x48] sm:$0xff]
                  %203 = vst [vmem:[%s199 + $0x8] sm:$0xff] %v202
                $region48: #{generator_forward.28} parent=42 // loop_footer
                  %s197 = sadd.s32 1, %s193
                $region49: #{generator_forward.28} parent=42 // loop_footer_branch
                  %192 = sbr.rel target = $region45
                $region50: #{generator_forward.28} parent=42 // loop_exit
                  _
              $region43: #{generator_forward.28} parent=27 // pred_fallthru
                _
              // Predicated region
              $region51: #{generator_forward.28} parent=27 // pred_check
                _
              $region52: #{generator_forward.28} parent=27 // pred_check_branch
                %205 = sbr.rel target = $region54
              $region53: #{generator_forward.28} parent=27 // pred_region
                _
              $region54: #{generator_forward.28} parent=27 // pred_fallthru
                _
            $region28: #{generator_forward.28} parent=23 // pred_fallthru
              _
            // Predicated region
            $region29: #{generator_forward.28} parent=23 // pred_check
              _
            $region30: #{generator_forward.28} parent=23 // pred_check_branch
              %175 = sbr.rel target = $region32
            $region31: #{generator_forward.28} parent=23 // pred_region
              %s177 = ssub.s32 256, 1
              loop: start=0, step=1, limit=1
              $region33: #{generator_forward.28} parent=31 // loop_pre_header
                _
              $region34: #{generator_forward.28} parent=31 // loop_header
                %s179 = sphi 0, %s183
                %p180 = scmp.ge.s32.totalorder %s179, 1
                %s184 = sphi %s169, %s169
                %s185 = sphi %s163, %s163
              $region35: #{generator_forward.28} parent=31 // loop_header_branch
                %182 = sbr.rel (%p180) target = $region39
              $region36: #{generator_forward.28} parent=31 // loop_body
                %v186 = vld [vmem:[%s184] sm:%s177]
                %187 = vst [vmem:[%s185] sm:%s177] %v186
                %v188 = vld [vmem:[%s184 + $0x48] sm:%s177]
                %189 = vst [vmem:[%s185 + $0x8] sm:%s177] %v188
              $region37: #{generator_forward.28} parent=31 // loop_footer
                %s183 = sadd.s32 1, %s179
              $region38: #{generator_forward.28} parent=31 // loop_footer_branch
                %178 = sbr.rel target = $region34
              $region39: #{generator_forward.28} parent=31 // loop_exit
                _
            $region32: #{generator_forward.28} parent=23 // pred_fallthru
              _
          $region24: #{generator_forward.28} parent=19 // pred_fallthru
            _
          %206 = vnop
        $region20: #{generator_forward.28} parent=15 // pred_fallthru
          _
        // Predicated region
        $region55: #{generator_forward.28} parent=15 // pred_check
          %p207 = pneg %p78
        $region56: #{generator_forward.28} parent=15 // pred_check_branch
          %209 = sbr.rel (%p207) target = $region58
        $region57: #{generator_forward.28} parent=15 // pred_region
          %s210 = sand.u32 %s68, 1
          %s211 = sand.u32 %s68, 1
          %s212 = smul.addr %s211, 256
          %s213 = scalar_lea.vmem [#allocation3], %s212
          %s214 = smul.u32 32, %s18
          %s215 = smul.u32 2, %s17
          %s216 = smul.addr %s214, 4
          %s217 = sadd.s32 %s215, %s216
          %s218 = smul.addr %s217, 4
          %s219 = scalar_lea.vmem %s1, %s218
          // Predicated region
          $region59: #{generator_forward.28} parent=57 // pred_check
            _
          $region60: #{generator_forward.28} parent=57 // pred_check_branch
            %221 = sbr.rel (0) target = $region62
          $region61: #{generator_forward.28} parent=57 // pred_region
            // Predicated region
            $region63: #{generator_forward.28} parent=61 // pred_check
              _
            $region64: #{generator_forward.28} parent=61 // pred_check_branch
              %223 = sbr.rel (0) target = $region66
            $region65: #{generator_forward.28} parent=61 // pred_region
              // Predicated region
              $region78: #{generator_forward.28} parent=65 // pred_check
                _
              $region79: #{generator_forward.28} parent=65 // pred_check_branch
                %301 = sbr.rel (0) target = $region81
              $region80: #{generator_forward.28} parent=65 // pred_region
                loop: start=0, step=1, limit=1
                $region82: #{generator_forward.28} parent=80 // loop_pre_header
                  _
                $region83: #{generator_forward.28} parent=80 // loop_header
                  %s303 = sphi 0, %s307
                  %p304 = scmp.ge.s32.totalorder %s303, 1
                  %s308 = sphi %s219, %s219
                  %s309 = sphi %s213, %s213
                $region84: #{generator_forward.28} parent=80 // loop_header_branch
                  %306 = sbr.rel (%p304) target = $region88
                $region85: #{generator_forward.28} parent=80 // loop_body
                  %v310 = vld [vmem:[%s308] sm:$0xff]
                  %311 = vst [vmem:[%s309] sm:$0xff] %v310
                  %v312 = vld [vmem:[%s308 + $0x10] sm:$0xff]
                  %313 = vst [vmem:[%s309 + $0x8] sm:$0xff] %v312
                  %v314 = vld [vmem:[%s308 + $0x20] sm:$0xff]
                  %315 = vst [vmem:[%s309 + $0x10] sm:$0xff] %v314
                  %v316 = vld [vmem:[%s308 + $0x30] sm:$0xff]
                  %317 = vst [vmem:[%s309 + $0x18] sm:$0xff] %v316
                  %v318 = vld [vmem:[%s308 + $0x40] sm:$0xff]
                  %319 = vst [vmem:[%s309 + $0x20] sm:$0xff] %v318
                  %v320 = vld [vmem:[%s308 + $0x50] sm:$0xff]
                  %321 = vst [vmem:[%s309 + $0x28] sm:$0xff] %v320
                  %v322 = vld [vmem:[%s308 + $0x60] sm:$0xff]
                  %323 = vst [vmem:[%s309 + $0x30] sm:$0xff] %v322
                  %v324 = vld [vmem:[%s308 + $0x70] sm:$0xff]
                  %325 = vst [vmem:[%s309 + $0x38] sm:$0xff] %v324
                  %v326 = vld [vmem:[%s308 + $0x80] sm:$0xff]
                  %327 = vst [vmem:[%s309 + $0x40] sm:$0xff] %v326
                  %v328 = vld [vmem:[%s308 + $0x90] sm:$0xff]
                  %329 = vst [vmem:[%s309 + $0x48] sm:$0xff] %v328
                  %v330 = vld [vmem:[%s308 + $0xa0] sm:$0xff]
                  %331 = vst [vmem:[%s309 + $0x50] sm:$0xff] %v330
                  %v332 = vld [vmem:[%s308 + $0xb0] sm:$0xff]
                  %333 = vst [vmem:[%s309 + $0x58] sm:$0xff] %v332
                  %v334 = vld [vmem:[%s308 + $0xc0] sm:$0xff]
                  %335 = vst [vmem:[%s309 + $0x60] sm:$0xff] %v334
                  %v336 = vld [vmem:[%s308 + $0xd0] sm:$0xff]
                  %337 = vst [vmem:[%s309 + $0x68] sm:$0xff] %v336
                  %v338 = vld [vmem:[%s308 + $0xe0] sm:$0xff]
                  %339 = vst [vmem:[%s309 + $0x70] sm:$0xff] %v338
                  %v340 = vld [vmem:[%s308 + $0xf0] sm:$0xff]
                  %341 = vst [vmem:[%s309 + $0x78] sm:$0xff] %v340
                  %v342 = vld [vmem:[%s308 + $0x100] sm:$0xff]
                  %343 = vst [vmem:[%s309 + $0x80] sm:$0xff] %v342
                  %v344 = vld [vmem:[%s308 + $0x110] sm:$0xff]
                  %345 = vst [vmem:[%s309 + $0x88] sm:$0xff] %v344
                  %v346 = vld [vmem:[%s308 + $0x120] sm:$0xff]
                  %347 = vst [vmem:[%s309 + $0x90] sm:$0xff] %v346
                  %v348 = vld [vmem:[%s308 + $0x130] sm:$0xff]
                  %349 = vst [vmem:[%s309 + $0x98] sm:$0xff] %v348
                  %v350 = vld [vmem:[%s308 + $0x140] sm:$0xff]
                  %351 = vst [vmem:[%s309 + $0xa0] sm:$0xff] %v350
                  %v352 = vld [vmem:[%s308 + $0x150] sm:$0xff]
                  %353 = vst [vmem:[%s309 + $0xa8] sm:$0xff] %v352
                  %v354 = vld [vmem:[%s308 + $0x160] sm:$0xff]
                  %355 = vst [vmem:[%s309 + $0xb0] sm:$0xff] %v354
                  %v356 = vld [vmem:[%s308 + $0x170] sm:$0xff]
                  %357 = vst [vmem:[%s309 + $0xb8] sm:$0xff] %v356
                  %v358 = vld [vmem:[%s308 + $0x180] sm:$0xff]
                  %359 = vst [vmem:[%s309 + $0xc0] sm:$0xff] %v358
                  %v360 = vld [vmem:[%s308 + $0x190] sm:$0xff]
                  %361 = vst [vmem:[%s309 + $0xc8] sm:$0xff] %v360
                  %v362 = vld [vmem:[%s308 + $0x1a0] sm:$0xff]
                  %363 = vst [vmem:[%s309 + $0xd0] sm:$0xff] %v362
                  %v364 = vld [vmem:[%s308 + $0x1b0] sm:$0xff]
                  %365 = vst [vmem:[%s309 + $0xd8] sm:$0xff] %v364
                  %v366 = vld [vmem:[%s308 + $0x1c0] sm:$0xff]
                  %367 = vst [vmem:[%s309 + $0xe0] sm:$0xff] %v366
                  %v368 = vld [vmem:[%s308 + $0x1d0] sm:$0xff]
                  %369 = vst [vmem:[%s309 + $0xe8] sm:$0xff] %v368
                  %v370 = vld [vmem:[%s308 + $0x1e0] sm:$0xff]
                  %371 = vst [vmem:[%s309 + $0xf0] sm:$0xff] %v370
                  %v372 = vld [vmem:[%s308 + $0x1f0] sm:$0xff]
                  %373 = vst [vmem:[%s309 + $0xf8] sm:$0xff] %v372
                $region86: #{generator_forward.28} parent=80 // loop_footer
                  %s307 = sadd.s32 1, %s303
                $region87: #{generator_forward.28} parent=80 // loop_footer_branch
                  %302 = sbr.rel target = $region83
                $region88: #{generator_forward.28} parent=80 // loop_exit
                  _
              $region81: #{generator_forward.28} parent=65 // pred_fallthru
                _
              // Predicated region
              $region89: #{generator_forward.28} parent=65 // pred_check
                _
              $region90: #{generator_forward.28} parent=65 // pred_check_branch
                %375 = sbr.rel target = $region92
              $region91: #{generator_forward.28} parent=65 // pred_region
                _
              $region92: #{generator_forward.28} parent=65 // pred_fallthru
                _
            $region66: #{generator_forward.28} parent=61 // pred_fallthru
              _
            // Predicated region
            $region67: #{generator_forward.28} parent=61 // pred_check
              _
            $region68: #{generator_forward.28} parent=61 // pred_check_branch
              %225 = sbr.rel target = $region70
            $region69: #{generator_forward.28} parent=61 // pred_region
              %s227 = ssub.s32 256, 1
              loop: start=0, step=1, limit=1
              $region71: #{generator_forward.28} parent=69 // loop_pre_header
                _
              $region72: #{generator_forward.28} parent=69 // loop_header
                %s229 = sphi 0, %s233
                %p230 = scmp.ge.s32.totalorder %s229, 1
                %s234 = sphi %s219, %s219
                %s235 = sphi %s213, %s213
              $region73: #{generator_forward.28} parent=69 // loop_header_branch
                %232 = sbr.rel (%p230) target = $region77
              $region74: #{generator_forward.28} parent=69 // loop_body
                %v236 = vld [vmem:[%s234] sm:%s227]
                %237 = vst [vmem:[%s235] sm:%s227] %v236
                %v238 = vld [vmem:[%s234 + $0x10] sm:%s227]
                %239 = vst [vmem:[%s235 + $0x8] sm:%s227] %v238
                %v240 = vld [vmem:[%s234 + $0x20] sm:%s227]
                %241 = vst [vmem:[%s235 + $0x10] sm:%s227] %v240
                %v242 = vld [vmem:[%s234 + $0x30] sm:%s227]
                %243 = vst [vmem:[%s235 + $0x18] sm:%s227] %v242
                %v244 = vld [vmem:[%s234 + $0x40] sm:%s227]
                %245 = vst [vmem:[%s235 + $0x20] sm:%s227] %v244
                %v246 = vld [vmem:[%s234 + $0x50] sm:%s227]
                %247 = vst [vmem:[%s235 + $0x28] sm:%s227] %v246
                %v248 = vld [vmem:[%s234 + $0x60] sm:%s227]
                %249 = vst [vmem:[%s235 + $0x30] sm:%s227] %v248
                %v250 = vld [vmem:[%s234 + $0x70] sm:%s227]
                %251 = vst [vmem:[%s235 + $0x38] sm:%s227] %v250
                %v252 = vld [vmem:[%s234 + $0x80] sm:%s227]
                %253 = vst [vmem:[%s235 + $0x40] sm:%s227] %v252
                %v254 = vld [vmem:[%s234 + $0x90] sm:%s227]
                %255 = vst [vmem:[%s235 + $0x48] sm:%s227] %v254
                %v256 = vld [vmem:[%s234 + $0xa0] sm:%s227]
                %257 = vst [vmem:[%s235 + $0x50] sm:%s227] %v256
                %v258 = vld [vmem:[%s234 + $0xb0] sm:%s227]
                %259 = vst [vmem:[%s235 + $0x58] sm:%s227] %v258
                %v260 = vld [vmem:[%s234 + $0xc0] sm:%s227]
                %261 = vst [vmem:[%s235 + $0x60] sm:%s227] %v260
                %v262 = vld [vmem:[%s234 + $0xd0] sm:%s227]
                %263 = vst [vmem:[%s235 + $0x68] sm:%s227] %v262
                %v264 = vld [vmem:[%s234 + $0xe0] sm:%s227]
                %265 = vst [vmem:[%s235 + $0x70] sm:%s227] %v264
                %v266 = vld [vmem:[%s234 + $0xf0] sm:%s227]
                %267 = vst [vmem:[%s235 + $0x78] sm:%s227] %v266
                %v268 = vld [vmem:[%s234 + $0x100] sm:%s227]
                %269 = vst [vmem:[%s235 + $0x80] sm:%s227] %v268
                %v270 = vld [vmem:[%s234 + $0x110] sm:%s227]
                %271 = vst [vmem:[%s235 + $0x88] sm:%s227] %v270
                %v272 = vld [vmem:[%s234 + $0x120] sm:%s227]
                %273 = vst [vmem:[%s235 + $0x90] sm:%s227] %v272
                %v274 = vld [vmem:[%s234 + $0x130] sm:%s227]
                %275 = vst [vmem:[%s235 + $0x98] sm:%s227] %v274
                %v276 = vld [vmem:[%s234 + $0x140] sm:%s227]
                %277 = vst [vmem:[%s235 + $0xa0] sm:%s227] %v276
                %v278 = vld [vmem:[%s234 + $0x150] sm:%s227]
                %279 = vst [vmem:[%s235 + $0xa8] sm:%s227] %v278
                %v280 = vld [vmem:[%s234 + $0x160] sm:%s227]
                %281 = vst [vmem:[%s235 + $0xb0] sm:%s227] %v280
                %v282 = vld [vmem:[%s234 + $0x170] sm:%s227]
                %283 = vst [vmem:[%s235 + $0xb8] sm:%s227] %v282
                %v284 = vld [vmem:[%s234 + $0x180] sm:%s227]
                %285 = vst [vmem:[%s235 + $0xc0] sm:%s227] %v284
                %v286 = vld [vmem:[%s234 + $0x190] sm:%s227]
                %287 = vst [vmem:[%s235 + $0xc8] sm:%s227] %v286
                %v288 = vld [vmem:[%s234 + $0x1a0] sm:%s227]
                %289 = vst [vmem:[%s235 + $0xd0] sm:%s227] %v288
                %v290 = vld [vmem:[%s234 + $0x1b0] sm:%s227]
                %291 = vst [vmem:[%s235 + $0xd8] sm:%s227] %v290
                %v292 = vld [vmem:[%s234 + $0x1c0] sm:%s227]
                %293 = vst [vmem:[%s235 + $0xe0] sm:%s227] %v292
                %v294 = vld [vmem:[%s234 + $0x1d0] sm:%s227]
                %295 = vst [vmem:[%s235 + $0xe8] sm:%s227] %v294
                %v296 = vld [vmem:[%s234 + $0x1e0] sm:%s227]
                %297 = vst [vmem:[%s235 + $0xf0] sm:%s227] %v296
                %v298 = vld [vmem:[%s234 + $0x1f0] sm:%s227]
                %299 = vst [vmem:[%s235 + $0xf8] sm:%s227] %v298
              $region75: #{generator_forward.28} parent=69 // loop_footer
                %s233 = sadd.s32 1, %s229
              $region76: #{generator_forward.28} parent=69 // loop_footer_branch
                %228 = sbr.rel target = $region72
              $region77: #{generator_forward.28} parent=69 // loop_exit
                _
            $region70: #{generator_forward.28} parent=61 // pred_fallthru
              _
          $region62: #{generator_forward.28} parent=57 // pred_fallthru
            _
          %376 = vnop
        $region58: #{generator_forward.28} parent=15 // pred_fallthru
          _
        // Predicated region
        $region93: #{generator_forward.28} parent=15 // pred_check
          %p377 = pneg %p104
        $region94: #{generator_forward.28} parent=15 // pred_check_branch
          %379 = sbr.rel (%p377) target = $region96
        $region95: #{generator_forward.28} parent=15 // pred_region
          %s380 = smul.u32 2, %s17
          %p381 = scmp.lt.s32.totalorder %s380, 3
          %s382 = scalar_select %p381, %s380, 3
          %s383 = smul.addr %s382, 2
          %s384 = scalar_lea.vmem %s2, %s383
          %s385 = smul.u32 2, %s17
        $region96: #{generator_forward.28} parent=15 // pred_fallthru
          _
      $region16: #{generator_forward.28} parent=5 // pred_fallthru
        _
      %p386 = scmp.le.s32.totalorder 1, %s9
      %p387 = scmp.lt.s32.totalorder %s9, 19
      %p388 = pnand %p386, %p387
      %p389 = pneg %p388
      // Predicated region
      $region97: #{generator_forward.28} parent=5 // pred_check
        _
      $region98: #{generator_forward.28} parent=5 // pred_check_branch
        %391 = sbr.rel (%p388) target = $region100
      $region99: #{generator_forward.28} parent=5 // pred_region
        %s392 = ssub.s32 %s9, 1
        %s393 = sand.u32 %s43, 1
        %s394 = sand.u32 %s43, 1
        %s395 = smul.addr %s394, 16
        %s396 = scalar_lea.vmem [#allocation2], %s395
        // Predicated region
        $region101: #{generator_forward.28} parent=99 // pred_check
          %p397 = pneg %p56
        $region102: #{generator_forward.28} parent=99 // pred_check_branch
          %399 = sbr.rel (%p397) target = $region104
        $region103: #{generator_forward.28} parent=99 // pred_region
          _
        $region104: #{generator_forward.28} parent=99 // pred_fallthru
          _
        %s400 = sand.u32 %s71, 1
        %s401 = sand.u32 %s71, 1
        %s402 = smul.addr %s401, 256
        %s403 = scalar_lea.vmem [#allocation3], %s402
        // Predicated region
        $region105: #{generator_forward.28} parent=99 // pred_check
          %p404 = pneg %p84
        $region106: #{generator_forward.28} parent=99 // pred_check_branch
          %406 = sbr.rel (%p404) target = $region108
        $region107: #{generator_forward.28} parent=99 // pred_region
          _
        $region108: #{generator_forward.28} parent=99 // pred_fallthru
          _
        %s407 = sand.u32 %s43, 1
        %s408 = sand.u32 %s43, 1
        %s409 = smul.addr %s408, 16
        %s410 = scalar_lea.vmem [#allocation2], %s409
        %p411 = pneg %p56
        %p412 = pneg %p53
        %s413 = sand.u32 %s71, 1
        %s414 = sand.u32 %s71, 1
        %s415 = smul.addr %s414, 256
        %s416 = scalar_lea.vmem [#allocation3], %s415
        %p417 = pneg %p84
        %p418 = pneg %p81
        %s419 = smul.u32 2, %s20
        %p420 = scmp.lt.s32.totalorder %s419, 3
        %s421 = scalar_select %p420, %s419, 3
        %s422 = smul.addr %s421, 2
        %s423 = scalar_lea.vmem %s2, %s422
        %p424 = pneg %p110
        %p425 = pneg %p107
        %p426 = pneg %p138
        %p427 = pneg %p135
        %s428 = sand.u32 %s125, 1
        %s429 = sand.u32 %s125, 1
        %s430 = smul.addr %s429, 32
        %s431 = scalar_lea.vmem [#allocation4], %s430
        %s432 = smul.u32 2, %s19
        %s433 = smul.u32 2, %s21
        %s434 = smul.u32 32, %s21
        %s435 = smul.u32 2, %s20
        %s436 = smul.u32 2, %s20
        %p437 = scmp.lt.s32.totalorder %s436, 3
        %s438 = scalar_select %p437, %s436, 3
        %s439 = smul.addr %s438, 2
        %s440 = scalar_lea.vmem %s2, %s439
        %s441 = smul.u32 2, %s20
        %s442 = smul.u32 2, %s19
        %s443 = smul.u32 2, %s20
        %p444 = scmp.eq.s32.totalorder %s21, 0
        // Predicated region
        $region109: #{generator_forward.28} parent=99 // pred_check
          %p445 = pneg %p444
        $region110: #{generator_forward.28} parent=99 // pred_check_branch
          %447 = sbr.rel (%p445) target = $region112
        $region111: #{generator_forward.28} parent=99 // pred_region
          %448 = vst [vmem:[%s431] sm:$0xff] 0.0
          %449 = vst [vmem:[%s431 + $0x8] sm:$0xff] 0.0
          %450 = vst [vmem:[%s431 + $0x10] sm:$0xff] 0.0
          %451 = vst [vmem:[%s431 + $0x18] sm:$0xff] 0.0
        $region112: #{generator_forward.28} parent=99 // pred_fallthru
          _
        %v452 = vld [vmem:[%s431] sm:$0xff]
        %v453 = vld [vmem:[%s431 + $0x8] sm:$0xff]
        %v454 = vld [vmem:[%s431 + $0x10] sm:$0xff]
        %v455 = vld [vmem:[%s431 + $0x18] sm:$0xff]
        %v456 = vld [vmem:[%s396] sm:$0xff]
        %v457 = vld [vmem:[%s396 + $0x8] sm:$0xff]
        %v458 = vld [vmem:[%s403] sm:$0xff]
        %v459 = vld [vmem:[%s403 + $0x8] sm:$0xff]
        %v460 = vld [vmem:[%s403 + $0x10] sm:$0xff]
        %v461 = vld [vmem:[%s403 + $0x18] sm:$0xff]
        %v462 = vld [vmem:[%s403 + $0x20] sm:$0xff]
        %v463 = vld [vmem:[%s403 + $0x28] sm:$0xff]
        %v464 = vld [vmem:[%s403 + $0x30] sm:$0xff]
        %v465 = vld [vmem:[%s403 + $0x38] sm:$0xff]
        %v466 = vld [vmem:[%s403 + $0x40] sm:$0xff]
        %v467 = vld [vmem:[%s403 + $0x48] sm:$0xff]
        %v468 = vld [vmem:[%s403 + $0x50] sm:$0xff]
        %v469 = vld [vmem:[%s403 + $0x58] sm:$0xff]
        %v470 = vld [vmem:[%s403 + $0x60] sm:$0xff]
        %v471 = vld [vmem:[%s403 + $0x68] sm:$0xff]
        %v472 = vld [vmem:[%s403 + $0x70] sm:$0xff]
        %v473 = vld [vmem:[%s403 + $0x78] sm:$0xff]
        %v474 = vld [vmem:[%s403 + $0x80] sm:$0xff]
        %v475 = vld [vmem:[%s403 + $0x88] sm:$0xff]
        %v476 = vld [vmem:[%s403 + $0x90] sm:$0xff]
        %v477 = vld [vmem:[%s403 + $0x98] sm:$0xff]
        %v478 = vld [vmem:[%s403 + $0xa0] sm:$0xff]
        %v479 = vld [vmem:[%s403 + $0xa8] sm:$0xff]
        %v480 = vld [vmem:[%s403 + $0xb0] sm:$0xff]
        %v481 = vld [vmem:[%s403 + $0xb8] sm:$0xff]
        %v482 = vld [vmem:[%s403 + $0xc0] sm:$0xff]
        %v483 = vld [vmem:[%s403 + $0xc8] sm:$0xff]
        %v484 = vld [vmem:[%s403 + $0xd0] sm:$0xff]
        %v485 = vld [vmem:[%s403 + $0xd8] sm:$0xff]
        %v486 = vld [vmem:[%s403 + $0xe0] sm:$0xff]
        %v487 = vld [vmem:[%s403 + $0xe8] sm:$0xff]
        %v488 = vld [vmem:[%s403 + $0xf0] sm:$0xff]
        %v489 = vld [vmem:[%s403 + $0xf8] sm:$0xff]
        %v492 = vunpack.c.l.b16 %v456
        %v493 = vunpack.c.h.b16 %v456
        %v494 = vunpack.c.l.b16 %v457
        %v495 = vunpack.c.h.b16 %v457
        %v496 = vpack.c.b16 %v494, %v492
        %v497 = vpack.c.b16 %v495, %v493
        %v532 = vunpack.c.l.b16 %v458
        %v533 = vunpack.c.h.b16 %v458
        %v534 = vunpack.c.l.b16 %v459
        %v535 = vunpack.c.h.b16 %v459
        %v536 = vunpack.c.l.b16 %v460
        %v537 = vunpack.c.h.b16 %v460
        %v538 = vunpack.c.l.b16 %v461
        %v539 = vunpack.c.h.b16 %v461
        %v540 = vunpack.c.l.b16 %v462
        %v541 = vunpack.c.h.b16 %v462
        %v542 = vunpack.c.l.b16 %v463
        %v543 = vunpack.c.h.b16 %v463
        %v544 = vunpack.c.l.b16 %v464
        %v545 = vunpack.c.h.b16 %v464
        %v546 = vunpack.c.l.b16 %v465
        %v547 = vunpack.c.h.b16 %v465
        %v548 = vunpack.c.l.b16 %v466
        %v549 = vunpack.c.h.b16 %v466
        %v550 = vunpack.c.l.b16 %v467
        %v551 = vunpack.c.h.b16 %v467
        %v552 = vunpack.c.l.b16 %v468
        %v553 = vunpack.c.h.b16 %v468
        %v554 = vunpack.c.l.b16 %v469
        %v555 = vunpack.c.h.b16 %v469
        %v556 = vunpack.c.l.b16 %v470
        %v557 = vunpack.c.h.b16 %v470
        %v558 = vunpack.c.l.b16 %v471
        %v559 = vunpack.c.h.b16 %v471
        %v560 = vunpack.c.l.b16 %v472
        %v561 = vunpack.c.h.b16 %v472
        %v562 = vunpack.c.l.b16 %v473
        %v563 = vunpack.c.h.b16 %v473
        %v564 = vunpack.c.l.b16 %v474
        %v565 = vunpack.c.h.b16 %v474
        %v566 = vunpack.c.l.b16 %v475
        %v567 = vunpack.c.h.b16 %v475
        %v568 = vunpack.c.l.b16 %v476
        %v569 = vunpack.c.h.b16 %v476
        %v570 = vunpack.c.l.b16 %v477
        %v571 = vunpack.c.h.b16 %v477
        %v572 = vunpack.c.l.b16 %v478
        %v573 = vunpack.c.h.b16 %v478
        %v574 = vunpack.c.l.b16 %v479
        %v575 = vunpack.c.h.b16 %v479
        %v576 = vunpack.c.l.b16 %v480
        %v577 = vunpack.c.h.b16 %v480
        %v578 = vunpack.c.l.b16 %v481
        %v579 = vunpack.c.h.b16 %v481
        %v580 = vunpack.c.l.b16 %v482
        %v581 = vunpack.c.h.b16 %v482
        %v582 = vunpack.c.l.b16 %v483
        %v583 = vunpack.c.h.b16 %v483
        %v584 = vunpack.c.l.b16 %v484
        %v585 = vunpack.c.h.b16 %v484
        %v586 = vunpack.c.l.b16 %v485
        %v587 = vunpack.c.h.b16 %v485
        %v588 = vunpack.c.l.b16 %v486
        %v589 = vunpack.c.h.b16 %v486
        %v590 = vunpack.c.l.b16 %v487
        %v591 = vunpack.c.h.b16 %v487
        %v592 = vunpack.c.l.b16 %v488
        %v593 = vunpack.c.h.b16 %v488
        %v594 = vunpack.c.l.b16 %v489
        %v595 = vunpack.c.h.b16 %v489
        %v596 = vpack.c.b16 %v534, %v532
        %v597 = vpack.c.b16 %v535, %v533
        %v598 = vpack.c.b16 %v538, %v536
        %v599 = vpack.c.b16 %v539, %v537
        %v600 = vpack.c.b16 %v542, %v540
        %v601 = vpack.c.b16 %v543, %v541
        %v602 = vpack.c.b16 %v546, %v544
        %v603 = vpack.c.b16 %v547, %v545
        %v604 = vpack.c.b16 %v550, %v548
        %v605 = vpack.c.b16 %v551, %v549
        %v606 = vpack.c.b16 %v554, %v552
        %v607 = vpack.c.b16 %v555, %v553
        %v608 = vpack.c.b16 %v558, %v556
        %v609 = vpack.c.b16 %v559, %v557
        %v610 = vpack.c.b16 %v562, %v560
        %v611 = vpack.c.b16 %v563, %v561
        %v612 = vpack.c.b16 %v566, %v564
        %v613 = vpack.c.b16 %v567, %v565
        %v614 = vpack.c.b16 %v570, %v568
        %v615 = vpack.c.b16 %v571, %v569
        %v616 = vpack.c.b16 %v574, %v572
        %v617 = vpack.c.b16 %v575, %v573
        %v618 = vpack.c.b16 %v578, %v576
        %v619 = vpack.c.b16 %v579, %v577
        %v620 = vpack.c.b16 %v582, %v580
        %v621 = vpack.c.b16 %v583, %v581
        %v622 = vpack.c.b16 %v586, %v584
        %v623 = vpack.c.b16 %v587, %v585
        %v624 = vpack.c.b16 %v590, %v588
        %v625 = vpack.c.b16 %v591, %v589
        %v626 = vpack.c.b16 %v594, %v592
        %v627 = vpack.c.b16 %v595, %v593
        %660 = vmatpush.bf16.msra.mxu0 %v610
        %661 = vmatpush.bf16.msra.mxu0 %v608
        %662 = vmatpush.bf16.msra.mxu0 %v606
        %663 = vmatpush.bf16.msra.mxu0 %v604
        %664 = vmatpush.bf16.msra.mxu0 %v602
        %665 = vmatpush.bf16.msra.mxu0 %v600
        %666 = vmatpush.bf16.msra.mxu0 %v598
        %667 = vmatpush.bf16.msra.mxu0 %v596
        %668 = vmatmul.bf16.gmra.mxu0 %v496
        %v669 = vpop.f32.mrf.mxu0
        %v670 = vadd.f32 0.0, %v669
        %v671 = vpop.f32.mrf.mxu0
        %v672 = vadd.f32 0.0, %v671
        %673 = vdwg.mxu0
        %674 = vmatpush.bf16.msra.mxu0 %v626
        %675 = vmatpush.bf16.msra.mxu0 %v624
        %676 = vmatpush.bf16.msra.mxu0 %v622
        %677 = vmatpush.bf16.msra.mxu0 %v620
        %678 = vmatpush.bf16.msra.mxu0 %v618
        %679 = vmatpush.bf16.msra.mxu0 %v616
        %680 = vmatpush.bf16.msra.mxu0 %v614
        %681 = vmatpush.bf16.msra.mxu0 %v612
        %682 = vmatmul.bf16.gmra.mxu0 %v497
        %v683 = vpop.f32.mrf.mxu0
        %v684 = vadd.f32 %v670, %v683
        %v685 = vpop.f32.mrf.mxu0
        %v686 = vadd.f32 %v672, %v685
        %687 = vdwg.mxu0
        %688 = vmatpush.bf16.msra.mxu0 %v611
        %689 = vmatpush.bf16.msra.mxu0 %v609
        %690 = vmatpush.bf16.msra.mxu0 %v607
        %691 = vmatpush.bf16.msra.mxu0 %v605
        %692 = vmatpush.bf16.msra.mxu0 %v603
        %693 = vmatpush.bf16.msra.mxu0 %v601
        %694 = vmatpush.bf16.msra.mxu0 %v599
        %695 = vmatpush.bf16.msra.mxu0 %v597
        %696 = vmatmul.bf16.gmra.mxu0 %v496
        %v697 = vpop.f32.mrf.mxu0
        %v698 = vadd.f32 0.0, %v697
        %v699 = vpop.f32.mrf.mxu0
        %v700 = vadd.f32 0.0, %v699
        %701 = vdwg.mxu0
        %702 = vmatpush.bf16.msra.mxu0 %v627
        %703 = vmatpush.bf16.msra.mxu0 %v625
        %704 = vmatpush.bf16.msra.mxu0 %v623
        %705 = vmatpush.bf16.msra.mxu0 %v621
        %706 = vmatpush.bf16.msra.mxu0 %v619
        %707 = vmatpush.bf16.msra.mxu0 %v617
        %708 = vmatpush.bf16.msra.mxu0 %v615
        %709 = vmatpush.bf16.msra.mxu0 %v613
        %710 = vmatmul.bf16.gmra.mxu0 %v497
        %v711 = vpop.f32.mrf.mxu0
        %v712 = vadd.f32 %v698, %v711
        %v713 = vpop.f32.mrf.mxu0
        %v714 = vadd.f32 %v700, %v713
        %715 = vdwg.mxu0
        %v716 = vadd.f32 %v452, %v684
        %v717 = vadd.f32 %v453, %v712
        %v718 = vadd.f32 %v454, %v686
        %v719 = vadd.f32 %v455, %v714
        %720 = vst [vmem:[%s431] sm:$0xff] %v716
        %721 = vst [vmem:[%s431 + $0x8] sm:$0xff] %v717
        %722 = vst [vmem:[%s431 + $0x10] sm:$0xff] %v718
        %723 = vst [vmem:[%s431 + $0x18] sm:$0xff] %v719
        %p724 = scmp.eq.s32.totalorder %s21, 8
        // Predicated region
        $region113: #{generator_forward.28} parent=99 // pred_check
          %p725 = pneg %p724
        $region114: #{generator_forward.28} parent=99 // pred_check_branch
          %727 = sbr.rel (%p725) target = $region116
        $region115: #{generator_forward.28} parent=99 // pred_region
          %v728 = vld [vmem:[%s440] sm:$0xf]
          %v729 = vld [vmem:[%s431] sm:$0xff]
          %v730 = vld [vmem:[%s431 + $0x8] sm:$0xff]
          %v731 = vld [vmem:[%s431 + $0x10] sm:$0xff]
          %v732 = vld [vmem:[%s431 + $0x18] sm:$0xff]
          %v734 = vperm.slane %v728, 0
          %v735 = vperm.slane %v728, 2
          %v738 = vperm.slane %v734, 0
          %v739 = vperm.slane %v735, 0
          %v740 = vmul.f32 %v729, %v738
          %v741 = vmul.f32 %v730, %v739
          %v742 = vmul.f32 %v731, %v738
          %v743 = vmul.f32 %v732, %v739
          %v744 = vperm.slane %v728, 1
          %v745 = vperm.slane %v728, 3
          %v748 = vperm.slane %v744, 1
          %v749 = vperm.slane %v745, 1
          %v750 = vadd.f32 %v740, %v748
          %v751 = vadd.f32 %v741, %v749
          %v752 = vadd.f32 %v742, %v748
          %v753 = vadd.f32 %v743, %v749
          %v754 = vmax.f32 %v750, 0.0
          %v755 = vmax.f32 %v751, 0.0
          %v756 = vmax.f32 %v752, 0.0
          %v757 = vmax.f32 %v753, 0.0
          %758 = vst [vmem:[%s431] sm:$0xff] %v754
          %759 = vst [vmem:[%s431 + $0x8] sm:$0xff] %v755
          %760 = vst [vmem:[%s431 + $0x10] sm:$0xff] %v756
          %761 = vst [vmem:[%s431 + $0x18] sm:$0xff] %v757
        $region116: #{generator_forward.28} parent=99 // pred_fallthru
          _
        %s762 = sand.u32 %s125, 1
        %s763 = sand.u32 %s125, 1
        %s764 = smul.addr %s763, 32
        %s765 = scalar_lea.vmem [#allocation4], %s764
        // Predicated region
        $region117: #{generator_forward.28} parent=99 // pred_check
          %p766 = pneg %p135
        $region118: #{generator_forward.28} parent=99 // pred_check_branch
          %768 = sbr.rel (%p766) target = $region120
        $region119: #{generator_forward.28} parent=99 // pred_region
          %s769 = smul.u32 2, %s19
          %s770 = smul.u32 2, %s20
          %s771 = smul.addr %s769, 4
          %s772 = sadd.s32 %s770, %s771
          %s773 = smul.addr %s772, 8
          %s774 = scalar_lea.vmem %s3, %s773
          // Predicated region
          $region121: #{generator_forward.28} parent=119 // pred_check
            _
          $region122: #{generator_forward.28} parent=119 // pred_check_branch
            %776 = sbr.rel (0) target = $region124
          $region123: #{generator_forward.28} parent=119 // pred_region
            // Predicated region
            $region125: #{generator_forward.28} parent=123 // pred_check
              _
            $region126: #{generator_forward.28} parent=123 // pred_check_branch
              %778 = sbr.rel (0) target = $region128
            $region127: #{generator_forward.28} parent=123 // pred_region
              loop: start=0, step=1, limit=1
              $region129: #{generator_forward.28} parent=127 // loop_pre_header
                _
              $region130: #{generator_forward.28} parent=127 // loop_header
                %s780 = sphi 0, %s784
                %p781 = scmp.ge.s32.totalorder %s780, 1
                %s785 = sphi %s765, %s765
                %s786 = sphi %s774, %s774
              $region131: #{generator_forward.28} parent=127 // loop_header_branch
                %783 = sbr.rel (%p781) target = $region135
              $region132: #{generator_forward.28} parent=127 // loop_body
                %v787 = vld [vmem:[%s785] sm:$0xff]
                %788 = vst [vmem:[%s786] sm:$0xff] %v787
                %v789 = vld [vmem:[%s785 + $0x8] sm:$0xff]
                %790 = vst [vmem:[%s786 + $0x8] sm:$0xff] %v789
                %v791 = vld [vmem:[%s785 + $0x10] sm:$0xff]
                %792 = vst [vmem:[%s786 + $0x20] sm:$0xff] %v791
                %v793 = vld [vmem:[%s785 + $0x18] sm:$0xff]
                %794 = vst [vmem:[%s786 + $0x28] sm:$0xff] %v793
              $region133: #{generator_forward.28} parent=127 // loop_footer
                %s784 = sadd.s32 1, %s780
              $region134: #{generator_forward.28} parent=127 // loop_footer_branch
                %779 = sbr.rel target = $region130
              $region135: #{generator_forward.28} parent=127 // loop_exit
                _
            $region128: #{generator_forward.28} parent=123 // pred_fallthru
              _
            // Predicated region
            $region136: #{generator_forward.28} parent=123 // pred_check
              _
            $region137: #{generator_forward.28} parent=123 // pred_check_branch
              %796 = sbr.rel target = $region139
            $region138: #{generator_forward.28} parent=123 // pred_region
              _
            $region139: #{generator_forward.28} parent=123 // pred_fallthru
              _
          $region124: #{generator_forward.28} parent=119 // pred_fallthru
            _
          %797 = vnop
        $region120: #{generator_forward.28} parent=99 // pred_fallthru
          _
      $region100: #{generator_forward.28} parent=5 // pred_fallthru
        _
      %p798 = scmp.le.s32.totalorder 2, %s9
      // Predicated region
      $region140: #{generator_forward.28} parent=5 // pred_check
        %p799 = pneg %p798
      $region141: #{generator_forward.28} parent=5 // pred_check_branch
        %801 = sbr.rel (%p799) target = $region143
      $region142: #{generator_forward.28} parent=5 // pred_region
        %s802 = ssub.s32 %s9, 2
        // Predicated region
        $region144: #{generator_forward.28} parent=142 // pred_check
          %p803 = pneg %p141
        $region145: #{generator_forward.28} parent=142 // pred_check_branch
          %805 = sbr.rel (%p803) target = $region147
        $region146: #{generator_forward.28} parent=142 // pred_region
          %s806 = sand.u32 %s126, 1
          %s807 = sand.u32 %s126, 1
          %s808 = smul.addr %s807, 32
          %s809 = scalar_lea.vmem [#allocation4], %s808
        $region147: #{generator_forward.28} parent=142 // pred_fallthru
          _
      $region143: #{generator_forward.28} parent=5 // pred_fallthru
        _
    $region6: #{generator_forward.28} parent=1 // loop_footer
      %s13 = sadd.s32 1, %s9
    $region7: #{generator_forward.28} parent=1 // loop_footer_branch
      %8 = sbr.rel target = $region3
    $region8: #{generator_forward.28} parent=1 // loop_exit
      _

// kernel: generator_forward.29
$region0: #{generator_forward.29}
  #allocation0 [shape = 'u32[]', space=smem, size = 0x4, offset = 0x4, fixed_abs, tag = 'smem constant byte address 0x4 - core index']
  #allocation1 [shape = 'u32[72,128]{1,0:T(1,128)}', space=vmem, size = 0x9000, scoped, tag = 'internal scratch']
  %s0 = inlined_call_operand.vmem [shape: bf16[16,4608], index: 0, kind: input, shape index: {}]
  %s1 = inlined_call_operand.vmem [shape: bf16[4608,1024], index: 1, kind: input, shape index: {}]
  %s2 = inlined_call_operand.vmem [shape: f32[2,1024], index: 2, kind: input, shape index: {}]
  %s3 = inlined_call_operand.vmem [shape: f32[16,1024], index: 3, kind: output, shape index: {}]
  %s4 = sld [smem:[#allocation0]]
  $region148: #{generator_forward.29} parent=0
    _
  %s6 = ssub.s32 1, %s4
  %s7 = scalar_select 0, %s6, %s4
  $region1: #{generator_forward.29} parent=0
    #allocation2 [shape = 'u8[16384]{0}', space=vmem, size = 0x4000, scoped, tag = 'input window, operand 0']
    #allocation3 [shape = 'u8[262144]{0}', space=vmem, size = 0x40000, scoped, tag = 'input window, operand 1']
    #allocation4 [shape = 'u8[32768]{0}', space=vmem, size = 0x8000, scoped, tag = 'output window, operand 0']
    loop: start=0, step=1, limit=74
    $region2: #{generator_forward.29} parent=1 // loop_pre_header
      _
    $region3: #{generator_forward.29} parent=1 // loop_header
      %s9 = sphi 0, %s13
      %p10 = scmp.ge.s32.totalorder %s9, 74
      %s16 = sphi 0, %s35
      %s17 = sphi 0, %s31
      %s18 = sphi 0, %s27
      %s19 = sphi 0, %s16
      %s20 = sphi 0, %s17
      %s21 = sphi 0, %s18
      %s22 = sphi 0, %s19
      %s23 = sphi 0, %s20
      %s24 = sphi 0, %s21
      %s40 = sphi 0, %s42
      %s43 = sphi 0, %s40
      %s44 = sphi 0, %s43
      %s60 = sphi 0, %s44
      %s68 = sphi 0, %s70
      %s71 = sphi 0, %s68
      %s72 = sphi 0, %s71
      %s88 = sphi 0, %s72
      %s94 = sphi 0, %s96
      %s97 = sphi 0, %s94
      %s98 = sphi 0, %s97
      %s114 = sphi 0, %s98
      %s122 = sphi 0, %s124
      %s125 = sphi 0, %s122
      %s126 = sphi 0, %s125
      %s142 = sphi 0, %s126
    $region4: #{generator_forward.29} parent=1 // loop_header_branch
      %12 = sbr.rel (%p10) target = $region8
    $region5: #{generator_forward.29} parent=1 // loop_body
      %s14 = ssub.s32 %s9, 1
      %s15 = ssub.s32 %s9, 2
      %s25 = sadd.s32 1, %s18
      %p26 = scmp.ge.s32.totalorder %s25, 18
      %s27 = scalar_select %p26, 0, %s25
      %s28 = sadd.s32 1, %s17
      %s29 = scalar_select %p26, %s28, %s17
      %p30 = scmp.ge.s32.totalorder %s29, 4
      %s31 = scalar_select %p30, 0, %s29
      %s32 = sadd.s32 1, %s16
      %s33 = scalar_select %p30, %s32, %s16
      %p34 = scmp.ge.s32.totalorder %s33, 1
      %s35 = scalar_select %p34, 0, %s33
      %s36 = ssub.s32 %s16, %s35
      %s37 = ssub.s32 %s18, %s27
      %s38 = sor.u32 %s36, %s37
      %p39 = scmp.eq.s32.totalorder %s38, 0
      %s41 = sadd.s32 %s40, 1
      %s42 = scalar_select %p39, %s40, %s41
      %p45 = pneg %p39
      %p46 = scmp.eq.s32.totalorder %s9, 71
      %p47 = por %p45, %p46
      %p48 = scmp.ne.s32.totalorder %s40, %s43
      %p49 = scmp.eq.s32.totalorder %s9, 0
      %p50 = por %p48, %p49
      %p51 = scmp.ne.s32.totalorder %s40, %s43
      %p52 = scmp.eq.s32.totalorder %s14, 71
      %p53 = por %p51, %p52
      %p54 = scmp.ne.s32.totalorder %s43, %s44
      %p55 = scmp.eq.s32.totalorder %s14, 0
      %p56 = por %p54, %p55
      %p57 = scmp.ne.s32.totalorder %s43, %s44
      %p58 = scmp.eq.s32.totalorder %s15, 71
      %p59 = por %p57, %p58
      %p61 = scmp.ne.s32.totalorder %s44, %s60
      %p62 = scmp.eq.s32.totalorder %s15, 0
      %p63 = por %p61, %p62
      %s64 = ssub.s32 %s18, %s27
      %s65 = ssub.s32 %s17, %s31
      %s66 = sor.u32 %s64, %s65
      %p67 = scmp.eq.s32.totalorder %s66, 0
      %s69 = sadd.s32 %s68, 1
      %s70 = scalar_select %p67, %s68, %s69
      %p73 = pneg %p67
      %p74 = scmp.eq.s32.totalorder %s9, 71
      %p75 = por %p73, %p74
      %p76 = scmp.ne.s32.totalorder %s68, %s71
      %p77 = scmp.eq.s32.totalorder %s9, 0
      %p78 = por %p76, %p77
      %p79 = scmp.ne.s32.totalorder %s68, %s71
      %p80 = scmp.eq.s32.totalorder %s14, 71
      %p81 = por %p79, %p80
      %p82 = scmp.ne.s32.totalorder %s71, %s72
      %p83 = scmp.eq.s32.totalorder %s14, 0
      %p84 = por %p82, %p83
      %p85 = scmp.ne.s32.totalorder %s71, %s72
      %p86 = scmp.eq.s32.totalorder %s15, 71
      %p87 = por %p85, %p86
      %p89 = scmp.ne.s32.totalorder %s72, %s88
      %p90 = scmp.eq.s32.totalorder %s15, 0
      %p91 = por %p89, %p90
      %s92 = ssub.s32 %s17, %s31
      %p93 = scmp.eq.s32.totalorder %s92, 0
      %s95 = sadd.s32 %s94, 1
      %s96 = scalar_select %p93, %s94, %s95
      %p99 = pneg %p93
      %p100 = scmp.eq.s32.totalorder %s9, 71
      %p101 = por %p99, %p100
      %p102 = scmp.ne.s32.totalorder %s94, %s97
      %p103 = scmp.eq.s32.totalorder %s9, 0
      %p104 = por %p102, %p103
      %p105 = scmp.ne.s32.totalorder %s94, %s97
      %p106 = scmp.eq.s32.totalorder %s14, 71
      %p107 = por %p105, %p106
      %p108 = scmp.ne.s32.totalorder %s97, %s98
      %p109 = scmp.eq.s32.totalorder %s14, 0
      %p110 = por %p108, %p109
      %p111 = scmp.ne.s32.totalorder %s97, %s98
      %p112 = scmp.eq.s32.totalorder %s15, 71
      %p113 = por %p111, %p112
      %p115 = scmp.ne.s32.totalorder %s98, %s114
      %p116 = scmp.eq.s32.totalorder %s15, 0
      %p117 = por %p115, %p116
      %s118 = ssub.s32 %s16, %s35
      %s119 = ssub.s32 %s17, %s31
      %s120 = sor.u32 %s118, %s119
      %p121 = scmp.eq.s32.totalorder %s120, 0
      %s123 = sadd.s32 %s122, 1
      %s124 = scalar_select %p121, %s122, %s123
      %p127 = pneg %p121
      %p128 = scmp.eq.s32.totalorder %s9, 71
      %p129 = por %p127, %p128
      %p130 = scmp.ne.s32.totalorder %s122, %s125
      %p131 = scmp.eq.s32.totalorder %s9, 0
      %p132 = por %p130, %p131
      %p133 = scmp.ne.s32.totalorder %s122, %s125
      %p134 = scmp.eq.s32.totalorder %s14, 71
      %p135 = por %p133, %p134
      %p136 = scmp.ne.s32.totalorder %s125, %s126
      %p137 = scmp.eq.s32.totalorder %s14, 0
      %p138 = por %p136, %p137
      %p139 = scmp.ne.s32.totalorder %s125, %s126
      %p140 = scmp.eq.s32.totalorder %s15, 71
      %p141 = por %p139, %p140
      %p143 = scmp.ne.s32.totalorder %s126, %s142
      %p144 = scmp.eq.s32.totalorder %s15, 0
      %p145 = por %p143, %p144
      %p146 = scmp.le.s32.totalorder 1, %s9
      %p147 = scmp.lt.s32.totalorder %s9, 73
      %p148 = pnand %p146, %p147
      %p149 = pneg %p148
      // Predicated region
      $region9: #{generator_forward.29} parent=5 // pred_check
        _
      $region10: #{generator_forward.29} parent=5 // pred_check_branch
        %151 = sbr.rel (%p148) target = $region12
      $region11: #{generator_forward.29} parent=5 // pred_region
        %s152 = ssub.s32 %s9, 1
      $region12: #{generator_forward.29} parent=5 // pred_fallthru
        _
      %p153 = scmp.lt.s32.totalorder %s9, 72
      // Predicated region
      $region13: #{generator_forward.29} parent=5 // pred_check
        %p154 = pneg %p153
      $region14: #{generator_forward.29} parent=5 // pred_check_branch
        %156 = sbr.rel (%p154) target = $region16
      $region15: #{generator_forward.29} parent=5 // pred_region
        // Predicated region
        $region17: #{generator_forward.29} parent=15 // pred_check
          %p157 = pneg %p50
        $region18: #{generator_forward.29} parent=15 // pred_check_branch
          %159 = sbr.rel (%p157) target = $region20
        $region19: #{generator_forward.29} parent=15 // pred_region
          %s160 = sand.u32 %s40, 1
          %s161 = sand.u32 %s40, 1
          %s162 = smul.addr %s161, 16
          %s163 = scalar_lea.vmem [#allocation2], %s162
          %s164 = smul.u32 2, %s16
          %s165 = smul.u32 2, %s18
          %s166 = smul.addr %s164, 36
          %s167 = sadd.s32 %s165, %s166
          %s168 = smul.addr %s167, 4
          %s169 = scalar_lea.vmem %s0, %s168
          // Predicated region
          $region21: #{generator_forward.29} parent=19 // pred_check
            _
          $region22: #{generator_forward.29} parent=19 // pred_check_branch
            %171 = sbr.rel (0) target = $region24
          $region23: #{generator_forward.29} parent=19 // pred_region
            // Predicated region
            $region25: #{generator_forward.29} parent=23 // pred_check
              _
            $region26: #{generator_forward.29} parent=23 // pred_check_branch
              %173 = sbr.rel (0) target = $region28
            $region27: #{generator_forward.29} parent=23 // pred_region
              // Predicated region
              $region40: #{generator_forward.29} parent=27 // pred_check
                _
              $region41: #{generator_forward.29} parent=27 // pred_check_branch
                %191 = sbr.rel (0) target = $region43
              $region42: #{generator_forward.29} parent=27 // pred_region
                loop: start=0, step=1, limit=1
                $region44: #{generator_forward.29} parent=42 // loop_pre_header
                  _
                $region45: #{generator_forward.29} parent=42 // loop_header
                  %s193 = sphi 0, %s197
                  %p194 = scmp.ge.s32.totalorder %s193, 1
                  %s198 = sphi %s169, %s169
                  %s199 = sphi %s163, %s163
                $region46: #{generator_forward.29} parent=42 // loop_header_branch
                  %196 = sbr.rel (%p194) target = $region50
                $region47: #{generator_forward.29} parent=42 // loop_body
                  %v200 = vld [vmem:[%s198] sm:$0xff]
                  %201 = vst [vmem:[%s199] sm:$0xff] %v200
                  %v202 = vld [vmem:[%s198 + $0x90] sm:$0xff]
                  %203 = vst [vmem:[%s199 + $0x8] sm:$0xff] %v202
                $region48: #{generator_forward.29} parent=42 // loop_footer
                  %s197 = sadd.s32 1, %s193
                $region49: #{generator_forward.29} parent=42 // loop_footer_branch
                  %192 = sbr.rel target = $region45
                $region50: #{generator_forward.29} parent=42 // loop_exit
                  _
              $region43: #{generator_forward.29} parent=27 // pred_fallthru
                _
              // Predicated region
              $region51: #{generator_forward.29} parent=27 // pred_check
                _
              $region52: #{generator_forward.29} parent=27 // pred_check_branch
                %205 = sbr.rel target = $region54
              $region53: #{generator_forward.29} parent=27 // pred_region
                _
              $region54: #{generator_forward.29} parent=27 // pred_fallthru
                _
            $region28: #{generator_forward.29} parent=23 // pred_fallthru
              _
            // Predicated region
            $region29: #{generator_forward.29} parent=23 // pred_check
              _
            $region30: #{generator_forward.29} parent=23 // pred_check_branch
              %175 = sbr.rel target = $region32
            $region31: #{generator_forward.29} parent=23 // pred_region
              %s177 = ssub.s32 256, 1
              loop: start=0, step=1, limit=1
              $region33: #{generator_forward.29} parent=31 // loop_pre_header
                _
              $region34: #{generator_forward.29} parent=31 // loop_header
                %s179 = sphi 0, %s183
                %p180 = scmp.ge.s32.totalorder %s179, 1
                %s184 = sphi %s169, %s169
                %s185 = sphi %s163, %s163
              $region35: #{generator_forward.29} parent=31 // loop_header_branch
                %182 = sbr.rel (%p180) target = $region39
              $region36: #{generator_forward.29} parent=31 // loop_body
                %v186 = vld [vmem:[%s184] sm:%s177]
                %187 = vst [vmem:[%s185] sm:%s177] %v186
                %v188 = vld [vmem:[%s184 + $0x90] sm:%s177]
                %189 = vst [vmem:[%s185 + $0x8] sm:%s177] %v188
              $region37: #{generator_forward.29} parent=31 // loop_footer
                %s183 = sadd.s32 1, %s179
              $region38: #{generator_forward.29} parent=31 // loop_footer_branch
                %178 = sbr.rel target = $region34
              $region39: #{generator_forward.29} parent=31 // loop_exit
                _
            $region32: #{generator_forward.29} parent=23 // pred_fallthru
              _
          $region24: #{generator_forward.29} parent=19 // pred_fallthru
            _
          %206 = vnop
        $region20: #{generator_forward.29} parent=15 // pred_fallthru
          _
        // Predicated region
        $region55: #{generator_forward.29} parent=15 // pred_check
          %p207 = pneg %p78
        $region56: #{generator_forward.29} parent=15 // pred_check_branch
          %209 = sbr.rel (%p207) target = $region58
        $region57: #{generator_forward.29} parent=15 // pred_region
          %s210 = sand.u32 %s68, 1
          %s211 = sand.u32 %s68, 1
          %s212 = smul.addr %s211, 256
          %s213 = scalar_lea.vmem [#allocation3], %s212
          %s214 = smul.u32 32, %s18
          %s215 = smul.u32 2, %s17
          %s216 = smul.addr %s214, 8
          %s217 = sadd.s32 %s215, %s216
          %s218 = smul.addr %s217, 4
          %s219 = scalar_lea.vmem %s1, %s218
          // Predicated region
          $region59: #{generator_forward.29} parent=57 // pred_check
            _
          $region60: #{generator_forward.29} parent=57 // pred_check_branch
            %221 = sbr.rel (0) target = $region62
          $region61: #{generator_forward.29} parent=57 // pred_region
            // Predicated region
            $region63: #{generator_forward.29} parent=61 // pred_check
              _
            $region64: #{generator_forward.29} parent=61 // pred_check_branch
              %223 = sbr.rel (0) target = $region66
            $region65: #{generator_forward.29} parent=61 // pred_region
              // Predicated region
              $region78: #{generator_forward.29} parent=65 // pred_check
                _
              $region79: #{generator_forward.29} parent=65 // pred_check_branch
                %301 = sbr.rel (0) target = $region81
              $region80: #{generator_forward.29} parent=65 // pred_region
                loop: start=0, step=1, limit=1
                $region82: #{generator_forward.29} parent=80 // loop_pre_header
                  _
                $region83: #{generator_forward.29} parent=80 // loop_header
                  %s303 = sphi 0, %s307
                  %p304 = scmp.ge.s32.totalorder %s303, 1
                  %s308 = sphi %s219, %s219
                  %s309 = sphi %s213, %s213
                $region84: #{generator_forward.29} parent=80 // loop_header_branch
                  %306 = sbr.rel (%p304) target = $region88
                $region85: #{generator_forward.29} parent=80 // loop_body
                  %v310 = vld [vmem:[%s308] sm:$0xff]
                  %311 = vst [vmem:[%s309] sm:$0xff] %v310
                  %v312 = vld [vmem:[%s308 + $0x20] sm:$0xff]
                  %313 = vst [vmem:[%s309 + $0x8] sm:$0xff] %v312
                  %v314 = vld [vmem:[%s308 + $0x40] sm:$0xff]
                  %315 = vst [vmem:[%s309 + $0x10] sm:$0xff] %v314
                  %v316 = vld [vmem:[%s308 + $0x60] sm:$0xff]
                  %317 = vst [vmem:[%s309 + $0x18] sm:$0xff] %v316
                  %v318 = vld [vmem:[%s308 + $0x80] sm:$0xff]
                  %319 = vst [vmem:[%s309 + $0x20] sm:$0xff] %v318
                  %v320 = vld [vmem:[%s308 + $0xa0] sm:$0xff]
                  %321 = vst [vmem:[%s309 + $0x28] sm:$0xff] %v320
                  %v322 = vld [vmem:[%s308 + $0xc0] sm:$0xff]
                  %323 = vst [vmem:[%s309 + $0x30] sm:$0xff] %v322
                  %v324 = vld [vmem:[%s308 + $0xe0] sm:$0xff]
                  %325 = vst [vmem:[%s309 + $0x38] sm:$0xff] %v324
                  %v326 = vld [vmem:[%s308 + $0x100] sm:$0xff]
                  %327 = vst [vmem:[%s309 + $0x40] sm:$0xff] %v326
                  %v328 = vld [vmem:[%s308 + $0x120] sm:$0xff]
                  %329 = vst [vmem:[%s309 + $0x48] sm:$0xff] %v328
                  %v330 = vld [vmem:[%s308 + $0x140] sm:$0xff]
                  %331 = vst [vmem:[%s309 + $0x50] sm:$0xff] %v330
                  %v332 = vld [vmem:[%s308 + $0x160] sm:$0xff]
                  %333 = vst [vmem:[%s309 + $0x58] sm:$0xff] %v332
                  %v334 = vld [vmem:[%s308 + $0x180] sm:$0xff]
                  %335 = vst [vmem:[%s309 + $0x60] sm:$0xff] %v334
                  %v336 = vld [vmem:[%s308 + $0x1a0] sm:$0xff]
                  %337 = vst [vmem:[%s309 + $0x68] sm:$0xff] %v336
                  %v338 = vld [vmem:[%s308 + $0x1c0] sm:$0xff]
                  %339 = vst [vmem:[%s309 + $0x70] sm:$0xff] %v338
                  %v340 = vld [vmem:[%s308 + $0x1e0] sm:$0xff]
                  %341 = vst [vmem:[%s309 + $0x78] sm:$0xff] %v340
                  %v342 = vld [vmem:[%s308 + $0x200] sm:$0xff]
                  %343 = vst [vmem:[%s309 + $0x80] sm:$0xff] %v342
                  %v344 = vld [vmem:[%s308 + $0x220] sm:$0xff]
                  %345 = vst [vmem:[%s309 + $0x88] sm:$0xff] %v344
                  %v346 = vld [vmem:[%s308 + $0x240] sm:$0xff]
                  %347 = vst [vmem:[%s309 + $0x90] sm:$0xff] %v346
                  %v348 = vld [vmem:[%s308 + $0x260] sm:$0xff]
                  %349 = vst [vmem:[%s309 + $0x98] sm:$0xff] %v348
                  %v350 = vld [vmem:[%s308 + $0x280] sm:$0xff]
                  %351 = vst [vmem:[%s309 + $0xa0] sm:$0xff] %v350
                  %v352 = vld [vmem:[%s308 + $0x2a0] sm:$0xff]
                  %353 = vst [vmem:[%s309 + $0xa8] sm:$0xff] %v352
                  %v354 = vld [vmem:[%s308 + $0x2c0] sm:$0xff]
                  %355 = vst [vmem:[%s309 + $0xb0] sm:$0xff] %v354
                  %v356 = vld [vmem:[%s308 + $0x2e0] sm:$0xff]
                  %357 = vst [vmem:[%s309 + $0xb8] sm:$0xff] %v356
                  %v358 = vld [vmem:[%s308 + $0x300] sm:$0xff]
                  %359 = vst [vmem:[%s309 + $0xc0] sm:$0xff] %v358
                  %v360 = vld [vmem:[%s308 + $0x320] sm:$0xff]
                  %361 = vst [vmem:[%s309 + $0xc8] sm:$0xff] %v360
                  %v362 = vld [vmem:[%s308 + $0x340] sm:$0xff]
                  %363 = vst [vmem:[%s309 + $0xd0] sm:$0xff] %v362
                  %v364 = vld [vmem:[%s308 + $0x360] sm:$0xff]
                  %365 = vst [vmem:[%s309 + $0xd8] sm:$0xff] %v364
                  %v366 = vld [vmem:[%s308 + $0x380] sm:$0xff]
                  %367 = vst [vmem:[%s309 + $0xe0] sm:$0xff] %v366
                  %v368 = vld [vmem:[%s308 + $0x3a0] sm:$0xff]
                  %369 = vst [vmem:[%s309 + $0xe8] sm:$0xff] %v368
                  %v370 = vld [vmem:[%s308 + $0x3c0] sm:$0xff]
                  %371 = vst [vmem:[%s309 + $0xf0] sm:$0xff] %v370
                  %v372 = vld [vmem:[%s308 + $0x3e0] sm:$0xff]
                  %373 = vst [vmem:[%s309 + $0xf8] sm:$0xff] %v372
                $region86: #{generator_forward.29} parent=80 // loop_footer
                  %s307 = sadd.s32 1, %s303
                $region87: #{generator_forward.29} parent=80 // loop_footer_branch
                  %302 = sbr.rel target = $region83
                $region88: #{generator_forward.29} parent=80 // loop_exit
                  _
              $region81: #{generator_forward.29} parent=65 // pred_fallthru
                _
              // Predicated region
              $region89: #{generator_forward.29} parent=65 // pred_check
                _
              $region90: #{generator_forward.29} parent=65 // pred_check_branch
                %375 = sbr.rel target = $region92
              $region91: #{generator_forward.29} parent=65 // pred_region
                _
              $region92: #{generator_forward.29} parent=65 // pred_fallthru
                _
            $region66: #{generator_forward.29} parent=61 // pred_fallthru
              _
            // Predicated region
            $region67: #{generator_forward.29} parent=61 // pred_check
              _
            $region68: #{generator_forward.29} parent=61 // pred_check_branch
              %225 = sbr.rel target = $region70
            $region69: #{generator_forward.29} parent=61 // pred_region
              %s227 = ssub.s32 256, 1
              loop: start=0, step=1, limit=1
              $region71: #{generator_forward.29} parent=69 // loop_pre_header
                _
              $region72: #{generator_forward.29} parent=69 // loop_header
                %s229 = sphi 0, %s233
                %p230 = scmp.ge.s32.totalorder %s229, 1
                %s234 = sphi %s219, %s219
                %s235 = sphi %s213, %s213
              $region73: #{generator_forward.29} parent=69 // loop_header_branch
                %232 = sbr.rel (%p230) target = $region77
              $region74: #{generator_forward.29} parent=69 // loop_body
                %v236 = vld [vmem:[%s234] sm:%s227]
                %237 = vst [vmem:[%s235] sm:%s227] %v236
                %v238 = vld [vmem:[%s234 + $0x20] sm:%s227]
                %239 = vst [vmem:[%s235 + $0x8] sm:%s227] %v238
                %v240 = vld [vmem:[%s234 + $0x40] sm:%s227]
                %241 = vst [vmem:[%s235 + $0x10] sm:%s227] %v240
                %v242 = vld [vmem:[%s234 + $0x60] sm:%s227]
                %243 = vst [vmem:[%s235 + $0x18] sm:%s227] %v242
                %v244 = vld [vmem:[%s234 + $0x80] sm:%s227]
                %245 = vst [vmem:[%s235 + $0x20] sm:%s227] %v244
                %v246 = vld [vmem:[%s234 + $0xa0] sm:%s227]
                %247 = vst [vmem:[%s235 + $0x28] sm:%s227] %v246
                %v248 = vld [vmem:[%s234 + $0xc0] sm:%s227]
                %249 = vst [vmem:[%s235 + $0x30] sm:%s227] %v248
                %v250 = vld [vmem:[%s234 + $0xe0] sm:%s227]
                %251 = vst [vmem:[%s235 + $0x38] sm:%s227] %v250
                %v252 = vld [vmem:[%s234 + $0x100] sm:%s227]
                %253 = vst [vmem:[%s235 + $0x40] sm:%s227] %v252
                %v254 = vld [vmem:[%s234 + $0x120] sm:%s227]
                %255 = vst [vmem:[%s235 + $0x48] sm:%s227] %v254
                %v256 = vld [vmem:[%s234 + $0x140] sm:%s227]
                %257 = vst [vmem:[%s235 + $0x50] sm:%s227] %v256
                %v258 = vld [vmem:[%s234 + $0x160] sm:%s227]
                %259 = vst [vmem:[%s235 + $0x58] sm:%s227] %v258
                %v260 = vld [vmem:[%s234 + $0x180] sm:%s227]
                %261 = vst [vmem:[%s235 + $0x60] sm:%s227] %v260
                %v262 = vld [vmem:[%s234 + $0x1a0] sm:%s227]
                %263 = vst [vmem:[%s235 + $0x68] sm:%s227] %v262
                %v264 = vld [vmem:[%s234 + $0x1c0] sm:%s227]
                %265 = vst [vmem:[%s235 + $0x70] sm:%s227] %v264
                %v266 = vld [vmem:[%s234 + $0x1e0] sm:%s227]
                %267 = vst [vmem:[%s235 + $0x78] sm:%s227] %v266
                %v268 = vld [vmem:[%s234 + $0x200] sm:%s227]
                %269 = vst [vmem:[%s235 + $0x80] sm:%s227] %v268
                %v270 = vld [vmem:[%s234 + $0x220] sm:%s227]
                %271 = vst [vmem:[%s235 + $0x88] sm:%s227] %v270
                %v272 = vld [vmem:[%s234 + $0x240] sm:%s227]
                %273 = vst [vmem:[%s235 + $0x90] sm:%s227] %v272
                %v274 = vld [vmem:[%s234 + $0x260] sm:%s227]
                %275 = vst [vmem:[%s235 + $0x98] sm:%s227] %v274
                %v276 = vld [vmem:[%s234 + $0x280] sm:%s227]
                %277 = vst [vmem:[%s235 + $0xa0] sm:%s227] %v276
                %v278 = vld [vmem:[%s234 + $0x2a0] sm:%s227]
                %279 = vst [vmem:[%s235 + $0xa8] sm:%s227] %v278
                %v280 = vld [vmem:[%s234 + $0x2c0] sm:%s227]
                %281 = vst [vmem:[%s235 + $0xb0] sm:%s227] %v280
                %v282 = vld [vmem:[%s234 + $0x2e0] sm:%s227]
                %283 = vst [vmem:[%s235 + $0xb8] sm:%s227] %v282
                %v284 = vld [vmem:[%s234 + $0x300] sm:%s227]
                %285 = vst [vmem:[%s235 + $0xc0] sm:%s227] %v284
                %v286 = vld [vmem:[%s234 + $0x320] sm:%s227]
                %287 = vst [vmem:[%s235 + $0xc8] sm:%s227] %v286
                %v288 = vld [vmem:[%s234 + $0x340] sm:%s227]
                %289 = vst [vmem:[%s235 + $0xd0] sm:%s227] %v288
                %v290 = vld [vmem:[%s234 + $0x360] sm:%s227]
                %291 = vst [vmem:[%s235 + $0xd8] sm:%s227] %v290
                %v292 = vld [vmem:[%s234 + $0x380] sm:%s227]
                %293 = vst [vmem:[%s235 + $0xe0] sm:%s227] %v292
                %v294 = vld [vmem:[%s234 + $0x3a0] sm:%s227]
                %295 = vst [vmem:[%s235 + $0xe8] sm:%s227] %v294
                %v296 = vld [vmem:[%s234 + $0x3c0] sm:%s227]
                %297 = vst [vmem:[%s235 + $0xf0] sm:%s227] %v296
                %v298 = vld [vmem:[%s234 + $0x3e0] sm:%s227]
                %299 = vst [vmem:[%s235 + $0xf8] sm:%s227] %v298
              $region75: #{generator_forward.29} parent=69 // loop_footer
                %s233 = sadd.s32 1, %s229
              $region76: #{generator_forward.29} parent=69 // loop_footer_branch
                %228 = sbr.rel target = $region72
              $region77: #{generator_forward.29} parent=69 // loop_exit
                _
            $region70: #{generator_forward.29} parent=61 // pred_fallthru
              _
          $region62: #{generator_forward.29} parent=57 // pred_fallthru
            _
          %376 = vnop
        $region58: #{generator_forward.29} parent=15 // pred_fallthru
          _
        // Predicated region
        $region93: #{generator_forward.29} parent=15 // pred_check
          %p377 = pneg %p104
        $region94: #{generator_forward.29} parent=15 // pred_check_branch
          %379 = sbr.rel (%p377) target = $region96
        $region95: #{generator_forward.29} parent=15 // pred_region
          %s380 = smul.u32 2, %s17
          %p381 = scmp.lt.s32.totalorder %s380, 7
          %s382 = scalar_select %p381, %s380, 7
          %s383 = smul.addr %s382, 2
          %s384 = scalar_lea.vmem %s2, %s383
          %s385 = smul.u32 2, %s17
        $region96: #{generator_forward.29} parent=15 // pred_fallthru
          _
      $region16: #{generator_forward.29} parent=5 // pred_fallthru
        _
      %p386 = scmp.le.s32.totalorder 1, %s9
      %p387 = scmp.lt.s32.totalorder %s9, 73
      %p388 = pnand %p386, %p387
      %p389 = pneg %p388
      // Predicated region
      $region97: #{generator_forward.29} parent=5 // pred_check
        _
      $region98: #{generator_forward.29} parent=5 // pred_check_branch
        %391 = sbr.rel (%p388) target = $region100
      $region99: #{generator_forward.29} parent=5 // pred_region
        %s392 = ssub.s32 %s9, 1
        %s393 = sand.u32 %s43, 1
        %s394 = sand.u32 %s43, 1
        %s395 = smul.addr %s394, 16
        %s396 = scalar_lea.vmem [#allocation2], %s395
        // Predicated region
        $region101: #{generator_forward.29} parent=99 // pred_check
          %p397 = pneg %p56
        $region102: #{generator_forward.29} parent=99 // pred_check_branch
          %399 = sbr.rel (%p397) target = $region104
        $region103: #{generator_forward.29} parent=99 // pred_region
          _
        $region104: #{generator_forward.29} parent=99 // pred_fallthru
          _
        %s400 = sand.u32 %s71, 1
        %s401 = sand.u32 %s71, 1
        %s402 = smul.addr %s401, 256
        %s403 = scalar_lea.vmem [#allocation3], %s402
        // Predicated region
        $region105: #{generator_forward.29} parent=99 // pred_check
          %p404 = pneg %p84
        $region106: #{generator_forward.29} parent=99 // pred_check_branch
          %406 = sbr.rel (%p404) target = $region108
        $region107: #{generator_forward.29} parent=99 // pred_region
          _
        $region108: #{generator_forward.29} parent=99 // pred_fallthru
          _
        %s407 = sand.u32 %s43, 1
        %s408 = sand.u32 %s43, 1
        %s409 = smul.addr %s408, 16
        %s410 = scalar_lea.vmem [#allocation2], %s409
        %p411 = pneg %p56
        %p412 = pneg %p53
        %s413 = sand.u32 %s71, 1
        %s414 = sand.u32 %s71, 1
        %s415 = smul.addr %s414, 256
        %s416 = scalar_lea.vmem [#allocation3], %s415
        %p417 = pneg %p84
        %p418 = pneg %p81
        %s419 = smul.u32 2, %s20
        %p420 = scmp.lt.s32.totalorder %s419, 7
        %s421 = scalar_select %p420, %s419, 7
        %s422 = smul.addr %s421, 2
        %s423 = scalar_lea.vmem %s2, %s422
        %p424 = pneg %p110
        %p425 = pneg %p107
        %p426 = pneg %p138
        %p427 = pneg %p135
        %s428 = sand.u32 %s125, 1
        %s429 = sand.u32 %s125, 1
        %s430 = smul.addr %s429, 32
        %s431 = scalar_lea.vmem [#allocation4], %s430
        %s432 = smul.u32 2, %s19
        %s433 = smul.u32 2, %s21
        %s434 = smul.u32 32, %s21
        %s435 = smul.u32 2, %s20
        %s436 = smul.u32 2, %s20
        %p437 = scmp.lt.s32.totalorder %s436, 7
        %s438 = scalar_select %p437, %s436, 7
        %s439 = smul.addr %s438, 2
        %s440 = scalar_lea.vmem %s2, %s439
        %s441 = smul.u32 2, %s20
        %s442 = smul.u32 2, %s19
        %s443 = smul.u32 2, %s20
        %p444 = scmp.eq.s32.totalorder %s21, 0
        // Predicated region
        $region109: #{generator_forward.29} parent=99 // pred_check
          %p445 = pneg %p444
        $region110: #{generator_forward.29} parent=99 // pred_check_branch
          %447 = sbr.rel (%p445) target = $region112
        $region111: #{generator_forward.29} parent=99 // pred_region
          %448 = vst [vmem:[%s431] sm:$0xff] 0.0
          %449 = vst [vmem:[%s431 + $0x8] sm:$0xff] 0.0
          %450 = vst [vmem:[%s431 + $0x10] sm:$0xff] 0.0
          %451 = vst [vmem:[%s431 + $0x18] sm:$0xff] 0.0
        $region112: #{generator_forward.29} parent=99 // pred_fallthru
          _
        %v452 = vld [vmem:[%s431] sm:$0xff]
        %v453 = vld [vmem:[%s431 + $0x8] sm:$0xff]
        %v454 = vld [vmem:[%s431 + $0x10] sm:$0xff]
        %v455 = vld [vmem:[%s431 + $0x18] sm:$0xff]
        %v456 = vld [vmem:[%s396] sm:$0xff]
        %v457 = vld [vmem:[%s396 + $0x8] sm:$0xff]
        %v458 = vld [vmem:[%s403] sm:$0xff]
        %v459 = vld [vmem:[%s403 + $0x8] sm:$0xff]
        %v460 = vld [vmem:[%s403 + $0x10] sm:$0xff]
        %v461 = vld [vmem:[%s403 + $0x18] sm:$0xff]
        %v462 = vld [vmem:[%s403 + $0x20] sm:$0xff]
        %v463 = vld [vmem:[%s403 + $0x28] sm:$0xff]
        %v464 = vld [vmem:[%s403 + $0x30] sm:$0xff]
        %v465 = vld [vmem:[%s403 + $0x38] sm:$0xff]
        %v466 = vld [vmem:[%s403 + $0x40] sm:$0xff]
        %v467 = vld [vmem:[%s403 + $0x48] sm:$0xff]
        %v468 = vld [vmem:[%s403 + $0x50] sm:$0xff]
        %v469 = vld [vmem:[%s403 + $0x58] sm:$0xff]
        %v470 = vld [vmem:[%s403 + $0x60] sm:$0xff]
        %v471 = vld [vmem:[%s403 + $0x68] sm:$0xff]
        %v472 = vld [vmem:[%s403 + $0x70] sm:$0xff]
        %v473 = vld [vmem:[%s403 + $0x78] sm:$0xff]
        %v474 = vld [vmem:[%s403 + $0x80] sm:$0xff]
        %v475 = vld [vmem:[%s403 + $0x88] sm:$0xff]
        %v476 = vld [vmem:[%s403 + $0x90] sm:$0xff]
        %v477 = vld [vmem:[%s403 + $0x98] sm:$0xff]
        %v478 = vld [vmem:[%s403 + $0xa0] sm:$0xff]
        %v479 = vld [vmem:[%s403 + $0xa8] sm:$0xff]
        %v480 = vld [vmem:[%s403 + $0xb0] sm:$0xff]
        %v481 = vld [vmem:[%s403 + $0xb8] sm:$0xff]
        %v482 = vld [vmem:[%s403 + $0xc0] sm:$0xff]
        %v483 = vld [vmem:[%s403 + $0xc8] sm:$0xff]
        %v484 = vld [vmem:[%s403 + $0xd0] sm:$0xff]
        %v485 = vld [vmem:[%s403 + $0xd8] sm:$0xff]
        %v486 = vld [vmem:[%s403 + $0xe0] sm:$0xff]
        %v487 = vld [vmem:[%s403 + $0xe8] sm:$0xff]
        %v488 = vld [vmem:[%s403 + $0xf0] sm:$0xff]
        %v489 = vld [vmem:[%s403 + $0xf8] sm:$0xff]
        %v492 = vunpack.c.l.b16 %v456
        %v493 = vunpack.c.h.b16 %v456
        %v494 = vunpack.c.l.b16 %v457
        %v495 = vunpack.c.h.b16 %v457
        %v496 = vpack.c.b16 %v494, %v492
        %v497 = vpack.c.b16 %v495, %v493
        %v532 = vunpack.c.l.b16 %v458
        %v533 = vunpack.c.h.b16 %v458
        %v534 = vunpack.c.l.b16 %v459
        %v535 = vunpack.c.h.b16 %v459
        %v536 = vunpack.c.l.b16 %v460
        %v537 = vunpack.c.h.b16 %v460
        %v538 = vunpack.c.l.b16 %v461
        %v539 = vunpack.c.h.b16 %v461
        %v540 = vunpack.c.l.b16 %v462
        %v541 = vunpack.c.h.b16 %v462
        %v542 = vunpack.c.l.b16 %v463
        %v543 = vunpack.c.h.b16 %v463
        %v544 = vunpack.c.l.b16 %v464
        %v545 = vunpack.c.h.b16 %v464
        %v546 = vunpack.c.l.b16 %v465
        %v547 = vunpack.c.h.b16 %v465
        %v548 = vunpack.c.l.b16 %v466
        %v549 = vunpack.c.h.b16 %v466
        %v550 = vunpack.c.l.b16 %v467
        %v551 = vunpack.c.h.b16 %v467
        %v552 = vunpack.c.l.b16 %v468
        %v553 = vunpack.c.h.b16 %v468
        %v554 = vunpack.c.l.b16 %v469
        %v555 = vunpack.c.h.b16 %v469
        %v556 = vunpack.c.l.b16 %v470
        %v557 = vunpack.c.h.b16 %v470
        %v558 = vunpack.c.l.b16 %v471
        %v559 = vunpack.c.h.b16 %v471
        %v560 = vunpack.c.l.b16 %v472
        %v561 = vunpack.c.h.b16 %v472
        %v562 = vunpack.c.l.b16 %v473
        %v563 = vunpack.c.h.b16 %v473
        %v564 = vunpack.c.l.b16 %v474
        %v565 = vunpack.c.h.b16 %v474
        %v566 = vunpack.c.l.b16 %v475
        %v567 = vunpack.c.h.b16 %v475
        %v568 = vunpack.c.l.b16 %v476
        %v569 = vunpack.c.h.b16 %v476
        %v570 = vunpack.c.l.b16 %v477
        %v571 = vunpack.c.h.b16 %v477
        %v572 = vunpack.c.l.b16 %v478
        %v573 = vunpack.c.h.b16 %v478
        %v574 = vunpack.c.l.b16 %v479
        %v575 = vunpack.c.h.b16 %v479
        %v576 = vunpack.c.l.b16 %v480
        %v577 = vunpack.c.h.b16 %v480
        %v578 = vunpack.c.l.b16 %v481
        %v579 = vunpack.c.h.b16 %v481
        %v580 = vunpack.c.l.b16 %v482
        %v581 = vunpack.c.h.b16 %v482
        %v582 = vunpack.c.l.b16 %v483
        %v583 = vunpack.c.h.b16 %v483
        %v584 = vunpack.c.l.b16 %v484
        %v585 = vunpack.c.h.b16 %v484
        %v586 = vunpack.c.l.b16 %v485
        %v587 = vunpack.c.h.b16 %v485
        %v588 = vunpack.c.l.b16 %v486
        %v589 = vunpack.c.h.b16 %v486
        %v590 = vunpack.c.l.b16 %v487
        %v591 = vunpack.c.h.b16 %v487
        %v592 = vunpack.c.l.b16 %v488
        %v593 = vunpack.c.h.b16 %v488
        %v594 = vunpack.c.l.b16 %v489
        %v595 = vunpack.c.h.b16 %v489
        %v596 = vpack.c.b16 %v534, %v532
        %v597 = vpack.c.b16 %v535, %v533
        %v598 = vpack.c.b16 %v538, %v536
        %v599 = vpack.c.b16 %v539, %v537
        %v600 = vpack.c.b16 %v542, %v540
        %v601 = vpack.c.b16 %v543, %v541
        %v602 = vpack.c.b16 %v546, %v544
        %v603 = vpack.c.b16 %v547, %v545
        %v604 = vpack.c.b16 %v550, %v548
        %v605 = vpack.c.b16 %v551, %v549
        %v606 = vpack.c.b16 %v554, %v552
        %v607 = vpack.c.b16 %v555, %v553
        %v608 = vpack.c.b16 %v558, %v556
        %v609 = vpack.c.b16 %v559, %v557
        %v610 = vpack.c.b16 %v562, %v560
        %v611 = vpack.c.b16 %v563, %v561
        %v612 = vpack.c.b16 %v566, %v564
        %v613 = vpack.c.b16 %v567, %v565
        %v614 = vpack.c.b16 %v570, %v568
        %v615 = vpack.c.b16 %v571, %v569
        %v616 = vpack.c.b16 %v574, %v572
        %v617 = vpack.c.b16 %v575, %v573
        %v618 = vpack.c.b16 %v578, %v576
        %v619 = vpack.c.b16 %v579, %v577
        %v620 = vpack.c.b16 %v582, %v580
        %v621 = vpack.c.b16 %v583, %v581
        %v622 = vpack.c.b16 %v586, %v584
        %v623 = vpack.c.b16 %v587, %v585
        %v624 = vpack.c.b16 %v590, %v588
        %v625 = vpack.c.b16 %v591, %v589
        %v626 = vpack.c.b16 %v594, %v592
        %v627 = vpack.c.b16 %v595, %v593
        %660 = vmatpush.bf16.msra.mxu0 %v610
        %661 = vmatpush.bf16.msra.mxu0 %v608
        %662 = vmatpush.bf16.msra.mxu0 %v606
        %663 = vmatpush.bf16.msra.mxu0 %v604
        %664 = vmatpush.bf16.msra.mxu0 %v602
        %665 = vmatpush.bf16.msra.mxu0 %v600
        %666 = vmatpush.bf16.msra.mxu0 %v598
        %667 = vmatpush.bf16.msra.mxu0 %v596
        %668 = vmatmul.bf16.gmra.mxu0 %v496
        %v669 = vpop.f32.mrf.mxu0
        %v670 = vadd.f32 0.0, %v669
        %v671 = vpop.f32.mrf.mxu0
        %v672 = vadd.f32 0.0, %v671
        %673 = vdwg.mxu0
        %674 = vmatpush.bf16.msra.mxu0 %v626
        %675 = vmatpush.bf16.msra.mxu0 %v624
        %676 = vmatpush.bf16.msra.mxu0 %v622
        %677 = vmatpush.bf16.msra.mxu0 %v620
        %678 = vmatpush.bf16.msra.mxu0 %v618
        %679 = vmatpush.bf16.msra.mxu0 %v616
        %680 = vmatpush.bf16.msra.mxu0 %v614
        %681 = vmatpush.bf16.msra.mxu0 %v612
        %682 = vmatmul.bf16.gmra.mxu0 %v497
        %v683 = vpop.f32.mrf.mxu0
        %v684 = vadd.f32 %v670, %v683
        %v685 = vpop.f32.mrf.mxu0
        %v686 = vadd.f32 %v672, %v685
        %687 = vdwg.mxu0
        %688 = vmatpush.bf16.msra.mxu0 %v611
        %689 = vmatpush.bf16.msra.mxu0 %v609
        %690 = vmatpush.bf16.msra.mxu0 %v607
        %691 = vmatpush.bf16.msra.mxu0 %v605
        %692 = vmatpush.bf16.msra.mxu0 %v603
        %693 = vmatpush.bf16.msra.mxu0 %v601
        %694 = vmatpush.bf16.msra.mxu0 %v599
        %695 = vmatpush.bf16.msra.mxu0 %v597
        %696 = vmatmul.bf16.gmra.mxu0 %v496
        %v697 = vpop.f32.mrf.mxu0
        %v698 = vadd.f32 0.0, %v697
        %v699 = vpop.f32.mrf.mxu0
        %v700 = vadd.f32 0.0, %v699
        %701 = vdwg.mxu0
        %702 = vmatpush.bf16.msra.mxu0 %v627
        %703 = vmatpush.bf16.msra.mxu0 %v625
        %704 = vmatpush.bf16.msra.mxu0 %v623
        %705 = vmatpush.bf16.msra.mxu0 %v621
        %706 = vmatpush.bf16.msra.mxu0 %v619
        %707 = vmatpush.bf16.msra.mxu0 %v617
        %708 = vmatpush.bf16.msra.mxu0 %v615
        %709 = vmatpush.bf16.msra.mxu0 %v613
        %710 = vmatmul.bf16.gmra.mxu0 %v497
        %v711 = vpop.f32.mrf.mxu0
        %v712 = vadd.f32 %v698, %v711
        %v713 = vpop.f32.mrf.mxu0
        %v714 = vadd.f32 %v700, %v713
        %715 = vdwg.mxu0
        %v716 = vadd.f32 %v452, %v684
        %v717 = vadd.f32 %v453, %v712
        %v718 = vadd.f32 %v454, %v686
        %v719 = vadd.f32 %v455, %v714
        %720 = vst [vmem:[%s431] sm:$0xff] %v716
        %721 = vst [vmem:[%s431 + $0x8] sm:$0xff] %v717
        %722 = vst [vmem:[%s431 + $0x10] sm:$0xff] %v718
        %723 = vst [vmem:[%s431 + $0x18] sm:$0xff] %v719
        %p724 = scmp.eq.s32.totalorder %s21, 17
        // Predicated region
        $region113: #{generator_forward.29} parent=99 // pred_check
          %p725 = pneg %p724
        $region114: #{generator_forward.29} parent=99 // pred_check_branch
          %727 = sbr.rel (%p725) target = $region116
        $region115: #{generator_forward.29} parent=99 // pred_region
          %v728 = vld [vmem:[%s440] sm:$0xf]
          %v729 = vld [vmem:[%s431] sm:$0xff]
          %v730 = vld [vmem:[%s431 + $0x8] sm:$0xff]
          %v731 = vld [vmem:[%s431 + $0x10] sm:$0xff]
          %v732 = vld [vmem:[%s431 + $0x18] sm:$0xff]
          %v734 = vperm.slane %v728, 0
          %v735 = vperm.slane %v728, 2
          %v738 = vperm.slane %v734, 0
          %v739 = vperm.slane %v735, 0
          %v740 = vmul.f32 %v729, %v738
          %v741 = vmul.f32 %v730, %v739
          %v742 = vmul.f32 %v731, %v738
          %v743 = vmul.f32 %v732, %v739
          %v744 = vperm.slane %v728, 1
          %v745 = vperm.slane %v728, 3
          %v748 = vperm.slane %v744, 1
          %v749 = vperm.slane %v745, 1
          %v750 = vadd.f32 %v740, %v748
          %v751 = vadd.f32 %v741, %v749
          %v752 = vadd.f32 %v742, %v748
          %v753 = vadd.f32 %v743, %v749
          %v754 = vmax.f32 %v750, 0.0
          %v755 = vmax.f32 %v751, 0.0
          %v756 = vmax.f32 %v752, 0.0
          %v757 = vmax.f32 %v753, 0.0
          %758 = vst [vmem:[%s431] sm:$0xff] %v754
          %759 = vst [vmem:[%s431 + $0x8] sm:$0xff] %v755
          %760 = vst [vmem:[%s431 + $0x10] sm:$0xff] %v756
          %761 = vst [vmem:[%s431 + $0x18] sm:$0xff] %v757
        $region116: #{generator_forward.29} parent=99 // pred_fallthru
          _
        %s762 = sand.u32 %s125, 1
        %s763 = sand.u32 %s125, 1
        %s764 = smul.addr %s763, 32
        %s765 = scalar_lea.vmem [#allocation4], %s764
        // Predicated region
        $region117: #{generator_forward.29} parent=99 // pred_check
          %p766 = pneg %p135
        $region118: #{generator_forward.29} parent=99 // pred_check_branch
          %768 = sbr.rel (%p766) target = $region120
        $region119: #{generator_forward.29} parent=99 // pred_region
          %s769 = smul.u32 2, %s19
          %s770 = smul.u32 2, %s20
          %s771 = smul.addr %s769, 8
          %s772 = sadd.s32 %s770, %s771
          %s773 = smul.addr %s772, 8
          %s774 = scalar_lea.vmem %s3, %s773
          // Predicated region
          $region121: #{generator_forward.29} parent=119 // pred_check
            _
          $region122: #{generator_forward.29} parent=119 // pred_check_branch
            %776 = sbr.rel (0) target = $region124
          $region123: #{generator_forward.29} parent=119 // pred_region
            // Predicated region
            $region125: #{generator_forward.29} parent=123 // pred_check
              _
            $region126: #{generator_forward.29} parent=123 // pred_check_branch
              %778 = sbr.rel (0) target = $region128
            $region127: #{generator_forward.29} parent=123 // pred_region
              loop: start=0, step=1, limit=1
              $region129: #{generator_forward.29} parent=127 // loop_pre_header
                _
              $region130: #{generator_forward.29} parent=127 // loop_header
                %s780 = sphi 0, %s784
                %p781 = scmp.ge.s32.totalorder %s780, 1
                %s785 = sphi %s765, %s765
                %s786 = sphi %s774, %s774
              $region131: #{generator_forward.29} parent=127 // loop_header_branch
                %783 = sbr.rel (%p781) target = $region135
              $region132: #{generator_forward.29} parent=127 // loop_body
                %v787 = vld [vmem:[%s785] sm:$0xff]
                %788 = vst [vmem:[%s786] sm:$0xff] %v787
                %v789 = vld [vmem:[%s785 + $0x8] sm:$0xff]
                %790 = vst [vmem:[%s786 + $0x8] sm:$0xff] %v789
                %v791 = vld [vmem:[%s785 + $0x10] sm:$0xff]
                %792 = vst [vmem:[%s786 + $0x40] sm:$0xff] %v791
                %v793 = vld [vmem:[%s785 + $0x18] sm:$0xff]
                %794 = vst [vmem:[%s786 + $0x48] sm:$0xff] %v793
              $region133: #{generator_forward.29} parent=127 // loop_footer
                %s784 = sadd.s32 1, %s780
              $region134: #{generator_forward.29} parent=127 // loop_footer_branch
                %779 = sbr.rel target = $region130
              $region135: #{generator_forward.29} parent=127 // loop_exit
                _
            $region128: #{generator_forward.29} parent=123 // pred_fallthru
              _
            // Predicated region
            $region136: #{generator_forward.29} parent=123 // pred_check
              _
            $region137: #{generator_forward.29} parent=123 // pred_check_branch
              %796 = sbr.rel target = $region139
            $region138: #{generator_forward.29} parent=123 // pred_region
              _
            $region139: #{generator_forward.29} parent=123 // pred_fallthru
              _
          $region124: #{generator_forward.29} parent=119 // pred_fallthru
            _
          %797 = vnop
        $region120: #{generator_forward.29} parent=99 // pred_fallthru
          _
      $region100: #{generator_forward.29} parent=5 // pred_fallthru
        _
      %p798 = scmp.le.s32.totalorder 2, %s9
      // Predicated region
      $region140: #{generator_forward.29} parent=5 // pred_check
        %p799 = pneg %p798
      $region141: #{generator_forward.29} parent=5 // pred_check_branch
        %801 = sbr.rel (%p799) target = $region143
      $region142: #{generator_forward.29} parent=5 // pred_region
        %s802 = ssub.s32 %s9, 2
        // Predicated region
        $region144: #{generator_forward.29} parent=142 // pred_check
          %p803 = pneg %p141
        $region145: #{generator_forward.29} parent=142 // pred_check_branch
          %805 = sbr.rel (%p803) target = $region147
        $region146: #{generator_forward.29} parent=142 // pred_region
          %s806 = sand.u32 %s126, 1
          %s807 = sand.u32 %s126, 1
          %s808 = smul.addr %s807, 32
          %s809 = scalar_lea.vmem [#allocation4], %s808
        $region147: #{generator_forward.29} parent=142 // pred_fallthru
          _
      $region143: #{generator_forward.29} parent=5 // pred_fallthru
        _
    $region6: #{generator_forward.29} parent=1 // loop_footer
      %s13 = sadd.s32 1, %s9
    $region7: #{generator_forward.29} parent=1 // loop_footer_branch
      %8 = sbr.rel target = $region3
    $region8: #{generator_forward.29} parent=1 // loop_exit
      _

// kernel: generator_forward.33
$region0: #{generator_forward.33}
  #allocation0 [shape = 'u32[]', space=smem, size = 0x4, offset = 0x4, fixed_abs, tag = 'smem constant byte address 0x4 - core index']
  #allocation1 [shape = 'u32[72,128]{1,0:T(1,128)}', space=vmem, size = 0x9000, scoped, tag = 'internal scratch']
  %s0 = inlined_call_operand.vmem [shape: bf16[16,4096], index: 0, kind: input, shape index: {}]
  %s1 = inlined_call_operand.vmem [shape: bf16[4096,512], index: 1, kind: input, shape index: {}]
  %s2 = inlined_call_operand.vmem [shape: f32[2,512], index: 2, kind: input, shape index: {}]
  %s3 = inlined_call_operand.vmem [shape: f32[16,512], index: 3, kind: output, shape index: {}]
  %s4 = sld [smem:[#allocation0]]
  $region148: #{generator_forward.33} parent=0
    _
  %s6 = ssub.s32 1, %s4
  %s7 = scalar_select 0, %s6, %s4
  $region1: #{generator_forward.33} parent=0
    #allocation2 [shape = 'u8[16384]{0}', space=vmem, size = 0x4000, scoped, tag = 'input window, operand 0']
    #allocation3 [shape = 'u8[262144]{0}', space=vmem, size = 0x40000, scoped, tag = 'input window, operand 1']
    #allocation4 [shape = 'u8[32768]{0}', space=vmem, size = 0x8000, scoped, tag = 'output window, operand 0']
    loop: start=0, step=1, limit=34
    $region2: #{generator_forward.33} parent=1 // loop_pre_header
      _
    $region3: #{generator_forward.33} parent=1 // loop_header
      %s9 = sphi 0, %s13
      %p10 = scmp.ge.s32.totalorder %s9, 34
      %s16 = sphi 0, %s35
      %s17 = sphi 0, %s31
      %s18 = sphi 0, %s27
      %s19 = sphi 0, %s16
      %s20 = sphi 0, %s17
      %s21 = sphi 0, %s18
      %s22 = sphi 0, %s19
      %s23 = sphi 0, %s20
      %s24 = sphi 0, %s21
      %s40 = sphi 0, %s42
      %s43 = sphi 0, %s40
      %s44 = sphi 0, %s43
      %s60 = sphi 0, %s44
      %s68 = sphi 0, %s70
      %s71 = sphi 0, %s68
      %s72 = sphi 0, %s71
      %s88 = sphi 0, %s72
      %s94 = sphi 0, %s96
      %s97 = sphi 0, %s94
      %s98 = sphi 0, %s97
      %s114 = sphi 0, %s98
      %s122 = sphi 0, %s124
      %s125 = sphi 0, %s122
      %s126 = sphi 0, %s125
      %s142 = sphi 0, %s126
    $region4: #{generator_forward.33} parent=1 // loop_header_branch
      %12 = sbr.rel (%p10) target = $region8
    $region5: #{generator_forward.33} parent=1 // loop_body
      %s14 = ssub.s32 %s9, 1
      %s15 = ssub.s32 %s9, 2
      %s25 = sadd.s32 1, %s18
      %p26 = scmp.ge.s32.totalorder %s25, 16
      %s27 = scalar_select %p26, 0, %s25
      %s28 = sadd.s32 1, %s17
      %s29 = scalar_select %p26, %s28, %s17
      %p30 = scmp.ge.s32.totalorder %s29, 2
      %s31 = scalar_select %p30, 0, %s29
      %s32 = sadd.s32 1, %s16
      %s33 = scalar_select %p30, %s32, %s16
      %p34 = scmp.ge.s32.totalorder %s33, 1
      %s35 = scalar_select %p34, 0, %s33
      %s36 = ssub.s32 %s16, %s35
      %s37 = ssub.s32 %s18, %s27
      %s38 = sor.u32 %s36, %s37
      %p39 = scmp.eq.s32.totalorder %s38, 0
      %s41 = sadd.s32 %s40, 1
      %s42 = scalar_select %p39, %s40, %s41
      %p45 = pneg %p39
      %p46 = scmp.eq.s32.totalorder %s9, 31
      %p47 = por %p45, %p46
      %p48 = scmp.ne.s32.totalorder %s40, %s43
      %p49 = scmp.eq.s32.totalorder %s9, 0
      %p50 = por %p48, %p49
      %p51 = scmp.ne.s32.totalorder %s40, %s43
      %p52 = scmp.eq.s32.totalorder %s14, 31
      %p53 = por %p51, %p52
      %p54 = scmp.ne.s32.totalorder %s43, %s44
      %p55 = scmp.eq.s32.totalorder %s14, 0
      %p56 = por %p54, %p55
      %p57 = scmp.ne.s32.totalorder %s43, %s44
      %p58 = scmp.eq.s32.totalorder %s15, 31
      %p59 = por %p57, %p58
      %p61 = scmp.ne.s32.totalorder %s44, %s60
      %p62 = scmp.eq.s32.totalorder %s15, 0
      %p63 = por %p61, %p62
      %s64 = ssub.s32 %s18, %s27
      %s65 = ssub.s32 %s17, %s31
      %s66 = sor.u32 %s64, %s65
      %p67 = scmp.eq.s32.totalorder %s66, 0
      %s69 = sadd.s32 %s68, 1
      %s70 = scalar_select %p67, %s68, %s69
      %p73 = pneg %p67
      %p74 = scmp.eq.s32.totalorder %s9, 31
      %p75 = por %p73, %p74
      %p76 = scmp.ne.s32.totalorder %s68, %s71
      %p77 = scmp.eq.s32.totalorder %s9, 0
      %p78 = por %p76, %p77
      %p79 = scmp.ne.s32.totalorder %s68, %s71
      %p80 = scmp.eq.s32.totalorder %s14, 31
      %p81 = por %p79, %p80
      %p82 = scmp.ne.s32.totalorder %s71, %s72
      %p83 = scmp.eq.s32.totalorder %s14, 0
      %p84 = por %p82, %p83
      %p85 = scmp.ne.s32.totalorder %s71, %s72
      %p86 = scmp.eq.s32.totalorder %s15, 31
      %p87 = por %p85, %p86
      %p89 = scmp.ne.s32.totalorder %s72, %s88
      %p90 = scmp.eq.s32.totalorder %s15, 0
      %p91 = por %p89, %p90
      %s92 = ssub.s32 %s17, %s31
      %p93 = scmp.eq.s32.totalorder %s92, 0
      %s95 = sadd.s32 %s94, 1
      %s96 = scalar_select %p93, %s94, %s95
      %p99 = pneg %p93
      %p100 = scmp.eq.s32.totalorder %s9, 31
      %p101 = por %p99, %p100
      %p102 = scmp.ne.s32.totalorder %s94, %s97
      %p103 = scmp.eq.s32.totalorder %s9, 0
      %p104 = por %p102, %p103
      %p105 = scmp.ne.s32.totalorder %s94, %s97
      %p106 = scmp.eq.s32.totalorder %s14, 31
      %p107 = por %p105, %p106
      %p108 = scmp.ne.s32.totalorder %s97, %s98
      %p109 = scmp.eq.s32.totalorder %s14, 0
      %p110 = por %p108, %p109
      %p111 = scmp.ne.s32.totalorder %s97, %s98
      %p112 = scmp.eq.s32.totalorder %s15, 31
      %p113 = por %p111, %p112
      %p115 = scmp.ne.s32.totalorder %s98, %s114
      %p116 = scmp.eq.s32.totalorder %s15, 0
      %p117 = por %p115, %p116
      %s118 = ssub.s32 %s16, %s35
      %s119 = ssub.s32 %s17, %s31
      %s120 = sor.u32 %s118, %s119
      %p121 = scmp.eq.s32.totalorder %s120, 0
      %s123 = sadd.s32 %s122, 1
      %s124 = scalar_select %p121, %s122, %s123
      %p127 = pneg %p121
      %p128 = scmp.eq.s32.totalorder %s9, 31
      %p129 = por %p127, %p128
      %p130 = scmp.ne.s32.totalorder %s122, %s125
      %p131 = scmp.eq.s32.totalorder %s9, 0
      %p132 = por %p130, %p131
      %p133 = scmp.ne.s32.totalorder %s122, %s125
      %p134 = scmp.eq.s32.totalorder %s14, 31
      %p135 = por %p133, %p134
      %p136 = scmp.ne.s32.totalorder %s125, %s126
      %p137 = scmp.eq.s32.totalorder %s14, 0
      %p138 = por %p136, %p137
      %p139 = scmp.ne.s32.totalorder %s125, %s126
      %p140 = scmp.eq.s32.totalorder %s15, 31
      %p141 = por %p139, %p140
      %p143 = scmp.ne.s32.totalorder %s126, %s142
      %p144 = scmp.eq.s32.totalorder %s15, 0
      %p145 = por %p143, %p144
      %p146 = scmp.le.s32.totalorder 1, %s9
      %p147 = scmp.lt.s32.totalorder %s9, 33
      %p148 = pnand %p146, %p147
      %p149 = pneg %p148
      // Predicated region
      $region9: #{generator_forward.33} parent=5 // pred_check
        _
      $region10: #{generator_forward.33} parent=5 // pred_check_branch
        %151 = sbr.rel (%p148) target = $region12
      $region11: #{generator_forward.33} parent=5 // pred_region
        %s152 = ssub.s32 %s9, 1
      $region12: #{generator_forward.33} parent=5 // pred_fallthru
        _
      %p153 = scmp.lt.s32.totalorder %s9, 32
      // Predicated region
      $region13: #{generator_forward.33} parent=5 // pred_check
        %p154 = pneg %p153
      $region14: #{generator_forward.33} parent=5 // pred_check_branch
        %156 = sbr.rel (%p154) target = $region16
      $region15: #{generator_forward.33} parent=5 // pred_region
        // Predicated region
        $region17: #{generator_forward.33} parent=15 // pred_check
          %p157 = pneg %p50
        $region18: #{generator_forward.33} parent=15 // pred_check_branch
          %159 = sbr.rel (%p157) target = $region20
        $region19: #{generator_forward.33} parent=15 // pred_region
          %s160 = sand.u32 %s40, 1
          %s161 = sand.u32 %s40, 1
          %s162 = smul.addr %s161, 16
          %s163 = scalar_lea.vmem [#allocation2], %s162
          %s164 = smul.u32 2, %s16
          %s165 = smul.u32 2, %s18
          %s166 = smul.addr %s164, 32
          %s167 = sadd.s32 %s165, %s166
          %s168 = smul.addr %s167, 4
          %s169 = scalar_lea.vmem %s0, %s168
          // Predicated region
          $region21: #{generator_forward.33} parent=19 // pred_check
            _
          $region22: #{generator_forward.33} parent=19 // pred_check_branch
            %171 = sbr.rel (0) target = $region24
          $region23: #{generator_forward.33} parent=19 // pred_region
            // Predicated region
            $region25: #{generator_forward.33} parent=23 // pred_check
              _
            $region26: #{generator_forward.33} parent=23 // pred_check_branch
              %173 = sbr.rel (0) target = $region28
            $region27: #{generator_forward.33} parent=23 // pred_region
              // Predicated region
              $region40: #{generator_forward.33} parent=27 // pred_check
                _
              $region41: #{generator_forward.33} parent=27 // pred_check_branch
                %191 = sbr.rel (0) target = $region43
              $region42: #{generator_forward.33} parent=27 // pred_region
                loop: start=0, step=1, limit=1
                $region44: #{generator_forward.33} parent=42 // loop_pre_header
                  _
                $region45: #{generator_forward.33} parent=42 // loop_header
                  %s193 = sphi 0, %s197
                  %p194 = scmp.ge.s32.totalorder %s193, 1
                  %s198 = sphi %s169, %s169
                  %s199 = sphi %s163, %s163
                $region46: #{generator_forward.33} parent=42 // loop_header_branch
                  %196 = sbr.rel (%p194) target = $region50
                $region47: #{generator_forward.33} parent=42 // loop_body
                  %v200 = vld [vmem:[%s198] sm:$0xff]
                  %201 = vst [vmem:[%s199] sm:$0xff] %v200
                  %v202 = vld [vmem:[%s198 + $0x80] sm:$0xff]
                  %203 = vst [vmem:[%s199 + $0x8] sm:$0xff] %v202
                $region48: #{generator_forward.33} parent=42 // loop_footer
                  %s197 = sadd.s32 1, %s193
                $region49: #{generator_forward.33} parent=42 // loop_footer_branch
                  %192 = sbr.rel target = $region45
                $region50: #{generator_forward.33} parent=42 // loop_exit
                  _
              $region43: #{generator_forward.33} parent=27 // pred_fallthru
                _
              // Predicated region
              $region51: #{generator_forward.33} parent=27 // pred_check
                _
              $region52: #{generator_forward.33} parent=27 // pred_check_branch
                %205 = sbr.rel target = $region54
              $region53: #{generator_forward.33} parent=27 // pred_region
                _
              $region54: #{generator_forward.33} parent=27 // pred_fallthru
                _
            $region28: #{generator_forward.33} parent=23 // pred_fallthru
              _
            // Predicated region
            $region29: #{generator_forward.33} parent=23 // pred_check
              _
            $region30: #{generator_forward.33} parent=23 // pred_check_branch
              %175 = sbr.rel target = $region32
            $region31: #{generator_forward.33} parent=23 // pred_region
              %s177 = ssub.s32 256, 1
              loop: start=0, step=1, limit=1
              $region33: #{generator_forward.33} parent=31 // loop_pre_header
                _
              $region34: #{generator_forward.33} parent=31 // loop_header
                %s179 = sphi 0, %s183
                %p180 = scmp.ge.s32.totalorder %s179, 1
                %s184 = sphi %s169, %s169
                %s185 = sphi %s163, %s163
              $region35: #{generator_forward.33} parent=31 // loop_header_branch
                %182 = sbr.rel (%p180) target = $region39
              $region36: #{generator_forward.33} parent=31 // loop_body
                %v186 = vld [vmem:[%s184] sm:%s177]
                %187 = vst [vmem:[%s185] sm:%s177] %v186
                %v188 = vld [vmem:[%s184 + $0x80] sm:%s177]
                %189 = vst [vmem:[%s185 + $0x8] sm:%s177] %v188
              $region37: #{generator_forward.33} parent=31 // loop_footer
                %s183 = sadd.s32 1, %s179
              $region38: #{generator_forward.33} parent=31 // loop_footer_branch
                %178 = sbr.rel target = $region34
              $region39: #{generator_forward.33} parent=31 // loop_exit
                _
            $region32: #{generator_forward.33} parent=23 // pred_fallthru
              _
          $region24: #{generator_forward.33} parent=19 // pred_fallthru
            _
          %206 = vnop
        $region20: #{generator_forward.33} parent=15 // pred_fallthru
          _
        // Predicated region
        $region55: #{generator_forward.33} parent=15 // pred_check
          %p207 = pneg %p78
        $region56: #{generator_forward.33} parent=15 // pred_check_branch
          %209 = sbr.rel (%p207) target = $region58
        $region57: #{generator_forward.33} parent=15 // pred_region
          %s210 = sand.u32 %s68, 1
          %s211 = sand.u32 %s68, 1
          %s212 = smul.addr %s211, 256
          %s213 = scalar_lea.vmem [#allocation3], %s212
          %s214 = smul.u32 32, %s18
          %s215 = smul.u32 2, %s17
          %s216 = smul.addr %s214, 4
          %s217 = sadd.s32 %s215, %s216
          %s218 = smul.addr %s217, 4
          %s219 = scalar_lea.vmem %s1, %s218
          // Predicated region
          $region59: #{generator_forward.33} parent=57 // pred_check
            _
          $region60: #{generator_forward.33} parent=57 // pred_check_branch
            %221 = sbr.rel (0) target = $region62
          $region61: #{generator_forward.33} parent=57 // pred_region
            // Predicated region
            $region63: #{generator_forward.33} parent=61 // pred_check
              _
            $region64: #{generator_forward.33} parent=61 // pred_check_branch
              %223 = sbr.rel (0) target = $region66
            $region65: #{generator_forward.33} parent=61 // pred_region
              // Predicated region
              $region78: #{generator_forward.33} parent=65 // pred_check
                _
              $region79: #{generator_forward.33} parent=65 // pred_check_branch
                %301 = sbr.rel (0) target = $region81
              $region80: #{generator_forward.33} parent=65 // pred_region
                loop: start=0, step=1, limit=1
                $region82: #{generator_forward.33} parent=80 // loop_pre_header
                  _
                $region83: #{generator_forward.33} parent=80 // loop_header
                  %s303 = sphi 0, %s307
                  %p304 = scmp.ge.s32.totalorder %s303, 1
                  %s308 = sphi %s219, %s219
                  %s309 = sphi %s213, %s213
                $region84: #{generator_forward.33} parent=80 // loop_header_branch
                  %306 = sbr.rel (%p304) target = $region88
                $region85: #{generator_forward.33} parent=80 // loop_body
                  %v310 = vld [vmem:[%s308] sm:$0xff]
                  %311 = vst [vmem:[%s309] sm:$0xff] %v310
                  %v312 = vld [vmem:[%s308 + $0x10] sm:$0xff]
                  %313 = vst [vmem:[%s309 + $0x8] sm:$0xff] %v312
                  %v314 = vld [vmem:[%s308 + $0x20] sm:$0xff]
                  %315 = vst [vmem:[%s309 + $0x10] sm:$0xff] %v314
                  %v316 = vld [vmem:[%s308 + $0x30] sm:$0xff]
                  %317 = vst [vmem:[%s309 + $0x18] sm:$0xff] %v316
                  %v318 = vld [vmem:[%s308 + $0x40] sm:$0xff]
                  %319 = vst [vmem:[%s309 + $0x20] sm:$0xff] %v318
                  %v320 = vld [vmem:[%s308 + $0x50] sm:$0xff]
                  %321 = vst [vmem:[%s309 + $0x28] sm:$0xff] %v320
                  %v322 = vld [vmem:[%s308 + $0x60] sm:$0xff]
                  %323 = vst [vmem:[%s309 + $0x30] sm:$0xff] %v322
                  %v324 = vld [vmem:[%s308 + $0x70] sm:$0xff]
                  %325 = vst [vmem:[%s309 + $0x38] sm:$0xff] %v324
                  %v326 = vld [vmem:[%s308 + $0x80] sm:$0xff]
                  %327 = vst [vmem:[%s309 + $0x40] sm:$0xff] %v326
                  %v328 = vld [vmem:[%s308 + $0x90] sm:$0xff]
                  %329 = vst [vmem:[%s309 + $0x48] sm:$0xff] %v328
                  %v330 = vld [vmem:[%s308 + $0xa0] sm:$0xff]
                  %331 = vst [vmem:[%s309 + $0x50] sm:$0xff] %v330
                  %v332 = vld [vmem:[%s308 + $0xb0] sm:$0xff]
                  %333 = vst [vmem:[%s309 + $0x58] sm:$0xff] %v332
                  %v334 = vld [vmem:[%s308 + $0xc0] sm:$0xff]
                  %335 = vst [vmem:[%s309 + $0x60] sm:$0xff] %v334
                  %v336 = vld [vmem:[%s308 + $0xd0] sm:$0xff]
                  %337 = vst [vmem:[%s309 + $0x68] sm:$0xff] %v336
                  %v338 = vld [vmem:[%s308 + $0xe0] sm:$0xff]
                  %339 = vst [vmem:[%s309 + $0x70] sm:$0xff] %v338
                  %v340 = vld [vmem:[%s308 + $0xf0] sm:$0xff]
                  %341 = vst [vmem:[%s309 + $0x78] sm:$0xff] %v340
                  %v342 = vld [vmem:[%s308 + $0x100] sm:$0xff]
                  %343 = vst [vmem:[%s309 + $0x80] sm:$0xff] %v342
                  %v344 = vld [vmem:[%s308 + $0x110] sm:$0xff]
                  %345 = vst [vmem:[%s309 + $0x88] sm:$0xff] %v344
                  %v346 = vld [vmem:[%s308 + $0x120] sm:$0xff]
                  %347 = vst [vmem:[%s309 + $0x90] sm:$0xff] %v346
                  %v348 = vld [vmem:[%s308 + $0x130] sm:$0xff]
                  %349 = vst [vmem:[%s309 + $0x98] sm:$0xff] %v348
                  %v350 = vld [vmem:[%s308 + $0x140] sm:$0xff]
                  %351 = vst [vmem:[%s309 + $0xa0] sm:$0xff] %v350
                  %v352 = vld [vmem:[%s308 + $0x150] sm:$0xff]
                  %353 = vst [vmem:[%s309 + $0xa8] sm:$0xff] %v352
                  %v354 = vld [vmem:[%s308 + $0x160] sm:$0xff]
                  %355 = vst [vmem:[%s309 + $0xb0] sm:$0xff] %v354
                  %v356 = vld [vmem:[%s308 + $0x170] sm:$0xff]
                  %357 = vst [vmem:[%s309 + $0xb8] sm:$0xff] %v356
                  %v358 = vld [vmem:[%s308 + $0x180] sm:$0xff]
                  %359 = vst [vmem:[%s309 + $0xc0] sm:$0xff] %v358
                  %v360 = vld [vmem:[%s308 + $0x190] sm:$0xff]
                  %361 = vst [vmem:[%s309 + $0xc8] sm:$0xff] %v360
                  %v362 = vld [vmem:[%s308 + $0x1a0] sm:$0xff]
                  %363 = vst [vmem:[%s309 + $0xd0] sm:$0xff] %v362
                  %v364 = vld [vmem:[%s308 + $0x1b0] sm:$0xff]
                  %365 = vst [vmem:[%s309 + $0xd8] sm:$0xff] %v364
                  %v366 = vld [vmem:[%s308 + $0x1c0] sm:$0xff]
                  %367 = vst [vmem:[%s309 + $0xe0] sm:$0xff] %v366
                  %v368 = vld [vmem:[%s308 + $0x1d0] sm:$0xff]
                  %369 = vst [vmem:[%s309 + $0xe8] sm:$0xff] %v368
                  %v370 = vld [vmem:[%s308 + $0x1e0] sm:$0xff]
                  %371 = vst [vmem:[%s309 + $0xf0] sm:$0xff] %v370
                  %v372 = vld [vmem:[%s308 + $0x1f0] sm:$0xff]
                  %373 = vst [vmem:[%s309 + $0xf8] sm:$0xff] %v372
                $region86: #{generator_forward.33} parent=80 // loop_footer
                  %s307 = sadd.s32 1, %s303
                $region87: #{generator_forward.33} parent=80 // loop_footer_branch
                  %302 = sbr.rel target = $region83
                $region88: #{generator_forward.33} parent=80 // loop_exit
                  _
              $region81: #{generator_forward.33} parent=65 // pred_fallthru
                _
              // Predicated region
              $region89: #{generator_forward.33} parent=65 // pred_check
                _
              $region90: #{generator_forward.33} parent=65 // pred_check_branch
                %375 = sbr.rel target = $region92
              $region91: #{generator_forward.33} parent=65 // pred_region
                _
              $region92: #{generator_forward.33} parent=65 // pred_fallthru
                _
            $region66: #{generator_forward.33} parent=61 // pred_fallthru
              _
            // Predicated region
            $region67: #{generator_forward.33} parent=61 // pred_check
              _
            $region68: #{generator_forward.33} parent=61 // pred_check_branch
              %225 = sbr.rel target = $region70
            $region69: #{generator_forward.33} parent=61 // pred_region
              %s227 = ssub.s32 256, 1
              loop: start=0, step=1, limit=1
              $region71: #{generator_forward.33} parent=69 // loop_pre_header
                _
              $region72: #{generator_forward.33} parent=69 // loop_header
                %s229 = sphi 0, %s233
                %p230 = scmp.ge.s32.totalorder %s229, 1
                %s234 = sphi %s219, %s219
                %s235 = sphi %s213, %s213
              $region73: #{generator_forward.33} parent=69 // loop_header_branch
                %232 = sbr.rel (%p230) target = $region77
              $region74: #{generator_forward.33} parent=69 // loop_body
                %v236 = vld [vmem:[%s234] sm:%s227]
                %237 = vst [vmem:[%s235] sm:%s227] %v236
                %v238 = vld [vmem:[%s234 + $0x10] sm:%s227]
                %239 = vst [vmem:[%s235 + $0x8] sm:%s227] %v238
                %v240 = vld [vmem:[%s234 + $0x20] sm:%s227]
                %241 = vst [vmem:[%s235 + $0x10] sm:%s227] %v240
                %v242 = vld [vmem:[%s234 + $0x30] sm:%s227]
                %243 = vst [vmem:[%s235 + $0x18] sm:%s227] %v242
                %v244 = vld [vmem:[%s234 + $0x40] sm:%s227]
                %245 = vst [vmem:[%s235 + $0x20] sm:%s227] %v244
                %v246 = vld [vmem:[%s234 + $0x50] sm:%s227]
                %247 = vst [vmem:[%s235 + $0x28] sm:%s227] %v246
                %v248 = vld [vmem:[%s234 + $0x60] sm:%s227]
                %249 = vst [vmem:[%s235 + $0x30] sm:%s227] %v248
                %v250 = vld [vmem:[%s234 + $0x70] sm:%s227]
                %251 = vst [vmem:[%s235 + $0x38] sm:%s227] %v250
                %v252 = vld [vmem:[%s234 + $0x80] sm:%s227]
                %253 = vst [vmem:[%s235 + $0x40] sm:%s227] %v252
                %v254 = vld [vmem:[%s234 + $0x90] sm:%s227]
                %255 = vst [vmem:[%s235 + $0x48] sm:%s227] %v254
                %v256 = vld [vmem:[%s234 + $0xa0] sm:%s227]
                %257 = vst [vmem:[%s235 + $0x50] sm:%s227] %v256
                %v258 = vld [vmem:[%s234 + $0xb0] sm:%s227]
                %259 = vst [vmem:[%s235 + $0x58] sm:%s227] %v258
                %v260 = vld [vmem:[%s234 + $0xc0] sm:%s227]
                %261 = vst [vmem:[%s235 + $0x60] sm:%s227] %v260
                %v262 = vld [vmem:[%s234 + $0xd0] sm:%s227]
                %263 = vst [vmem:[%s235 + $0x68] sm:%s227] %v262
                %v264 = vld [vmem:[%s234 + $0xe0] sm:%s227]
                %265 = vst [vmem:[%s235 + $0x70] sm:%s227] %v264
                %v266 = vld [vmem:[%s234 + $0xf0] sm:%s227]
                %267 = vst [vmem:[%s235 + $0x78] sm:%s227] %v266
                %v268 = vld [vmem:[%s234 + $0x100] sm:%s227]
                %269 = vst [vmem:[%s235 + $0x80] sm:%s227] %v268
                %v270 = vld [vmem:[%s234 + $0x110] sm:%s227]
                %271 = vst [vmem:[%s235 + $0x88] sm:%s227] %v270
                %v272 = vld [vmem:[%s234 + $0x120] sm:%s227]
                %273 = vst [vmem:[%s235 + $0x90] sm:%s227] %v272
                %v274 = vld [vmem:[%s234 + $0x130] sm:%s227]
                %275 = vst [vmem:[%s235 + $0x98] sm:%s227] %v274
                %v276 = vld [vmem:[%s234 + $0x140] sm:%s227]
                %277 = vst [vmem:[%s235 + $0xa0] sm:%s227] %v276
                %v278 = vld [vmem:[%s234 + $0x150] sm:%s227]
                %279 = vst [vmem:[%s235 + $0xa8] sm:%s227] %v278
                %v280 = vld [vmem:[%s234 + $0x160] sm:%s227]
                %281 = vst [vmem:[%s235 + $0xb0] sm:%s227] %v280
                %v282 = vld [vmem:[%s234 + $0x170] sm:%s227]
                %283 = vst [vmem:[%s235 + $0xb8] sm:%s227] %v282
                %v284 = vld [vmem:[%s234 + $0x180] sm:%s227]
                %285 = vst [vmem:[%s235 + $0xc0] sm:%s227] %v284
                %v286 = vld [vmem:[%s234 + $0x190] sm:%s227]
                %287 = vst [vmem:[%s235 + $0xc8] sm:%s227] %v286
                %v288 = vld [vmem:[%s234 + $0x1a0] sm:%s227]
                %289 = vst [vmem:[%s235 + $0xd0] sm:%s227] %v288
                %v290 = vld [vmem:[%s234 + $0x1b0] sm:%s227]
                %291 = vst [vmem:[%s235 + $0xd8] sm:%s227] %v290
                %v292 = vld [vmem:[%s234 + $0x1c0] sm:%s227]
                %293 = vst [vmem:[%s235 + $0xe0] sm:%s227] %v292
                %v294 = vld [vmem:[%s234 + $0x1d0] sm:%s227]
                %295 = vst [vmem:[%s235 + $0xe8] sm:%s227] %v294
                %v296 = vld [vmem:[%s234 + $0x1e0] sm:%s227]
                %297 = vst [vmem:[%s235 + $0xf0] sm:%s227] %v296
                %v298 = vld [vmem:[%s234 + $0x1f0] sm:%s227]
                %299 = vst [vmem:[%s235 + $0xf8] sm:%s227] %v298
              $region75: #{generator_forward.33} parent=69 // loop_footer
                %s233 = sadd.s32 1, %s229
              $region76: #{generator_forward.33} parent=69 // loop_footer_branch
                %228 = sbr.rel target = $region72
              $region77: #{generator_forward.33} parent=69 // loop_exit
                _
            $region70: #{generator_forward.33} parent=61 // pred_fallthru
              _
          $region62: #{generator_forward.33} parent=57 // pred_fallthru
            _
          %376 = vnop
        $region58: #{generator_forward.33} parent=15 // pred_fallthru
          _
        // Predicated region
        $region93: #{generator_forward.33} parent=15 // pred_check
          %p377 = pneg %p104
        $region94: #{generator_forward.33} parent=15 // pred_check_branch
          %379 = sbr.rel (%p377) target = $region96
        $region95: #{generator_forward.33} parent=15 // pred_region
          %s380 = smul.u32 2, %s17
          %p381 = scmp.lt.s32.totalorder %s380, 3
          %s382 = scalar_select %p381, %s380, 3
          %s383 = smul.addr %s382, 2
          %s384 = scalar_lea.vmem %s2, %s383
          %s385 = smul.u32 2, %s17
        $region96: #{generator_forward.33} parent=15 // pred_fallthru
          _
      $region16: #{generator_forward.33} parent=5 // pred_fallthru
        _
      %p386 = scmp.le.s32.totalorder 1, %s9
      %p387 = scmp.lt.s32.totalorder %s9, 33
      %p388 = pnand %p386, %p387
      %p389 = pneg %p388
      // Predicated region
      $region97: #{generator_forward.33} parent=5 // pred_check
        _
      $region98: #{generator_forward.33} parent=5 // pred_check_branch
        %391 = sbr.rel (%p388) target = $region100
      $region99: #{generator_forward.33} parent=5 // pred_region
        %s392 = ssub.s32 %s9, 1
        %s393 = sand.u32 %s43, 1
        %s394 = sand.u32 %s43, 1
        %s395 = smul.addr %s394, 16
        %s396 = scalar_lea.vmem [#allocation2], %s395
        // Predicated region
        $region101: #{generator_forward.33} parent=99 // pred_check
          %p397 = pneg %p56
        $region102: #{generator_forward.33} parent=99 // pred_check_branch
          %399 = sbr.rel (%p397) target = $region104
        $region103: #{generator_forward.33} parent=99 // pred_region
          _
        $region104: #{generator_forward.33} parent=99 // pred_fallthru
          _
        %s400 = sand.u32 %s71, 1
        %s401 = sand.u32 %s71, 1
        %s402 = smul.addr %s401, 256
        %s403 = scalar_lea.vmem [#allocation3], %s402
        // Predicated region
        $region105: #{generator_forward.33} parent=99 // pred_check
          %p404 = pneg %p84
        $region106: #{generator_forward.33} parent=99 // pred_check_branch
          %406 = sbr.rel (%p404) target = $region108
        $region107: #{generator_forward.33} parent=99 // pred_region
          _
        $region108: #{generator_forward.33} parent=99 // pred_fallthru
          _
        %s407 = sand.u32 %s43, 1
        %s408 = sand.u32 %s43, 1
        %s409 = smul.addr %s408, 16
        %s410 = scalar_lea.vmem [#allocation2], %s409
        %p411 = pneg %p56
        %p412 = pneg %p53
        %s413 = sand.u32 %s71, 1
        %s414 = sand.u32 %s71, 1
        %s415 = smul.addr %s414, 256
        %s416 = scalar_lea.vmem [#allocation3], %s415
        %p417 = pneg %p84
        %p418 = pneg %p81
        %s419 = smul.u32 2, %s20
        %p420 = scmp.lt.s32.totalorder %s419, 3
        %s421 = scalar_select %p420, %s419, 3
        %s422 = smul.addr %s421, 2
        %s423 = scalar_lea.vmem %s2, %s422
        %p424 = pneg %p110
        %p425 = pneg %p107
        %p426 = pneg %p138
        %p427 = pneg %p135
        %s428 = sand.u32 %s125, 1
        %s429 = sand.u32 %s125, 1
        %s430 = smul.addr %s429, 32
        %s431 = scalar_lea.vmem [#allocation4], %s430
        %s432 = smul.u32 2, %s19
        %s433 = smul.u32 2, %s21
        %s434 = smul.u32 32, %s21
        %s435 = smul.u32 2, %s20
        %s436 = smul.u32 2, %s20
        %p437 = scmp.lt.s32.totalorder %s436, 3
        %s438 = scalar_select %p437, %s436, 3
        %s439 = smul.addr %s438, 2
        %s440 = scalar_lea.vmem %s2, %s439
        %s441 = smul.u32 2, %s20
        %s442 = smul.u32 2, %s19
        %s443 = smul.u32 2, %s20
        %p444 = scmp.eq.s32.totalorder %s21, 0
        // Predicated region
        $region109: #{generator_forward.33} parent=99 // pred_check
          %p445 = pneg %p444
        $region110: #{generator_forward.33} parent=99 // pred_check_branch
          %447 = sbr.rel (%p445) target = $region112
        $region111: #{generator_forward.33} parent=99 // pred_region
          %448 = vst [vmem:[%s431] sm:$0xff] 0.0
          %449 = vst [vmem:[%s431 + $0x8] sm:$0xff] 0.0
          %450 = vst [vmem:[%s431 + $0x10] sm:$0xff] 0.0
          %451 = vst [vmem:[%s431 + $0x18] sm:$0xff] 0.0
        $region112: #{generator_forward.33} parent=99 // pred_fallthru
          _
        %v452 = vld [vmem:[%s431] sm:$0xff]
        %v453 = vld [vmem:[%s431 + $0x8] sm:$0xff]
        %v454 = vld [vmem:[%s431 + $0x10] sm:$0xff]
        %v455 = vld [vmem:[%s431 + $0x18] sm:$0xff]
        %v456 = vld [vmem:[%s396] sm:$0xff]
        %v457 = vld [vmem:[%s396 + $0x8] sm:$0xff]
        %v458 = vld [vmem:[%s403] sm:$0xff]
        %v459 = vld [vmem:[%s403 + $0x8] sm:$0xff]
        %v460 = vld [vmem:[%s403 + $0x10] sm:$0xff]
        %v461 = vld [vmem:[%s403 + $0x18] sm:$0xff]
        %v462 = vld [vmem:[%s403 + $0x20] sm:$0xff]
        %v463 = vld [vmem:[%s403 + $0x28] sm:$0xff]
        %v464 = vld [vmem:[%s403 + $0x30] sm:$0xff]
        %v465 = vld [vmem:[%s403 + $0x38] sm:$0xff]
        %v466 = vld [vmem:[%s403 + $0x40] sm:$0xff]
        %v467 = vld [vmem:[%s403 + $0x48] sm:$0xff]
        %v468 = vld [vmem:[%s403 + $0x50] sm:$0xff]
        %v469 = vld [vmem:[%s403 + $0x58] sm:$0xff]
        %v470 = vld [vmem:[%s403 + $0x60] sm:$0xff]
        %v471 = vld [vmem:[%s403 + $0x68] sm:$0xff]
        %v472 = vld [vmem:[%s403 + $0x70] sm:$0xff]
        %v473 = vld [vmem:[%s403 + $0x78] sm:$0xff]
        %v474 = vld [vmem:[%s403 + $0x80] sm:$0xff]
        %v475 = vld [vmem:[%s403 + $0x88] sm:$0xff]
        %v476 = vld [vmem:[%s403 + $0x90] sm:$0xff]
        %v477 = vld [vmem:[%s403 + $0x98] sm:$0xff]
        %v478 = vld [vmem:[%s403 + $0xa0] sm:$0xff]
        %v479 = vld [vmem:[%s403 + $0xa8] sm:$0xff]
        %v480 = vld [vmem:[%s403 + $0xb0] sm:$0xff]
        %v481 = vld [vmem:[%s403 + $0xb8] sm:$0xff]
        %v482 = vld [vmem:[%s403 + $0xc0] sm:$0xff]
        %v483 = vld [vmem:[%s403 + $0xc8] sm:$0xff]
        %v484 = vld [vmem:[%s403 + $0xd0] sm:$0xff]
        %v485 = vld [vmem:[%s403 + $0xd8] sm:$0xff]
        %v486 = vld [vmem:[%s403 + $0xe0] sm:$0xff]
        %v487 = vld [vmem:[%s403 + $0xe8] sm:$0xff]
        %v488 = vld [vmem:[%s403 + $0xf0] sm:$0xff]
        %v489 = vld [vmem:[%s403 + $0xf8] sm:$0xff]
        %v492 = vunpack.c.l.b16 %v456
        %v493 = vunpack.c.h.b16 %v456
        %v494 = vunpack.c.l.b16 %v457
        %v495 = vunpack.c.h.b16 %v457
        %v496 = vpack.c.b16 %v494, %v492
        %v497 = vpack.c.b16 %v495, %v493
        %v532 = vunpack.c.l.b16 %v458
        %v533 = vunpack.c.h.b16 %v458
        %v534 = vunpack.c.l.b16 %v459
        %v535 = vunpack.c.h.b16 %v459
        %v536 = vunpack.c.l.b16 %v460
        %v537 = vunpack.c.h.b16 %v460
        %v538 = vunpack.c.l.b16 %v461
        %v539 = vunpack.c.h.b16 %v461
        %v540 = vunpack.c.l.b16 %v462
        %v541 = vunpack.c.h.b16 %v462
        %v542 = vunpack.c.l.b16 %v463
        %v543 = vunpack.c.h.b16 %v463
        %v544 = vunpack.c.l.b16 %v464
        %v545 = vunpack.c.h.b16 %v464
        %v546 = vunpack.c.l.b16 %v465
        %v547 = vunpack.c.h.b16 %v465
        %v548 = vunpack.c.l.b16 %v466
        %v549 = vunpack.c.h.b16 %v466
        %v550 = vunpack.c.l.b16 %v467
        %v551 = vunpack.c.h.b16 %v467
        %v552 = vunpack.c.l.b16 %v468
        %v553 = vunpack.c.h.b16 %v468
        %v554 = vunpack.c.l.b16 %v469
        %v555 = vunpack.c.h.b16 %v469
        %v556 = vunpack.c.l.b16 %v470
        %v557 = vunpack.c.h.b16 %v470
        %v558 = vunpack.c.l.b16 %v471
        %v559 = vunpack.c.h.b16 %v471
        %v560 = vunpack.c.l.b16 %v472
        %v561 = vunpack.c.h.b16 %v472
        %v562 = vunpack.c.l.b16 %v473
        %v563 = vunpack.c.h.b16 %v473
        %v564 = vunpack.c.l.b16 %v474
        %v565 = vunpack.c.h.b16 %v474
        %v566 = vunpack.c.l.b16 %v475
        %v567 = vunpack.c.h.b16 %v475
        %v568 = vunpack.c.l.b16 %v476
        %v569 = vunpack.c.h.b16 %v476
        %v570 = vunpack.c.l.b16 %v477
        %v571 = vunpack.c.h.b16 %v477
        %v572 = vunpack.c.l.b16 %v478
        %v573 = vunpack.c.h.b16 %v478
        %v574 = vunpack.c.l.b16 %v479
        %v575 = vunpack.c.h.b16 %v479
        %v576 = vunpack.c.l.b16 %v480
        %v577 = vunpack.c.h.b16 %v480
        %v578 = vunpack.c.l.b16 %v481
        %v579 = vunpack.c.h.b16 %v481
        %v580 = vunpack.c.l.b16 %v482
        %v581 = vunpack.c.h.b16 %v482
        %v582 = vunpack.c.l.b16 %v483
        %v583 = vunpack.c.h.b16 %v483
        %v584 = vunpack.c.l.b16 %v484
        %v585 = vunpack.c.h.b16 %v484
        %v586 = vunpack.c.l.b16 %v485
        %v587 = vunpack.c.h.b16 %v485
        %v588 = vunpack.c.l.b16 %v486
        %v589 = vunpack.c.h.b16 %v486
        %v590 = vunpack.c.l.b16 %v487
        %v591 = vunpack.c.h.b16 %v487
        %v592 = vunpack.c.l.b16 %v488
        %v593 = vunpack.c.h.b16 %v488
        %v594 = vunpack.c.l.b16 %v489
        %v595 = vunpack.c.h.b16 %v489
        %v596 = vpack.c.b16 %v534, %v532
        %v597 = vpack.c.b16 %v535, %v533
        %v598 = vpack.c.b16 %v538, %v536
        %v599 = vpack.c.b16 %v539, %v537
        %v600 = vpack.c.b16 %v542, %v540
        %v601 = vpack.c.b16 %v543, %v541
        %v602 = vpack.c.b16 %v546, %v544
        %v603 = vpack.c.b16 %v547, %v545
        %v604 = vpack.c.b16 %v550, %v548
        %v605 = vpack.c.b16 %v551, %v549
        %v606 = vpack.c.b16 %v554, %v552
        %v607 = vpack.c.b16 %v555, %v553
        %v608 = vpack.c.b16 %v558, %v556
        %v609 = vpack.c.b16 %v559, %v557
        %v610 = vpack.c.b16 %v562, %v560
        %v611 = vpack.c.b16 %v563, %v561
        %v612 = vpack.c.b16 %v566, %v564
        %v613 = vpack.c.b16 %v567, %v565
        %v614 = vpack.c.b16 %v570, %v568
        %v615 = vpack.c.b16 %v571, %v569
        %v616 = vpack.c.b16 %v574, %v572
        %v617 = vpack.c.b16 %v575, %v573
        %v618 = vpack.c.b16 %v578, %v576
        %v619 = vpack.c.b16 %v579, %v577
        %v620 = vpack.c.b16 %v582, %v580
        %v621 = vpack.c.b16 %v583, %v581
        %v622 = vpack.c.b16 %v586, %v584
        %v623 = vpack.c.b16 %v587, %v585
        %v624 = vpack.c.b16 %v590, %v588
        %v625 = vpack.c.b16 %v591, %v589
        %v626 = vpack.c.b16 %v594, %v592
        %v627 = vpack.c.b16 %v595, %v593
        %660 = vmatpush.bf16.msra.mxu0 %v610
        %661 = vmatpush.bf16.msra.mxu0 %v608
        %662 = vmatpush.bf16.msra.mxu0 %v606
        %663 = vmatpush.bf16.msra.mxu0 %v604
        %664 = vmatpush.bf16.msra.mxu0 %v602
        %665 = vmatpush.bf16.msra.mxu0 %v600
        %666 = vmatpush.bf16.msra.mxu0 %v598
        %667 = vmatpush.bf16.msra.mxu0 %v596
        %668 = vmatmul.bf16.gmra.mxu0 %v496
        %v669 = vpop.f32.mrf.mxu0
        %v670 = vadd.f32 0.0, %v669
        %v671 = vpop.f32.mrf.mxu0
        %v672 = vadd.f32 0.0, %v671
        %673 = vdwg.mxu0
        %674 = vmatpush.bf16.msra.mxu0 %v626
        %675 = vmatpush.bf16.msra.mxu0 %v624
        %676 = vmatpush.bf16.msra.mxu0 %v622
        %677 = vmatpush.bf16.msra.mxu0 %v620
        %678 = vmatpush.bf16.msra.mxu0 %v618
        %679 = vmatpush.bf16.msra.mxu0 %v616
        %680 = vmatpush.bf16.msra.mxu0 %v614
        %681 = vmatpush.bf16.msra.mxu0 %v612
        %682 = vmatmul.bf16.gmra.mxu0 %v497
        %v683 = vpop.f32.mrf.mxu0
        %v684 = vadd.f32 %v670, %v683
        %v685 = vpop.f32.mrf.mxu0
        %v686 = vadd.f32 %v672, %v685
        %687 = vdwg.mxu0
        %688 = vmatpush.bf16.msra.mxu0 %v611
        %689 = vmatpush.bf16.msra.mxu0 %v609
        %690 = vmatpush.bf16.msra.mxu0 %v607
        %691 = vmatpush.bf16.msra.mxu0 %v605
        %692 = vmatpush.bf16.msra.mxu0 %v603
        %693 = vmatpush.bf16.msra.mxu0 %v601
        %694 = vmatpush.bf16.msra.mxu0 %v599
        %695 = vmatpush.bf16.msra.mxu0 %v597
        %696 = vmatmul.bf16.gmra.mxu0 %v496
        %v697 = vpop.f32.mrf.mxu0
        %v698 = vadd.f32 0.0, %v697
        %v699 = vpop.f32.mrf.mxu0
        %v700 = vadd.f32 0.0, %v699
        %701 = vdwg.mxu0
        %702 = vmatpush.bf16.msra.mxu0 %v627
        %703 = vmatpush.bf16.msra.mxu0 %v625
        %704 = vmatpush.bf16.msra.mxu0 %v623
        %705 = vmatpush.bf16.msra.mxu0 %v621
        %706 = vmatpush.bf16.msra.mxu0 %v619
        %707 = vmatpush.bf16.msra.mxu0 %v617
        %708 = vmatpush.bf16.msra.mxu0 %v615
        %709 = vmatpush.bf16.msra.mxu0 %v613
        %710 = vmatmul.bf16.gmra.mxu0 %v497
        %v711 = vpop.f32.mrf.mxu0
        %v712 = vadd.f32 %v698, %v711
        %v713 = vpop.f32.mrf.mxu0
        %v714 = vadd.f32 %v700, %v713
        %715 = vdwg.mxu0
        %v716 = vadd.f32 %v452, %v684
        %v717 = vadd.f32 %v453, %v712
        %v718 = vadd.f32 %v454, %v686
        %v719 = vadd.f32 %v455, %v714
        %720 = vst [vmem:[%s431] sm:$0xff] %v716
        %721 = vst [vmem:[%s431 + $0x8] sm:$0xff] %v717
        %722 = vst [vmem:[%s431 + $0x10] sm:$0xff] %v718
        %723 = vst [vmem:[%s431 + $0x18] sm:$0xff] %v719
        %p724 = scmp.eq.s32.totalorder %s21, 15
        // Predicated region
        $region113: #{generator_forward.33} parent=99 // pred_check
          %p725 = pneg %p724
        $region114: #{generator_forward.33} parent=99 // pred_check_branch
          %727 = sbr.rel (%p725) target = $region116
        $region115: #{generator_forward.33} parent=99 // pred_region
          %v728 = vld [vmem:[%s440] sm:$0xf]
          %v729 = vld [vmem:[%s431] sm:$0xff]
          %v730 = vld [vmem:[%s431 + $0x8] sm:$0xff]
          %v731 = vld [vmem:[%s431 + $0x10] sm:$0xff]
          %v732 = vld [vmem:[%s431 + $0x18] sm:$0xff]
          %v734 = vperm.slane %v728, 0
          %v735 = vperm.slane %v728, 2
          %v738 = vperm.slane %v734, 0
          %v739 = vperm.slane %v735, 0
          %v740 = vmul.f32 %v729, %v738
          %v741 = vmul.f32 %v730, %v739
          %v742 = vmul.f32 %v731, %v738
          %v743 = vmul.f32 %v732, %v739
          %v744 = vperm.slane %v728, 1
          %v745 = vperm.slane %v728, 3
          %v748 = vperm.slane %v744, 1
          %v749 = vperm.slane %v745, 1
          %v750 = vadd.f32 %v740, %v748
          %v751 = vadd.f32 %v741, %v749
          %v752 = vadd.f32 %v742, %v748
          %v753 = vadd.f32 %v743, %v749
          %v754 = vmax.f32 %v750, 0.0
          %v755 = vmax.f32 %v751, 0.0
          %v756 = vmax.f32 %v752, 0.0
          %v757 = vmax.f32 %v753, 0.0
          %758 = vst [vmem:[%s431] sm:$0xff] %v754
          %759 = vst [vmem:[%s431 + $0x8] sm:$0xff] %v755
          %760 = vst [vmem:[%s431 + $0x10] sm:$0xff] %v756
          %761 = vst [vmem:[%s431 + $0x18] sm:$0xff] %v757
        $region116: #{generator_forward.33} parent=99 // pred_fallthru
          _
        %s762 = sand.u32 %s125, 1
        %s763 = sand.u32 %s125, 1
        %s764 = smul.addr %s763, 32
        %s765 = scalar_lea.vmem [#allocation4], %s764
        // Predicated region
        $region117: #{generator_forward.33} parent=99 // pred_check
          %p766 = pneg %p135
        $region118: #{generator_forward.33} parent=99 // pred_check_branch
          %768 = sbr.rel (%p766) target = $region120
        $region119: #{generator_forward.33} parent=99 // pred_region
          %s769 = smul.u32 2, %s19
          %s770 = smul.u32 2, %s20
          %s771 = smul.addr %s769, 4
          %s772 = sadd.s32 %s770, %s771
          %s773 = smul.addr %s772, 8
          %s774 = scalar_lea.vmem %s3, %s773
          // Predicated region
          $region121: #{generator_forward.33} parent=119 // pred_check
            _
          $region122: #{generator_forward.33} parent=119 // pred_check_branch
            %776 = sbr.rel (0) target = $region124
          $region123: #{generator_forward.33} parent=119 // pred_region
            // Predicated region
            $region125: #{generator_forward.33} parent=123 // pred_check
              _
            $region126: #{generator_forward.33} parent=123 // pred_check_branch
              %778 = sbr.rel (0) target = $region128
            $region127: #{generator_forward.33} parent=123 // pred_region
              loop: start=0, step=1, limit=1
              $region129: #{generator_forward.33} parent=127 // loop_pre_header
                _
              $region130: #{generator_forward.33} parent=127 // loop_header
                %s780 = sphi 0, %s784
                %p781 = scmp.ge.s32.totalorder %s780, 1
                %s785 = sphi %s765, %s765
                %s786 = sphi %s774, %s774
              $region131: #{generator_forward.33} parent=127 // loop_header_branch
                %783 = sbr.rel (%p781) target = $region135
              $region132: #{generator_forward.33} parent=127 // loop_body
                %v787 = vld [vmem:[%s785] sm:$0xff]
                %788 = vst [vmem:[%s786] sm:$0xff] %v787
                %v789 = vld [vmem:[%s785 + $0x8] sm:$0xff]
                %790 = vst [vmem:[%s786 + $0x8] sm:$0xff] %v789
                %v791 = vld [vmem:[%s785 + $0x10] sm:$0xff]
                %792 = vst [vmem:[%s786 + $0x20] sm:$0xff] %v791
                %v793 = vld [vmem:[%s785 + $0x18] sm:$0xff]
                %794 = vst [vmem:[%s786 + $0x28] sm:$0xff] %v793
              $region133: #{generator_forward.33} parent=127 // loop_footer
                %s784 = sadd.s32 1, %s780
              $region134: #{generator_forward.33} parent=127 // loop_footer_branch
                %779 = sbr.rel target = $region130
              $region135: #{generator_forward.33} parent=127 // loop_exit
                _
            $region128: #{generator_forward.33} parent=123 // pred_fallthru
              _
            // Predicated region
            $region136: #{generator_forward.33} parent=123 // pred_check
              _
            $region137: #{generator_forward.33} parent=123 // pred_check_branch
              %796 = sbr.rel target = $region139
            $region138: #{generator_forward.33} parent=123 // pred_region
              _
            $region139: #{generator_forward.33} parent=123 // pred_fallthru
              _
          $region124: #{generator_forward.33} parent=119 // pred_fallthru
            _
          %797 = vnop
        $region120: #{generator_forward.33} parent=99 // pred_fallthru
          _
      $region100: #{generator_forward.33} parent=5 // pred_fallthru
        _
      %p798 = scmp.le.s32.totalorder 2, %s9
      // Predicated region
      $region140: #{generator_forward.33} parent=5 // pred_check
        %p799 = pneg %p798
      $region141: #{generator_forward.33} parent=5 // pred_check_branch
        %801 = sbr.rel (%p799) target = $region143
      $region142: #{generator_forward.33} parent=5 // pred_region
        %s802 = ssub.s32 %s9, 2
        // Predicated region
        $region144: #{generator_forward.33} parent=142 // pred_check
          %p803 = pneg %p141
        $region145: #{generator_forward.33} parent=142 // pred_check_branch
          %805 = sbr.rel (%p803) target = $region147
        $region146: #{generator_forward.33} parent=142 // pred_region
          %s806 = sand.u32 %s126, 1
          %s807 = sand.u32 %s126, 1
          %s808 = smul.addr %s807, 32
          %s809 = scalar_lea.vmem [#allocation4], %s808
        $region147: #{generator_forward.33} parent=142 // pred_fallthru
          _
      $region143: #{generator_forward.33} parent=5 // pred_fallthru
        _
    $region6: #{generator_forward.33} parent=1 // loop_footer
      %s13 = sadd.s32 1, %s9
    $region7: #{generator_forward.33} parent=1 // loop_footer_branch
      %8 = sbr.rel target = $region3
    $region8: #{generator_forward.33} parent=1 // loop_exit
      _

// kernel: generator_forward.37
$region0: #{generator_forward.37}
  #allocation0 [shape = 'u32[]', space=smem, size = 0x4, offset = 0x4, fixed_abs, tag = 'smem constant byte address 0x4 - core index']
  #allocation1 [shape = 'u32[72,128]{1,0:T(1,128)}', space=vmem, size = 0x9000, scoped, tag = 'internal scratch']
  %s0 = inlined_call_operand.vmem [shape: bf16[16,2048], index: 0, kind: input, shape index: {}]
  %s1 = inlined_call_operand.vmem [shape: bf16[2048,256], index: 1, kind: input, shape index: {}]
  %s2 = inlined_call_operand.vmem [shape: f32[2,256], index: 2, kind: input, shape index: {}]
  %s3 = inlined_call_operand.vmem [shape: f32[16,256], index: 3, kind: output, shape index: {}]
  %s4 = sld [smem:[#allocation0]]
  $region91: #{generator_forward.37} parent=0
    _
  %s6 = ssub.s32 1, %s4
  %s7 = scalar_select 0, %s6, %s4
  $region1: #{generator_forward.37} parent=0
    #allocation2 [shape = 'u8[16384]{0}', space=vmem, size = 0x4000, scoped, tag = 'input window, operand 0']
    loop: start=0, step=1, limit=10
    $region2: #{generator_forward.37} parent=1 // loop_pre_header
      _
    $region3: #{generator_forward.37} parent=1 // loop_header
      %s9 = sphi 0, %s13
      %p10 = scmp.ge.s32.totalorder %s9, 10
      %s16 = sphi 0, %s35
      %s17 = sphi 0, %s31
      %s18 = sphi 0, %s27
      %s19 = sphi 0, %s16
      %s20 = sphi 0, %s17
      %s21 = sphi 0, %s18
      %s22 = sphi 0, %s19
      %s23 = sphi 0, %s20
      %s24 = sphi 0, %s21
      %s40 = sphi 0, %s42
      %s43 = sphi 0, %s40
      %s44 = sphi 0, %s43
      %s60 = sphi 0, %s44
      %s68 = sphi 0, %s70
      %s71 = sphi 0, %s68
      %s72 = sphi 0, %s71
      %s88 = sphi 0, %s72
      %s94 = sphi 0, %s96
      %s97 = sphi 0, %s94
      %s98 = sphi 0, %s97
      %s114 = sphi 0, %s98
      %s122 = sphi 0, %s124
      %s125 = sphi 0, %s122
      %s126 = sphi 0, %s125
      %s142 = sphi 0, %s126
    $region4: #{generator_forward.37} parent=1 // loop_header_branch
      %12 = sbr.rel (%p10) target = $region8
    $region5: #{generator_forward.37} parent=1 // loop_body
      %s14 = ssub.s32 %s9, 1
      %s15 = ssub.s32 %s9, 2
      %s25 = sadd.s32 1, %s18
      %p26 = scmp.ge.s32.totalorder %s25, 8
      %s27 = scalar_select %p26, 0, %s25
      %s28 = sadd.s32 1, %s17
      %s29 = scalar_select %p26, %s28, %s17
      %p30 = scmp.ge.s32.totalorder %s29, 1
      %s31 = scalar_select %p30, 0, %s29
      %s32 = sadd.s32 1, %s16
      %s33 = scalar_select %p30, %s32, %s16
      %p34 = scmp.ge.s32.totalorder %s33, 1
      %s35 = scalar_select %p34, 0, %s33
      %s36 = ssub.s32 %s16, %s35
      %s37 = ssub.s32 %s18, %s27
      %s38 = sor.u32 %s36, %s37
      %p39 = scmp.eq.s32.totalorder %s38, 0
      %s41 = sadd.s32 %s40, 1
      %s42 = scalar_select %p39, %s40, %s41
      %p45 = pneg %p39
      %p46 = scmp.eq.s32.totalorder %s9, 7
      %p47 = por %p45, %p46
      %p48 = scmp.ne.s32.totalorder %s40, %s43
      %p49 = scmp.eq.s32.totalorder %s9, 0
      %p50 = por %p48, %p49
      %p51 = scmp.ne.s32.totalorder %s40, %s43
      %p52 = scmp.eq.s32.totalorder %s14, 7
      %p53 = por %p51, %p52
      %p54 = scmp.ne.s32.totalorder %s43, %s44
      %p55 = scmp.eq.s32.totalorder %s14, 0
      %p56 = por %p54, %p55
      %p57 = scmp.ne.s32.totalorder %s43, %s44
      %p58 = scmp.eq.s32.totalorder %s15, 7
      %p59 = por %p57, %p58
      %p61 = scmp.ne.s32.totalorder %s44, %s60
      %p62 = scmp.eq.s32.totalorder %s15, 0
      %p63 = por %p61, %p62
      %s64 = ssub.s32 %s18, %s27
      %s65 = ssub.s32 %s17, %s31
      %s66 = sor.u32 %s64, %s65
      %p67 = scmp.eq.s32.totalorder %s66, 0
      %s69 = sadd.s32 %s68, 1
      %s70 = scalar_select %p67, %s68, %s69
      %p73 = pneg %p67
      %p74 = scmp.eq.s32.totalorder %s9, 7
      %p75 = por %p73, %p74
      %p76 = scmp.ne.s32.totalorder %s68, %s71
      %p77 = scmp.eq.s32.totalorder %s9, 0
      %p78 = por %p76, %p77
      %p79 = scmp.ne.s32.totalorder %s68, %s71
      %p80 = scmp.eq.s32.totalorder %s14, 7
      %p81 = por %p79, %p80
      %p82 = scmp.ne.s32.totalorder %s71, %s72
      %p83 = scmp.eq.s32.totalorder %s14, 0
      %p84 = por %p82, %p83
      %p85 = scmp.ne.s32.totalorder %s71, %s72
      %p86 = scmp.eq.s32.totalorder %s15, 7
      %p87 = por %p85, %p86
      %p89 = scmp.ne.s32.totalorder %s72, %s88
      %p90 = scmp.eq.s32.totalorder %s15, 0
      %p91 = por %p89, %p90
      %s92 = ssub.s32 %s17, %s31
      %p93 = scmp.eq.s32.totalorder %s92, 0
      %s95 = sadd.s32 %s94, 1
      %s96 = scalar_select %p93, %s94, %s95
      %p99 = pneg %p93
      %p100 = scmp.eq.s32.totalorder %s9, 7
      %p101 = por %p99, %p100
      %p102 = scmp.ne.s32.totalorder %s94, %s97
      %p103 = scmp.eq.s32.totalorder %s9, 0
      %p104 = por %p102, %p103
      %p105 = scmp.ne.s32.totalorder %s94, %s97
      %p106 = scmp.eq.s32.totalorder %s14, 7
      %p107 = por %p105, %p106
      %p108 = scmp.ne.s32.totalorder %s97, %s98
      %p109 = scmp.eq.s32.totalorder %s14, 0
      %p110 = por %p108, %p109
      %p111 = scmp.ne.s32.totalorder %s97, %s98
      %p112 = scmp.eq.s32.totalorder %s15, 7
      %p113 = por %p111, %p112
      %p115 = scmp.ne.s32.totalorder %s98, %s114
      %p116 = scmp.eq.s32.totalorder %s15, 0
      %p117 = por %p115, %p116
      %s118 = ssub.s32 %s16, %s35
      %s119 = ssub.s32 %s17, %s31
      %s120 = sor.u32 %s118, %s119
      %p121 = scmp.eq.s32.totalorder %s120, 0
      %s123 = sadd.s32 %s122, 1
      %s124 = scalar_select %p121, %s122, %s123
      %p127 = pneg %p121
      %p128 = scmp.eq.s32.totalorder %s9, 7
      %p129 = por %p127, %p128
      %p130 = scmp.ne.s32.totalorder %s122, %s125
      %p131 = scmp.eq.s32.totalorder %s9, 0
      %p132 = por %p130, %p131
      %p133 = scmp.ne.s32.totalorder %s122, %s125
      %p134 = scmp.eq.s32.totalorder %s14, 7
      %p135 = por %p133, %p134
      %p136 = scmp.ne.s32.totalorder %s125, %s126
      %p137 = scmp.eq.s32.totalorder %s14, 0
      %p138 = por %p136, %p137
      %p139 = scmp.ne.s32.totalorder %s125, %s126
      %p140 = scmp.eq.s32.totalorder %s15, 7
      %p141 = por %p139, %p140
      %p143 = scmp.ne.s32.totalorder %s126, %s142
      %p144 = scmp.eq.s32.totalorder %s15, 0
      %p145 = por %p143, %p144
      %p146 = scmp.le.s32.totalorder 1, %s9
      %p147 = scmp.lt.s32.totalorder %s9, 9
      %p148 = pnand %p146, %p147
      %p149 = pneg %p148
      // Predicated region
      $region9: #{generator_forward.37} parent=5 // pred_check
        _
      $region10: #{generator_forward.37} parent=5 // pred_check_branch
        %151 = sbr.rel (%p148) target = $region12
      $region11: #{generator_forward.37} parent=5 // pred_region
        %s152 = ssub.s32 %s9, 1
        // Predicated region
        $region13: #{generator_forward.37} parent=11 // pred_check
          %p153 = pneg %p110
        $region14: #{generator_forward.37} parent=11 // pred_check_branch
          %155 = sbr.rel (%p153) target = $region16
        $region15: #{generator_forward.37} parent=11 // pred_region
          %s156 = smul.u32 2, %s20
          %p157 = scmp.lt.s32.totalorder %s156, 1
          %s158 = scalar_select %p157, %s156, 1
          %s159 = smul.addr %s158, 2
          %s160 = scalar_lea.vmem %s2, %s159
          %s161 = smul.u32 2, %s20
        $region16: #{generator_forward.37} parent=11 // pred_fallthru
          _
      $region12: #{generator_forward.37} parent=5 // pred_fallthru
        _
      %p162 = scmp.lt.s32.totalorder %s9, 8
      // Predicated region
      $region17: #{generator_forward.37} parent=5 // pred_check
        %p163 = pneg %p162
      $region18: #{generator_forward.37} parent=5 // pred_check_branch
        %165 = sbr.rel (%p163) target = $region20
      $region19: #{generator_forward.37} parent=5 // pred_region
        // Predicated region
        $region21: #{generator_forward.37} parent=19 // pred_check
          %p166 = pneg %p50
        $region22: #{generator_forward.37} parent=19 // pred_check_branch
          %168 = sbr.rel (%p166) target = $region24
        $region23: #{generator_forward.37} parent=19 // pred_region
          %s169 = sand.u32 %s40, 1
          %s170 = sand.u32 %s40, 1
          %s171 = smul.addr %s170, 16
          %s172 = scalar_lea.vmem [#allocation2], %s171
          %s173 = smul.u32 2, %s16
          %s174 = smul.u32 2, %s18
          %s175 = smul.addr %s173, 16
          %s176 = sadd.s32 %s174, %s175
          %s177 = smul.addr %s176, 4
          %s178 = scalar_lea.vmem %s0, %s177
          // Predicated region
          $region25: #{generator_forward.37} parent=23 // pred_check
            _
          $region26: #{generator_forward.37} parent=23 // pred_check_branch
            %180 = sbr.rel (0) target = $region28
          $region27: #{generator_forward.37} parent=23 // pred_region
            // Predicated region
            $region29: #{generator_forward.37} parent=27 // pred_check
              _
            $region30: #{generator_forward.37} parent=27 // pred_check_branch
              %182 = sbr.rel (0) target = $region32
            $region31: #{generator_forward.37} parent=27 // pred_region
              // Predicated region
              $region44: #{generator_forward.37} parent=31 // pred_check
                _
              $region45: #{generator_forward.37} parent=31 // pred_check_branch
                %200 = sbr.rel (0) target = $region47
              $region46: #{generator_forward.37} parent=31 // pred_region
                loop: start=0, step=1, limit=1
                $region48: #{generator_forward.37} parent=46 // loop_pre_header
                  _
                $region49: #{generator_forward.37} parent=46 // loop_header
                  %s202 = sphi 0, %s206
                  %p203 = scmp.ge.s32.totalorder %s202, 1
                  %s207 = sphi %s178, %s178
                  %s208 = sphi %s172, %s172
                $region50: #{generator_forward.37} parent=46 // loop_header_branch
                  %205 = sbr.rel (%p203) target = $region54
                $region51: #{generator_forward.37} parent=46 // loop_body
                  %v209 = vld [vmem:[%s207] sm:$0xff]
                  %210 = vst [vmem:[%s208] sm:$0xff] %v209
                  %v211 = vld [vmem:[%s207 + $0x40] sm:$0xff]
                  %212 = vst [vmem:[%s208 + $0x8] sm:$0xff] %v211
                $region52: #{generator_forward.37} parent=46 // loop_footer
                  %s206 = sadd.s32 1, %s202
                $region53: #{generator_forward.37} parent=46 // loop_footer_branch
                  %201 = sbr.rel target = $region49
                $region54: #{generator_forward.37} parent=46 // loop_exit
                  _
              $region47: #{generator_forward.37} parent=31 // pred_fallthru
                _
              // Predicated region
              $region55: #{generator_forward.37} parent=31 // pred_check
                _
              $region56: #{generator_forward.37} parent=31 // pred_check_branch
                %214 = sbr.rel target = $region58
              $region57: #{generator_forward.37} parent=31 // pred_region
                _
              $region58: #{generator_forward.37} parent=31 // pred_fallthru
                _
            $region32: #{generator_forward.37} parent=27 // pred_fallthru
              _
            // Predicated region
            $region33: #{generator_forward.37} parent=27 // pred_check
              _
            $region34: #{generator_forward.37} parent=27 // pred_check_branch
              %184 = sbr.rel target = $region36
            $region35: #{generator_forward.37} parent=27 // pred_region
              %s186 = ssub.s32 256, 1
              loop: start=0, step=1, limit=1
              $region37: #{generator_forward.37} parent=35 // loop_pre_header
                _
              $region38: #{generator_forward.37} parent=35 // loop_header
                %s188 = sphi 0, %s192
                %p189 = scmp.ge.s32.totalorder %s188, 1
                %s193 = sphi %s178, %s178
                %s194 = sphi %s172, %s172
              $region39: #{generator_forward.37} parent=35 // loop_header_branch
                %191 = sbr.rel (%p189) target = $region43
              $region40: #{generator_forward.37} parent=35 // loop_body
                %v195 = vld [vmem:[%s193] sm:%s186]
                %196 = vst [vmem:[%s194] sm:%s186] %v195
                %v197 = vld [vmem:[%s193 + $0x40] sm:%s186]
                %198 = vst [vmem:[%s194 + $0x8] sm:%s186] %v197
              $region41: #{generator_forward.37} parent=35 // loop_footer
                %s192 = sadd.s32 1, %s188
              $region42: #{generator_forward.37} parent=35 // loop_footer_branch
                %187 = sbr.rel target = $region38
              $region43: #{generator_forward.37} parent=35 // loop_exit
                _
            $region36: #{generator_forward.37} parent=27 // pred_fallthru
              _
          $region28: #{generator_forward.37} parent=23 // pred_fallthru
            _
          %215 = vnop
        $region24: #{generator_forward.37} parent=19 // pred_fallthru
          _
        // Predicated region
        $region59: #{generator_forward.37} parent=19 // pred_check
          %p216 = pneg %p78
        $region60: #{generator_forward.37} parent=19 // pred_check_branch
          %218 = sbr.rel (%p216) target = $region62
        $region61: #{generator_forward.37} parent=19 // pred_region
          %s219 = smul.u32 32, %s18
          %s220 = smul.u32 2, %s17
          %p221 = scmp.lt.s32.totalorder %s219, 255
          %s222 = scalar_select %p221, %s219, 255
          %p223 = scmp.lt.s32.totalorder %s220, 1
          %s224 = scalar_select %p223, %s220, 1
          %s225 = smul.addr %s222, 2
          %s226 = sadd.s32 %s224, %s225
          %s227 = smul.addr %s226, 4
          %s228 = scalar_lea.vmem %s1, %s227
          %s229 = smul.u32 32, %s18
          %s230 = smul.u32 2, %s17
        $region62: #{generator_forward.37} parent=19 // pred_fallthru
          _
      $region20: #{generator_forward.37} parent=5 // pred_fallthru
        _
      %p231 = scmp.le.s32.totalorder 1, %s9
      %p232 = scmp.lt.s32.totalorder %s9, 9
      %p233 = pnand %p231, %p232
      %p234 = pneg %p233
      // Predicated region
      $region63: #{generator_forward.37} parent=5 // pred_check
        _
      $region64: #{generator_forward.37} parent=5 // pred_check_branch
        %236 = sbr.rel (%p233) target = $region66
      $region65: #{generator_forward.37} parent=5 // pred_region
        %s237 = ssub.s32 %s9, 1
        %s238 = sand.u32 %s43, 1
        %s239 = sand.u32 %s43, 1
        %s240 = smul.addr %s239, 16
        %s241 = scalar_lea.vmem [#allocation2], %s240
        // Predicated region
        $region67: #{generator_forward.37} parent=65 // pred_check
          %p242 = pneg %p56
        $region68: #{generator_forward.37} parent=65 // pred_check_branch
          %244 = sbr.rel (%p242) target = $region70
        $region69: #{generator_forward.37} parent=65 // pred_region
          _
        $region70: #{generator_forward.37} parent=65 // pred_fallthru
          _
        %s245 = sand.u32 %s43, 1
        %s246 = sand.u32 %s43, 1
        %s247 = smul.addr %s246, 16
        %s248 = scalar_lea.vmem [#allocation2], %s247
        %p249 = pneg %p56
        %p250 = pneg %p53
        %s251 = smul.u32 32, %s21
        %s252 = smul.u32 2, %s20
        %p253 = scmp.lt.s32.totalorder %s251, 255
        %s254 = scalar_select %p253, %s251, 255
        %p255 = scmp.lt.s32.totalorder %s252, 1
        %s256 = scalar_select %p255, %s252, 1
        %s257 = smul.addr %s254, 2
        %s258 = sadd.s32 %s256, %s257
        %s259 = smul.addr %s258, 4
        %s260 = scalar_lea.vmem %s1, %s259
        %p261 = pneg %p84
        %p262 = pneg %p81
        %s263 = smul.u32 2, %s20
        %p264 = scmp.lt.s32.totalorder %s263, 1
        %s265 = scalar_select %p264, %s263, 1
        %s266 = smul.addr %s265, 2
        %s267 = scalar_lea.vmem %s2, %s266
        %p268 = pneg %p110
        %p269 = pneg %p107
        %p270 = pneg %p138
        %p271 = pneg %p135
        %s272 = smul.u32 2, %s19
        %s273 = smul.u32 2, %s20
        %p274 = scmp.lt.s32.totalorder %s272, 1
        %s275 = scalar_select %p274, %s272, 1
        %p276 = scmp.lt.s32.totalorder %s273, 1
        %s277 = scalar_select %p276, %s273, 1
        %s278 = smul.addr %s275, 2
        %s279 = sadd.s32 %s277, %s278
        %s280 = smul.addr %s279, 8
        %s281 = scalar_lea.vmem %s3, %s280
        %s282 = smul.u32 2, %s19
        %s283 = smul.u32 2, %s21
        %s284 = smul.u32 32, %s21
        %s285 = smul.u32 2, %s20
        %p286 = scmp.lt.s32.totalorder %s284, 255
        %s287 = scalar_select %p286, %s284, 255
        %p288 = scmp.lt.s32.totalorder %s285, 1
        %s289 = scalar_select %p288, %s285, 1
        %s290 = smul.addr %s287, 2
        %s291 = sadd.s32 %s289, %s290
        %s292 = smul.addr %s291, 4
        %s293 = scalar_lea.vmem %s1, %s292
        %s294 = smul.u32 32, %s21
        %s295 = smul.u32 2, %s20
        %s296 = smul.u32 2, %s20
        %p297 = scmp.lt.s32.totalorder %s296, 1
        %s298 = scalar_select %p297, %s296, 1
        %s299 = smul.addr %s298, 2
        %s300 = scalar_lea.vmem %s2, %s299
        %s301 = smul.u32 2, %s20
        %s302 = smul.u32 2, %s19
        %s303 = smul.u32 2, %s20
        %p304 = scmp.lt.s32.totalorder %s302, 1
        %s305 = scalar_select %p304, %s302, 1
        %p306 = scmp.lt.s32.totalorder %s303, 1
        %s307 = scalar_select %p306, %s303, 1
        %s308 = smul.addr %s305, 2
        %s309 = sadd.s32 %s307, %s308
        %s310 = smul.addr %s309, 8
        %s311 = scalar_lea.vmem %s3, %s310
        %s312 = smul.u32 2, %s19
        %s313 = smul.u32 2, %s20
        %p314 = scmp.eq.s32.totalorder %s21, 0
        // Predicated region
        $region71: #{generator_forward.37} parent=65 // pred_check
          %p315 = pneg %p314
        $region72: #{generator_forward.37} parent=65 // pred_check_branch
          %317 = sbr.rel (%p315) target = $region74
        $region73: #{generator_forward.37} parent=65 // pred_region
          %318 = vst [vmem:[%s311] sm:$0xff] 0.0
          %319 = vst [vmem:[%s311 + $0x8] sm:$0xff] 0.0
          %320 = vst [vmem:[%s311 + $0x10] sm:$0xff] 0.0
          %321 = vst [vmem:[%s311 + $0x18] sm:$0xff] 0.0
        $region74: #{generator_forward.37} parent=65 // pred_fallthru
          _
        %v322 = vld [vmem:[%s311] sm:$0xff]
        %v323 = vld [vmem:[%s311 + $0x8] sm:$0xff]
        %v324 = vld [vmem:[%s311 + $0x10] sm:$0xff]
        %v325 = vld [vmem:[%s311 + $0x18] sm:$0xff]
        %v326 = vld [vmem:[%s241] sm:$0xff]
        %v327 = vld [vmem:[%s241 + $0x8] sm:$0xff]
        %v328 = vld [vmem:[%s293] sm:$0xff]
        %v329 = vld [vmem:[%s293 + $0x8] sm:$0xff]
        %v330 = vld [vmem:[%s293 + $0x10] sm:$0xff]
        %v331 = vld [vmem:[%s293 + $0x18] sm:$0xff]
        %v332 = vld [vmem:[%s293 + $0x20] sm:$0xff]
        %v333 = vld [vmem:[%s293 + $0x28] sm:$0xff]
        %v334 = vld [vmem:[%s293 + $0x30] sm:$0xff]
        %v335 = vld [vmem:[%s293 + $0x38] sm:$0xff]
        %v336 = vld [vmem:[%s293 + $0x40] sm:$0xff]
        %v337 = vld [vmem:[%s293 + $0x48] sm:$0xff]
        %v338 = vld [vmem:[%s293 + $0x50] sm:$0xff]
        %v339 = vld [vmem:[%s293 + $0x58] sm:$0xff]
        %v340 = vld [vmem:[%s293 + $0x60] sm:$0xff]
        %v341 = vld [vmem:[%s293 + $0x68] sm:$0xff]
        %v342 = vld [vmem:[%s293 + $0x70] sm:$0xff]
        %v343 = vld [vmem:[%s293 + $0x78] sm:$0xff]
        %v344 = vld [vmem:[%s293 + $0x80] sm:$0xff]
        %v345 = vld [vmem:[%s293 + $0x88] sm:$0xff]
        %v346 = vld [vmem:[%s293 + $0x90] sm:$0xff]
        %v347 = vld [vmem:[%s293 + $0x98] sm:$0xff]
        %v348 = vld [vmem:[%s293 + $0xa0] sm:$0xff]
        %v349 = vld [vmem:[%s293 + $0xa8] sm:$0xff]
        %v350 = vld [vmem:[%s293 + $0xb0] sm:$0xff]
        %v351 = vld [vmem:[%s293 + $0xb8] sm:$0xff]
        %v352 = vld [vmem:[%s293 + $0xc0] sm:$0xff]
        %v353 = vld [vmem:[%s293 + $0xc8] sm:$0xff]
        %v354 = vld [vmem:[%s293 + $0xd0] sm:$0xff]
        %v355 = vld [vmem:[%s293 + $0xd8] sm:$0xff]
        %v356 = vld [vmem:[%s293 + $0xe0] sm:$0xff]
        %v357 = vld [vmem:[%s293 + $0xe8] sm:$0xff]
        %v358 = vld [vmem:[%s293 + $0xf0] sm:$0xff]
        %v359 = vld [vmem:[%s293 + $0xf8] sm:$0xff]
        %v362 = vunpack.c.l.b16 %v326
        %v363 = vunpack.c.h.b16 %v326
        %v364 = vunpack.c.l.b16 %v327
        %v365 = vunpack.c.h.b16 %v327
        %v366 = vpack.c.b16 %v364, %v362
        %v367 = vpack.c.b16 %v365, %v363
        %v402 = vunpack.c.l.b16 %v328
        %v403 = vunpack.c.h.b16 %v328
        %v404 = vunpack.c.l.b16 %v329
        %v405 = vunpack.c.h.b16 %v329
        %v406 = vunpack.c.l.b16 %v330
        %v407 = vunpack.c.h.b16 %v330
        %v408 = vunpack.c.l.b16 %v331
        %v409 = vunpack.c.h.b16 %v331
        %v410 = vunpack.c.l.b16 %v332
        %v411 = vunpack.c.h.b16 %v332
        %v412 = vunpack.c.l.b16 %v333
        %v413 = vunpack.c.h.b16 %v333
        %v414 = vunpack.c.l.b16 %v334
        %v415 = vunpack.c.h.b16 %v334
        %v416 = vunpack.c.l.b16 %v335
        %v417 = vunpack.c.h.b16 %v335
        %v418 = vunpack.c.l.b16 %v336
        %v419 = vunpack.c.h.b16 %v336
        %v420 = vunpack.c.l.b16 %v337
        %v421 = vunpack.c.h.b16 %v337
        %v422 = vunpack.c.l.b16 %v338
        %v423 = vunpack.c.h.b16 %v338
        %v424 = vunpack.c.l.b16 %v339
        %v425 = vunpack.c.h.b16 %v339
        %v426 = vunpack.c.l.b16 %v340
        %v427 = vunpack.c.h.b16 %v340
        %v428 = vunpack.c.l.b16 %v341
        %v429 = vunpack.c.h.b16 %v341
        %v430 = vunpack.c.l.b16 %v342
        %v431 = vunpack.c.h.b16 %v342
        %v432 = vunpack.c.l.b16 %v343
        %v433 = vunpack.c.h.b16 %v343
        %v434 = vunpack.c.l.b16 %v344
        %v435 = vunpack.c.h.b16 %v344
        %v436 = vunpack.c.l.b16 %v345
        %v437 = vunpack.c.h.b16 %v345
        %v438 = vunpack.c.l.b16 %v346
        %v439 = vunpack.c.h.b16 %v346
        %v440 = vunpack.c.l.b16 %v347
        %v441 = vunpack.c.h.b16 %v347
        %v442 = vunpack.c.l.b16 %v348
        %v443 = vunpack.c.h.b16 %v348
        %v444 = vunpack.c.l.b16 %v349
        %v445 = vunpack.c.h.b16 %v349
        %v446 = vunpack.c.l.b16 %v350
        %v447 = vunpack.c.h.b16 %v350
        %v448 = vunpack.c.l.b16 %v351
        %v449 = vunpack.c.h.b16 %v351
        %v450 = vunpack.c.l.b16 %v352
        %v451 = vunpack.c.h.b16 %v352
        %v452 = vunpack.c.l.b16 %v353
        %v453 = vunpack.c.h.b16 %v353
        %v454 = vunpack.c.l.b16 %v354
        %v455 = vunpack.c.h.b16 %v354
        %v456 = vunpack.c.l.b16 %v355
        %v457 = vunpack.c.h.b16 %v355
        %v458 = vunpack.c.l.b16 %v356
        %v459 = vunpack.c.h.b16 %v356
        %v460 = vunpack.c.l.b16 %v357
        %v461 = vunpack.c.h.b16 %v357
        %v462 = vunpack.c.l.b16 %v358
        %v463 = vunpack.c.h.b16 %v358
        %v464 = vunpack.c.l.b16 %v359
        %v465 = vunpack.c.h.b16 %v359
        %v466 = vpack.c.b16 %v404, %v402
        %v467 = vpack.c.b16 %v405, %v403
        %v468 = vpack.c.b16 %v408, %v406
        %v469 = vpack.c.b16 %v409, %v407
        %v470 = vpack.c.b16 %v412, %v410
        %v471 = vpack.c.b16 %v413, %v411
        %v472 = vpack.c.b16 %v416, %v414
        %v473 = vpack.c.b16 %v417, %v415
        %v474 = vpack.c.b16 %v420, %v418
        %v475 = vpack.c.b16 %v421, %v419
        %v476 = vpack.c.b16 %v424, %v422
        %v477 = vpack.c.b16 %v425, %v423
        %v478 = vpack.c.b16 %v428, %v426
        %v479 = vpack.c.b16 %v429, %v427
        %v480 = vpack.c.b16 %v432, %v430
        %v481 = vpack.c.b16 %v433, %v431
        %v482 = vpack.c.b16 %v436, %v434
        %v483 = vpack.c.b16 %v437, %v435
        %v484 = vpack.c.b16 %v440, %v438
        %v485 = vpack.c.b16 %v441, %v439
        %v486 = vpack.c.b16 %v444, %v442
        %v487 = vpack.c.b16 %v445, %v443
        %v488 = vpack.c.b16 %v448, %v446
        %v489 = vpack.c.b16 %v449, %v447
        %v490 = vpack.c.b16 %v452, %v450
        %v491 = vpack.c.b16 %v453, %v451
        %v492 = vpack.c.b16 %v456, %v454
        %v493 = vpack.c.b16 %v457, %v455
        %v494 = vpack.c.b16 %v460, %v458
        %v495 = vpack.c.b16 %v461, %v459
        %v496 = vpack.c.b16 %v464, %v462
        %v497 = vpack.c.b16 %v465, %v463
        %530 = vmatpush.bf16.msra.mxu0 %v480
        %531 = vmatpush.bf16.msra.mxu0 %v478
        %532 = vmatpush.bf16.msra.mxu0 %v476
        %533 = vmatpush.bf16.msra.mxu0 %v474
        %534 = vmatpush.bf16.msra.mxu0 %v472
        %535 = vmatpush.bf16.msra.mxu0 %v470
        %536 = vmatpush.bf16.msra.mxu0 %v468
        %537 = vmatpush.bf16.msra.mxu0 %v466
        %538 = vmatmul.bf16.gmra.mxu0 %v366
        %v539 = vpop.f32.mrf.mxu0
        %v540 = vadd.f32 0.0, %v539
        %v541 = vpop.f32.mrf.mxu0
        %v542 = vadd.f32 0.0, %v541
        %543 = vdwg.mxu0
        %544 = vmatpush.bf16.msra.mxu0 %v496
        %545 = vmatpush.bf16.msra.mxu0 %v494
        %546 = vmatpush.bf16.msra.mxu0 %v492
        %547 = vmatpush.bf16.msra.mxu0 %v490
        %548 = vmatpush.bf16.msra.mxu0 %v488
        %549 = vmatpush.bf16.msra.mxu0 %v486
        %550 = vmatpush.bf16.msra.mxu0 %v484
        %551 = vmatpush.bf16.msra.mxu0 %v482
        %552 = vmatmul.bf16.gmra.mxu0 %v367
        %v553 = vpop.f32.mrf.mxu0
        %v554 = vadd.f32 %v540, %v553
        %v555 = vpop.f32.mrf.mxu0
        %v556 = vadd.f32 %v542, %v555
        %557 = vdwg.mxu0
        %558 = vmatpush.bf16.msra.mxu0 %v481
        %559 = vmatpush.bf16.msra.mxu0 %v479
        %560 = vmatpush.bf16.msra.mxu0 %v477
        %561 = vmatpush.bf16.msra.mxu0 %v475
        %562 = vmatpush.bf16.msra.mxu0 %v473
        %563 = vmatpush.bf16.msra.mxu0 %v471
        %564 = vmatpush.bf16.msra.mxu0 %v469
        %565 = vmatpush.bf16.msra.mxu0 %v467
        %566 = vmatmul.bf16.gmra.mxu0 %v366
        %v567 = vpop.f32.mrf.mxu0
        %v568 = vadd.f32 0.0, %v567
        %v569 = vpop.f32.mrf.mxu0
        %v570 = vadd.f32 0.0, %v569
        %571 = vdwg.mxu0
        %572 = vmatpush.bf16.msra.mxu0 %v497
        %573 = vmatpush.bf16.msra.mxu0 %v495
        %574 = vmatpush.bf16.msra.mxu0 %v493
        %575 = vmatpush.bf16.msra.mxu0 %v491
        %576 = vmatpush.bf16.msra.mxu0 %v489
        %577 = vmatpush.bf16.msra.mxu0 %v487
        %578 = vmatpush.bf16.msra.mxu0 %v485
        %579 = vmatpush.bf16.msra.mxu0 %v483
        %580 = vmatmul.bf16.gmra.mxu0 %v367
        %v581 = vpop.f32.mrf.mxu0
        %v582 = vadd.f32 %v568, %v581
        %v583 = vpop.f32.mrf.mxu0
        %v584 = vadd.f32 %v570, %v583
        %585 = vdwg.mxu0
        %v586 = vadd.f32 %v322, %v554
        %v587 = vadd.f32 %v323, %v582
        %v588 = vadd.f32 %v324, %v556
        %v589 = vadd.f32 %v325, %v584
        %590 = vst [vmem:[%s311] sm:$0xff] %v586
        %591 = vst [vmem:[%s311 + $0x8] sm:$0xff] %v587
        %592 = vst [vmem:[%s311 + $0x10] sm:$0xff] %v588
        %593 = vst [vmem:[%s311 + $0x18] sm:$0xff] %v589
        %p594 = scmp.eq.s32.totalorder %s21, 7
        // Predicated region
        $region75: #{generator_forward.37} parent=65 // pred_check
          %p595 = pneg %p594
        $region76: #{generator_forward.37} parent=65 // pred_check_branch
          %597 = sbr.rel (%p595) target = $region78
        $region77: #{generator_forward.37} parent=65 // pred_region
          %v598 = vld [vmem:[%s300] sm:$0xf]
          %v599 = vld [vmem:[%s311] sm:$0xff]
          %v600 = vld [vmem:[%s311 + $0x8] sm:$0xff]
          %v601 = vld [vmem:[%s311 + $0x10] sm:$0xff]
          %v602 = vld [vmem:[%s311 + $0x18] sm:$0xff]
          %v604 = vperm.slane %v598, 0
          %v605 = vperm.slane %v598, 2
          %v608 = vperm.slane %v604, 0
          %v609 = vperm.slane %v605, 0
          %v610 = vmul.f32 %v599, %v608
          %v611 = vmul.f32 %v600, %v609
          %v612 = vmul.f32 %v601, %v608
          %v613 = vmul.f32 %v602, %v609
          %v614 = vperm.slane %v598, 1
          %v615 = vperm.slane %v598, 3
          %v618 = vperm.slane %v614, 1
          %v619 = vperm.slane %v615, 1
          %v620 = vadd.f32 %v610, %v618
          %v621 = vadd.f32 %v611, %v619
          %v622 = vadd.f32 %v612, %v618
          %v623 = vadd.f32 %v613, %v619
          %v624 = vmax.f32 %v620, 0.0
          %v625 = vmax.f32 %v621, 0.0
          %v626 = vmax.f32 %v622, 0.0
          %v627 = vmax.f32 %v623, 0.0
          %628 = vst [vmem:[%s311] sm:$0xff] %v624
          %629 = vst [vmem:[%s311 + $0x8] sm:$0xff] %v625
          %630 = vst [vmem:[%s311 + $0x10] sm:$0xff] %v626
          %631 = vst [vmem:[%s311 + $0x18] sm:$0xff] %v627
        $region78: #{generator_forward.37} parent=65 // pred_fallthru
          _
        %s632 = smul.u32 2, %s19
        %s633 = smul.u32 2, %s20
        %p634 = scmp.lt.s32.totalorder %s632, 1
        %s635 = scalar_select %p634, %s632, 1
        %p636 = scmp.lt.s32.totalorder %s633, 1
        %s637 = scalar_select %p636, %s633, 1
        %s638 = smul.addr %s635, 2
        %s639 = sadd.s32 %s637, %s638
        %s640 = smul.addr %s639, 8
        %s641 = scalar_lea.vmem %s3, %s640
        // Predicated region
        $region79: #{generator_forward.37} parent=65 // pred_check
          %p642 = pneg %p135
        $region80: #{generator_forward.37} parent=65 // pred_check_branch
          %644 = sbr.rel (%p642) target = $region82
        $region81: #{generator_forward.37} parent=65 // pred_region
          %s645 = smul.u32 2, %s19
          %s646 = smul.u32 2, %s20
        $region82: #{generator_forward.37} parent=65 // pred_fallthru
          _
        // Predicated region
        $region83: #{generator_forward.37} parent=65 // pred_check
          %p647 = pneg %p135
        $region84: #{generator_forward.37} parent=65 // pred_check_branch
          %649 = sbr.rel (%p647) target = $region86
        $region85: #{generator_forward.37} parent=65 // pred_region
          %s650 = smul.u32 2, %s19
          %s651 = smul.u32 2, %s20
          %p652 = scmp.lt.s32.totalorder %s650, 1
          %s653 = scalar_select %p652, %s650, 1
          %p654 = scmp.lt.s32.totalorder %s651, 1
          %s655 = scalar_select %p654, %s651, 1
          %s656 = smul.addr %s653, 2
          %s657 = sadd.s32 %s655, %s656
          %s658 = smul.addr %s657, 8
          %s659 = scalar_lea.vmem %s3, %s658
        $region86: #{generator_forward.37} parent=65 // pred_fallthru
          _
      $region66: #{generator_forward.37} parent=5 // pred_fallthru
        _
      %p660 = scmp.le.s32.totalorder 2, %s9
      // Predicated region
      $region87: #{generator_forward.37} parent=5 // pred_check
        %p661 = pneg %p660
      $region88: #{generator_forward.37} parent=5 // pred_check_branch
        %663 = sbr.rel (%p661) target = $region90
      $region89: #{generator_forward.37} parent=5 // pred_region
        %s664 = ssub.s32 %s9, 2
      $region90: #{generator_forward.37} parent=5 // pred_fallthru
        _
    $region6: #{generator_forward.37} parent=1 // loop_footer
      %s13 = sadd.s32 1, %s9
    $region7: #{generator_forward.37} parent=1 // loop_footer_branch
      %8 = sbr.rel target = $region3
    $region8: #{generator_forward.37} parent=1 // loop_exit
      _

// kernel: generator_forward.41
$region0: #{generator_forward.41}
  #allocation0 [shape = 'u32[]', space=smem, size = 0x4, offset = 0x4, fixed_abs, tag = 'smem constant byte address 0x4 - core index']
  #allocation1 [shape = 'u32[72,128]{1,0:T(1,128)}', space=vmem, size = 0x9000, scoped, tag = 'internal scratch']
  %s0 = inlined_call_operand.vmem [shape: bf16[64,1792], index: 0, kind: input, shape index: {}]
  %s1 = inlined_call_operand.vmem [shape: bf16[1792,256], index: 1, kind: input, shape index: {}]
  %s2 = inlined_call_operand.vmem [shape: f32[2,256], index: 2, kind: input, shape index: {}]
  %s3 = inlined_call_operand.vmem [shape: f32[64,256], index: 3, kind: output, shape index: {}]
  %s4 = sld [smem:[#allocation0]]
  $region91: #{generator_forward.41} parent=0
    _
  %s6 = ssub.s32 1, %s4
  %s7 = scalar_select 0, %s6, %s4
  $region1: #{generator_forward.41} parent=0
    #allocation2 [shape = 'u8[65536]{0}', space=vmem, size = 0x10000, scoped, tag = 'input window, operand 0']
    loop: start=0, step=1, limit=9
    $region2: #{generator_forward.41} parent=1 // loop_pre_header
      _
    $region3: #{generator_forward.41} parent=1 // loop_header
      %s9 = sphi 0, %s13
      %p10 = scmp.ge.s32.totalorder %s9, 9
      %s16 = sphi 0, %s35
      %s17 = sphi 0, %s31
      %s18 = sphi 0, %s27
      %s19 = sphi 0, %s16
      %s20 = sphi 0, %s17
      %s21 = sphi 0, %s18
      %s22 = sphi 0, %s19
      %s23 = sphi 0, %s20
      %s24 = sphi 0, %s21
      %s40 = sphi 0, %s42
      %s43 = sphi 0, %s40
      %s44 = sphi 0, %s43
      %s60 = sphi 0, %s44
      %s68 = sphi 0, %s70
      %s71 = sphi 0, %s68
      %s72 = sphi 0, %s71
      %s88 = sphi 0, %s72
      %s94 = sphi 0, %s96
      %s97 = sphi 0, %s94
      %s98 = sphi 0, %s97
      %s114 = sphi 0, %s98
      %s122 = sphi 0, %s124
      %s125 = sphi 0, %s122
      %s126 = sphi 0, %s125
      %s142 = sphi 0, %s126
    $region4: #{generator_forward.41} parent=1 // loop_header_branch
      %12 = sbr.rel (%p10) target = $region8
    $region5: #{generator_forward.41} parent=1 // loop_body
      %s14 = ssub.s32 %s9, 1
      %s15 = ssub.s32 %s9, 2
      %s25 = sadd.s32 1, %s18
      %p26 = scmp.ge.s32.totalorder %s25, 7
      %s27 = scalar_select %p26, 0, %s25
      %s28 = sadd.s32 1, %s17
      %s29 = scalar_select %p26, %s28, %s17
      %p30 = scmp.ge.s32.totalorder %s29, 1
      %s31 = scalar_select %p30, 0, %s29
      %s32 = sadd.s32 1, %s16
      %s33 = scalar_select %p30, %s32, %s16
      %p34 = scmp.ge.s32.totalorder %s33, 1
      %s35 = scalar_select %p34, 0, %s33
      %s36 = ssub.s32 %s16, %s35
      %s37 = ssub.s32 %s18, %s27
      %s38 = sor.u32 %s36, %s37
      %p39 = scmp.eq.s32.totalorder %s38, 0
      %s41 = sadd.s32 %s40, 1
      %s42 = scalar_select %p39, %s40, %s41
      %p45 = pneg %p39
      %p46 = scmp.eq.s32.totalorder %s9, 6
      %p47 = por %p45, %p46
      %p48 = scmp.ne.s32.totalorder %s40, %s43
      %p49 = scmp.eq.s32.totalorder %s9, 0
      %p50 = por %p48, %p49
      %p51 = scmp.ne.s32.totalorder %s40, %s43
      %p52 = scmp.eq.s32.totalorder %s14, 6
      %p53 = por %p51, %p52
      %p54 = scmp.ne.s32.totalorder %s43, %s44
      %p55 = scmp.eq.s32.totalorder %s14, 0
      %p56 = por %p54, %p55
      %p57 = scmp.ne.s32.totalorder %s43, %s44
      %p58 = scmp.eq.s32.totalorder %s15, 6
      %p59 = por %p57, %p58
      %p61 = scmp.ne.s32.totalorder %s44, %s60
      %p62 = scmp.eq.s32.totalorder %s15, 0
      %p63 = por %p61, %p62
      %s64 = ssub.s32 %s18, %s27
      %s65 = ssub.s32 %s17, %s31
      %s66 = sor.u32 %s64, %s65
      %p67 = scmp.eq.s32.totalorder %s66, 0
      %s69 = sadd.s32 %s68, 1
      %s70 = scalar_select %p67, %s68, %s69
      %p73 = pneg %p67
      %p74 = scmp.eq.s32.totalorder %s9, 6
      %p75 = por %p73, %p74
      %p76 = scmp.ne.s32.totalorder %s68, %s71
      %p77 = scmp.eq.s32.totalorder %s9, 0
      %p78 = por %p76, %p77
      %p79 = scmp.ne.s32.totalorder %s68, %s71
      %p80 = scmp.eq.s32.totalorder %s14, 6
      %p81 = por %p79, %p80
      %p82 = scmp.ne.s32.totalorder %s71, %s72
      %p83 = scmp.eq.s32.totalorder %s14, 0
      %p84 = por %p82, %p83
      %p85 = scmp.ne.s32.totalorder %s71, %s72
      %p86 = scmp.eq.s32.totalorder %s15, 6
      %p87 = por %p85, %p86
      %p89 = scmp.ne.s32.totalorder %s72, %s88
      %p90 = scmp.eq.s32.totalorder %s15, 0
      %p91 = por %p89, %p90
      %s92 = ssub.s32 %s17, %s31
      %p93 = scmp.eq.s32.totalorder %s92, 0
      %s95 = sadd.s32 %s94, 1
      %s96 = scalar_select %p93, %s94, %s95
      %p99 = pneg %p93
      %p100 = scmp.eq.s32.totalorder %s9, 6
      %p101 = por %p99, %p100
      %p102 = scmp.ne.s32.totalorder %s94, %s97
      %p103 = scmp.eq.s32.totalorder %s9, 0
      %p104 = por %p102, %p103
      %p105 = scmp.ne.s32.totalorder %s94, %s97
      %p106 = scmp.eq.s32.totalorder %s14, 6
      %p107 = por %p105, %p106
      %p108 = scmp.ne.s32.totalorder %s97, %s98
      %p109 = scmp.eq.s32.totalorder %s14, 0
      %p110 = por %p108, %p109
      %p111 = scmp.ne.s32.totalorder %s97, %s98
      %p112 = scmp.eq.s32.totalorder %s15, 6
      %p113 = por %p111, %p112
      %p115 = scmp.ne.s32.totalorder %s98, %s114
      %p116 = scmp.eq.s32.totalorder %s15, 0
      %p117 = por %p115, %p116
      %s118 = ssub.s32 %s16, %s35
      %s119 = ssub.s32 %s17, %s31
      %s120 = sor.u32 %s118, %s119
      %p121 = scmp.eq.s32.totalorder %s120, 0
      %s123 = sadd.s32 %s122, 1
      %s124 = scalar_select %p121, %s122, %s123
      %p127 = pneg %p121
      %p128 = scmp.eq.s32.totalorder %s9, 6
      %p129 = por %p127, %p128
      %p130 = scmp.ne.s32.totalorder %s122, %s125
      %p131 = scmp.eq.s32.totalorder %s9, 0
      %p132 = por %p130, %p131
      %p133 = scmp.ne.s32.totalorder %s122, %s125
      %p134 = scmp.eq.s32.totalorder %s14, 6
      %p135 = por %p133, %p134
      %p136 = scmp.ne.s32.totalorder %s125, %s126
      %p137 = scmp.eq.s32.totalorder %s14, 0
      %p138 = por %p136, %p137
      %p139 = scmp.ne.s32.totalorder %s125, %s126
      %p140 = scmp.eq.s32.totalorder %s15, 6
      %p141 = por %p139, %p140
      %p143 = scmp.ne.s32.totalorder %s126, %s142
      %p144 = scmp.eq.s32.totalorder %s15, 0
      %p145 = por %p143, %p144
      %p146 = scmp.le.s32.totalorder 1, %s9
      %p147 = scmp.lt.s32.totalorder %s9, 8
      %p148 = pnand %p146, %p147
      %p149 = pneg %p148
      // Predicated region
      $region9: #{generator_forward.41} parent=5 // pred_check
        _
      $region10: #{generator_forward.41} parent=5 // pred_check_branch
        %151 = sbr.rel (%p148) target = $region12
      $region11: #{generator_forward.41} parent=5 // pred_region
        %s152 = ssub.s32 %s9, 1
        // Predicated region
        $region13: #{generator_forward.41} parent=11 // pred_check
          %p153 = pneg %p110
        $region14: #{generator_forward.41} parent=11 // pred_check_branch
          %155 = sbr.rel (%p153) target = $region16
        $region15: #{generator_forward.41} parent=11 // pred_region
          %s156 = smul.u32 2, %s20
          %p157 = scmp.lt.s32.totalorder %s156, 1
          %s158 = scalar_select %p157, %s156, 1
          %s159 = smul.addr %s158, 2
          %s160 = scalar_lea.vmem %s2, %s159
          %s161 = smul.u32 2, %s20
        $region16: #{generator_forward.41} parent=11 // pred_fallthru
          _
      $region12: #{generator_forward.41} parent=5 // pred_fallthru
        _
      %p162 = scmp.lt.s32.totalorder %s9, 7
      // Predicated region
      $region17: #{generator_forward.41} parent=5 // pred_check
        %p163 = pneg %p162
      $region18: #{generator_forward.41} parent=5 // pred_check_branch
        %165 = sbr.rel (%p163) target = $region20
      $region19: #{generator_forward.41} parent=5 // pred_region
        // Predicated region
        $region21: #{generator_forward.41} parent=19 // pred_check
          %p166 = pneg %p50
        $region22: #{generator_forward.41} parent=19 // pred_check_branch
          %168 = sbr.rel (%p166) target = $region24
        $region23: #{generator_forward.41} parent=19 // pred_region
          %s169 = sand.u32 %s40, 1
          %s170 = sand.u32 %s40, 1
          %s171 = smul.addr %s170, 64
          %s172 = scalar_lea.vmem [#allocation2], %s171
          %s173 = smul.u32 8, %s16
          %s174 = smul.u32 2, %s18
          %s175 = smul.addr %s173, 14
          %s176 = sadd.s32 %s174, %s175
          %s177 = smul.addr %s176, 4
          %s178 = scalar_lea.vmem %s0, %s177
          // Predicated region
          $region25: #{generator_forward.41} parent=23 // pred_check
            _
          $region26: #{generator_forward.41} parent=23 // pred_check_branch
            %180 = sbr.rel (0) target = $region28
          $region27: #{generator_forward.41} parent=23 // pred_region
            // Predicated region
            $region29: #{generator_forward.41} parent=27 // pred_check
              _
            $region30: #{generator_forward.41} parent=27 // pred_check_branch
              %182 = sbr.rel (0) target = $region32
            $region31: #{generator_forward.41} parent=27 // pred_region
              // Predicated region
              $region44: #{generator_forward.41} parent=31 // pred_check
                _
              $region45: #{generator_forward.41} parent=31 // pred_check_branch
                %212 = sbr.rel (0) target = $region47
              $region46: #{generator_forward.41} parent=31 // pred_region
                loop: start=0, step=1, limit=1
                $region48: #{generator_forward.41} parent=46 // loop_pre_header
                  _
                $region49: #{generator_forward.41} parent=46 // loop_header
                  %s214 = sphi 0, %s218
                  %p215 = scmp.ge.s32.totalorder %s214, 1
                  %s219 = sphi %s178, %s178
                  %s220 = sphi %s172, %s172
                $region50: #{generator_forward.41} parent=46 // loop_header_branch
                  %217 = sbr.rel (%p215) target = $region54
                $region51: #{generator_forward.41} parent=46 // loop_body
                  %v221 = vld [vmem:[%s219] sm:$0xff]
                  %222 = vst [vmem:[%s220] sm:$0xff] %v221
                  %v223 = vld [vmem:[%s219 + $0x38] sm:$0xff]
                  %224 = vst [vmem:[%s220 + $0x8] sm:$0xff] %v223
                  %v225 = vld [vmem:[%s219 + $0x70] sm:$0xff]
                  %226 = vst [vmem:[%s220 + $0x10] sm:$0xff] %v225
                  %v227 = vld [vmem:[%s219 + $0xa8] sm:$0xff]
                  %228 = vst [vmem:[%s220 + $0x18] sm:$0xff] %v227
                  %v229 = vld [vmem:[%s219 + $0xe0] sm:$0xff]
                  %230 = vst [vmem:[%s220 + $0x20] sm:$0xff] %v229
                  %v231 = vld [vmem:[%s219 + $0x118] sm:$0xff]
                  %232 = vst [vmem:[%s220 + $0x28] sm:$0xff] %v231
                  %v233 = vld [vmem:[%s219 + $0x150] sm:$0xff]
                  %234 = vst [vmem:[%s220 + $0x30] sm:$0xff] %v233
                  %v235 = vld [vmem:[%s219 + $0x188] sm:$0xff]
                  %236 = vst [vmem:[%s220 + $0x38] sm:$0xff] %v235
                $region52: #{generator_forward.41} parent=46 // loop_footer
                  %s218 = sadd.s32 1, %s214
                $region53: #{generator_forward.41} parent=46 // loop_footer_branch
                  %213 = sbr.rel target = $region49
                $region54: #{generator_forward.41} parent=46 // loop_exit
                  _
              $region47: #{generator_forward.41} parent=31 // pred_fallthru
                _
              // Predicated region
              $region55: #{generator_forward.41} parent=31 // pred_check
                _
              $region56: #{generator_forward.41} parent=31 // pred_check_branch
                %238 = sbr.rel target = $region58
              $region57: #{generator_forward.41} parent=31 // pred_region
                _
              $region58: #{generator_forward.41} parent=31 // pred_fallthru
                _
            $region32: #{generator_forward.41} parent=27 // pred_fallthru
              _
            // Predicated region
            $region33: #{generator_forward.41} parent=27 // pred_check
              _
            $region34: #{generator_forward.41} parent=27 // pred_check_branch
              %184 = sbr.rel target = $region36
            $region35: #{generator_forward.41} parent=27 // pred_region
              %s186 = ssub.s32 256, 1
              loop: start=0, step=1, limit=1
              $region37: #{generator_forward.41} parent=35 // loop_pre_header
                _
              $region38: #{generator_forward.41} parent=35 // loop_header
                %s188 = sphi 0, %s192
                %p189 = scmp.ge.s32.totalorder %s188, 1
                %s193 = sphi %s178, %s178
                %s194 = sphi %s172, %s172
              $region39: #{generator_forward.41} parent=35 // loop_header_branch
                %191 = sbr.rel (%p189) target = $region43
              $region40: #{generator_forward.41} parent=35 // loop_body
                %v195 = vld [vmem:[%s193] sm:%s186]
                %196 = vst [vmem:[%s194] sm:%s186] %v195
                %v197 = vld [vmem:[%s193 + $0x38] sm:%s186]
                %198 = vst [vmem:[%s194 + $0x8] sm:%s186] %v197
                %v199 = vld [vmem:[%s193 + $0x70] sm:%s186]
                %200 = vst [vmem:[%s194 + $0x10] sm:%s186] %v199
                %v201 = vld [vmem:[%s193 + $0xa8] sm:%s186]
                %202 = vst [vmem:[%s194 + $0x18] sm:%s186] %v201
                %v203 = vld [vmem:[%s193 + $0xe0] sm:%s186]
                %204 = vst [vmem:[%s194 + $0x20] sm:%s186] %v203
                %v205 = vld [vmem:[%s193 + $0x118] sm:%s186]
                %206 = vst [vmem:[%s194 + $0x28] sm:%s186] %v205
                %v207 = vld [vmem:[%s193 + $0x150] sm:%s186]
                %208 = vst [vmem:[%s194 + $0x30] sm:%s186] %v207
                %v209 = vld [vmem:[%s193 + $0x188] sm:%s186]
                %210 = vst [vmem:[%s194 + $0x38] sm:%s186] %v209
              $region41: #{generator_forward.41} parent=35 // loop_footer
                %s192 = sadd.s32 1, %s188
              $region42: #{generator_forward.41} parent=35 // loop_footer_branch
                %187 = sbr.rel target = $region38
              $region43: #{generator_forward.41} parent=35 // loop_exit
                _
            $region36: #{generator_forward.41} parent=27 // pred_fallthru
              _
          $region28: #{generator_forward.41} parent=23 // pred_fallthru
            _
          %239 = vnop
        $region24: #{generator_forward.41} parent=19 // pred_fallthru
          _
        // Predicated region
        $region59: #{generator_forward.41} parent=19 // pred_check
          %p240 = pneg %p78
        $region60: #{generator_forward.41} parent=19 // pred_check_branch
          %242 = sbr.rel (%p240) target = $region62
        $region61: #{generator_forward.41} parent=19 // pred_region
          %s243 = smul.u32 32, %s18
          %s244 = smul.u32 2, %s17
          %p245 = scmp.lt.s32.totalorder %s243, 223
          %s246 = scalar_select %p245, %s243, 223
          %p247 = scmp.lt.s32.totalorder %s244, 1
          %s248 = scalar_select %p247, %s244, 1
          %s249 = smul.addr %s246, 2
          %s250 = sadd.s32 %s248, %s249
          %s251 = smul.addr %s250, 4
          %s252 = scalar_lea.vmem %s1, %s251
          %s253 = smul.u32 32, %s18
          %s254 = smul.u32 2, %s17
        $region62: #{generator_forward.41} parent=19 // pred_fallthru
          _
      $region20: #{generator_forward.41} parent=5 // pred_fallthru
        _
      %p255 = scmp.le.s32.totalorder 1, %s9
      %p256 = scmp.lt.s32.totalorder %s9, 8
      %p257 = pnand %p255, %p256
      %p258 = pneg %p257
      // Predicated region
      $region63: #{generator_forward.41} parent=5 // pred_check
        _
      $region64: #{generator_forward.41} parent=5 // pred_check_branch
        %260 = sbr.rel (%p257) target = $region66
      $region65: #{generator_forward.41} parent=5 // pred_region
        %s261 = ssub.s32 %s9, 1
        %s262 = sand.u32 %s43, 1
        %s263 = sand.u32 %s43, 1
        %s264 = smul.addr %s263, 64
        %s265 = scalar_lea.vmem [#allocation2], %s264
        // Predicated region
        $region67: #{generator_forward.41} parent=65 // pred_check
          %p266 = pneg %p56
        $region68: #{generator_forward.41} parent=65 // pred_check_branch
          %268 = sbr.rel (%p266) target = $region70
        $region69: #{generator_forward.41} parent=65 // pred_region
          _
        $region70: #{generator_forward.41} parent=65 // pred_fallthru
          _
        %s269 = sand.u32 %s43, 1
        %s270 = sand.u32 %s43, 1
        %s271 = smul.addr %s270, 64
        %s272 = scalar_lea.vmem [#allocation2], %s271
        %p273 = pneg %p56
        %p274 = pneg %p53
        %s275 = smul.u32 32, %s21
        %s276 = smul.u32 2, %s20
        %p277 = scmp.lt.s32.totalorder %s275, 223
        %s278 = scalar_select %p277, %s275, 223
        %p279 = scmp.lt.s32.totalorder %s276, 1
        %s280 = scalar_select %p279, %s276, 1
        %s281 = smul.addr %s278, 2
        %s282 = sadd.s32 %s280, %s281
        %s283 = smul.addr %s282, 4
        %s284 = scalar_lea.vmem %s1, %s283
        %p285 = pneg %p84
        %p286 = pneg %p81
        %s287 = smul.u32 2, %s20
        %p288 = scmp.lt.s32.totalorder %s287, 1
        %s289 = scalar_select %p288, %s287, 1
        %s290 = smul.addr %s289, 2
        %s291 = scalar_lea.vmem %s2, %s290
        %p292 = pneg %p110
        %p293 = pneg %p107
        %p294 = pneg %p138
        %p295 = pneg %p135
        %s296 = smul.u32 8, %s19
        %s297 = smul.u32 2, %s20
        %p298 = scmp.lt.s32.totalorder %s296, 7
        %s299 = scalar_select %p298, %s296, 7
        %p300 = scmp.lt.s32.totalorder %s297, 1
        %s301 = scalar_select %p300, %s297, 1
        %s302 = smul.addr %s299, 2
        %s303 = sadd.s32 %s301, %s302
        %s304 = smul.addr %s303, 8
        %s305 = scalar_lea.vmem %s3, %s304
        %s306 = smul.u32 8, %s19
        %s307 = smul.u32 2, %s21
        %s308 = smul.u32 32, %s21
        %s309 = smul.u32 2, %s20
        %p310 = scmp.lt.s32.totalorder %s308, 223
        %s311 = scalar_select %p310, %s308, 223
        %p312 = scmp.lt.s32.totalorder %s309, 1
        %s313 = scalar_select %p312, %s309, 1
        %s314 = smul.addr %s311, 2
        %s315 = sadd.s32 %s313, %s314
        %s316 = smul.addr %s315, 4
        %s317 = scalar_lea.vmem %s1, %s316
        %s318 = smul.u32 32, %s21
        %s319 = smul.u32 2, %s20
        %s320 = smul.u32 2, %s20
        %p321 = scmp.lt.s32.totalorder %s320, 1
        %s322 = scalar_select %p321, %s320, 1
        %s323 = smul.addr %s322, 2
        %s324 = scalar_lea.vmem %s2, %s323
        %s325 = smul.u32 2, %s20
        %s326 = smul.u32 8, %s19
        %s327 = smul.u32 2, %s20
        %p328 = scmp.lt.s32.totalorder %s326, 7
        %s329 = scalar_select %p328, %s326, 7
        %p330 = scmp.lt.s32.totalorder %s327, 1
        %s331 = scalar_select %p330, %s327, 1
        %s332 = smul.addr %s329, 2
        %s333 = sadd.s32 %s331, %s332
        %s334 = smul.addr %s333, 8
        %s335 = scalar_lea.vmem %s3, %s334
        %s336 = smul.u32 8, %s19
        %s337 = smul.u32 2, %s20
        %p338 = scmp.eq.s32.totalorder %s21, 0
        // Predicated region
        $region71: #{generator_forward.41} parent=65 // pred_check
          %p339 = pneg %p338
        $region72: #{generator_forward.41} parent=65 // pred_check_branch
          %341 = sbr.rel (%p339) target = $region74
        $region73: #{generator_forward.41} parent=65 // pred_region
          %342 = vst [vmem:[%s335] sm:$0xff] 0.0
          %343 = vst [vmem:[%s335 + $0x8] sm:$0xff] 0.0
          %344 = vst [vmem:[%s335 + $0x10] sm:$0xff] 0.0
          %345 = vst [vmem:[%s335 + $0x18] sm:$0xff] 0.0
          %346 = vst [vmem:[%s335 + $0x20] sm:$0xff] 0.0
          %347 = vst [vmem:[%s335 + $0x28] sm:$0xff] 0.0
          %348 = vst [vmem:[%s335 + $0x30] sm:$0xff] 0.0
          %349 = vst [vmem:[%s335 + $0x38] sm:$0xff] 0.0
          %350 = vst [vmem:[%s335 + $0x40] sm:$0xff] 0.0
          %351 = vst [vmem:[%s335 + $0x48] sm:$0xff] 0.0
          %352 = vst [vmem:[%s335 + $0x50] sm:$0xff] 0.0
          %353 = vst [vmem:[%s335 + $0x58] sm:$0xff] 0.0
          %354 = vst [vmem:[%s335 + $0x60] sm:$0xff] 0.0
          %355 = vst [vmem:[%s335 + $0x68] sm:$0xff] 0.0
          %356 = vst [vmem:[%s335 + $0x70] sm:$0xff] 0.0
          %357 = vst [vmem:[%s335 + $0x78] sm:$0xff] 0.0
        $region74: #{generator_forward.41} parent=65 // pred_fallthru
          _
        %v358 = vld [vmem:[%s335] sm:$0xff]
        %v359 = vld [vmem:[%s335 + $0x8] sm:$0xff]
        %v360 = vld [vmem:[%s335 + $0x10] sm:$0xff]
        %v361 = vld [vmem:[%s335 + $0x18] sm:$0xff]
        %v362 = vld [vmem:[%s335 + $0x20] sm:$0xff]
        %v363 = vld [vmem:[%s335 + $0x28] sm:$0xff]
        %v364 = vld [vmem:[%s335 + $0x30] sm:$0xff]
        %v365 = vld [vmem:[%s335 + $0x38] sm:$0xff]
        %v366 = vld [vmem:[%s335 + $0x40] sm:$0xff]
        %v367 = vld [vmem:[%s335 + $0x48] sm:$0xff]
        %v368 = vld [vmem:[%s335 + $0x50] sm:$0xff]
        %v369 = vld [vmem:[%s335 + $0x58] sm:$0xff]
        %v370 = vld [vmem:[%s335 + $0x60] sm:$0xff]
        %v371 = vld [vmem:[%s335 + $0x68] sm:$0xff]
        %v372 = vld [vmem:[%s335 + $0x70] sm:$0xff]
        %v373 = vld [vmem:[%s335 + $0x78] sm:$0xff]
        %v374 = vld [vmem:[%s265] sm:$0xff]
        %v375 = vld [vmem:[%s265 + $0x8] sm:$0xff]
        %v376 = vld [vmem:[%s265 + $0x10] sm:$0xff]
        %v377 = vld [vmem:[%s265 + $0x18] sm:$0xff]
        %v378 = vld [vmem:[%s265 + $0x20] sm:$0xff]
        %v379 = vld [vmem:[%s265 + $0x28] sm:$0xff]
        %v380 = vld [vmem:[%s265 + $0x30] sm:$0xff]
        %v381 = vld [vmem:[%s265 + $0x38] sm:$0xff]
        %v382 = vld [vmem:[%s317] sm:$0xff]
        %v383 = vld [vmem:[%s317 + $0x8] sm:$0xff]
        %v384 = vld [vmem:[%s317 + $0x10] sm:$0xff]
        %v385 = vld [vmem:[%s317 + $0x18] sm:$0xff]
        %v386 = vld [vmem:[%s317 + $0x20] sm:$0xff]
        %v387 = vld [vmem:[%s317 + $0x28] sm:$0xff]
        %v388 = vld [vmem:[%s317 + $0x30] sm:$0xff]
        %v389 = vld [vmem:[%s317 + $0x38] sm:$0xff]
        %v390 = vld [vmem:[%s317 + $0x40] sm:$0xff]
        %v391 = vld [vmem:[%s317 + $0x48] sm:$0xff]
        %v392 = vld [vmem:[%s317 + $0x50] sm:$0xff]
        %v393 = vld [vmem:[%s317 + $0x58] sm:$0xff]
        %v394 = vld [vmem:[%s317 + $0x60] sm:$0xff]
        %v395 = vld [vmem:[%s317 + $0x68] sm:$0xff]
        %v396 = vld [vmem:[%s317 + $0x70] sm:$0xff]
        %v397 = vld [vmem:[%s317 + $0x78] sm:$0xff]
        %v398 = vld [vmem:[%s317 + $0x80] sm:$0xff]
        %v399 = vld [vmem:[%s317 + $0x88] sm:$0xff]
        %v400 = vld [vmem:[%s317 + $0x90] sm:$0xff]
        %v401 = vld [vmem:[%s317 + $0x98] sm:$0xff]
        %v402 = vld [vmem:[%s317 + $0xa0] sm:$0xff]
        %v403 = vld [vmem:[%s317 + $0xa8] sm:$0xff]
        %v404 = vld [vmem:[%s317 + $0xb0] sm:$0xff]
        %v405 = vld [vmem:[%s317 + $0xb8] sm:$0xff]
        %v406 = vld [vmem:[%s317 + $0xc0] sm:$0xff]
        %v407 = vld [vmem:[%s317 + $0xc8] sm:$0xff]
        %v408 = vld [vmem:[%s317 + $0xd0] sm:$0xff]
        %v409 = vld [vmem:[%s317 + $0xd8] sm:$0xff]
        %v410 = vld [vmem:[%s317 + $0xe0] sm:$0xff]
        %v411 = vld [vmem:[%s317 + $0xe8] sm:$0xff]
        %v412 = vld [vmem:[%s317 + $0xf0] sm:$0xff]
        %v413 = vld [vmem:[%s317 + $0xf8] sm:$0xff]
        %v422 = vunpack.c.l.b16 %v374
        %v423 = vunpack.c.h.b16 %v374
        %v424 = vunpack.c.l.b16 %v375
        %v425 = vunpack.c.h.b16 %v375
        %v426 = vunpack.c.l.b16 %v376
        %v427 = vunpack.c.h.b16 %v376
        %v428 = vunpack.c.l.b16 %v377
        %v429 = vunpack.c.h.b16 %v377
        %v430 = vunpack.c.l.b16 %v378
        %v431 = vunpack.c.h.b16 %v378
        %v432 = vunpack.c.l.b16 %v379
        %v433 = vunpack.c.h.b16 %v379
        %v434 = vunpack.c.l.b16 %v380
        %v435 = vunpack.c.h.b16 %v380
        %v436 = vunpack.c.l.b16 %v381
        %v437 = vunpack.c.h.b16 %v381
        %v438 = vpack.c.b16 %v424, %v422
        %v439 = vpack.c.b16 %v425, %v423
        %v440 = vpack.c.b16 %v428, %v426
        %v441 = vpack.c.b16 %v429, %v427
        %v442 = vpack.c.b16 %v432, %v430
        %v443 = vpack.c.b16 %v433, %v431
        %v444 = vpack.c.b16 %v436, %v434
        %v445 = vpack.c.b16 %v437, %v435
        %v486 = vunpack.c.l.b16 %v382
        %v487 = vunpack.c.h.b16 %v382
        %v488 = vunpack.c.l.b16 %v383
        %v489 = vunpack.c.h.b16 %v383
        %v490 = vunpack.c.l.b16 %v384
        %v491 = vunpack.c.h.b16 %v384
        %v492 = vunpack.c.l.b16 %v385
        %v493 = vunpack.c.h.b16 %v385
        %v494 = vunpack.c.l.b16 %v386
        %v495 = vunpack.c.h.b16 %v386
        %v496 = vunpack.c.l.b16 %v387
        %v497 = vunpack.c.h.b16 %v387
        %v498 = vunpack.c.l.b16 %v388
        %v499 = vunpack.c.h.b16 %v388
        %v500 = vunpack.c.l.b16 %v389
        %v501 = vunpack.c.h.b16 %v389
        %v502 = vunpack.c.l.b16 %v390
        %v503 = vunpack.c.h.b16 %v390
        %v504 = vunpack.c.l.b16 %v391
        %v505 = vunpack.c.h.b16 %v391
        %v506 = vunpack.c.l.b16 %v392
        %v507 = vunpack.c.h.b16 %v392
        %v508 = vunpack.c.l.b16 %v393
        %v509 = vunpack.c.h.b16 %v393
        %v510 = vunpack.c.l.b16 %v394
        %v511 = vunpack.c.h.b16 %v394
        %v512 = vunpack.c.l.b16 %v395
        %v513 = vunpack.c.h.b16 %v395
        %v514 = vunpack.c.l.b16 %v396
        %v515 = vunpack.c.h.b16 %v396
        %v516 = vunpack.c.l.b16 %v397
        %v517 = vunpack.c.h.b16 %v397
        %v518 = vunpack.c.l.b16 %v398
        %v519 = vunpack.c.h.b16 %v398
        %v520 = vunpack.c.l.b16 %v399
        %v521 = vunpack.c.h.b16 %v399
        %v522 = vunpack.c.l.b16 %v400
        %v523 = vunpack.c.h.b16 %v400
        %v524 = vunpack.c.l.b16 %v401
        %v525 = vunpack.c.h.b16 %v401
        %v526 = vunpack.c.l.b16 %v402
        %v527 = vunpack.c.h.b16 %v402
        %v528 = vunpack.c.l.b16 %v403
        %v529 = vunpack.c.h.b16 %v403
        %v530 = vunpack.c.l.b16 %v404
        %v531 = vunpack.c.h.b16 %v404
        %v532 = vunpack.c.l.b16 %v405
        %v533 = vunpack.c.h.b16 %v405
        %v534 = vunpack.c.l.b16 %v406
        %v535 = vunpack.c.h.b16 %v406
        %v536 = vunpack.c.l.b16 %v407
        %v537 = vunpack.c.h.b16 %v407
        %v538 = vunpack.c.l.b16 %v408
        %v539 = vunpack.c.h.b16 %v408
        %v540 = vunpack.c.l.b16 %v409
        %v541 = vunpack.c.h.b16 %v409
        %v542 = vunpack.c.l.b16 %v410
        %v543 = vunpack.c.h.b16 %v410
        %v544 = vunpack.c.l.b16 %v411
        %v545 = vunpack.c.h.b16 %v411
        %v546 = vunpack.c.l.b16 %v412
        %v547 = vunpack.c.h.b16 %v412
        %v548 = vunpack.c.l.b16 %v413
        %v549 = vunpack.c.h.b16 %v413
        %v550 = vpack.c.b16 %v488, %v486
        %v551 = vpack.c.b16 %v489, %v487
        %v552 = vpack.c.b16 %v492, %v490
        %v553 = vpack.c.b16 %v493, %v491
        %v554 = vpack.c.b16 %v496, %v494
        %v555 = vpack.c.b16 %v497, %v495
        %v556 = vpack.c.b16 %v500, %v498
        %v557 = vpack.c.b16 %v501, %v499
        %v558 = vpack.c.b16 %v504, %v502
        %v559 = vpack.c.b16 %v505, %v503
        %v560 = vpack.c.b16 %v508, %v506
        %v561 = vpack.c.b16 %v509, %v507
        %v562 = vpack.c.b16 %v512, %v510
        %v563 = vpack.c.b16 %v513, %v511
        %v564 = vpack.c.b16 %v516, %v514
        %v565 = vpack.c.b16 %v517, %v515
        %v566 = vpack.c.b16 %v520, %v518
        %v567 = vpack.c.b16 %v521, %v519
        %v568 = vpack.c.b16 %v524, %v522
        %v569 = vpack.c.b16 %v525, %v523
        %v570 = vpack.c.b16 %v528, %v526
        %v571 = vpack.c.b16 %v529, %v527
        %v572 = vpack.c.b16 %v532, %v530
        %v573 = vpack.c.b16 %v533, %v531
        %v574 = vpack.c.b16 %v536, %v534
        %v575 = vpack.c.b16 %v537, %v535
        %v576 = vpack.c.b16 %v540, %v538
        %v577 = vpack.c.b16 %v541, %v539
        %v578 = vpack.c.b16 %v544, %v542
        %v579 = vpack.c.b16 %v545, %v543
        %v580 = vpack.c.b16 %v548, %v546
        %v581 = vpack.c.b16 %v549, %v547
        %614 = vmatpush.bf16.msra.mxu0 %v564
        %615 = vmatpush.bf16.msra.mxu0 %v562
        %616 = vmatpush.bf16.msra.mxu0 %v560
        %617 = vmatpush.bf16.msra.mxu0 %v558
        %618 = vmatpush.bf16.msra.mxu0 %v556
        %619 = vmatpush.bf16.msra.mxu0 %v554
        %620 = vmatpush.bf16.msra.mxu0 %v552
        %621 = vmatpush.bf16.msra.mxu0 %v550
        %622 = vmatmul.bf16.gmra.mxu0 %v438
        %v623 = vpop.f32.mrf.mxu0
        %v624 = vadd.f32 0.0, %v623
        %v625 = vpop.f32.mrf.mxu0
        %v626 = vadd.f32 0.0, %v625
        %627 = vmatmul.bf16.gmra.mxu0 %v440
        %v628 = vpop.f32.mrf.mxu0
        %v629 = vadd.f32 0.0, %v628
        %v630 = vpop.f32.mrf.mxu0
        %v631 = vadd.f32 0.0, %v630
        %632 = vmatmul.bf16.gmra.mxu0 %v442
        %v633 = vpop.f32.mrf.mxu0
        %v634 = vadd.f32 0.0, %v633
        %v635 = vpop.f32.mrf.mxu0
        %v636 = vadd.f32 0.0, %v635
        %637 = vmatmul.bf16.gmra.mxu0 %v444
        %v638 = vpop.f32.mrf.mxu0
        %v639 = vadd.f32 0.0, %v638
        %v640 = vpop.f32.mrf.mxu0
        %v641 = vadd.f32 0.0, %v640
        %642 = vdwg.mxu0
        %643 = vmatpush.bf16.msra.mxu0 %v580
        %644 = vmatpush.bf16.msra.mxu0 %v578
        %645 = vmatpush.bf16.msra.mxu0 %v576
        %646 = vmatpush.bf16.msra.mxu0 %v574
        %647 = vmatpush.bf16.msra.mxu0 %v572
        %648 = vmatpush.bf16.msra.mxu0 %v570
        %649 = vmatpush.bf16.msra.mxu0 %v568
        %650 = vmatpush.bf16.msra.mxu0 %v566
        %651 = vmatmul.bf16.gmra.mxu0 %v439
        %v652 = vpop.f32.mrf.mxu0
        %v653 = vadd.f32 %v624, %v652
        %v654 = vpop.f32.mrf.mxu0
        %v655 = vadd.f32 %v626, %v654
        %656 = vmatmul.bf16.gmra.mxu0 %v441
        %v657 = vpop.f32.mrf.mxu0
        %v658 = vadd.f32 %v629, %v657
        %v659 = vpop.f32.mrf.mxu0
        %v660 = vadd.f32 %v631, %v659
        %661 = vmatmul.bf16.gmra.mxu0 %v443
        %v662 = vpop.f32.mrf.mxu0
        %v663 = vadd.f32 %v634, %v662
        %v664 = vpop.f32.mrf.mxu0
        %v665 = vadd.f32 %v636, %v664
        %666 = vmatmul.bf16.gmra.mxu0 %v445
        %v667 = vpop.f32.mrf.mxu0
        %v668 = vadd.f32 %v639, %v667
        %v669 = vpop.f32.mrf.mxu0
        %v670 = vadd.f32 %v641, %v669
        %671 = vdwg.mxu0
        %672 = vmatpush.bf16.msra.mxu0 %v565
        %673 = vmatpush.bf16.msra.mxu0 %v563
        %674 = vmatpush.bf16.msra.mxu0 %v561
        %675 = vmatpush.bf16.msra.mxu0 %v559
        %676 = vmatpush.bf16.msra.mxu0 %v557
        %677 = vmatpush.bf16.msra.mxu0 %v555
        %678 = vmatpush.bf16.msra.mxu0 %v553
        %679 = vmatpush.bf16.msra.mxu0 %v551
        %680 = vmatmul.bf16.gmra.mxu0 %v438
        %v681 = vpop.f32.mrf.mxu0
        %v682 = vadd.f32 0.0, %v681
        %v683 = vpop.f32.mrf.mxu0
        %v684 = vadd.f32 0.0, %v683
        %685 = vmatmul.bf16.gmra.mxu0 %v440
        %v686 = vpop.f32.mrf.mxu0
        %v687 = vadd.f32 0.0, %v686
        %v688 = vpop.f32.mrf.mxu0
        %v689 = vadd.f32 0.0, %v688
        %690 = vmatmul.bf16.gmra.mxu0 %v442
        %v691 = vpop.f32.mrf.mxu0
        %v692 = vadd.f32 0.0, %v691
        %v693 = vpop.f32.mrf.mxu0
        %v694 = vadd.f32 0.0, %v693
        %695 = vmatmul.bf16.gmra.mxu0 %v444
        %v696 = vpop.f32.mrf.mxu0
        %v697 = vadd.f32 0.0, %v696
        %v698 = vpop.f32.mrf.mxu0
        %v699 = vadd.f32 0.0, %v698
        %700 = vdwg.mxu0
        %701 = vmatpush.bf16.msra.mxu0 %v581
        %702 = vmatpush.bf16.msra.mxu0 %v579
        %703 = vmatpush.bf16.msra.mxu0 %v577
        %704 = vmatpush.bf16.msra.mxu0 %v575
        %705 = vmatpush.bf16.msra.mxu0 %v573
        %706 = vmatpush.bf16.msra.mxu0 %v571
        %707 = vmatpush.bf16.msra.mxu0 %v569
        %708 = vmatpush.bf16.msra.mxu0 %v567
        %709 = vmatmul.bf16.gmra.mxu0 %v439
        %v710 = vpop.f32.mrf.mxu0
        %v711 = vadd.f32 %v682, %v710
        %v712 = vpop.f32.mrf.mxu0
        %v713 = vadd.f32 %v684, %v712
        %714 = vmatmul.bf16.gmra.mxu0 %v441
        %v715 = vpop.f32.mrf.mxu0
        %v716 = vadd.f32 %v687, %v715
        %v717 = vpop.f32.mrf.mxu0
        %v718 = vadd.f32 %v689, %v717
        %719 = vmatmul.bf16.gmra.mxu0 %v443
        %v720 = vpop.f32.mrf.mxu0
        %v721 = vadd.f32 %v692, %v720
        %v722 = vpop.f32.mrf.mxu0
        %v723 = vadd.f32 %v694, %v722
        %724 = vmatmul.bf16.gmra.mxu0 %v445
        %v725 = vpop.f32.mrf.mxu0
        %v726 = vadd.f32 %v697, %v725
        %v727 = vpop.f32.mrf.mxu0
        %v728 = vadd.f32 %v699, %v727
        %729 = vdwg.mxu0
        %v730 = vadd.f32 %v358, %v653
        %v731 = vadd.f32 %v359, %v711
        %v732 = vadd.f32 %v360, %v655
        %v733 = vadd.f32 %v361, %v713
        %v734 = vadd.f32 %v362, %v658
        %v735 = vadd.f32 %v363, %v716
        %v736 = vadd.f32 %v364, %v660
        %v737 = vadd.f32 %v365, %v718
        %v738 = vadd.f32 %v366, %v663
        %v739 = vadd.f32 %v367, %v721
        %v740 = vadd.f32 %v368, %v665
        %v741 = vadd.f32 %v369, %v723
        %v742 = vadd.f32 %v370, %v668
        %v743 = vadd.f32 %v371, %v726
        %v744 = vadd.f32 %v372, %v670
        %v745 = vadd.f32 %v373, %v728
        %746 = vst [vmem:[%s335] sm:$0xff] %v730
        %747 = vst [vmem:[%s335 + $0x8] sm:$0xff] %v731
        %748 = vst [vmem:[%s335 + $0x10] sm:$0xff] %v732
        %749 = vst [vmem:[%s335 + $0x18] sm:$0xff] %v733
        %750 = vst [vmem:[%s335 + $0x20] sm:$0xff] %v734
        %751 = vst [vmem:[%s335 + $0x28] sm:$0xff] %v735
        %752 = vst [vmem:[%s335 + $0x30] sm:$0xff] %v736
        %753 = vst [vmem:[%s335 + $0x38] sm:$0xff] %v737
        %754 = vst [vmem:[%s335 + $0x40] sm:$0xff] %v738
        %755 = vst [vmem:[%s335 + $0x48] sm:$0xff] %v739
        %756 = vst [vmem:[%s335 + $0x50] sm:$0xff] %v740
        %757 = vst [vmem:[%s335 + $0x58] sm:$0xff] %v741
        %758 = vst [vmem:[%s335 + $0x60] sm:$0xff] %v742
        %759 = vst [vmem:[%s335 + $0x68] sm:$0xff] %v743
        %760 = vst [vmem:[%s335 + $0x70] sm:$0xff] %v744
        %761 = vst [vmem:[%s335 + $0x78] sm:$0xff] %v745
        %p762 = scmp.eq.s32.totalorder %s21, 6
        // Predicated region
        $region75: #{generator_forward.41} parent=65 // pred_check
          %p763 = pneg %p762
        $region76: #{generator_forward.41} parent=65 // pred_check_branch
          %765 = sbr.rel (%p763) target = $region78
        $region77: #{generator_forward.41} parent=65 // pred_region
          %v766 = vld [vmem:[%s324] sm:$0xf]
          %v767 = vld [vmem:[%s335] sm:$0xff]
          %v768 = vld [vmem:[%s335 + $0x8] sm:$0xff]
          %v769 = vld [vmem:[%s335 + $0x10] sm:$0xff]
          %v770 = vld [vmem:[%s335 + $0x18] sm:$0xff]
          %v771 = vld [vmem:[%s335 + $0x20] sm:$0xff]
          %v772 = vld [vmem:[%s335 + $0x28] sm:$0xff]
          %v773 = vld [vmem:[%s335 + $0x30] sm:$0xff]
          %v774 = vld [vmem:[%s335 + $0x38] sm:$0xff]
          %v775 = vld [vmem:[%s335 + $0x40] sm:$0xff]
          %v776 = vld [vmem:[%s335 + $0x48] sm:$0xff]
          %v777 = vld [vmem:[%s335 + $0x50] sm:$0xff]
          %v778 = vld [vmem:[%s335 + $0x58] sm:$0xff]
          %v779 = vld [vmem:[%s335 + $0x60] sm:$0xff]
          %v780 = vld [vmem:[%s335 + $0x68] sm:$0xff]
          %v781 = vld [vmem:[%s335 + $0x70] sm:$0xff]
          %v782 = vld [vmem:[%s335 + $0x78] sm:$0xff]
          %v784 = vperm.slane %v766, 0
          %v785 = vperm.slane %v766, 2
          %v788 = vperm.slane %v784, 0
          %v789 = vperm.slane %v785, 0
          %v790 = vmul.f32 %v767, %v788
          %v791 = vmul.f32 %v768, %v789
          %v792 = vmul.f32 %v769, %v788
          %v793 = vmul.f32 %v770, %v789
          %v794 = vmul.f32 %v771, %v788
          %v795 = vmul.f32 %v772, %v789
          %v796 = vmul.f32 %v773, %v788
          %v797 = vmul.f32 %v774, %v789
          %v798 = vmul.f32 %v775, %v788
          %v799 = vmul.f32 %v776, %v789
          %v800 = vmul.f32 %v777, %v788
          %v801 = vmul.f32 %v778, %v789
          %v802 = vmul.f32 %v779, %v788
          %v803 = vmul.f32 %v780, %v789
          %v804 = vmul.f32 %v781, %v788
          %v805 = vmul.f32 %v782, %v789
          %v806 = vperm.slane %v766, 1
          %v807 = vperm.slane %v766, 3
          %v810 = vperm.slane %v806, 1
          %v811 = vperm.slane %v807, 1
          %v812 = vadd.f32 %v790, %v810
          %v813 = vadd.f32 %v791, %v811
          %v814 = vadd.f32 %v792, %v810
          %v815 = vadd.f32 %v793, %v811
          %v816 = vadd.f32 %v794, %v810
          %v817 = vadd.f32 %v795, %v811
          %v818 = vadd.f32 %v796, %v810
          %v819 = vadd.f32 %v797, %v811
          %v820 = vadd.f32 %v798, %v810
          %v821 = vadd.f32 %v799, %v811
          %v822 = vadd.f32 %v800, %v810
          %v823 = vadd.f32 %v801, %v811
          %v824 = vadd.f32 %v802, %v810
          %v825 = vadd.f32 %v803, %v811
          %v826 = vadd.f32 %v804, %v810
          %v827 = vadd.f32 %v805, %v811
          %828 = vst [vmem:[%s335] sm:$0xff] %v812
          %829 = vst [vmem:[%s335 + $0x8] sm:$0xff] %v813
          %830 = vst [vmem:[%s335 + $0x10] sm:$0xff] %v814
          %831 = vst [vmem:[%s335 + $0x18] sm:$0xff] %v815
          %832 = vst [vmem:[%s335 + $0x20] sm:$0xff] %v816
          %833 = vst [vmem:[%s335 + $0x28] sm:$0xff] %v817
          %834 = vst [vmem:[%s335 + $0x30] sm:$0xff] %v818
          %835 = vst [vmem:[%s335 + $0x38] sm:$0xff] %v819
          %836 = vst [vmem:[%s335 + $0x40] sm:$0xff] %v820
          %837 = vst [vmem:[%s335 + $0x48] sm:$0xff] %v821
          %838 = vst [vmem:[%s335 + $0x50] sm:$0xff] %v822
          %839 = vst [vmem:[%s335 + $0x58] sm:$0xff] %v823
          %840 = vst [vmem:[%s335 + $0x60] sm:$0xff] %v824
          %841 = vst [vmem:[%s335 + $0x68] sm:$0xff] %v825
          %842 = vst [vmem:[%s335 + $0x70] sm:$0xff] %v826
          %843 = vst [vmem:[%s335 + $0x78] sm:$0xff] %v827
        $region78: #{generator_forward.41} parent=65 // pred_fallthru
          _
        %s844 = smul.u32 8, %s19
        %s845 = smul.u32 2, %s20
        %p846 = scmp.lt.s32.totalorder %s844, 7
        %s847 = scalar_select %p846, %s844, 7
        %p848 = scmp.lt.s32.totalorder %s845, 1
        %s849 = scalar_select %p848, %s845, 1
        %s850 = smul.addr %s847, 2
        %s851 = sadd.s32 %s849, %s850
        %s852 = smul.addr %s851, 8
        %s853 = scalar_lea.vmem %s3, %s852
        // Predicated region
        $region79: #{generator_forward.41} parent=65 // pred_check
          %p854 = pneg %p135
        $region80: #{generator_forward.41} parent=65 // pred_check_branch
          %856 = sbr.rel (%p854) target = $region82
        $region81: #{generator_forward.41} parent=65 // pred_region
          %s857 = smul.u32 8, %s19
          %s858 = smul.u32 2, %s20
        $region82: #{generator_forward.41} parent=65 // pred_fallthru
          _
        // Predicated region
        $region83: #{generator_forward.41} parent=65 // pred_check
          %p859 = pneg %p135
        $region84: #{generator_forward.41} parent=65 // pred_check_branch
          %861 = sbr.rel (%p859) target = $region86
        $region85: #{generator_forward.41} parent=65 // pred_region
          %s862 = smul.u32 8, %s19
          %s863 = smul.u32 2, %s20
          %p864 = scmp.lt.s32.totalorder %s862, 7
          %s865 = scalar_select %p864, %s862, 7
          %p866 = scmp.lt.s32.totalorder %s863, 1
          %s867 = scalar_select %p866, %s863, 1
          %s868 = smul.addr %s865, 2
          %s869 = sadd.s32 %s867, %s868
          %s870 = smul.addr %s869, 8
          %s871 = scalar_lea.vmem %s3, %s870
        $region86: #{generator_forward.41} parent=65 // pred_fallthru
          _
      $region66: #{generator_forward.41} parent=5 // pred_fallthru
        _
      %p872 = scmp.le.s32.totalorder 2, %s9
      // Predicated region
      $region87: #{generator_forward.41} parent=5 // pred_check
        %p873 = pneg %p872
      $region88: #{generator_forward.41} parent=5 // pred_check_branch
        %875 = sbr.rel (%p873) target = $region90
      $region89: #{generator_forward.41} parent=5 // pred_region
        %s876 = ssub.s32 %s9, 2
      $region90: #{generator_forward.41} parent=5 // pred_fallthru
        _
    $region6: #{generator_forward.41} parent=1 // loop_footer
      %s13 = sadd.s32 1, %s9
    $region7: #{generator_forward.41} parent=1 // loop_footer_branch
      %8 = sbr.rel target = $region3
    $region8: #{generator_forward.41} parent=1 // loop_exit
      _

// kernel: generator_forward.42
$region0: #{generator_forward.42}
  #allocation0 [shape = 'u32[]', space=smem, size = 0x4, offset = 0x4, fixed_abs, tag = 'smem constant byte address 0x4 - core index']
  #allocation1 [shape = 'u32[72,128]{1,0:T(1,128)}', space=vmem, size = 0x9000, scoped, tag = 'internal scratch']
  %s0 = inlined_call_operand.vmem [shape: f32[64,256], index: 0, kind: input, shape index: {}]
  %s1 = inlined_call_operand.vmem [shape: f32[256,256], index: 1, kind: input, shape index: {}]
  %s2 = inlined_call_operand.vmem [shape: f32[1,256], index: 2, kind: input, shape index: {}]
  %s3 = inlined_call_operand.vmem [shape: f32[64,256], index: 3, kind: output, shape index: {}]
  %s4 = sld [smem:[#allocation0]]
  $region22: #{generator_forward.42} parent=0
    _
  %s6 = ssub.s32 1, %s4
  %s7 = scalar_select 0, %s6, %s4
  // Predicated region
  $region2: #{generator_forward.42} parent=0 // pred_check
    _
  $region3: #{generator_forward.42} parent=0 // pred_check_branch
    %9 = sbr.rel (0) target = $region5
  $region4: #{generator_forward.42} parent=0 // pred_region
    _
  $region5: #{generator_forward.42} parent=0 // pred_fallthru
    _
  // Predicated region
  $region6: #{generator_forward.42} parent=0 // pred_check
    _
  $region7: #{generator_forward.42} parent=0 // pred_check_branch
    %11 = sbr.rel (0) target = $region9
  $region8: #{generator_forward.42} parent=0 // pred_region
    _
  $region9: #{generator_forward.42} parent=0 // pred_fallthru
    _
  // Predicated region
  $region10: #{generator_forward.42} parent=0 // pred_check
    _
  $region11: #{generator_forward.42} parent=0 // pred_check_branch
    %13 = sbr.rel (0) target = $region13
  $region12: #{generator_forward.42} parent=0 // pred_region
    _
  $region13: #{generator_forward.42} parent=0 // pred_fallthru
    _
  %v14 = vld [vmem:[%s0] sm:$0xff]
  %v15 = vld [vmem:[%s0 + $0x8] sm:$0xff]
  %v16 = vld [vmem:[%s0 + $0x10] sm:$0xff]
  %v17 = vld [vmem:[%s0 + $0x18] sm:$0xff]
  %v18 = vld [vmem:[%s0 + $0x20] sm:$0xff]
  %v19 = vld [vmem:[%s0 + $0x28] sm:$0xff]
  %v20 = vld [vmem:[%s0 + $0x30] sm:$0xff]
  %v21 = vld [vmem:[%s0 + $0x38] sm:$0xff]
  %v22 = vld [vmem:[%s0 + $0x40] sm:$0xff]
  %v23 = vld [vmem:[%s0 + $0x48] sm:$0xff]
  %v24 = vld [vmem:[%s0 + $0x50] sm:$0xff]
  %v25 = vld [vmem:[%s0 + $0x58] sm:$0xff]
  %v26 = vld [vmem:[%s0 + $0x60] sm:$0xff]
  %v27 = vld [vmem:[%s0 + $0x68] sm:$0xff]
  %v28 = vld [vmem:[%s0 + $0x70] sm:$0xff]
  %v29 = vld [vmem:[%s0 + $0x78] sm:$0xff]
  %v30 = vmul.f32 %v14, %v14
  %v31 = vmul.f32 %v15, %v15
  %v32 = vmul.f32 %v16, %v16
  %v33 = vmul.f32 %v17, %v17
  %v34 = vmul.f32 %v18, %v18
  %v35 = vmul.f32 %v19, %v19
  %v36 = vmul.f32 %v20, %v20
  %v37 = vmul.f32 %v21, %v21
  %v38 = vmul.f32 %v22, %v22
  %v39 = vmul.f32 %v23, %v23
  %v40 = vmul.f32 %v24, %v24
  %v41 = vmul.f32 %v25, %v25
  %v42 = vmul.f32 %v26, %v26
  %v43 = vmul.f32 %v27, %v27
  %v44 = vmul.f32 %v28, %v28
  %v45 = vmul.f32 %v29, %v29
  %v46 = vld [vmem:[%s1] sm:$0xff]
  %v47 = vld [vmem:[%s1 + $0x8] sm:$0xff]
  %v48 = vld [vmem:[%s1 + $0x10] sm:$0xff]
  %v49 = vld [vmem:[%s1 + $0x18] sm:$0xff]
  %v50 = vld [vmem:[%s1 + $0x20] sm:$0xff]
  %v51 = vld [vmem:[%s1 + $0x28] sm:$0xff]
  %v52 = vld [vmem:[%s1 + $0x30] sm:$0xff]
  %v53 = vld [vmem:[%s1 + $0x38] sm:$0xff]
  %v54 = vld [vmem:[%s1 + $0x40] sm:$0xff]
  %v55 = vld [vmem:[%s1 + $0x48] sm:$0xff]
  %v56 = vld [vmem:[%s1 + $0x50] sm:$0xff]
  %v57 = vld [vmem:[%s1 + $0x58] sm:$0xff]
  %v58 = vld [vmem:[%s1 + $0x60] sm:$0xff]
  %v59 = vld [vmem:[%s1 + $0x68] sm:$0xff]
  %v60 = vld [vmem:[%s1 + $0x70] sm:$0xff]
  %v61 = vld [vmem:[%s1 + $0x78] sm:$0xff]
  %v62 = vld [vmem:[%s1 + $0x80] sm:$0xff]
  %v63 = vld [vmem:[%s1 + $0x88] sm:$0xff]
  %v64 = vld [vmem:[%s1 + $0x90] sm:$0xff]
  %v65 = vld [vmem:[%s1 + $0x98] sm:$0xff]
  %v66 = vld [vmem:[%s1 + $0xa0] sm:$0xff]
  %v67 = vld [vmem:[%s1 + $0xa8] sm:$0xff]
  %v68 = vld [vmem:[%s1 + $0xb0] sm:$0xff]
  %v69 = vld [vmem:[%s1 + $0xb8] sm:$0xff]
  %v70 = vld [vmem:[%s1 + $0xc0] sm:$0xff]
  %v71 = vld [vmem:[%s1 + $0xc8] sm:$0xff]
  %v72 = vld [vmem:[%s1 + $0xd0] sm:$0xff]
  %v73 = vld [vmem:[%s1 + $0xd8] sm:$0xff]
  %v74 = vld [vmem:[%s1 + $0xe0] sm:$0xff]
  %v75 = vld [vmem:[%s1 + $0xe8] sm:$0xff]
  %v76 = vld [vmem:[%s1 + $0xf0] sm:$0xff]
  %v77 = vld [vmem:[%s1 + $0xf8] sm:$0xff]
  %v78 = vld [vmem:[%s1 + $0x100] sm:$0xff]
  %v79 = vld [vmem:[%s1 + $0x108] sm:$0xff]
  %v80 = vld [vmem:[%s1 + $0x110] sm:$0xff]
  %v81 = vld [vmem:[%s1 + $0x118] sm:$0xff]
  %v82 = vld [vmem:[%s1 + $0x120] sm:$0xff]
  %v83 = vld [vmem:[%s1 + $0x128] sm:$0xff]
  %v84 = vld [vmem:[%s1 + $0x130] sm:$0xff]
  %v85 = vld [vmem:[%s1 + $0x138] sm:$0xff]
  %v86 = vld [vmem:[%s1 + $0x140] sm:$0xff]
  %v87 = vld [vmem:[%s1 + $0x148] sm:$0xff]
  %v88 = vld [vmem:[%s1 + $0x150] sm:$0xff]
  %v89 = vld [vmem:[%s1 + $0x158] sm:$0xff]
  %v90 = vld [vmem:[%s1 + $0x160] sm:$0xff]
  %v91 = vld [vmem:[%s1 + $0x168] sm:$0xff]
  %v92 = vld [vmem:[%s1 + $0x170] sm:$0xff]
  %v93 = vld [vmem:[%s1 + $0x178] sm:$0xff]
  %v94 = vld [vmem:[%s1 + $0x180] sm:$0xff]
  %v95 = vld [vmem:[%s1 + $0x188] sm:$0xff]
  %v96 = vld [vmem:[%s1 + $0x190] sm:$0xff]
  %v97 = vld [vmem:[%s1 + $0x198] sm:$0xff]
  %v98 = vld [vmem:[%s1 + $0x1a0] sm:$0xff]
  %v99 = vld [vmem:[%s1 + $0x1a8] sm:$0xff]
  %v100 = vld [vmem:[%s1 + $0x1b0] sm:$0xff]
  %v101 = vld [vmem:[%s1 + $0x1b8] sm:$0xff]
  %v102 = vld [vmem:[%s1 + $0x1c0] sm:$0xff]
  %v103 = vld [vmem:[%s1 + $0x1c8] sm:$0xff]
  %v104 = vld [vmem:[%s1 + $0x1d0] sm:$0xff]
  %v105 = vld [vmem:[%s1 + $0x1d8] sm:$0xff]
  %v106 = vld [vmem:[%s1 + $0x1e0] sm:$0xff]
  %v107 = vld [vmem:[%s1 + $0x1e8] sm:$0xff]
  %v108 = vld [vmem:[%s1 + $0x1f0] sm:$0xff]
  %v109 = vld [vmem:[%s1 + $0x1f8] sm:$0xff]
  %v110 = vld [vmem:[%s2] sm:$0x3]
  %v112 = vperm.slane %v110, 0
  %v113 = vperm.slane %v110, 1
  %116 = vmatpush.msra.mxu0 %v76
  %117 = vmatpush.msra.mxu0 %v74
  %118 = vmatpush.msra.mxu0 %v72
  %119 = vmatpush.msra.mxu0 %v70
  %120 = vmatpush.msra.mxu0 %v68
  %121 = vmatpush.msra.mxu0 %v66
  %122 = vmatpush.msra.mxu0 %v64
  %123 = vmatpush.msra.mxu0 %v62
  %124 = vmatpush.msra.mxu0 %v60
  %125 = vmatpush.msra.mxu0 %v58
  %126 = vmatpush.msra.mxu0 %v56
  %127 = vmatpush.msra.mxu0 %v54
  %128 = vmatpush.msra.mxu0 %v52
  %129 = vmatpush.msra.mxu0 %v50
  %130 = vmatpush.msra.mxu0 %v48
  %131 = vmatpush.msra.mxu0 %v46
  %132 = vmatmul.f32.gmra.mxu0 %v30
  %v133 = vpop.f32.mrf.mxu0
  %v134 = vadd.f32 %v112, %v133
  %135 = vmatmul.f32.gmra.mxu0 %v32
  %v136 = vpop.f32.mrf.mxu0
  %v137 = vadd.f32 %v112, %v136
  %138 = vmatmul.f32.gmra.mxu0 %v34
  %v139 = vpop.f32.mrf.mxu0
  %v140 = vadd.f32 %v112, %v139
  %141 = vmatmul.f32.gmra.mxu0 %v36
  %v142 = vpop.f32.mrf.mxu0
  %v143 = vadd.f32 %v112, %v142
  %144 = vmatmul.f32.gmra.mxu0 %v38
  %v145 = vpop.f32.mrf.mxu0
  %v146 = vadd.f32 %v112, %v145
  %147 = vmatmul.f32.gmra.mxu0 %v40
  %v148 = vpop.f32.mrf.mxu0
  %v149 = vadd.f32 %v112, %v148
  %150 = vmatmul.f32.gmra.mxu0 %v42
  %v151 = vpop.f32.mrf.mxu0
  %v152 = vadd.f32 %v112, %v151
  %153 = vmatmul.f32.gmra.mxu0 %v44
  %v154 = vpop.f32.mrf.mxu0
  %v155 = vadd.f32 %v112, %v154
  %156 = vdwg.mxu0
  %157 = vmatpush.msra.mxu0 %v108
  %158 = vmatpush.msra.mxu0 %v106
  %159 = vmatpush.msra.mxu0 %v104
  %160 = vmatpush.msra.mxu0 %v102
  %161 = vmatpush.msra.mxu0 %v100
  %162 = vmatpush.msra.mxu0 %v98
  %163 = vmatpush.msra.mxu0 %v96
  %164 = vmatpush.msra.mxu0 %v94
  %165 = vmatpush.msra.mxu0 %v92
  %166 = vmatpush.msra.mxu0 %v90
  %167 = vmatpush.msra.mxu0 %v88
  %168 = vmatpush.msra.mxu0 %v86
  %169 = vmatpush.msra.mxu0 %v84
  %170 = vmatpush.msra.mxu0 %v82
  %171 = vmatpush.msra.mxu0 %v80
  %172 = vmatpush.msra.mxu0 %v78
  %173 = vmatmul.f32.gmra.mxu0 %v31
  %v174 = vpop.f32.mrf.mxu0
  %v175 = vadd.f32 %v134, %v174
  %176 = vmatmul.f32.gmra.mxu0 %v33
  %v177 = vpop.f32.mrf.mxu0
  %v178 = vadd.f32 %v137, %v177
  %179 = vmatmul.f32.gmra.mxu0 %v35
  %v180 = vpop.f32.mrf.mxu0
  %v181 = vadd.f32 %v140, %v180
  %182 = vmatmul.f32.gmra.mxu0 %v37
  %v183 = vpop.f32.mrf.mxu0
  %v184 = vadd.f32 %v143, %v183
  %185 = vmatmul.f32.gmra.mxu0 %v39
  %v186 = vpop.f32.mrf.mxu0
  %v187 = vadd.f32 %v146, %v186
  %188 = vmatmul.f32.gmra.mxu0 %v41
  %v189 = vpop.f32.mrf.mxu0
  %v190 = vadd.f32 %v149, %v189
  %191 = vmatmul.f32.gmra.mxu0 %v43
  %v192 = vpop.f32.mrf.mxu0
  %v193 = vadd.f32 %v152, %v192
  %194 = vmatmul.f32.gmra.mxu0 %v45
  %v195 = vpop.f32.mrf.mxu0
  %v196 = vadd.f32 %v155, %v195
  %197 = vdwg.mxu0
  %198 = vmatpush.msra.mxu0 %v77
  %199 = vmatpush.msra.mxu0 %v75
  %200 = vmatpush.msra.mxu0 %v73
  %201 = vmatpush.msra.mxu0 %v71
  %202 = vmatpush.msra.mxu0 %v69
  %203 = vmatpush.msra.mxu0 %v67
  %204 = vmatpush.msra.mxu0 %v65
  %205 = vmatpush.msra.mxu0 %v63
  %206 = vmatpush.msra.mxu0 %v61
  %207 = vmatpush.msra.mxu0 %v59
  %208 = vmatpush.msra.mxu0 %v57
  %209 = vmatpush.msra.mxu0 %v55
  %210 = vmatpush.msra.mxu0 %v53
  %211 = vmatpush.msra.mxu0 %v51
  %212 = vmatpush.msra.mxu0 %v49
  %213 = vmatpush.msra.mxu0 %v47
  %214 = vmatmul.f32.gmra.mxu0 %v30
  %v215 = vpop.f32.mrf.mxu0
  %v216 = vadd.f32 %v113, %v215
  %217 = vmatmul.f32.gmra.mxu0 %v32
  %v218 = vpop.f32.mrf.mxu0
  %v219 = vadd.f32 %v113, %v218
  %220 = vmatmul.f32.gmra.mxu0 %v34
  %v221 = vpop.f32.mrf.mxu0
  %v222 = vadd.f32 %v113, %v221
  %223 = vmatmul.f32.gmra.mxu0 %v36
  %v224 = vpop.f32.mrf.mxu0
  %v225 = vadd.f32 %v113, %v224
  %226 = vmatmul.f32.gmra.mxu0 %v38
  %v227 = vpop.f32.mrf.mxu0
  %v228 = vadd.f32 %v113, %v227
  %229 = vmatmul.f32.gmra.mxu0 %v40
  %v230 = vpop.f32.mrf.mxu0
  %v231 = vadd.f32 %v113, %v230
  %232 = vmatmul.f32.gmra.mxu0 %v42
  %v233 = vpop.f32.mrf.mxu0
  %v234 = vadd.f32 %v113, %v233
  %235 = vmatmul.f32.gmra.mxu0 %v44
  %v236 = vpop.f32.mrf.mxu0
  %v237 = vadd.f32 %v113, %v236
  %238 = vdwg.mxu0
  %239 = vmatpush.msra.mxu0 %v109
  %240 = vmatpush.msra.mxu0 %v107
  %241 = vmatpush.msra.mxu0 %v105
  %242 = vmatpush.msra.mxu0 %v103
  %243 = vmatpush.msra.mxu0 %v101
  %244 = vmatpush.msra.mxu0 %v99
  %245 = vmatpush.msra.mxu0 %v97
  %246 = vmatpush.msra.mxu0 %v95
  %247 = vmatpush.msra.mxu0 %v93
  %248 = vmatpush.msra.mxu0 %v91
  %249 = vmatpush.msra.mxu0 %v89
  %250 = vmatpush.msra.mxu0 %v87
  %251 = vmatpush.msra.mxu0 %v85
  %252 = vmatpush.msra.mxu0 %v83
  %253 = vmatpush.msra.mxu0 %v81
  %254 = vmatpush.msra.mxu0 %v79
  %255 = vmatmul.f32.gmra.mxu0 %v31
  %v256 = vpop.f32.mrf.mxu0
  %v257 = vadd.f32 %v216, %v256
  %258 = vmatmul.f32.gmra.mxu0 %v33
  %v259 = vpop.f32.mrf.mxu0
  %v260 = vadd.f32 %v219, %v259
  %261 = vmatmul.f32.gmra.mxu0 %v35
  %v262 = vpop.f32.mrf.mxu0
  %v263 = vadd.f32 %v222, %v262
  %264 = vmatmul.f32.gmra.mxu0 %v37
  %v265 = vpop.f32.mrf.mxu0
  %v266 = vadd.f32 %v225, %v265
  %267 = vmatmul.f32.gmra.mxu0 %v39
  %v268 = vpop.f32.mrf.mxu0
  %v269 = vadd.f32 %v228, %v268
  %270 = vmatmul.f32.gmra.mxu0 %v41
  %v271 = vpop.f32.mrf.mxu0
  %v272 = vadd.f32 %v231, %v271
  %273 = vmatmul.f32.gmra.mxu0 %v43
  %v274 = vpop.f32.mrf.mxu0
  %v275 = vadd.f32 %v234, %v274
  %276 = vmatmul.f32.gmra.mxu0 %v45
  %v277 = vpop.f32.mrf.mxu0
  %v278 = vadd.f32 %v237, %v277
  %279 = vdwg.mxu0
  %v280 = vrsqrt.pop %v175
  %v281 = vmul.f32 %v280, %v175
  %v282 = vmul.f32 %v281, %v280
  %v283 = vmul.f32 0.5, %v282
  %v284 = vsub.f32 1.5, %v283
  %v285 = vmul.f32 %v280, %v284
  %v286 = vmul.f32 %v175, %v285
  %vm287 = vcmp.eq.f32.partialorder %v175, inf
  %v288 = vsel %vm287, %v175, %v286
  %vm289 = vcmp.eq.f32.partialorder %v175, 0.0
  %v290 = vand.u32 %v175, 2147483648
  %v291 = vsel %vm289, %v290, %v288
  %v292 = vrsqrt.pop %v257
  %v293 = vmul.f32 %v292, %v257
  %v294 = vmul.f32 %v293, %v292
  %v295 = vmul.f32 0.5, %v294
  %v296 = vsub.f32 1.5, %v295
  %v297 = vmul.f32 %v292, %v296
  %v298 = vmul.f32 %v257, %v297
  %vm299 = vcmp.eq.f32.partialorder %v257, inf
  %v300 = vsel %vm299, %v257, %v298
  %vm301 = vcmp.eq.f32.partialorder %v257, 0.0
  %v302 = vand.u32 %v257, 2147483648
  %v303 = vsel %vm301, %v302, %v300
  %v304 = vrsqrt.pop %v178
  %v305 = vmul.f32 %v304, %v178
  %v306 = vmul.f32 %v305, %v304
  %v307 = vmul.f32 0.5, %v306
  %v308 = vsub.f32 1.5, %v307
  %v309 = vmul.f32 %v304, %v308
  %v310 = vmul.f32 %v178, %v309
  %vm311 = vcmp.eq.f32.partialorder %v178, inf
  %v312 = vsel %vm311, %v178, %v310
  %vm313 = vcmp.eq.f32.partialorder %v178, 0.0
  %v314 = vand.u32 %v178, 2147483648
  %v315 = vsel %vm313, %v314, %v312
  %v316 = vrsqrt.pop %v260
  %v317 = vmul.f32 %v316, %v260
  %v318 = vmul.f32 %v317, %v316
  %v319 = vmul.f32 0.5, %v318
  %v320 = vsub.f32 1.5, %v319
  %v321 = vmul.f32 %v316, %v320
  %v322 = vmul.f32 %v260, %v321
  %vm323 = vcmp.eq.f32.partialorder %v260, inf
  %v324 = vsel %vm323, %v260, %v322
  %vm325 = vcmp.eq.f32.partialorder %v260, 0.0
  %v326 = vand.u32 %v260, 2147483648
  %v327 = vsel %vm325, %v326, %v324
  %v328 = vrsqrt.pop %v181
  %v329 = vmul.f32 %v328, %v181
  %v330 = vmul.f32 %v329, %v328
  %v331 = vmul.f32 0.5, %v330
  %v332 = vsub.f32 1.5, %v331
  %v333 = vmul.f32 %v328, %v332
  %v334 = vmul.f32 %v181, %v333
  %vm335 = vcmp.eq.f32.partialorder %v181, inf
  %v336 = vsel %vm335, %v181, %v334
  %vm337 = vcmp.eq.f32.partialorder %v181, 0.0
  %v338 = vand.u32 %v181, 2147483648
  %v339 = vsel %vm337, %v338, %v336
  %v340 = vrsqrt.pop %v263
  %v341 = vmul.f32 %v340, %v263
  %v342 = vmul.f32 %v341, %v340
  %v343 = vmul.f32 0.5, %v342
  %v344 = vsub.f32 1.5, %v343
  %v345 = vmul.f32 %v340, %v344
  %v346 = vmul.f32 %v263, %v345
  %vm347 = vcmp.eq.f32.partialorder %v263, inf
  %v348 = vsel %vm347, %v263, %v346
  %vm349 = vcmp.eq.f32.partialorder %v263, 0.0
  %v350 = vand.u32 %v263, 2147483648
  %v351 = vsel %vm349, %v350, %v348
  %v352 = vrsqrt.pop %v184
  %v353 = vmul.f32 %v352, %v184
  %v354 = vmul.f32 %v353, %v352
  %v355 = vmul.f32 0.5, %v354
  %v356 = vsub.f32 1.5, %v355
  %v357 = vmul.f32 %v352, %v356
  %v358 = vmul.f32 %v184, %v357
  %vm359 = vcmp.eq.f32.partialorder %v184, inf
  %v360 = vsel %vm359, %v184, %v358
  %vm361 = vcmp.eq.f32.partialorder %v184, 0.0
  %v362 = vand.u32 %v184, 2147483648
  %v363 = vsel %vm361, %v362, %v360
  %v364 = vrsqrt.pop %v266
  %v365 = vmul.f32 %v364, %v266
  %v366 = vmul.f32 %v365, %v364
  %v367 = vmul.f32 0.5, %v366
  %v368 = vsub.f32 1.5, %v367
  %v369 = vmul.f32 %v364, %v368
  %v370 = vmul.f32 %v266, %v369
  %vm371 = vcmp.eq.f32.partialorder %v266, inf
  %v372 = vsel %vm371, %v266, %v370
  %vm373 = vcmp.eq.f32.partialorder %v266, 0.0
  %v374 = vand.u32 %v266, 2147483648
  %v375 = vsel %vm373, %v374, %v372
  %v376 = vrsqrt.pop %v187
  %v377 = vmul.f32 %v376, %v187
  %v378 = vmul.f32 %v377, %v376
  %v379 = vmul.f32 0.5, %v378
  %v380 = vsub.f32 1.5, %v379
  %v381 = vmul.f32 %v376, %v380
  %v382 = vmul.f32 %v187, %v381
  %vm383 = vcmp.eq.f32.partialorder %v187, inf
  %v384 = vsel %vm383, %v187, %v382
  %vm385 = vcmp.eq.f32.partialorder %v187, 0.0
  %v386 = vand.u32 %v187, 2147483648
  %v387 = vsel %vm385, %v386, %v384
  %v388 = vrsqrt.pop %v269
  %v389 = vmul.f32 %v388, %v269
  %v390 = vmul.f32 %v389, %v388
  %v391 = vmul.f32 0.5, %v390
  %v392 = vsub.f32 1.5, %v391
  %v393 = vmul.f32 %v388, %v392
  %v394 = vmul.f32 %v269, %v393
  %vm395 = vcmp.eq.f32.partialorder %v269, inf
  %v396 = vsel %vm395, %v269, %v394
  %vm397 = vcmp.eq.f32.partialorder %v269, 0.0
  %v398 = vand.u32 %v269, 2147483648
  %v399 = vsel %vm397, %v398, %v396
  %v400 = vrsqrt.pop %v190
  %v401 = vmul.f32 %v400, %v190
  %v402 = vmul.f32 %v401, %v400
  %v403 = vmul.f32 0.5, %v402
  %v404 = vsub.f32 1.5, %v403
  %v405 = vmul.f32 %v400, %v404
  %v406 = vmul.f32 %v190, %v405
  %vm407 = vcmp.eq.f32.partialorder %v190, inf
  %v408 = vsel %vm407, %v190, %v406
  %vm409 = vcmp.eq.f32.partialorder %v190, 0.0
  %v410 = vand.u32 %v190, 2147483648
  %v411 = vsel %vm409, %v410, %v408
  %v412 = vrsqrt.pop %v272
  %v413 = vmul.f32 %v412, %v272
  %v414 = vmul.f32 %v413, %v412
  %v415 = vmul.f32 0.5, %v414
  %v416 = vsub.f32 1.5, %v415
  %v417 = vmul.f32 %v412, %v416
  %v418 = vmul.f32 %v272, %v417
  %vm419 = vcmp.eq.f32.partialorder %v272, inf
  %v420 = vsel %vm419, %v272, %v418
  %vm421 = vcmp.eq.f32.partialorder %v272, 0.0
  %v422 = vand.u32 %v272, 2147483648
  %v423 = vsel %vm421, %v422, %v420
  %v424 = vrsqrt.pop %v193
  %v425 = vmul.f32 %v424, %v193
  %v426 = vmul.f32 %v425, %v424
  %v427 = vmul.f32 0.5, %v426
  %v428 = vsub.f32 1.5, %v427
  %v429 = vmul.f32 %v424, %v428
  %v430 = vmul.f32 %v193, %v429
  %vm431 = vcmp.eq.f32.partialorder %v193, inf
  %v432 = vsel %vm431, %v193, %v430
  %vm433 = vcmp.eq.f32.partialorder %v193, 0.0
  %v434 = vand.u32 %v193, 2147483648
  %v435 = vsel %vm433, %v434, %v432
  %v436 = vrsqrt.pop %v275
  %v437 = vmul.f32 %v436, %v275
  %v438 = vmul.f32 %v437, %v436
  %v439 = vmul.f32 0.5, %v438
  %v440 = vsub.f32 1.5, %v439
  %v441 = vmul.f32 %v436, %v440
  %v442 = vmul.f32 %v275, %v441
  %vm443 = vcmp.eq.f32.partialorder %v275, inf
  %v444 = vsel %vm443, %v275, %v442
  %vm445 = vcmp.eq.f32.partialorder %v275, 0.0
  %v446 = vand.u32 %v275, 2147483648
  %v447 = vsel %vm445, %v446, %v444
  %v448 = vrsqrt.pop %v196
  %v449 = vmul.f32 %v448, %v196
  %v450 = vmul.f32 %v449, %v448
  %v451 = vmul.f32 0.5, %v450
  %v452 = vsub.f32 1.5, %v451
  %v453 = vmul.f32 %v448, %v452
  %v454 = vmul.f32 %v196, %v453
  %vm455 = vcmp.eq.f32.partialorder %v196, inf
  %v456 = vsel %vm455, %v196, %v454
  %vm457 = vcmp.eq.f32.partialorder %v196, 0.0
  %v458 = vand.u32 %v196, 2147483648
  %v459 = vsel %vm457, %v458, %v456
  %v460 = vrsqrt.pop %v278
  %v461 = vmul.f32 %v460, %v278
  %v462 = vmul.f32 %v461, %v460
  %v463 = vmul.f32 0.5, %v462
  %v464 = vsub.f32 1.5, %v463
  %v465 = vmul.f32 %v460, %v464
  %v466 = vmul.f32 %v278, %v465
  %vm467 = vcmp.eq.f32.partialorder %v278, inf
  %v468 = vsel %vm467, %v278, %v466
  %vm469 = vcmp.eq.f32.partialorder %v278, 0.0
  %v470 = vand.u32 %v278, 2147483648
  %v471 = vsel %vm469, %v470, %v468
  %v472 = vmul.f32 %v14, %v291
  %v473 = vmul.f32 %v15, %v303
  %v474 = vmul.f32 %v16, %v315
  %v475 = vmul.f32 %v17, %v327
  %v476 = vmul.f32 %v18, %v339
  %v477 = vmul.f32 %v19, %v351
  %v478 = vmul.f32 %v20, %v363
  %v479 = vmul.f32 %v21, %v375
  %v480 = vmul.f32 %v22, %v387
  %v481 = vmul.f32 %v23, %v399
  %v482 = vmul.f32 %v24, %v411
  %v483 = vmul.f32 %v25, %v423
  %v484 = vmul.f32 %v26, %v435
  %v485 = vmul.f32 %v27, %v447
  %v486 = vmul.f32 %v28, %v459
  %v487 = vmul.f32 %v29, %v471
  %488 = vst [vmem:[%s3] sm:$0xff] %v472
  %489 = vst [vmem:[%s3 + $0x8] sm:$0xff] %v473
  %490 = vst [vmem:[%s3 + $0x10] sm:$0xff] %v474
  %491 = vst [vmem:[%s3 + $0x18] sm:$0xff] %v475
  %492 = vst [vmem:[%s3 + $0x20] sm:$0xff] %v476
  %493 = vst [vmem:[%s3 + $0x28] sm:$0xff] %v477
  %494 = vst [vmem:[%s3 + $0x30] sm:$0xff] %v478
  %495 = vst [vmem:[%s3 + $0x38] sm:$0xff] %v479
  %496 = vst [vmem:[%s3 + $0x40] sm:$0xff] %v480
  %497 = vst [vmem:[%s3 + $0x48] sm:$0xff] %v481
  %498 = vst [vmem:[%s3 + $0x50] sm:$0xff] %v482
  %499 = vst [vmem:[%s3 + $0x58] sm:$0xff] %v483
  %500 = vst [vmem:[%s3 + $0x60] sm:$0xff] %v484
  %501 = vst [vmem:[%s3 + $0x68] sm:$0xff] %v485
  %502 = vst [vmem:[%s3 + $0x70] sm:$0xff] %v486
  %503 = vst [vmem:[%s3 + $0x78] sm:$0xff] %v487
  // Predicated region
  $region14: #{generator_forward.42} parent=0 // pred_check
    _
  $region15: #{generator_forward.42} parent=0 // pred_check_branch
    %505 = sbr.rel (0) target = $region17
  $region16: #{generator_forward.42} parent=0 // pred_region
    _
  $region17: #{generator_forward.42} parent=0 // pred_fallthru
    _
  // Predicated region
  $region18: #{generator_forward.42} parent=0 // pred_check
    _
  $region19: #{generator_forward.42} parent=0 // pred_check_branch
    %507 = sbr.rel (0) target = $region21
  $region20: #{generator_forward.42} parent=0 // pred_region
    _
  $region21: #{generator_forward.42} parent=0 // pred_fallthru
    _

</llo_original>
